<compile_context>
chip_gen: v7x
topology: tpu7x:2x2x1
jax: 0.10.0
libtpu: 0.0.40
codegen_flags: <defaults>
</compile_context>

<pallas_src>
import jax
import jax.numpy as jnp
from jax.experimental import pallas as pl
from jax.experimental.pallas import tpu as pltpu

VMEM = pltpu.MemorySpace.VMEM
SMEM = pltpu.MemorySpace.SMEM
EPS = 1e-5


# --------------------------------------------------------------------------
# Kernel 1: fused per-year GNN block (GAT1/BN/PReLU/GAT2/BN/PReLU/gather/ln)
# --------------------------------------------------------------------------
def gnn_fused_kernel(x_ref, adj_ref, lef_ref, ssrc_ref, sdst_ref, hsum_ref,
                     g1w_ref, g1b_ref, g1x_ref, g1aux_ref,
                     g2w_ref, g2b_ref, g2x_ref, g2aux_ref,
                     ln_ref, out_ref):
    # x: [N, I]   adj: [N, N] edge counts (dst, src) incl. self-loops
    # ssrc/sdst: [E, N] one-hot selectors   hsum: [H*C, C] head-sum matrix
    # g*w: [I, 2*H*C + C]  (= [wl | wr | wres])   g*b: [1, 2*H*C + C]
    # g*x: [H*C, H*C] block-diagonal attention (per-head att broadcast to C)
    # g*aux: [4, C] rows = (gat bias, bn gamma, bn beta, prelu slope)
    x = x_ref[...]
    adj = adj_ref[...]
    hsum = hsum_ref[...]
    n = x.shape[0]
    adj3 = adj[:, :, None]

    def gat_bn_prelu(inp, w_ref, b_ref, attx_ref, aux_ref):
        c = aux_ref.shape[1]
        hc = attx_ref.shape[0]
        heads = hc // c
        # fused projections: [xl | xr | residual] in one MXU pass
        proj = (jnp.dot(inp, w_ref[...], preferred_element_type=jnp.float32)
                + b_ref[...])
        xl = proj[:, :hc]                     # source-side features  [N, H*C]
        xr = proj[:, hc:2 * hc]               # target-side features  [N, H*C]
        res = proj[:, 2 * hc:2 * hc + c]      # residual projection   [N, C]
        # e[d, s, :] = leaky_relu(xr[d] + xl[s], 0.2), all heads at once
        e = xr[:, None, :] + xl[None, :, :]                       # [N, N, H*C]
        e = jnp.where(e > 0, e, 0.2 * e)
        # per-head scores replicated across that head's C lanes (block-diag att)
        s = jnp.dot(e.reshape(n * n, hc), attx_ref[...],
                    preferred_element_type=jnp.float32).reshape(n, n, hc)
        masked = jnp.where(adj3 > 0, s, -1e30)
        m = jnp.max(masked, axis=1, keepdims=True)
        # exponentiate the *masked* scores so 0*inf can never produce NaN
        p = adj3 * jnp.exp(masked - m)
        alpha = p / jnp.sum(p, axis=1, keepdims=True)
        # sum_s alpha * xl, then mean over heads via one small matmul
        agg_full = jnp.sum(alpha * xl[None, :, :], axis=1)        # [N, H*C]
        y = jnp.dot(agg_full, hsum, preferred_element_type=jnp.float32) / heads
        y = y + res + aux_ref[0:1, :]                             # GAT bias
        # BatchNorm (batch statistics over the N nodes) + PReLU
        mu = jnp.mean(y, axis=0, keepdims=True)
        var = jnp.mean((y - mu) ** 2, axis=0, keepdims=True)
        y = (y - mu) * jax.lax.rsqrt(var + EPS) * aux_ref[1:2, :] + aux_ref[2:3, :]
        return jnp.where(y > 0, y, aux_ref[3:4, :] * y)

    x1 = gat_bn_prelu(x, g1w_ref, g1b_ref, g1x_ref, g1aux_ref)
    x2 = gat_bn_prelu(x1, g2w_ref, g2b_ref, g2x_ref, g2aux_ref)
    x_all = jnp.concatenate([x1, x2], axis=-1)                    # [N, 32]

    # label-edge gather via one-hot matmuls, concat, per-year ln BatchNorm
    src = jnp.dot(ssrc_ref[...], x_all, preferred_element_type=jnp.float32)
    dst = jnp.dot(sdst_ref[...], x_all, preferred_element_type=jnp.float32)
    feat = jnp.concatenate([src, dst, lef_ref[...]], axis=-1)     # [E, 86]
    mu = jnp.mean(feat, axis=0, keepdims=True)
    var = jnp.mean((feat - mu) ** 2, axis=0, keepdims=True)
    out_ref[...] = ((feat - mu) * jax.lax.rsqrt(var + EPS) * ln_ref[0:1, :]
                    + ln_ref[1:2, :])


def _pack_gat(gp, bn_g, bn_b, prelu_a):
    heads, c = gp["att"].shape
    wcat = jnp.concatenate([gp["wl"], gp["wr"], gp["wres"]], axis=1)
    bcat = jnp.concatenate([gp["bl"], gp["br"],
                            jnp.zeros((1, c), jnp.float32)], axis=1)
    eye_h = jnp.eye(heads, dtype=jnp.float32)
    att_exp = jnp.broadcast_to(
        gp["att"][:, :, None, None] * eye_h[:, None, :, None],
        (heads, c, heads, c)).reshape(heads * c, heads * c)
    aux = jnp.concatenate([gp["bias"], bn_g, bn_b, prelu_a], axis=0)   # [4, C]
    return wcat, bcat, att_exp, aux


def gnn_fused(params, x_stack, adj_stack, lef_stack, sel_src, sel_dst):
    t_, n_, _ = x_stack.shape
    e_, dlef = lef_stack.shape[1], lef_stack.shape[2]
    heads, c = params["gat1"]["att"].shape
    hsum = jnp.tile(jnp.eye(c, dtype=jnp.float32), (heads, 1))        # [H*C, C]
    g1 = _pack_gat(params["gat1"], params["bn1_g"], params["bn1_b"],
                   params["prelu1"])
    g2 = _pack_gat(params["gat2"], params["bn2_g"], params["bn2_b"],
                   params["prelu2"])
    ln = jnp.concatenate([params["ln_g"], params["ln_b"]], axis=0)    # [2, 86]
    out_dim = 4 * c + dlef                                            # 86

    def year3d(shape):
        return pl.BlockSpec((None, shape[1], shape[2]), lambda t: (t, 0, 0))

    def const2d(arr):
        return pl.BlockSpec(arr.shape, lambda t: (0, 0))

    args = (x_stack, adj_stack, lef_stack, sel_src, sel_dst, hsum,
            g1[0], g1[1], g1[2], g1[3], g2[0], g2[1], g2[2], g2[3], ln)
    in_specs = ([year3d(x_stack.shape), year3d(adj_stack.shape),
                 year3d(lef_stack.shape)]
                + [const2d(a) for a in args[3:]])

    return pl.pallas_call(
        gnn_fused_kernel,
        out_shape=jax.ShapeDtypeStruct((t_, e_, out_dim), jnp.float32),
        grid=(t_,),
        in_specs=in_specs,
        out_specs=pl.BlockSpec((None, e_, out_dim), lambda t: (t, 0, 0)),
        compiler_params=pltpu.CompilerParams(
            dimension_semantics=("parallel",)),
    )(*args)


# --------------------------------------------------------------------------
# Kernel 2: fused 2-layer bidirectional GRU + agg Linear(5,1) + MLP head
# --------------------------------------------------------------------------
def rnn_mlp_kernel(x_ref, wi1_ref, bi1_ref, wh1_ref, bh1_ref,
                   wi2_ref, bi2_ref, wh2_ref, bh2_ref, agg_ref,
                   bn0_ref, w1_ref, p1_ref, w2_ref, p2_ref, w3_ref, c3_ref,
                   feat_ref, out_ref):
    # x: [T, E, D]   wi*: [D, 6H] (fwd|bwd)   wh*: [2, H, 3H]   bh*: [2, 3H]
    # agg (SMEM): [T+1] = (agg weights..., agg bias)
    t_, e_, d_ = x_ref.shape
    h = wh1_ref.shape[1]

    def bn(v, gamma, beta):
        mu = jnp.mean(v, axis=0, keepdims=True)
        var = jnp.mean((v - mu) ** 2, axis=0, keepdims=True)
        return (v - mu) * jax.lax.rsqrt(var + EPS) * gamma + beta

    def gru_bidir(x_flat, wi_ref, bi_ref, wh_ref, bh_ref):
        # input projection for all timesteps & both directions in ONE matmul
        gi = (jnp.dot(x_flat, wi_ref[...], preferred_element_type=jnp.float32)
              + bi_ref[...])                                      # [T*E, 6H]
        whf, whb = wh_ref[0], wh_ref[1]
        bhf, bhb = bh_ref[0:1, :], bh_ref[1:2, :]

        def step(gi_t, hprev, wh, bh):
            gh = jnp.dot(hprev, wh, preferred_element_type=jnp.float32) + bh
            r = jax.nn.sigmoid(gi_t[:, 0:h] + gh[:, 0:h])
            z = jax.nn.sigmoid(gi_t[:, h:2 * h] + gh[:, h:2 * h])
            ng = jnp.tanh(gi_t[:, 2 * h:3 * h] + r * gh[:, 2 * h:3 * h])
            return (1.0 - z) * ng + z * hprev

        hs = jnp.zeros((e_, h), jnp.float32)
        fwd = []
        for t in range(t_):
            hs = step(gi[t * e_:(t + 1) * e_, 0:3 * h], hs, whf, bhf)
            fwd.append(hs)
        hs = jnp.zeros((e_, h), jnp.float32)
        bwd = [None] * t_
        for t in range(t_ - 1, -1, -1):
            hs = step(gi[t * e_:(t + 1) * e_, 3 * h:6 * h], hs, whb, bhb)
            bwd[t] = hs
        return [jnp.concatenate([fwd[t], bwd[t]], axis=-1) for t in range(t_)]

    o1 = gru_bidir(x_ref[...].reshape(t_ * e_, d_),
                   wi1_ref, bi1_ref, wh1_ref, bh1_ref)            # T x [E, 2H]
    o2 = gru_bidir(jnp.concatenate(o1, axis=0),
                   wi2_ref, bi2_ref, wh2_ref, bh2_ref)            # T x [E, 2H]

    # agg = Linear(T, 1) over the time axis (+ bias)
    feat = agg_ref[0] * o2[0]
    for t in range(1, t_):
        feat = feat + agg_ref[t] * o2[t]
    feat = feat + agg_ref[t_]
    feat_ref[...] = feat

    # MLP head: BN -> fc1 -> BN -> LeakyReLU -> fc2 -> BN -> LeakyReLU -> fc3
    def lrelu(v):
        return jnp.where(v > 0, v, 0.01 * v)

    y = bn(feat, bn0_ref[0:1, :], bn0_ref[1:2, :])
    y = jnp.dot(y, w1_ref[...], preferred_element_type=jnp.float32) + p1_ref[0:1, :]
    y = lrelu(bn(y, p1_ref[1:2, :], p1_ref[2:3, :]))
    y = jnp.dot(y, w2_ref[...], preferred_element_type=jnp.float32) + p2_ref[0:1, :]
    y = lrelu(bn(y, p2_ref[1:2, :], p2_ref[2:3, :]))
    out_ref[...] = (jnp.dot(y, w3_ref[...], preferred_element_type=jnp.float32)
                    + c3_ref[...])


def _pack_gru_layer(layer):
    wi = jnp.concatenate([layer["f"]["wi"], layer["b"]["wi"]], axis=1)
    bi = jnp.concatenate([layer["f"]["bi"], layer["b"]["bi"]], axis=1)
    wh = jnp.stack([layer["f"]["wh"], layer["b"]["wh"]], axis=0)
    bh = jnp.concatenate([layer["f"]["bh"], layer["b"]["bh"]], axis=0)
    return wi, bi, wh, bh


def rnn_mlp_fused(params, x_seq):
    e_ = x_seq.shape[1]
    wi1, bi1, wh1, bh1 = _pack_gru_layer(params["gru"][0])
    wi2, bi2, wh2, bh2 = _pack_gru_layer(params["gru"][1])
    agg = jnp.concatenate([params["agg_w"], params["agg_b"]], axis=0)   # [T+1]
    m = params["mlp"]
    bn0 = jnp.concatenate([m["g0"], m["b0"]], axis=0)                   # [2, 64]
    p1 = jnp.concatenate([m["c1"], m["g1"], m["t1"]], axis=0)           # [3, 32]
    p2 = jnp.concatenate([m["c2"], m["g2"], m["t2"]], axis=0)           # [3, 8]
    feat_dim = 2 * params["gru"][1]["f"]["wh"].shape[0]
    out_dim = m["w3"].shape[1]
    return pl.pallas_call(
        rnn_mlp_kernel,
        out_shape=(jax.ShapeDtypeStruct((e_, feat_dim), jnp.float32),
                   jax.ShapeDtypeStruct((e_, out_dim), jnp.float32)),
        in_specs=([pl.BlockSpec(memory_space=VMEM)] * 9
                  + [pl.BlockSpec(memory_space=SMEM)]
                  + [pl.BlockSpec(memory_space=VMEM)] * 7),
        out_specs=(pl.BlockSpec(memory_space=VMEM),
                   pl.BlockSpec(memory_space=VMEM)),
    )(x_seq, wi1, bi1, wh1, bh1, wi2, bi2, wh2, bh2, agg,
      bn0, m["w1"], p1, m["w2"], p2, m["w3"], m["c3"])


# --------------------------------------------------------------------------
# Glue (plain JAX, all under one jit): adjacency build, selectors, wiring
# --------------------------------------------------------------------------
def build_adj(edge_index, n):
    # counts[dst, src]; remove existing self-loops, then add one per node (PyG)
    src, dst = edge_index[0], edge_index[1]
    adj = jnp.zeros((n, n), jnp.float32).at[dst, src].add(1.0)
    eye = jnp.eye(n, dtype=jnp.float32)
    return adj * (1.0 - eye) + eye


@jax.jit
def model_tn_forward(params, x_per_year, label_edge_index,
                     edge_index_every_year, label_edge_feature_every_year):
    x_stack = jnp.stack(x_per_year, axis=0)                        # [T, N, 128]
    lef_stack = jnp.stack(label_edge_feature_every_year, axis=0)   # [T, E, 22]
    ei_stack = jnp.stack(edge_index_every_year, axis=0)            # [T, 2, Eg]
    n = x_stack.shape[1]
    adj_stack = jax.vmap(lambda ei: build_adj(ei, n))(ei_stack)    # [T, N, N]
    sel_src = jax.nn.one_hot(label_edge_index[0], n, dtype=jnp.float32)
    sel_dst = jax.nn.one_hot(label_edge_index[1], n, dtype=jnp.float32)
    gru_in = gnn_fused(params, x_stack, adj_stack, lef_stack,
                       sel_src, sel_dst)                           # [T, E, 86]
    return rnn_mlp_fused(params, gru_in)                           # ([E,64],[E,2])


# --------------------------------------------------------------------------
# Deterministic parameter init
# --------------------------------------------------------------------------
def init_params(key):
    keys = iter(jax.random.split(key, 64))

    def w(shape, scale=0.1):
        return (scale * jax.random.normal(next(keys), shape)).astype(jnp.float32)

    def gat(i_dim, c=16, h=4):
        return dict(wl=w((i_dim, h * c)), bl=w((1, h * c)),
                    wr=w((i_dim, h * c)), br=w((1, h * c)),
                    att=w((h, c)), wres=w((i_dim, c)), bias=w((1, c)))

    def gru_dir(din, h=32):
        return dict(wi=w((din, 3 * h)), wh=w((h, 3 * h)),
                    bi=w((1, 3 * h)), bh=w((1, 3 * h)))

    return dict(
        gat1=gat(128), gat2=gat(16),
        bn1_g=jnp.ones((1, 16), jnp.float32), bn1_b=jnp.zeros((1, 16), jnp.float32),
        bn2_g=jnp.ones((1, 16), jnp.float32), bn2_b=jnp.zeros((1, 16), jnp.float32),
        prelu1=jnp.full((1, 16), 0.25, jnp.float32),
        prelu2=jnp.full((1, 16), 0.25, jnp.float32),
        ln_g=jnp.ones((1, 86), jnp.float32), ln_b=jnp.zeros((1, 86), jnp.float32),
        gru=[dict(f=gru_dir(86), b=gru_dir(86)),
             dict(f=gru_dir(64), b=gru_dir(64))],
        agg_w=w((5,)), agg_b=w((1,)),
        mlp=dict(
            g0=jnp.ones((1, 64), jnp.float32), b0=jnp.zeros((1, 64), jnp.float32),
            w1=w((64, 32)), c1=w((1, 32)),
            g1=jnp.ones((1, 32), jnp.float32), t1=jnp.zeros((1, 32), jnp.float32),
            w2=w((32, 8)), c2=w((1, 8)),
            g2=jnp.ones((1, 8), jnp.float32), t2=jnp.zeros((1, 8), jnp.float32),
            w3=w((8, 2)), c3=w((1, 2))),
    )


# --------------------------------------------------------------------------
if __name__ == "__main__":
    key = jax.random.PRNGKey(0)
    kp, kd = jax.random.split(key)
    params = init_params(kp)

    N, T, E_LABEL, E_GRAPH = 16, 5, 8, 32   # T=5 fixed by agg=Linear(5,1); 64+22=86
    ks = jax.random.split(kd, 3 * T + 1)
    x_per_year = [jax.random.normal(ks[t], (N, 128), jnp.float32) for t in range(T)]
    edge_index_every_year = [jax.random.randint(ks[T + t], (2, E_GRAPH), 0, N)
                             for t in range(T)]
    label_edge_feature_every_year = [
        jax.random.normal(ks[2 * T + t], (E_LABEL, 22), jnp.float32) for t in range(T)]
    label_edge_index = jax.random.randint(ks[-1], (2, E_LABEL), 0, N)

    x_lstm, logits = model_tn_forward(params, x_per_year, label_edge_index,
                                      edge_index_every_year,
                                      label_edge_feature_every_year)
    jax.block_until_ready((x_lstm, logits))
    assert x_lstm.shape == (E_LABEL, 64) and logits.shape == (E_LABEL, 2)
    assert bool(jnp.all(jnp.isfinite(x_lstm))) and bool(jnp.all(jnp.isfinite(logits)))
    print("KERNEL_OK")
</pallas_src>

<mosaic_0001>
module attributes {stable_mosaic.version = 11 : i64} {
  func.func private @main(%arg0: i32) attributes {dimension_semantics = [#tpu.dimension_semantics<core_parallel>], iteration_bounds = array<i64: 2>, tpu.core_type = #tpu.core_type<sc_scalar_subcore>, window_params = []} {
    return
  }
}

module attributes {stable_mosaic.version = 11 : i64} {
  func.func private @main(%arg0: i32) attributes {dimension_semantics = [#tpu.dimension_semantics<core_parallel>], iteration_bounds = array<i64: 2>, tpu.core_type = #tpu.core_type<sc_scalar_subcore>, window_params = []} {
    return
  }
}

module attributes {stable_mosaic.version = 11 : i64} {
  func.func @gnn_fused_kernel(%arg0: i32, %arg1: memref<1x16x128xf32, #tpu.memory_space<vmem>>, %arg2: memref<1x16x16xf32, #tpu.memory_space<vmem>>, %arg3: memref<1x8x22xf32, #tpu.memory_space<vmem>>, %arg4: memref<8x16xf32, #tpu.memory_space<vmem>>, %arg5: memref<8x16xf32, #tpu.memory_space<vmem>>, %arg6: memref<64x16xf32, #tpu.memory_space<vmem>>, %arg7: memref<128x144xf32, #tpu.memory_space<vmem>>, %arg8: memref<1x144xf32, #tpu.memory_space<vmem>>, %arg9: memref<64x64xf32, #tpu.memory_space<vmem>>, %arg10: memref<4x16xf32, #tpu.memory_space<vmem>>, %arg11: memref<16x144xf32, #tpu.memory_space<vmem>>, %arg12: memref<1x144xf32, #tpu.memory_space<vmem>>, %arg13: memref<64x64xf32, #tpu.memory_space<vmem>>, %arg14: memref<4x16xf32, #tpu.memory_space<vmem>>, %arg15: memref<2x86xf32, #tpu.memory_space<vmem>>, %arg16: memref<1x8x86xf32, #tpu.memory_space<vmem>>) attributes {dimension_semantics = [#tpu.dimension_semantics<parallel>], iteration_bounds = array<i64: 5>, scalar_prefetch = 0 : i64, scratch_operands = 0 : i64, tpu.core_type = #tpu.core_type<tc>, window_params = [{transform_indices = @transform_0, window_bounds = array<i64: 1, 16, 128>}, {transform_indices = @transform_1, window_bounds = array<i64: 1, 16, 16>}, {transform_indices = @transform_2, window_bounds = array<i64: 1, 8, 22>}, {pipeline_mode = #tpu.pipeline_mode<synchronous>, transform_indices = @transform_3, window_bounds = array<i64: 8, 16>}, {pipeline_mode = #tpu.pipeline_mode<synchronous>, transform_indices = @transform_4, window_bounds = array<i64: 8, 16>}, {pipeline_mode = #tpu.pipeline_mode<synchronous>, transform_indices = @transform_5, window_bounds = array<i64: 64, 16>}, {pipeline_mode = #tpu.pipeline_mode<synchronous>, transform_indices = @transform_6, window_bounds = array<i64: 128, 144>}, {pipeline_mode = #tpu.pipeline_mode<synchronous>, transform_indices = @transform_7, window_bounds = array<i64: 1, 144>}, {pipeline_mode = #tpu.pipeline_mode<synchronous>, transform_indices = @transform_8, window_bounds = array<i64: 64, 64>}, {pipeline_mode = #tpu.pipeline_mode<synchronous>, transform_indices = @transform_9, window_bounds = array<i64: 4, 16>}, {pipeline_mode = #tpu.pipeline_mode<synchronous>, transform_indices = @transform_10, window_bounds = array<i64: 16, 144>}, {pipeline_mode = #tpu.pipeline_mode<synchronous>, transform_indices = @transform_11, window_bounds = array<i64: 1, 144>}, {pipeline_mode = #tpu.pipeline_mode<synchronous>, transform_indices = @transform_12, window_bounds = array<i64: 64, 64>}, {pipeline_mode = #tpu.pipeline_mode<synchronous>, transform_indices = @transform_13, window_bounds = array<i64: 4, 16>}, {pipeline_mode = #tpu.pipeline_mode<synchronous>, transform_indices = @transform_14, window_bounds = array<i64: 2, 86>}, {transform_indices = @transform_15, window_bounds = array<i64: 1, 8, 86>}]} {
    %c0 = arith.constant 0 : index
    %c0_0 = arith.constant 0 : index
    %c0_1 = arith.constant 0 : index
    %0 = vector.load %arg1[%c0, %c0_0, %c0_1] : memref<1x16x128xf32, #tpu.memory_space<vmem>>, vector<1x16x128xf32>
    %1 = vector.shape_cast %0 : vector<1x16x128xf32> to vector<16x128xf32>
    %c0_2 = arith.constant 0 : index
    %c0_3 = arith.constant 0 : index
    %c0_4 = arith.constant 0 : index
    %2 = vector.load %arg2[%c0_2, %c0_3, %c0_4] : memref<1x16x16xf32, #tpu.memory_space<vmem>>, vector<1x16x16xf32>
    %3 = vector.shape_cast %2 : vector<1x16x16xf32> to vector<16x16xf32>
    %c0_5 = arith.constant 0 : index
    %c0_6 = arith.constant 0 : index
    %4 = vector.load %arg6[%c0_5, %c0_6] : memref<64x16xf32, #tpu.memory_space<vmem>>, vector<64x16xf32>
    %5 = vector.shape_cast %3 : vector<16x16xf32> to vector<16x16x1xf32>
    %c0_7 = arith.constant 0 : index
    %c0_8 = arith.constant 0 : index
    %6 = vector.load %arg7[%c0_7, %c0_8] : memref<128x144xf32, #tpu.memory_space<vmem>>, vector<128x144xf32>
    %cst = arith.constant dense<0.000000e+00> : vector<16x144xf32>
    %7 = tpu.matmul %1, %6, %cst {dimension_numbers = #tpu.dot_dimension_numbers<[1], [0], [0], [1], [0, 0, 1, 1], [], []>} : vector<16x128xf32>, vector<128x144xf32>, vector<16x144xf32> -> vector<16x144xf32>
    %c0_9 = arith.constant 0 : index
    %c0_10 = arith.constant 0 : index
    %8 = vector.load %arg8[%c0_9, %c0_10] : memref<1x144xf32, #tpu.memory_space<vmem>>, vector<1x144xf32>
    %9 = vector.broadcast %8 : vector<1x144xf32> to vector<16x144xf32>
    %10 = arith.addf %7, %9 : vector<16x144xf32>
    %11 = vector.extract_strided_slice %10 {offsets = [0, 0], sizes = [16, 64], strides = [1, 1]} : vector<16x144xf32> to vector<16x64xf32>
    %12 = vector.extract_strided_slice %10 {offsets = [0, 64], sizes = [16, 64], strides = [1, 1]} : vector<16x144xf32> to vector<16x64xf32>
    %13 = vector.extract_strided_slice %10 {offsets = [0, 128], sizes = [16, 16], strides = [1, 1]} : vector<16x144xf32> to vector<16x16xf32>
    %14 = vector.shape_cast %12 : vector<16x64xf32> to vector<16x1x64xf32>
    %15 = vector.shape_cast %11 : vector<16x64xf32> to vector<1x16x64xf32>
    %16 = vector.broadcast %14 : vector<16x1x64xf32> to vector<16x16x64xf32>
    %17 = vector.broadcast %15 : vector<1x16x64xf32> to vector<16x16x64xf32>
    %18 = arith.addf %16, %17 : vector<16x16x64xf32>
    %cst_11 = arith.constant 0.000000e+00 : f32
    %19 = vector.broadcast %cst_11 : f32 to vector<16x16x64xf32>
    %20 = arith.cmpf ogt, %18, %19 : vector<16x16x64xf32>
    %cst_12 = arith.constant 2.000000e-01 : f32
    %21 = vector.broadcast %cst_12 : f32 to vector<16x16x64xf32>
    %22 = arith.mulf %21, %18 : vector<16x16x64xf32>
    %23 = arith.select %20, %18, %22 : vector<16x16x64xi1>, vector<16x16x64xf32>
    %24 = vector.shape_cast %23 : vector<16x16x64xf32> to vector<256x64xf32>
    %c0_13 = arith.constant 0 : index
    %c0_14 = arith.constant 0 : index
    %25 = vector.load %arg9[%c0_13, %c0_14] : memref<64x64xf32, #tpu.memory_space<vmem>>, vector<64x64xf32>
    %cst_15 = arith.constant dense<0.000000e+00> : vector<256x64xf32>
    %26 = tpu.matmul %24, %25, %cst_15 {dimension_numbers = #tpu.dot_dimension_numbers<[1], [0], [0], [1], [0, 0, 1, 1], [], []>} : vector<256x64xf32>, vector<64x64xf32>, vector<256x64xf32> -> vector<256x64xf32>
    %27 = vector.shape_cast %26 : vector<256x64xf32> to vector<16x16x64xf32>
    %cst_16 = arith.constant 0.000000e+00 : f32
    %28 = vector.broadcast %cst_16 : f32 to vector<16x16x1xf32>
    %29 = arith.cmpf ogt, %5, %28 : vector<16x16x1xf32>
    %cst_17 = arith.constant -1.000000e+30 : f32
    %30 = vector.shape_cast %29 : vector<16x16x1xi1> to vector<16x16x1xi1>
    %31 = vector.broadcast %30 : vector<16x16x1xi1> to vector<16x16x64xi1>
    %32 = vector.broadcast %cst_17 : f32 to vector<16x16x64xf32>
    %33 = arith.select %31, %27, %32 : vector<16x16x64xi1>, vector<16x16x64xf32>
    %cst_18 = arith.constant dense<0xFF800000> : vector<16x64xf32>
    %34 = vector.multi_reduction <maximumf>, %33, %cst_18 [1] : vector<16x16x64xf32> to vector<16x64xf32>
    %35 = vector.shape_cast %34 : vector<16x64xf32> to vector<16x1x64xf32>
    %36 = vector.broadcast %35 : vector<16x1x64xf32> to vector<16x16x64xf32>
    %37 = arith.subf %33, %36 : vector<16x16x64xf32>
    %38 = math.exp %37 : vector<16x16x64xf32>
    %39 = vector.broadcast %5 : vector<16x16x1xf32> to vector<16x16x64xf32>
    %40 = arith.mulf %39, %38 : vector<16x16x64xf32>
    %cst_19 = arith.constant dense<0.000000e+00> : vector<16x64xf32>
    %41 = vector.multi_reduction <add>, %40, %cst_19 [1] : vector<16x16x64xf32> to vector<16x64xf32>
    %42 = vector.shape_cast %41 : vector<16x64xf32> to vector<16x1x64xf32>
    %43 = vector.broadcast %42 : vector<16x1x64xf32> to vector<16x16x64xf32>
    %44 = arith.divf %40, %43 : vector<16x16x64xf32>
    %45 = vector.shape_cast %11 : vector<16x64xf32> to vector<1x16x64xf32>
    %46 = vector.broadcast %45 : vector<1x16x64xf32> to vector<16x16x64xf32>
    %47 = arith.mulf %44, %46 : vector<16x16x64xf32>
    %cst_20 = arith.constant dense<0.000000e+00> : vector<16x64xf32>
    %48 = vector.multi_reduction <add>, %47, %cst_20 [1] : vector<16x16x64xf32> to vector<16x64xf32>
    %cst_21 = arith.constant dense<0.000000e+00> : vector<16x16xf32>
    %49 = tpu.matmul %48, %4, %cst_21 {dimension_numbers = #tpu.dot_dimension_numbers<[1], [0], [0], [1], [0, 0, 1, 1], [], []>} : vector<16x64xf32>, vector<64x16xf32>, vector<16x16xf32> -> vector<16x16xf32>
    %cst_22 = arith.constant 4.000000e+00 : f32
    %50 = vector.broadcast %cst_22 : f32 to vector<16x16xf32>
    %51 = arith.divf %49, %50 : vector<16x16xf32>
    %52 = arith.addf %51, %13 : vector<16x16xf32>
    %c0_23 = arith.constant 0 : index
    %c0_24 = arith.constant 0 : index
    %53 = vector.load %arg10[%c0_23, %c0_24] : memref<4x16xf32, #tpu.memory_space<vmem>>, vector<1x16xf32>
    %54 = vector.broadcast %53 : vector<1x16xf32> to vector<16x16xf32>
    %55 = arith.addf %52, %54 : vector<16x16xf32>
    %cst_25 = arith.constant dense<0.000000e+00> : vector<16xf32>
    %56 = vector.multi_reduction <add>, %55, %cst_25 [0] : vector<16x16xf32> to vector<16xf32>
    %57 = vector.shape_cast %56 : vector<16xf32> to vector<1x16xf32>
    %cst_26 = arith.constant 1.600000e+01 : f32
    %58 = vector.broadcast %cst_26 : f32 to vector<1x16xf32>
    %59 = arith.divf %57, %58 : vector<1x16xf32>
    %60 = vector.broadcast %59 : vector<1x16xf32> to vector<16x16xf32>
    %61 = arith.subf %55, %60 : vector<16x16xf32>
    %62 = arith.mulf %61, %61 : vector<16x16xf32>
    %cst_27 = arith.constant dense<0.000000e+00> : vector<16xf32>
    %63 = vector.multi_reduction <add>, %62, %cst_27 [0] : vector<16x16xf32> to vector<16xf32>
    %64 = vector.shape_cast %63 : vector<16xf32> to vector<1x16xf32>
    %cst_28 = arith.constant 1.600000e+01 : f32
    %65 = vector.broadcast %cst_28 : f32 to vector<1x16xf32>
    %66 = arith.divf %64, %65 : vector<1x16xf32>
    %67 = vector.broadcast %59 : vector<1x16xf32> to vector<16x16xf32>
    %68 = arith.subf %55, %67 : vector<16x16xf32>
    %cst_29 = arith.constant 9.99999974E-6 : f32
    %69 = vector.broadcast %cst_29 : f32 to vector<1x16xf32>
    %70 = arith.addf %66, %69 : vector<1x16xf32>
    %71 = math.rsqrt %70 : vector<1x16xf32>
    %72 = vector.broadcast %71 : vector<1x16xf32> to vector<16x16xf32>
    %73 = arith.mulf %68, %72 : vector<16x16xf32>
    %c1 = arith.constant 1 : index
    %c0_30 = arith.constant 0 : index
    %74 = vector.load %arg10[%c1, %c0_30] : memref<4x16xf32, #tpu.memory_space<vmem>>, vector<1x16xf32>
    %75 = vector.broadcast %74 : vector<1x16xf32> to vector<16x16xf32>
    %76 = arith.mulf %73, %75 : vector<16x16xf32>
    %c2 = arith.constant 2 : index
    %c0_31 = arith.constant 0 : index
    %77 = vector.load %arg10[%c2, %c0_31] : memref<4x16xf32, #tpu.memory_space<vmem>>, vector<1x16xf32>
    %78 = vector.broadcast %77 : vector<1x16xf32> to vector<16x16xf32>
    %79 = arith.addf %76, %78 : vector<16x16xf32>
    %cst_32 = arith.constant 0.000000e+00 : f32
    %80 = vector.broadcast %cst_32 : f32 to vector<16x16xf32>
    %81 = arith.cmpf ogt, %79, %80 : vector<16x16xf32>
    %c3 = arith.constant 3 : index
    %c0_33 = arith.constant 0 : index
    %82 = vector.load %arg10[%c3, %c0_33] : memref<4x16xf32, #tpu.memory_space<vmem>>, vector<1x16xf32>
    %83 = vector.broadcast %82 : vector<1x16xf32> to vector<16x16xf32>
    %84 = arith.mulf %83, %79 : vector<16x16xf32>
    %85 = arith.select %81, %79, %84 : vector<16x16xi1>, vector<16x16xf32>
    %c0_34 = arith.constant 0 : index
    %c0_35 = arith.constant 0 : index
    %86 = vector.load %arg11[%c0_34, %c0_35] : memref<16x144xf32, #tpu.memory_space<vmem>>, vector<16x144xf32>
    %cst_36 = arith.constant dense<0.000000e+00> : vector<16x144xf32>
    %87 = tpu.matmul %85, %86, %cst_36 {dimension_numbers = #tpu.dot_dimension_numbers<[1], [0], [0], [1], [0, 0, 1, 1], [], []>} : vector<16x16xf32>, vector<16x144xf32>, vector<16x144xf32> -> vector<16x144xf32>
    %c0_37 = arith.constant 0 : index
    %c0_38 = arith.constant 0 : index
    %88 = vector.load %arg12[%c0_37, %c0_38] : memref<1x144xf32, #tpu.memory_space<vmem>>, vector<1x144xf32>
    %89 = vector.broadcast %88 : vector<1x144xf32> to vector<16x144xf32>
    %90 = arith.addf %87, %89 : vector<16x144xf32>
    %91 = vector.extract_strided_slice %90 {offsets = [0, 0], sizes = [16, 64], strides = [1, 1]} : vector<16x144xf32> to vector<16x64xf32>
    %92 = vector.extract_strided_slice %90 {offsets = [0, 64], sizes = [16, 64], strides = [1, 1]} : vector<16x144xf32> to vector<16x64xf32>
    %93 = vector.extract_strided_slice %90 {offsets = [0, 128], sizes = [16, 16], strides = [1, 1]} : vector<16x144xf32> to vector<16x16xf32>
    %94 = vector.shape_cast %92 : vector<16x64xf32> to vector<16x1x64xf32>
    %95 = vector.shape_cast %91 : vector<16x64xf32> to vector<1x16x64xf32>
    %96 = vector.broadcast %94 : vector<16x1x64xf32> to vector<16x16x64xf32>
    %97 = vector.broadcast %95 : vector<1x16x64xf32> to vector<16x16x64xf32>
    %98 = arith.addf %96, %97 : vector<16x16x64xf32>
    %cst_39 = arith.constant 0.000000e+00 : f32
    %99 = vector.broadcast %cst_39 : f32 to vector<16x16x64xf32>
    %100 = arith.cmpf ogt, %98, %99 : vector<16x16x64xf32>
    %cst_40 = arith.constant 2.000000e-01 : f32
    %101 = vector.broadcast %cst_40 : f32 to vector<16x16x64xf32>
    %102 = arith.mulf %101, %98 : vector<16x16x64xf32>
    %103 = arith.select %100, %98, %102 : vector<16x16x64xi1>, vector<16x16x64xf32>
    %104 = vector.shape_cast %103 : vector<16x16x64xf32> to vector<256x64xf32>
    %c0_41 = arith.constant 0 : index
    %c0_42 = arith.constant 0 : index
    %105 = vector.load %arg13[%c0_41, %c0_42] : memref<64x64xf32, #tpu.memory_space<vmem>>, vector<64x64xf32>
    %cst_43 = arith.constant dense<0.000000e+00> : vector<256x64xf32>
    %106 = tpu.matmul %104, %105, %cst_43 {dimension_numbers = #tpu.dot_dimension_numbers<[1], [0], [0], [1], [0, 0, 1, 1], [], []>} : vector<256x64xf32>, vector<64x64xf32>, vector<256x64xf32> -> vector<256x64xf32>
    %107 = vector.shape_cast %106 : vector<256x64xf32> to vector<16x16x64xf32>
    %cst_44 = arith.constant 0.000000e+00 : f32
    %108 = vector.broadcast %cst_44 : f32 to vector<16x16x1xf32>
    %109 = arith.cmpf ogt, %5, %108 : vector<16x16x1xf32>
    %cst_45 = arith.constant -1.000000e+30 : f32
    %110 = vector.shape_cast %109 : vector<16x16x1xi1> to vector<16x16x1xi1>
    %111 = vector.broadcast %110 : vector<16x16x1xi1> to vector<16x16x64xi1>
    %112 = vector.broadcast %cst_45 : f32 to vector<16x16x64xf32>
    %113 = arith.select %111, %107, %112 : vector<16x16x64xi1>, vector<16x16x64xf32>
    %cst_46 = arith.constant dense<0xFF800000> : vector<16x64xf32>
    %114 = vector.multi_reduction <maximumf>, %113, %cst_46 [1] : vector<16x16x64xf32> to vector<16x64xf32>
    %115 = vector.shape_cast %114 : vector<16x64xf32> to vector<16x1x64xf32>
    %116 = vector.broadcast %115 : vector<16x1x64xf32> to vector<16x16x64xf32>
    %117 = arith.subf %113, %116 : vector<16x16x64xf32>
    %118 = math.exp %117 : vector<16x16x64xf32>
    %119 = vector.broadcast %5 : vector<16x16x1xf32> to vector<16x16x64xf32>
    %120 = arith.mulf %119, %118 : vector<16x16x64xf32>
    %cst_47 = arith.constant dense<0.000000e+00> : vector<16x64xf32>
    %121 = vector.multi_reduction <add>, %120, %cst_47 [1] : vector<16x16x64xf32> to vector<16x64xf32>
    %122 = vector.shape_cast %121 : vector<16x64xf32> to vector<16x1x64xf32>
    %123 = vector.broadcast %122 : vector<16x1x64xf32> to vector<16x16x64xf32>
    %124 = arith.divf %120, %123 : vector<16x16x64xf32>
    %125 = vector.shape_cast %91 : vector<16x64xf32> to vector<1x16x64xf32>
    %126 = vector.broadcast %125 : vector<1x16x64xf32> to vector<16x16x64xf32>
    %127 = arith.mulf %124, %126 : vector<16x16x64xf32>
    %cst_48 = arith.constant dense<0.000000e+00> : vector<16x64xf32>
    %128 = vector.multi_reduction <add>, %127, %cst_48 [1] : vector<16x16x64xf32> to vector<16x64xf32>
    %cst_49 = arith.constant dense<0.000000e+00> : vector<16x16xf32>
    %129 = tpu.matmul %128, %4, %cst_49 {dimension_numbers = #tpu.dot_dimension_numbers<[1], [0], [0], [1], [0, 0, 1, 1], [], []>} : vector<16x64xf32>, vector<64x16xf32>, vector<16x16xf32> -> vector<16x16xf32>
    %cst_50 = arith.constant 4.000000e+00 : f32
    %130 = vector.broadcast %cst_50 : f32 to vector<16x16xf32>
    %131 = arith.divf %129, %130 : vector<16x16xf32>
    %132 = arith.addf %131, %93 : vector<16x16xf32>
    %c0_51 = arith.constant 0 : index
    %c0_52 = arith.constant 0 : index
    %133 = vector.load %arg14[%c0_51, %c0_52] : memref<4x16xf32, #tpu.memory_space<vmem>>, vector<1x16xf32>
    %134 = vector.broadcast %133 : vector<1x16xf32> to vector<16x16xf32>
    %135 = arith.addf %132, %134 : vector<16x16xf32>
    %cst_53 = arith.constant dense<0.000000e+00> : vector<16xf32>
    %136 = vector.multi_reduction <add>, %135, %cst_53 [0] : vector<16x16xf32> to vector<16xf32>
    %137 = vector.shape_cast %136 : vector<16xf32> to vector<1x16xf32>
    %cst_54 = arith.constant 1.600000e+01 : f32
    %138 = vector.broadcast %cst_54 : f32 to vector<1x16xf32>
    %139 = arith.divf %137, %138 : vector<1x16xf32>
    %140 = vector.broadcast %139 : vector<1x16xf32> to vector<16x16xf32>
    %141 = arith.subf %135, %140 : vector<16x16xf32>
    %142 = arith.mulf %141, %141 : vector<16x16xf32>
    %cst_55 = arith.constant dense<0.000000e+00> : vector<16xf32>
    %143 = vector.multi_reduction <add>, %142, %cst_55 [0] : vector<16x16xf32> to vector<16xf32>
    %144 = vector.shape_cast %143 : vector<16xf32> to vector<1x16xf32>
    %cst_56 = arith.constant 1.600000e+01 : f32
    %145 = vector.broadcast %cst_56 : f32 to vector<1x16xf32>
    %146 = arith.divf %144, %145 : vector<1x16xf32>
    %147 = vector.broadcast %139 : vector<1x16xf32> to vector<16x16xf32>
    %148 = arith.subf %135, %147 : vector<16x16xf32>
    %cst_57 = arith.constant 9.99999974E-6 : f32
    %149 = vector.broadcast %cst_57 : f32 to vector<1x16xf32>
    %150 = arith.addf %146, %149 : vector<1x16xf32>
    %151 = math.rsqrt %150 : vector<1x16xf32>
    %152 = vector.broadcast %151 : vector<1x16xf32> to vector<16x16xf32>
    %153 = arith.mulf %148, %152 : vector<16x16xf32>
    %c1_58 = arith.constant 1 : index
    %c0_59 = arith.constant 0 : index
    %154 = vector.load %arg14[%c1_58, %c0_59] : memref<4x16xf32, #tpu.memory_space<vmem>>, vector<1x16xf32>
    %155 = vector.broadcast %154 : vector<1x16xf32> to vector<16x16xf32>
    %156 = arith.mulf %153, %155 : vector<16x16xf32>
    %c2_60 = arith.constant 2 : index
    %c0_61 = arith.constant 0 : index
    %157 = vector.load %arg14[%c2_60, %c0_61] : memref<4x16xf32, #tpu.memory_space<vmem>>, vector<1x16xf32>
    %158 = vector.broadcast %157 : vector<1x16xf32> to vector<16x16xf32>
    %159 = arith.addf %156, %158 : vector<16x16xf32>
    %cst_62 = arith.constant 0.000000e+00 : f32
    %160 = vector.broadcast %cst_62 : f32 to vector<16x16xf32>
    %161 = arith.cmpf ogt, %159, %160 : vector<16x16xf32>
    %c3_63 = arith.constant 3 : index
    %c0_64 = arith.constant 0 : index
    %162 = vector.load %arg14[%c3_63, %c0_64] : memref<4x16xf32, #tpu.memory_space<vmem>>, vector<1x16xf32>
    %163 = vector.broadcast %162 : vector<1x16xf32> to vector<16x16xf32>
    %164 = arith.mulf %163, %159 : vector<16x16xf32>
    %165 = arith.select %161, %159, %164 : vector<16x16xi1>, vector<16x16xf32>
    %166 = tpu.concatenate %85, %165 in 1 : vector<16x16xf32>, vector<16x16xf32> -> vector<16x32xf32>
    %c0_65 = arith.constant 0 : index
    %c0_66 = arith.constant 0 : index
    %167 = vector.load %arg4[%c0_65, %c0_66] : memref<8x16xf32, #tpu.memory_space<vmem>>, vector<8x16xf32>
    %cst_67 = arith.constant dense<0.000000e+00> : vector<8x32xf32>
    %168 = tpu.matmul %167, %166, %cst_67 {dimension_numbers = #tpu.dot_dimension_numbers<[1], [0], [0], [1], [0, 0, 1, 1], [], []>} : vector<8x16xf32>, vector<16x32xf32>, vector<8x32xf32> -> vector<8x32xf32>
    %c0_68 = arith.constant 0 : index
    %c0_69 = arith.constant 0 : index
    %169 = vector.load %arg5[%c0_68, %c0_69] : memref<8x16xf32, #tpu.memory_space<vmem>>, vector<8x16xf32>
    %cst_70 = arith.constant dense<0.000000e+00> : vector<8x32xf32>
    %170 = tpu.matmul %169, %166, %cst_70 {dimension_numbers = #tpu.dot_dimension_numbers<[1], [0], [0], [1], [0, 0, 1, 1], [], []>} : vector<8x16xf32>, vector<16x32xf32>, vector<8x32xf32> -> vector<8x32xf32>
    %c0_71 = arith.constant 0 : index
    %c0_72 = arith.constant 0 : index
    %c0_73 = arith.constant 0 : index
    %171 = vector.load %arg3[%c0_71, %c0_72, %c0_73] : memref<1x8x22xf32, #tpu.memory_space<vmem>>, vector<1x8x22xf32>
    %172 = vector.shape_cast %171 : vector<1x8x22xf32> to vector<8x22xf32>
    %173 = tpu.concatenate %168, %170, %172 in 1 : vector<8x32xf32>, vector<8x32xf32>, vector<8x22xf32> -> vector<8x86xf32>
    %cst_74 = arith.constant dense<0.000000e+00> : vector<86xf32>
    %174 = vector.multi_reduction <add>, %173, %cst_74 [0] : vector<8x86xf32> to vector<86xf32>
    %175 = vector.shape_cast %174 : vector<86xf32> to vector<1x86xf32>
    %cst_75 = arith.constant 8.000000e+00 : f32
    %176 = vector.broadcast %cst_75 : f32 to vector<1x86xf32>
    %177 = arith.divf %175, %176 : vector<1x86xf32>
    %178 = vector.broadcast %177 : vector<1x86xf32> to vector<8x86xf32>
    %179 = arith.subf %173, %178 : vector<8x86xf32>
    %180 = arith.mulf %179, %179 : vector<8x86xf32>
    %cst_76 = arith.constant dense<0.000000e+00> : vector<86xf32>
    %181 = vector.multi_reduction <add>, %180, %cst_76 [0] : vector<8x86xf32> to vector<86xf32>
    %182 = vector.shape_cast %181 : vector<86xf32> to vector<1x86xf32>
    %cst_77 = arith.constant 8.000000e+00 : f32
    %183 = vector.broadcast %cst_77 : f32 to vector<1x86xf32>
    %184 = arith.divf %182, %183 : vector<1x86xf32>
    %185 = vector.broadcast %177 : vector<1x86xf32> to vector<8x86xf32>
    %186 = arith.subf %173, %185 : vector<8x86xf32>
    %cst_78 = arith.constant 9.99999974E-6 : f32
    %187 = vector.broadcast %cst_78 : f32 to vector<1x86xf32>
    %188 = arith.addf %184, %187 : vector<1x86xf32>
    %189 = math.rsqrt %188 : vector<1x86xf32>
    %190 = vector.broadcast %189 : vector<1x86xf32> to vector<8x86xf32>
    %191 = arith.mulf %186, %190 : vector<8x86xf32>
    %c0_79 = arith.constant 0 : index
    %c0_80 = arith.constant 0 : index
    %192 = vector.load %arg15[%c0_79, %c0_80] : memref<2x86xf32, #tpu.memory_space<vmem>>, vector<1x86xf32>
    %193 = vector.broadcast %192 : vector<1x86xf32> to vector<8x86xf32>
    %194 = arith.mulf %191, %193 : vector<8x86xf32>
    %c1_81 = arith.constant 1 : index
    %c0_82 = arith.constant 0 : index
    %195 = vector.load %arg15[%c1_81, %c0_82] : memref<2x86xf32, #tpu.memory_space<vmem>>, vector<1x86xf32>
    %196 = vector.broadcast %195 : vector<1x86xf32> to vector<8x86xf32>
    %197 = arith.addf %194, %196 : vector<8x86xf32>
    %c0_83 = arith.constant 0 : index
    %c0_84 = arith.constant 0 : index
    %c0_85 = arith.constant 0 : index
    %198 = vector.load %arg16[%c0_83, %c0_84, %c0_85] : memref<1x8x86xf32, #tpu.memory_space<vmem>>, vector<1x8x86xf32>
    %199 = vector.shape_cast %198 : vector<1x8x86xf32> to vector<8x86xf32>
    %200 = vector.shape_cast %197 : vector<8x86xf32> to vector<1x8x86xf32>
    tpu.vector_store %arg16[%c0_83, %c0_84, %c0_85], %200 {strides = array<i32>} : memref<1x8x86xf32, #tpu.memory_space<vmem>>, vector<1x8x86xf32>,
    return
  }
  func.func @transform_0(%arg0: i32) -> (i32, i32, i32) {
    %c0_i32 = arith.constant 0 : i32
    %c0_i32_0 = arith.constant 0 : i32
    %c0_i32_1 = arith.constant 0 : i32
    return %arg0, %c0_i32, %c0_i32_0 : i32, i32, i32
  }
  func.func @transform_1(%arg0: i32) -> (i32, i32, i32) {
    %c0_i32 = arith.constant 0 : i32
    %c0_i32_0 = arith.constant 0 : i32
    %c0_i32_1 = arith.constant 0 : i32
    return %arg0, %c0_i32, %c0_i32_0 : i32, i32, i32
  }
  func.func @transform_2(%arg0: i32) -> (i32, i32, i32) {
    %c0_i32 = arith.constant 0 : i32
    %c0_i32_0 = arith.constant 0 : i32
    %c0_i32_1 = arith.constant 0 : i32
    return %arg0, %c0_i32, %c0_i32_0 : i32, i32, i32
  }
  func.func @transform_3(%arg0: i32) -> (i32, i32) {
    %c0_i32 = arith.constant 0 : i32
    %c0_i32_0 = arith.constant 0 : i32
    %c0_i32_1 = arith.constant 0 : i32
    return %c0_i32, %c0_i32_0 : i32, i32
  }
  func.func @transform_4(%arg0: i32) -> (i32, i32) {
    %c0_i32 = arith.constant 0 : i32
    %c0_i32_0 = arith.constant 0 : i32
    %c0_i32_1 = arith.constant 0 : i32
    return %c0_i32, %c0_i32_0 : i32, i32
  }
  func.func @transform_5(%arg0: i32) -> (i32, i32) {
    %c0_i32 = arith.constant 0 : i32
    %c0_i32_0 = arith.constant 0 : i32
    %c0_i32_1 = arith.constant 0 : i32
    return %c0_i32, %c0_i32_0 : i32, i32
  }
  func.func @transform_6(%arg0: i32) -> (i32, i32) {
    %c0_i32 = arith.constant 0 : i32
    %c0_i32_0 = arith.constant 0 : i32
    %c0_i32_1 = arith.constant 0 : i32
    return %c0_i32, %c0_i32_0 : i32, i32
  }
  func.func @transform_7(%arg0: i32) -> (i32, i32) {
    %c0_i32 = arith.constant 0 : i32
    %c0_i32_0 = arith.constant 0 : i32
    %c0_i32_1 = arith.constant 0 : i32
    return %c0_i32, %c0_i32_0 : i32, i32
  }
  func.func @transform_8(%arg0: i32) -> (i32, i32) {
    %c0_i32 = arith.constant 0 : i32
    %c0_i32_0 = arith.constant 0 : i32
    %c0_i32_1 = arith.constant 0 : i32
    return %c0_i32, %c0_i32_0 : i32, i32
  }
  func.func @transform_9(%arg0: i32) -> (i32, i32) {
    %c0_i32 = arith.constant 0 : i32
    %c0_i32_0 = arith.constant 0 : i32
    %c0_i32_1 = arith.constant 0 : i32
    return %c0_i32, %c0_i32_0 : i32, i32
  }
  func.func @transform_10(%arg0: i32) -> (i32, i32) {
    %c0_i32 = arith.constant 0 : i32
    %c0_i32_0 = arith.constant 0 : i32
    %c0_i32_1 = arith.constant 0 : i32
    return %c0_i32, %c0_i32_0 : i32, i32
  }
  func.func @transform_11(%arg0: i32) -> (i32, i32) {
    %c0_i32 = arith.constant 0 : i32
    %c0_i32_0 = arith.constant 0 : i32
    %c0_i32_1 = arith.constant 0 : i32
    return %c0_i32, %c0_i32_0 : i32, i32
  }
  func.func @transform_12(%arg0: i32) -> (i32, i32) {
    %c0_i32 = arith.constant 0 : i32
    %c0_i32_0 = arith.constant 0 : i32
    %c0_i32_1 = arith.constant 0 : i32
    return %c0_i32, %c0_i32_0 : i32, i32
  }
  func.func @transform_13(%arg0: i32) -> (i32, i32) {
    %c0_i32 = arith.constant 0 : i32
    %c0_i32_0 = arith.constant 0 : i32
    %c0_i32_1 = arith.constant 0 : i32
    return %c0_i32, %c0_i32_0 : i32, i32
  }
  func.func @transform_14(%arg0: i32) -> (i32, i32) {
    %c0_i32 = arith.constant 0 : i32
    %c0_i32_0 = arith.constant 0 : i32
    %c0_i32_1 = arith.constant 0 : i32
    return %c0_i32, %c0_i32_0 : i32, i32
  }
  func.func @transform_15(%arg0: i32) -> (i32, i32, i32) {
    %c0_i32 = arith.constant 0 : i32
    %c0_i32_0 = arith.constant 0 : i32
    %c0_i32_1 = arith.constant 0 : i32
    return %arg0, %c0_i32, %c0_i32_0 : i32, i32, i32
  }
}

module attributes {stable_mosaic.version = 11 : i64} {
  func.func @rnn_mlp_kernel(%arg0: memref<5x8x86xf32, #tpu.memory_space<vmem>>, %arg1: memref<86x192xf32, #tpu.memory_space<vmem>>, %arg2: memref<1x192xf32, #tpu.memory_space<vmem>>, %arg3: memref<2x32x96xf32, #tpu.memory_space<vmem>>, %arg4: memref<2x96xf32, #tpu.memory_space<vmem>>, %arg5: memref<64x192xf32, #tpu.memory_space<vmem>>, %arg6: memref<1x192xf32, #tpu.memory_space<vmem>>, %arg7: memref<2x32x96xf32, #tpu.memory_space<vmem>>, %arg8: memref<2x96xf32, #tpu.memory_space<vmem>>, %arg9: memref<6xf32, #tpu.memory_space<smem>>, %arg10: memref<2x64xf32, #tpu.memory_space<vmem>>, %arg11: memref<64x32xf32, #tpu.memory_space<vmem>>, %arg12: memref<3x32xf32, #tpu.memory_space<vmem>>, %arg13: memref<32x8xf32, #tpu.memory_space<vmem>>, %arg14: memref<3x8xf32, #tpu.memory_space<vmem>>, %arg15: memref<8x2xf32, #tpu.memory_space<vmem>>, %arg16: memref<1x2xf32, #tpu.memory_space<vmem>>, %arg17: memref<8x64xf32, #tpu.memory_space<vmem>>, %arg18: memref<8x2xf32, #tpu.memory_space<vmem>>) attributes {dimension_semantics = [], scalar_prefetch = 0 : i64, scratch_operands = 0 : i64, tpu.core_type = #tpu.core_type<tc>} {
    %c0 = arith.constant 0 : index
    %c0_0 = arith.constant 0 : index
    %c0_1 = arith.constant 0 : index
    %0 = vector.load %arg0[%c0, %c0_0, %c0_1] : memref<5x8x86xf32, #tpu.memory_space<vmem>>, vector<5x8x86xf32>
    %1 = vector.shape_cast %0 : vector<5x8x86xf32> to vector<40x86xf32>
    %c0_2 = arith.constant 0 : index
    %c0_3 = arith.constant 0 : index
    %2 = vector.load %arg1[%c0_2, %c0_3] : memref<86x192xf32, #tpu.memory_space<vmem>>, vector<86x192xf32>
    %cst = arith.constant dense<0.000000e+00> : vector<40x192xf32>
    %3 = tpu.matmul %1, %2, %cst {dimension_numbers = #tpu.dot_dimension_numbers<[1], [0], [0], [1], [0, 0, 1, 1], [], []>} : vector<40x86xf32>, vector<86x192xf32>, vector<40x192xf32> -> vector<40x192xf32>
    %c0_4 = arith.constant 0 : index
    %c0_5 = arith.constant 0 : index
    %4 = vector.load %arg2[%c0_4, %c0_5] : memref<1x192xf32, #tpu.memory_space<vmem>>, vector<1x192xf32>
    %5 = vector.broadcast %4 : vector<1x192xf32> to vector<40x192xf32>
    %6 = arith.addf %3, %5 : vector<40x192xf32>
    %c0_6 = arith.constant 0 : index
    %c0_7 = arith.constant 0 : index
    %c0_8 = arith.constant 0 : index
    %7 = vector.load %arg3[%c0_6, %c0_7, %c0_8] : memref<2x32x96xf32, #tpu.memory_space<vmem>>, vector<1x32x96xf32>
    %8 = vector.shape_cast %7 : vector<1x32x96xf32> to vector<32x96xf32>
    %c1 = arith.constant 1 : index
    %c0_9 = arith.constant 0 : index
    %c0_10 = arith.constant 0 : index
    %9 = vector.load %arg3[%c1, %c0_9, %c0_10] : memref<2x32x96xf32, #tpu.memory_space<vmem>>, vector<1x32x96xf32>
    %10 = vector.shape_cast %9 : vector<1x32x96xf32> to vector<32x96xf32>
    %c0_11 = arith.constant 0 : index
    %c0_12 = arith.constant 0 : index
    %11 = vector.load %arg4[%c0_11, %c0_12] : memref<2x96xf32, #tpu.memory_space<vmem>>, vector<1x96xf32>
    %c1_13 = arith.constant 1 : index
    %c0_14 = arith.constant 0 : index
    %12 = vector.load %arg4[%c1_13, %c0_14] : memref<2x96xf32, #tpu.memory_space<vmem>>, vector<1x96xf32>
    %cst_15 = arith.constant 0.000000e+00 : f32
    %13 = vector.broadcast %cst_15 : f32 to vector<8x32xf32>
    %14 = vector.extract_strided_slice %6 {offsets = [0, 0], sizes = [8, 96], strides = [1, 1]} : vector<40x192xf32> to vector<8x96xf32>
    %cst_16 = arith.constant dense<0.000000e+00> : vector<8x96xf32>
    %15 = tpu.matmul %13, %8, %cst_16 {dimension_numbers = #tpu.dot_dimension_numbers<[1], [0], [0], [1], [0, 0, 1, 1], [], []>} : vector<8x32xf32>, vector<32x96xf32>, vector<8x96xf32> -> vector<8x96xf32>
    %16 = vector.broadcast %11 : vector<1x96xf32> to vector<8x96xf32>
    %17 = arith.addf %15, %16 : vector<8x96xf32>
    %18 = vector.extract_strided_slice %14 {offsets = [0, 0], sizes = [8, 32], strides = [1, 1]} : vector<8x96xf32> to vector<8x32xf32>
    %19 = vector.extract_strided_slice %17 {offsets = [0, 0], sizes = [8, 32], strides = [1, 1]} : vector<8x96xf32> to vector<8x32xf32>
    %20 = arith.addf %18, %19 : vector<8x32xf32>
    %21 = arith.negf %20 : vector<8x32xf32>
    %22 = math.exp %21 : vector<8x32xf32>
    %cst_17 = arith.constant 1.000000e+00 : f32
    %23 = vector.broadcast %cst_17 : f32 to vector<8x32xf32>
    %24 = arith.addf %23, %22 : vector<8x32xf32>
    %25 = arith.divf %23, %24 : vector<8x32xf32>
    %26 = vector.extract_strided_slice %14 {offsets = [0, 32], sizes = [8, 32], strides = [1, 1]} : vector<8x96xf32> to vector<8x32xf32>
    %27 = vector.extract_strided_slice %17 {offsets = [0, 32], sizes = [8, 32], strides = [1, 1]} : vector<8x96xf32> to vector<8x32xf32>
    %28 = arith.addf %26, %27 : vector<8x32xf32>
    %29 = arith.negf %28 : vector<8x32xf32>
    %30 = math.exp %29 : vector<8x32xf32>
    %cst_18 = arith.constant 1.000000e+00 : f32
    %31 = vector.broadcast %cst_18 : f32 to vector<8x32xf32>
    %32 = arith.addf %31, %30 : vector<8x32xf32>
    %33 = arith.divf %31, %32 : vector<8x32xf32>
    %34 = vector.extract_strided_slice %14 {offsets = [0, 64], sizes = [8, 32], strides = [1, 1]} : vector<8x96xf32> to vector<8x32xf32>
    %35 = vector.extract_strided_slice %17 {offsets = [0, 64], sizes = [8, 32], strides = [1, 1]} : vector<8x96xf32> to vector<8x32xf32>
    %36 = arith.mulf %25, %35 : vector<8x32xf32>
    %37 = arith.addf %34, %36 : vector<8x32xf32>
    %38 = math.tanh %37 : vector<8x32xf32>
    %cst_19 = arith.constant 1.000000e+00 : f32
    %39 = vector.broadcast %cst_19 : f32 to vector<8x32xf32>
    %40 = arith.subf %39, %33 : vector<8x32xf32>
    %41 = arith.mulf %40, %38 : vector<8x32xf32>
    %42 = arith.mulf %33, %13 : vector<8x32xf32>
    %43 = arith.addf %41, %42 : vector<8x32xf32>
    %44 = vector.extract_strided_slice %6 {offsets = [8, 0], sizes = [8, 96], strides = [1, 1]} : vector<40x192xf32> to vector<8x96xf32>
    %cst_20 = arith.constant dense<0.000000e+00> : vector<8x96xf32>
    %45 = tpu.matmul %43, %8, %cst_20 {dimension_numbers = #tpu.dot_dimension_numbers<[1], [0], [0], [1], [0, 0, 1, 1], [], []>} : vector<8x32xf32>, vector<32x96xf32>, vector<8x96xf32> -> vector<8x96xf32>
    %46 = vector.broadcast %11 : vector<1x96xf32> to vector<8x96xf32>
    %47 = arith.addf %45, %46 : vector<8x96xf32>
    %48 = vector.extract_strided_slice %44 {offsets = [0, 0], sizes = [8, 32], strides = [1, 1]} : vector<8x96xf32> to vector<8x32xf32>
    %49 = vector.extract_strided_slice %47 {offsets = [0, 0], sizes = [8, 32], strides = [1, 1]} : vector<8x96xf32> to vector<8x32xf32>
    %50 = arith.addf %48, %49 : vector<8x32xf32>
    %51 = arith.negf %50 : vector<8x32xf32>
    %52 = math.exp %51 : vector<8x32xf32>
    %cst_21 = arith.constant 1.000000e+00 : f32
    %53 = vector.broadcast %cst_21 : f32 to vector<8x32xf32>
    %54 = arith.addf %53, %52 : vector<8x32xf32>
    %55 = arith.divf %53, %54 : vector<8x32xf32>
    %56 = vector.extract_strided_slice %44 {offsets = [0, 32], sizes = [8, 32], strides = [1, 1]} : vector<8x96xf32> to vector<8x32xf32>
    %57 = vector.extract_strided_slice %47 {offsets = [0, 32], sizes = [8, 32], strides = [1, 1]} : vector<8x96xf32> to vector<8x32xf32>
    %58 = arith.addf %56, %57 : vector<8x32xf32>
    %59 = arith.negf %58 : vector<8x32xf32>
    %60 = math.exp %59 : vector<8x32xf32>
    %cst_22 = arith.constant 1.000000e+00 : f32
    %61 = vector.broadcast %cst_22 : f32 to vector<8x32xf32>
    %62 = arith.addf %61, %60 : vector<8x32xf32>
    %63 = arith.divf %61, %62 : vector<8x32xf32>
    %64 = vector.extract_strided_slice %44 {offsets = [0, 64], sizes = [8, 32], strides = [1, 1]} : vector<8x96xf32> to vector<8x32xf32>
    %65 = vector.extract_strided_slice %47 {offsets = [0, 64], sizes = [8, 32], strides = [1, 1]} : vector<8x96xf32> to vector<8x32xf32>
    %66 = arith.mulf %55, %65 : vector<8x32xf32>
    %67 = arith.addf %64, %66 : vector<8x32xf32>
    %68 = math.tanh %67 : vector<8x32xf32>
    %cst_23 = arith.constant 1.000000e+00 : f32
    %69 = vector.broadcast %cst_23 : f32 to vector<8x32xf32>
    %70 = arith.subf %69, %63 : vector<8x32xf32>
    %71 = arith.mulf %70, %68 : vector<8x32xf32>
    %72 = arith.mulf %63, %43 : vector<8x32xf32>
    %73 = arith.addf %71, %72 : vector<8x32xf32>
    %74 = vector.extract_strided_slice %6 {offsets = [16, 0], sizes = [8, 96], strides = [1, 1]} : vector<40x192xf32> to vector<8x96xf32>
    %cst_24 = arith.constant dense<0.000000e+00> : vector<8x96xf32>
    %75 = tpu.matmul %73, %8, %cst_24 {dimension_numbers = #tpu.dot_dimension_numbers<[1], [0], [0], [1], [0, 0, 1, 1], [], []>} : vector<8x32xf32>, vector<32x96xf32>, vector<8x96xf32> -> vector<8x96xf32>
    %76 = vector.broadcast %11 : vector<1x96xf32> to vector<8x96xf32>
    %77 = arith.addf %75, %76 : vector<8x96xf32>
    %78 = vector.extract_strided_slice %74 {offsets = [0, 0], sizes = [8, 32], strides = [1, 1]} : vector<8x96xf32> to vector<8x32xf32>
    %79 = vector.extract_strided_slice %77 {offsets = [0, 0], sizes = [8, 32], strides = [1, 1]} : vector<8x96xf32> to vector<8x32xf32>
    %80 = arith.addf %78, %79 : vector<8x32xf32>
    %81 = arith.negf %80 : vector<8x32xf32>
    %82 = math.exp %81 : vector<8x32xf32>
    %cst_25 = arith.constant 1.000000e+00 : f32
    %83 = vector.broadcast %cst_25 : f32 to vector<8x32xf32>
    %84 = arith.addf %83, %82 : vector<8x32xf32>
    %85 = arith.divf %83, %84 : vector<8x32xf32>
    %86 = vector.extract_strided_slice %74 {offsets = [0, 32], sizes = [8, 32], strides = [1, 1]} : vector<8x96xf32> to vector<8x32xf32>
    %87 = vector.extract_strided_slice %77 {offsets = [0, 32], sizes = [8, 32], strides = [1, 1]} : vector<8x96xf32> to vector<8x32xf32>
    %88 = arith.addf %86, %87 : vector<8x32xf32>
    %89 = arith.negf %88 : vector<8x32xf32>
    %90 = math.exp %89 : vector<8x32xf32>
    %cst_26 = arith.constant 1.000000e+00 : f32
    %91 = vector.broadcast %cst_26 : f32 to vector<8x32xf32>
    %92 = arith.addf %91, %90 : vector<8x32xf32>
    %93 = arith.divf %91, %92 : vector<8x32xf32>
    %94 = vector.extract_strided_slice %74 {offsets = [0, 64], sizes = [8, 32], strides = [1, 1]} : vector<8x96xf32> to vector<8x32xf32>
    %95 = vector.extract_strided_slice %77 {offsets = [0, 64], sizes = [8, 32], strides = [1, 1]} : vector<8x96xf32> to vector<8x32xf32>
    %96 = arith.mulf %85, %95 : vector<8x32xf32>
    %97 = arith.addf %94, %96 : vector<8x32xf32>
    %98 = math.tanh %97 : vector<8x32xf32>
    %cst_27 = arith.constant 1.000000e+00 : f32
    %99 = vector.broadcast %cst_27 : f32 to vector<8x32xf32>
    %100 = arith.subf %99, %93 : vector<8x32xf32>
    %101 = arith.mulf %100, %98 : vector<8x32xf32>
    %102 = arith.mulf %93, %73 : vector<8x32xf32>
    %103 = arith.addf %101, %102 : vector<8x32xf32>
    %104 = vector.extract_strided_slice %6 {offsets = [24, 0], sizes = [8, 96], strides = [1, 1]} : vector<40x192xf32> to vector<8x96xf32>
    %cst_28 = arith.constant dense<0.000000e+00> : vector<8x96xf32>
    %105 = tpu.matmul %103, %8, %cst_28 {dimension_numbers = #tpu.dot_dimension_numbers<[1], [0], [0], [1], [0, 0, 1, 1], [], []>} : vector<8x32xf32>, vector<32x96xf32>, vector<8x96xf32> -> vector<8x96xf32>
    %106 = vector.broadcast %11 : vector<1x96xf32> to vector<8x96xf32>
    %107 = arith.addf %105, %106 : vector<8x96xf32>
    %108 = vector.extract_strided_slice %104 {offsets = [0, 0], sizes = [8, 32], strides = [1, 1]} : vector<8x96xf32> to vector<8x32xf32>
    %109 = vector.extract_strided_slice %107 {offsets = [0, 0], sizes = [8, 32], strides = [1, 1]} : vector<8x96xf32> to vector<8x32xf32>
    %110 = arith.addf %108, %109 : vector<8x32xf32>
    %111 = arith.negf %110 : vector<8x32xf32>
    %112 = math.exp %111 : vector<8x32xf32>
    %cst_29 = arith.constant 1.000000e+00 : f32
    %113 = vector.broadcast %cst_29 : f32 to vector<8x32xf32>
    %114 = arith.addf %113, %112 : vector<8x32xf32>
    %115 = arith.divf %113, %114 : vector<8x32xf32>
    %116 = vector.extract_strided_slice %104 {offsets = [0, 32], sizes = [8, 32], strides = [1, 1]} : vector<8x96xf32> to vector<8x32xf32>
    %117 = vector.extract_strided_slice %107 {offsets = [0, 32], sizes = [8, 32], strides = [1, 1]} : vector<8x96xf32> to vector<8x32xf32>
    %118 = arith.addf %116, %117 : vector<8x32xf32>
    %119 = arith.negf %118 : vector<8x32xf32>
    %120 = math.exp %119 : vector<8x32xf32>
    %cst_30 = arith.constant 1.000000e+00 : f32
    %121 = vector.broadcast %cst_30 : f32 to vector<8x32xf32>
    %122 = arith.addf %121, %120 : vector<8x32xf32>
    %123 = arith.divf %121, %122 : vector<8x32xf32>
    %124 = vector.extract_strided_slice %104 {offsets = [0, 64], sizes = [8, 32], strides = [1, 1]} : vector<8x96xf32> to vector<8x32xf32>
    %125 = vector.extract_strided_slice %107 {offsets = [0, 64], sizes = [8, 32], strides = [1, 1]} : vector<8x96xf32> to vector<8x32xf32>
    %126 = arith.mulf %115, %125 : vector<8x32xf32>
    %127 = arith.addf %124, %126 : vector<8x32xf32>
    %128 = math.tanh %127 : vector<8x32xf32>
    %cst_31 = arith.constant 1.000000e+00 : f32
    %129 = vector.broadcast %cst_31 : f32 to vector<8x32xf32>
    %130 = arith.subf %129, %123 : vector<8x32xf32>
    %131 = arith.mulf %130, %128 : vector<8x32xf32>
    %132 = arith.mulf %123, %103 : vector<8x32xf32>
    %133 = arith.addf %131, %132 : vector<8x32xf32>
    %134 = vector.extract_strided_slice %6 {offsets = [32, 0], sizes = [8, 96], strides = [1, 1]} : vector<40x192xf32> to vector<8x96xf32>
    %cst_32 = arith.constant dense<0.000000e+00> : vector<8x96xf32>
    %135 = tpu.matmul %133, %8, %cst_32 {dimension_numbers = #tpu.dot_dimension_numbers<[1], [0], [0], [1], [0, 0, 1, 1], [], []>} : vector<8x32xf32>, vector<32x96xf32>, vector<8x96xf32> -> vector<8x96xf32>
    %136 = vector.broadcast %11 : vector<1x96xf32> to vector<8x96xf32>
    %137 = arith.addf %135, %136 : vector<8x96xf32>
    %138 = vector.extract_strided_slice %134 {offsets = [0, 0], sizes = [8, 32], strides = [1, 1]} : vector<8x96xf32> to vector<8x32xf32>
    %139 = vector.extract_strided_slice %137 {offsets = [0, 0], sizes = [8, 32], strides = [1, 1]} : vector<8x96xf32> to vector<8x32xf32>
    %140 = arith.addf %138, %139 : vector<8x32xf32>
    %141 = arith.negf %140 : vector<8x32xf32>
    %142 = math.exp %141 : vector<8x32xf32>
    %cst_33 = arith.constant 1.000000e+00 : f32
    %143 = vector.broadcast %cst_33 : f32 to vector<8x32xf32>
    %144 = arith.addf %143, %142 : vector<8x32xf32>
    %145 = arith.divf %143, %144 : vector<8x32xf32>
    %146 = vector.extract_strided_slice %134 {offsets = [0, 32], sizes = [8, 32], strides = [1, 1]} : vector<8x96xf32> to vector<8x32xf32>
    %147 = vector.extract_strided_slice %137 {offsets = [0, 32], sizes = [8, 32], strides = [1, 1]} : vector<8x96xf32> to vector<8x32xf32>
    %148 = arith.addf %146, %147 : vector<8x32xf32>
    %149 = arith.negf %148 : vector<8x32xf32>
    %150 = math.exp %149 : vector<8x32xf32>
    %cst_34 = arith.constant 1.000000e+00 : f32
    %151 = vector.broadcast %cst_34 : f32 to vector<8x32xf32>
    %152 = arith.addf %151, %150 : vector<8x32xf32>
    %153 = arith.divf %151, %152 : vector<8x32xf32>
    %154 = vector.extract_strided_slice %134 {offsets = [0, 64], sizes = [8, 32], strides = [1, 1]} : vector<8x96xf32> to vector<8x32xf32>
    %155 = vector.extract_strided_slice %137 {offsets = [0, 64], sizes = [8, 32], strides = [1, 1]} : vector<8x96xf32> to vector<8x32xf32>
    %156 = arith.mulf %145, %155 : vector<8x32xf32>
    %157 = arith.addf %154, %156 : vector<8x32xf32>
    %158 = math.tanh %157 : vector<8x32xf32>
    %cst_35 = arith.constant 1.000000e+00 : f32
    %159 = vector.broadcast %cst_35 : f32 to vector<8x32xf32>
    %160 = arith.subf %159, %153 : vector<8x32xf32>
    %161 = arith.mulf %160, %158 : vector<8x32xf32>
    %162 = arith.mulf %153, %133 : vector<8x32xf32>
    %163 = arith.addf %161, %162 : vector<8x32xf32>
    %cst_36 = arith.constant 0.000000e+00 : f32
    %164 = vector.broadcast %cst_36 : f32 to vector<8x32xf32>
    %165 = vector.extract_strided_slice %6 {offsets = [32, 96], sizes = [8, 96], strides = [1, 1]} : vector<40x192xf32> to vector<8x96xf32>
    %cst_37 = arith.constant dense<0.000000e+00> : vector<8x96xf32>
    %166 = tpu.matmul %164, %10, %cst_37 {dimension_numbers = #tpu.dot_dimension_numbers<[1], [0], [0], [1], [0, 0, 1, 1], [], []>} : vector<8x32xf32>, vector<32x96xf32>, vector<8x96xf32> -> vector<8x96xf32>
    %167 = vector.broadcast %12 : vector<1x96xf32> to vector<8x96xf32>
    %168 = arith.addf %166, %167 : vector<8x96xf32>
    %169 = vector.extract_strided_slice %165 {offsets = [0, 0], sizes = [8, 32], strides = [1, 1]} : vector<8x96xf32> to vector<8x32xf32>
    %170 = vector.extract_strided_slice %168 {offsets = [0, 0], sizes = [8, 32], strides = [1, 1]} : vector<8x96xf32> to vector<8x32xf32>
    %171 = arith.addf %169, %170 : vector<8x32xf32>
    %172 = arith.negf %171 : vector<8x32xf32>
    %173 = math.exp %172 : vector<8x32xf32>
    %cst_38 = arith.constant 1.000000e+00 : f32
    %174 = vector.broadcast %cst_38 : f32 to vector<8x32xf32>
    %175 = arith.addf %174, %173 : vector<8x32xf32>
    %176 = arith.divf %174, %175 : vector<8x32xf32>
    %177 = vector.extract_strided_slice %165 {offsets = [0, 32], sizes = [8, 32], strides = [1, 1]} : vector<8x96xf32> to vector<8x32xf32>
    %178 = vector.extract_strided_slice %168 {offsets = [0, 32], sizes = [8, 32], strides = [1, 1]} : vector<8x96xf32> to vector<8x32xf32>
    %179 = arith.addf %177, %178 : vector<8x32xf32>
    %180 = arith.negf %179 : vector<8x32xf32>
    %181 = math.exp %180 : vector<8x32xf32>
    %cst_39 = arith.constant 1.000000e+00 : f32
    %182 = vector.broadcast %cst_39 : f32 to vector<8x32xf32>
    %183 = arith.addf %182, %181 : vector<8x32xf32>
    %184 = arith.divf %182, %183 : vector<8x32xf32>
    %185 = vector.extract_strided_slice %165 {offsets = [0, 64], sizes = [8, 32], strides = [1, 1]} : vector<8x96xf32> to vector<8x32xf32>
    %186 = vector.extract_strided_slice %168 {offsets = [0, 64], sizes = [8, 32], strides = [1, 1]} : vector<8x96xf32> to vector<8x32xf32>
    %187 = arith.mulf %176, %186 : vector<8x32xf32>
    %188 = arith.addf %185, %187 : vector<8x32xf32>
    %189 = math.tanh %188 : vector<8x32xf32>
    %cst_40 = arith.constant 1.000000e+00 : f32
    %190 = vector.broadcast %cst_40 : f32 to vector<8x32xf32>
    %191 = arith.subf %190, %184 : vector<8x32xf32>
    %192 = arith.mulf %191, %189 : vector<8x32xf32>
    %193 = arith.mulf %184, %164 : vector<8x32xf32>
    %194 = arith.addf %192, %193 : vector<8x32xf32>
    %195 = vector.extract_strided_slice %6 {offsets = [24, 96], sizes = [8, 96], strides = [1, 1]} : vector<40x192xf32> to vector<8x96xf32>
    %cst_41 = arith.constant dense<0.000000e+00> : vector<8x96xf32>
    %196 = tpu.matmul %194, %10, %cst_41 {dimension_numbers = #tpu.dot_dimension_numbers<[1], [0], [0], [1], [0, 0, 1, 1], [], []>} : vector<8x32xf32>, vector<32x96xf32>, vector<8x96xf32> -> vector<8x96xf32>
    %197 = vector.broadcast %12 : vector<1x96xf32> to vector<8x96xf32>
    %198 = arith.addf %196, %197 : vector<8x96xf32>
    %199 = vector.extract_strided_slice %195 {offsets = [0, 0], sizes = [8, 32], strides = [1, 1]} : vector<8x96xf32> to vector<8x32xf32>
    %200 = vector.extract_strided_slice %198 {offsets = [0, 0], sizes = [8, 32], strides = [1, 1]} : vector<8x96xf32> to vector<8x32xf32>
    %201 = arith.addf %199, %200 : vector<8x32xf32>
    %202 = arith.negf %201 : vector<8x32xf32>
    %203 = math.exp %202 : vector<8x32xf32>
    %cst_42 = arith.constant 1.000000e+00 : f32
    %204 = vector.broadcast %cst_42 : f32 to vector<8x32xf32>
    %205 = arith.addf %204, %203 : vector<8x32xf32>
    %206 = arith.divf %204, %205 : vector<8x32xf32>
    %207 = vector.extract_strided_slice %195 {offsets = [0, 32], sizes = [8, 32], strides = [1, 1]} : vector<8x96xf32> to vector<8x32xf32>
    %208 = vector.extract_strided_slice %198 {offsets = [0, 32], sizes = [8, 32], strides = [1, 1]} : vector<8x96xf32> to vector<8x32xf32>
    %209 = arith.addf %207, %208 : vector<8x32xf32>
    %210 = arith.negf %209 : vector<8x32xf32>
    %211 = math.exp %210 : vector<8x32xf32>
    %cst_43 = arith.constant 1.000000e+00 : f32
    %212 = vector.broadcast %cst_43 : f32 to vector<8x32xf32>
    %213 = arith.addf %212, %211 : vector<8x32xf32>
    %214 = arith.divf %212, %213 : vector<8x32xf32>
    %215 = vector.extract_strided_slice %195 {offsets = [0, 64], sizes = [8, 32], strides = [1, 1]} : vector<8x96xf32> to vector<8x32xf32>
    %216 = vector.extract_strided_slice %198 {offsets = [0, 64], sizes = [8, 32], strides = [1, 1]} : vector<8x96xf32> to vector<8x32xf32>
    %217 = arith.mulf %206, %216 : vector<8x32xf32>
    %218 = arith.addf %215, %217 : vector<8x32xf32>
    %219 = math.tanh %218 : vector<8x32xf32>
    %cst_44 = arith.constant 1.000000e+00 : f32
    %220 = vector.broadcast %cst_44 : f32 to vector<8x32xf32>
    %221 = arith.subf %220, %214 : vector<8x32xf32>
    %222 = arith.mulf %221, %219 : vector<8x32xf32>
    %223 = arith.mulf %214, %194 : vector<8x32xf32>
    %224 = arith.addf %222, %223 : vector<8x32xf32>
    %225 = vector.extract_strided_slice %6 {offsets = [16, 96], sizes = [8, 96], strides = [1, 1]} : vector<40x192xf32> to vector<8x96xf32>
    %cst_45 = arith.constant dense<0.000000e+00> : vector<8x96xf32>
    %226 = tpu.matmul %224, %10, %cst_45 {dimension_numbers = #tpu.dot_dimension_numbers<[1], [0], [0], [1], [0, 0, 1, 1], [], []>} : vector<8x32xf32>, vector<32x96xf32>, vector<8x96xf32> -> vector<8x96xf32>
    %227 = vector.broadcast %12 : vector<1x96xf32> to vector<8x96xf32>
    %228 = arith.addf %226, %227 : vector<8x96xf32>
    %229 = vector.extract_strided_slice %225 {offsets = [0, 0], sizes = [8, 32], strides = [1, 1]} : vector<8x96xf32> to vector<8x32xf32>
    %230 = vector.extract_strided_slice %228 {offsets = [0, 0], sizes = [8, 32], strides = [1, 1]} : vector<8x96xf32> to vector<8x32xf32>
    %231 = arith.addf %229, %230 : vector<8x32xf32>
    %232 = arith.negf %231 : vector<8x32xf32>
    %233 = math.exp %232 : vector<8x32xf32>
    %cst_46 = arith.constant 1.000000e+00 : f32
    %234 = vector.broadcast %cst_46 : f32 to vector<8x32xf32>
    %235 = arith.addf %234, %233 : vector<8x32xf32>
    %236 = arith.divf %234, %235 : vector<8x32xf32>
    %237 = vector.extract_strided_slice %225 {offsets = [0, 32], sizes = [8, 32], strides = [1, 1]} : vector<8x96xf32> to vector<8x32xf32>
    %238 = vector.extract_strided_slice %228 {offsets = [0, 32], sizes = [8, 32], strides = [1, 1]} : vector<8x96xf32> to vector<8x32xf32>
    %239 = arith.addf %237, %238 : vector<8x32xf32>
    %240 = arith.negf %239 : vector<8x32xf32>
    %241 = math.exp %240 : vector<8x32xf32>
    %cst_47 = arith.constant 1.000000e+00 : f32
    %242 = vector.broadcast %cst_47 : f32 to vector<8x32xf32>
    %243 = arith.addf %242, %241 : vector<8x32xf32>
    %244 = arith.divf %242, %243 : vector<8x32xf32>
    %245 = vector.extract_strided_slice %225 {offsets = [0, 64], sizes = [8, 32], strides = [1, 1]} : vector<8x96xf32> to vector<8x32xf32>
    %246 = vector.extract_strided_slice %228 {offsets = [0, 64], sizes = [8, 32], strides = [1, 1]} : vector<8x96xf32> to vector<8x32xf32>
    %247 = arith.mulf %236, %246 : vector<8x32xf32>
    %248 = arith.addf %245, %247 : vector<8x32xf32>
    %249 = math.tanh %248 : vector<8x32xf32>
    %cst_48 = arith.constant 1.000000e+00 : f32
    %250 = vector.broadcast %cst_48 : f32 to vector<8x32xf32>
    %251 = arith.subf %250, %244 : vector<8x32xf32>
    %252 = arith.mulf %251, %249 : vector<8x32xf32>
    %253 = arith.mulf %244, %224 : vector<8x32xf32>
    %254 = arith.addf %252, %253 : vector<8x32xf32>
    %255 = vector.extract_strided_slice %6 {offsets = [8, 96], sizes = [8, 96], strides = [1, 1]} : vector<40x192xf32> to vector<8x96xf32>
    %cst_49 = arith.constant dense<0.000000e+00> : vector<8x96xf32>
    %256 = tpu.matmul %254, %10, %cst_49 {dimension_numbers = #tpu.dot_dimension_numbers<[1], [0], [0], [1], [0, 0, 1, 1], [], []>} : vector<8x32xf32>, vector<32x96xf32>, vector<8x96xf32> -> vector<8x96xf32>
    %257 = vector.broadcast %12 : vector<1x96xf32> to vector<8x96xf32>
    %258 = arith.addf %256, %257 : vector<8x96xf32>
    %259 = vector.extract_strided_slice %255 {offsets = [0, 0], sizes = [8, 32], strides = [1, 1]} : vector<8x96xf32> to vector<8x32xf32>
    %260 = vector.extract_strided_slice %258 {offsets = [0, 0], sizes = [8, 32], strides = [1, 1]} : vector<8x96xf32> to vector<8x32xf32>
    %261 = arith.addf %259, %260 : vector<8x32xf32>
    %262 = arith.negf %261 : vector<8x32xf32>
    %263 = math.exp %262 : vector<8x32xf32>
    %cst_50 = arith.constant 1.000000e+00 : f32
    %264 = vector.broadcast %cst_50 : f32 to vector<8x32xf32>
    %265 = arith.addf %264, %263 : vector<8x32xf32>
    %266 = arith.divf %264, %265 : vector<8x32xf32>
    %267 = vector.extract_strided_slice %255 {offsets = [0, 32], sizes = [8, 32], strides = [1, 1]} : vector<8x96xf32> to vector<8x32xf32>
    %268 = vector.extract_strided_slice %258 {offsets = [0, 32], sizes = [8, 32], strides = [1, 1]} : vector<8x96xf32> to vector<8x32xf32>
    %269 = arith.addf %267, %268 : vector<8x32xf32>
    %270 = arith.negf %269 : vector<8x32xf32>
    %271 = math.exp %270 : vector<8x32xf32>
    %cst_51 = arith.constant 1.000000e+00 : f32
    %272 = vector.broadcast %cst_51 : f32 to vector<8x32xf32>
    %273 = arith.addf %272, %271 : vector<8x32xf32>
    %274 = arith.divf %272, %273 : vector<8x32xf32>
    %275 = vector.extract_strided_slice %255 {offsets = [0, 64], sizes = [8, 32], strides = [1, 1]} : vector<8x96xf32> to vector<8x32xf32>
    %276 = vector.extract_strided_slice %258 {offsets = [0, 64], sizes = [8, 32], strides = [1, 1]} : vector<8x96xf32> to vector<8x32xf32>
    %277 = arith.mulf %266, %276 : vector<8x32xf32>
    %278 = arith.addf %275, %277 : vector<8x32xf32>
    %279 = math.tanh %278 : vector<8x32xf32>
    %cst_52 = arith.constant 1.000000e+00 : f32
    %280 = vector.broadcast %cst_52 : f32 to vector<8x32xf32>
    %281 = arith.subf %280, %274 : vector<8x32xf32>
    %282 = arith.mulf %281, %279 : vector<8x32xf32>
    %283 = arith.mulf %274, %254 : vector<8x32xf32>
    %284 = arith.addf %282, %283 : vector<8x32xf32>
    %285 = vector.extract_strided_slice %6 {offsets = [0, 96], sizes = [8, 96], strides = [1, 1]} : vector<40x192xf32> to vector<8x96xf32>
    %cst_53 = arith.constant dense<0.000000e+00> : vector<8x96xf32>
    %286 = tpu.matmul %284, %10, %cst_53 {dimension_numbers = #tpu.dot_dimension_numbers<[1], [0], [0], [1], [0, 0, 1, 1], [], []>} : vector<8x32xf32>, vector<32x96xf32>, vector<8x96xf32> -> vector<8x96xf32>
    %287 = vector.broadcast %12 : vector<1x96xf32> to vector<8x96xf32>
    %288 = arith.addf %286, %287 : vector<8x96xf32>
    %289 = vector.extract_strided_slice %285 {offsets = [0, 0], sizes = [8, 32], strides = [1, 1]} : vector<8x96xf32> to vector<8x32xf32>
    %290 = vector.extract_strided_slice %288 {offsets = [0, 0], sizes = [8, 32], strides = [1, 1]} : vector<8x96xf32> to vector<8x32xf32>
    %291 = arith.addf %289, %290 : vector<8x32xf32>
    %292 = arith.negf %291 : vector<8x32xf32>
    %293 = math.exp %292 : vector<8x32xf32>
    %cst_54 = arith.constant 1.000000e+00 : f32
    %294 = vector.broadcast %cst_54 : f32 to vector<8x32xf32>
    %295 = arith.addf %294, %293 : vector<8x32xf32>
    %296 = arith.divf %294, %295 : vector<8x32xf32>
    %297 = vector.extract_strided_slice %285 {offsets = [0, 32], sizes = [8, 32], strides = [1, 1]} : vector<8x96xf32> to vector<8x32xf32>
    %298 = vector.extract_strided_slice %288 {offsets = [0, 32], sizes = [8, 32], strides = [1, 1]} : vector<8x96xf32> to vector<8x32xf32>
    %299 = arith.addf %297, %298 : vector<8x32xf32>
    %300 = arith.negf %299 : vector<8x32xf32>
    %301 = math.exp %300 : vector<8x32xf32>
    %cst_55 = arith.constant 1.000000e+00 : f32
    %302 = vector.broadcast %cst_55 : f32 to vector<8x32xf32>
    %303 = arith.addf %302, %301 : vector<8x32xf32>
    %304 = arith.divf %302, %303 : vector<8x32xf32>
    %305 = vector.extract_strided_slice %285 {offsets = [0, 64], sizes = [8, 32], strides = [1, 1]} : vector<8x96xf32> to vector<8x32xf32>
    %306 = vector.extract_strided_slice %288 {offsets = [0, 64], sizes = [8, 32], strides = [1, 1]} : vector<8x96xf32> to vector<8x32xf32>
    %307 = arith.mulf %296, %306 : vector<8x32xf32>
    %308 = arith.addf %305, %307 : vector<8x32xf32>
    %309 = math.tanh %308 : vector<8x32xf32>
    %cst_56 = arith.constant 1.000000e+00 : f32
    %310 = vector.broadcast %cst_56 : f32 to vector<8x32xf32>
    %311 = arith.subf %310, %304 : vector<8x32xf32>
    %312 = arith.mulf %311, %309 : vector<8x32xf32>
    %313 = arith.mulf %304, %284 : vector<8x32xf32>
    %314 = arith.addf %312, %313 : vector<8x32xf32>
    %315 = tpu.concatenate %43, %314 in 1 : vector<8x32xf32>, vector<8x32xf32> -> vector<8x64xf32>
    %316 = tpu.concatenate %73, %284 in 1 : vector<8x32xf32>, vector<8x32xf32> -> vector<8x64xf32>
    %317 = tpu.concatenate %103, %254 in 1 : vector<8x32xf32>, vector<8x32xf32> -> vector<8x64xf32>
    %318 = tpu.concatenate %133, %224 in 1 : vector<8x32xf32>, vector<8x32xf32> -> vector<8x64xf32>
    %319 = tpu.concatenate %163, %194 in 1 : vector<8x32xf32>, vector<8x32xf32> -> vector<8x64xf32>
    %320 = tpu.concatenate %315, %316, %317, %318, %319 in 0 : vector<8x64xf32>, vector<8x64xf32>, vector<8x64xf32>, vector<8x64xf32>, vector<8x64xf32> -> vector<40x64xf32>
    %c0_57 = arith.constant 0 : index
    %c0_58 = arith.constant 0 : index
    %321 = vector.load %arg5[%c0_57, %c0_58] : memref<64x192xf32, #tpu.memory_space<vmem>>, vector<64x192xf32>
    %cst_59 = arith.constant dense<0.000000e+00> : vector<40x192xf32>
    %322 = tpu.matmul %320, %321, %cst_59 {dimension_numbers = #tpu.dot_dimension_numbers<[1], [0], [0], [1], [0, 0, 1, 1], [], []>} : vector<40x64xf32>, vector<64x192xf32>, vector<40x192xf32> -> vector<40x192xf32>
    %c0_60 = arith.constant 0 : index
    %c0_61 = arith.constant 0 : index
    %323 = vector.load %arg6[%c0_60, %c0_61] : memref<1x192xf32, #tpu.memory_space<vmem>>, vector<1x192xf32>
    %324 = vector.broadcast %323 : vector<1x192xf32> to vector<40x192xf32>
    %325 = arith.addf %322, %324 : vector<40x192xf32>
    %c0_62 = arith.constant 0 : index
    %c0_63 = arith.constant 0 : index
    %c0_64 = arith.constant 0 : index
    %326 = vector.load %arg7[%c0_62, %c0_63, %c0_64] : memref<2x32x96xf32, #tpu.memory_space<vmem>>, vector<1x32x96xf32>
    %327 = vector.shape_cast %326 : vector<1x32x96xf32> to vector<32x96xf32>
    %c1_65 = arith.constant 1 : index
    %c0_66 = arith.constant 0 : index
    %c0_67 = arith.constant 0 : index
    %328 = vector.load %arg7[%c1_65, %c0_66, %c0_67] : memref<2x32x96xf32, #tpu.memory_space<vmem>>, vector<1x32x96xf32>
    %329 = vector.shape_cast %328 : vector<1x32x96xf32> to vector<32x96xf32>
    %c0_68 = arith.constant 0 : index
    %c0_69 = arith.constant 0 : index
    %330 = vector.load %arg8[%c0_68, %c0_69] : memref<2x96xf32, #tpu.memory_space<vmem>>, vector<1x96xf32>
    %c1_70 = arith.constant 1 : index
    %c0_71 = arith.constant 0 : index
    %331 = vector.load %arg8[%c1_70, %c0_71] : memref<2x96xf32, #tpu.memory_space<vmem>>, vector<1x96xf32>
    %cst_72 = arith.constant 0.000000e+00 : f32
    %332 = vector.broadcast %cst_72 : f32 to vector<8x32xf32>
    %333 = vector.extract_strided_slice %325 {offsets = [0, 0], sizes = [8, 96], strides = [1, 1]} : vector<40x192xf32> to vector<8x96xf32>
    %cst_73 = arith.constant dense<0.000000e+00> : vector<8x96xf32>
    %334 = tpu.matmul %332, %327, %cst_73 {dimension_numbers = #tpu.dot_dimension_numbers<[1], [0], [0], [1], [0, 0, 1, 1], [], []>} : vector<8x32xf32>, vector<32x96xf32>, vector<8x96xf32> -> vector<8x96xf32>
    %335 = vector.broadcast %330 : vector<1x96xf32> to vector<8x96xf32>
    %336 = arith.addf %334, %335 : vector<8x96xf32>
    %337 = vector.extract_strided_slice %333 {offsets = [0, 0], sizes = [8, 32], strides = [1, 1]} : vector<8x96xf32> to vector<8x32xf32>
    %338 = vector.extract_strided_slice %336 {offsets = [0, 0], sizes = [8, 32], strides = [1, 1]} : vector<8x96xf32> to vector<8x32xf32>
    %339 = arith.addf %337, %338 : vector<8x32xf32>
    %340 = arith.negf %339 : vector<8x32xf32>
    %341 = math.exp %340 : vector<8x32xf32>
    %cst_74 = arith.constant 1.000000e+00 : f32
    %342 = vector.broadcast %cst_74 : f32 to vector<8x32xf32>
    %343 = arith.addf %342, %341 : vector<8x32xf32>
    %344 = arith.divf %342, %343 : vector<8x32xf32>
    %345 = vector.extract_strided_slice %333 {offsets = [0, 32], sizes = [8, 32], strides = [1, 1]} : vector<8x96xf32> to vector<8x32xf32>
    %346 = vector.extract_strided_slice %336 {offsets = [0, 32], sizes = [8, 32], strides = [1, 1]} : vector<8x96xf32> to vector<8x32xf32>
    %347 = arith.addf %345, %346 : vector<8x32xf32>
    %348 = arith.negf %347 : vector<8x32xf32>
    %349 = math.exp %348 : vector<8x32xf32>
    %cst_75 = arith.constant 1.000000e+00 : f32
    %350 = vector.broadcast %cst_75 : f32 to vector<8x32xf32>
    %351 = arith.addf %350, %349 : vector<8x32xf32>
    %352 = arith.divf %350, %351 : vector<8x32xf32>
    %353 = vector.extract_strided_slice %333 {offsets = [0, 64], sizes = [8, 32], strides = [1, 1]} : vector<8x96xf32> to vector<8x32xf32>
    %354 = vector.extract_strided_slice %336 {offsets = [0, 64], sizes = [8, 32], strides = [1, 1]} : vector<8x96xf32> to vector<8x32xf32>
    %355 = arith.mulf %344, %354 : vector<8x32xf32>
    %356 = arith.addf %353, %355 : vector<8x32xf32>
    %357 = math.tanh %356 : vector<8x32xf32>
    %cst_76 = arith.constant 1.000000e+00 : f32
    %358 = vector.broadcast %cst_76 : f32 to vector<8x32xf32>
    %359 = arith.subf %358, %352 : vector<8x32xf32>
    %360 = arith.mulf %359, %357 : vector<8x32xf32>
    %361 = arith.mulf %352, %332 : vector<8x32xf32>
    %362 = arith.addf %360, %361 : vector<8x32xf32>
    %363 = vector.extract_strided_slice %325 {offsets = [8, 0], sizes = [8, 96], strides = [1, 1]} : vector<40x192xf32> to vector<8x96xf32>
    %cst_77 = arith.constant dense<0.000000e+00> : vector<8x96xf32>
    %364 = tpu.matmul %362, %327, %cst_77 {dimension_numbers = #tpu.dot_dimension_numbers<[1], [0], [0], [1], [0, 0, 1, 1], [], []>} : vector<8x32xf32>, vector<32x96xf32>, vector<8x96xf32> -> vector<8x96xf32>
    %365 = vector.broadcast %330 : vector<1x96xf32> to vector<8x96xf32>
    %366 = arith.addf %364, %365 : vector<8x96xf32>
    %367 = vector.extract_strided_slice %363 {offsets = [0, 0], sizes = [8, 32], strides = [1, 1]} : vector<8x96xf32> to vector<8x32xf32>
    %368 = vector.extract_strided_slice %366 {offsets = [0, 0], sizes = [8, 32], strides = [1, 1]} : vector<8x96xf32> to vector<8x32xf32>
    %369 = arith.addf %367, %368 : vector<8x32xf32>
    %370 = arith.negf %369 : vector<8x32xf32>
    %371 = math.exp %370 : vector<8x32xf32>
    %cst_78 = arith.constant 1.000000e+00 : f32
    %372 = vector.broadcast %cst_78 : f32 to vector<8x32xf32>
    %373 = arith.addf %372, %371 : vector<8x32xf32>
    %374 = arith.divf %372, %373 : vector<8x32xf32>
    %375 = vector.extract_strided_slice %363 {offsets = [0, 32], sizes = [8, 32], strides = [1, 1]} : vector<8x96xf32> to vector<8x32xf32>
    %376 = vector.extract_strided_slice %366 {offsets = [0, 32], sizes = [8, 32], strides = [1, 1]} : vector<8x96xf32> to vector<8x32xf32>
    %377 = arith.addf %375, %376 : vector<8x32xf32>
    %378 = arith.negf %377 : vector<8x32xf32>
    %379 = math.exp %378 : vector<8x32xf32>
    %cst_79 = arith.constant 1.000000e+00 : f32
    %380 = vector.broadcast %cst_79 : f32 to vector<8x32xf32>
    %381 = arith.addf %380, %379 : vector<8x32xf32>
    %382 = arith.divf %380, %381 : vector<8x32xf32>
    %383 = vector.extract_strided_slice %363 {offsets = [0, 64], sizes = [8, 32], strides = [1, 1]} : vector<8x96xf32> to vector<8x32xf32>
    %384 = vector.extract_strided_slice %366 {offsets = [0, 64], sizes = [8, 32], strides = [1, 1]} : vector<8x96xf32> to vector<8x32xf32>
    %385 = arith.mulf %374, %384 : vector<8x32xf32>
    %386 = arith.addf %383, %385 : vector<8x32xf32>
    %387 = math.tanh %386 : vector<8x32xf32>
    %cst_80 = arith.constant 1.000000e+00 : f32
    %388 = vector.broadcast %cst_80 : f32 to vector<8x32xf32>
    %389 = arith.subf %388, %382 : vector<8x32xf32>
    %390 = arith.mulf %389, %387 : vector<8x32xf32>
    %391 = arith.mulf %382, %362 : vector<8x32xf32>
    %392 = arith.addf %390, %391 : vector<8x32xf32>
    %393 = vector.extract_strided_slice %325 {offsets = [16, 0], sizes = [8, 96], strides = [1, 1]} : vector<40x192xf32> to vector<8x96xf32>
    %cst_81 = arith.constant dense<0.000000e+00> : vector<8x96xf32>
    %394 = tpu.matmul %392, %327, %cst_81 {dimension_numbers = #tpu.dot_dimension_numbers<[1], [0], [0], [1], [0, 0, 1, 1], [], []>} : vector<8x32xf32>, vector<32x96xf32>, vector<8x96xf32> -> vector<8x96xf32>
    %395 = vector.broadcast %330 : vector<1x96xf32> to vector<8x96xf32>
    %396 = arith.addf %394, %395 : vector<8x96xf32>
    %397 = vector.extract_strided_slice %393 {offsets = [0, 0], sizes = [8, 32], strides = [1, 1]} : vector<8x96xf32> to vector<8x32xf32>
    %398 = vector.extract_strided_slice %396 {offsets = [0, 0], sizes = [8, 32], strides = [1, 1]} : vector<8x96xf32> to vector<8x32xf32>
    %399 = arith.addf %397, %398 : vector<8x32xf32>
    %400 = arith.negf %399 : vector<8x32xf32>
    %401 = math.exp %400 : vector<8x32xf32>
    %cst_82 = arith.constant 1.000000e+00 : f32
    %402 = vector.broadcast %cst_82 : f32 to vector<8x32xf32>
    %403 = arith.addf %402, %401 : vector<8x32xf32>
    %404 = arith.divf %402, %403 : vector<8x32xf32>
    %405 = vector.extract_strided_slice %393 {offsets = [0, 32], sizes = [8, 32], strides = [1, 1]} : vector<8x96xf32> to vector<8x32xf32>
    %406 = vector.extract_strided_slice %396 {offsets = [0, 32], sizes = [8, 32], strides = [1, 1]} : vector<8x96xf32> to vector<8x32xf32>
    %407 = arith.addf %405, %406 : vector<8x32xf32>
    %408 = arith.negf %407 : vector<8x32xf32>
    %409 = math.exp %408 : vector<8x32xf32>
    %cst_83 = arith.constant 1.000000e+00 : f32
    %410 = vector.broadcast %cst_83 : f32 to vector<8x32xf32>
    %411 = arith.addf %410, %409 : vector<8x32xf32>
    %412 = arith.divf %410, %411 : vector<8x32xf32>
    %413 = vector.extract_strided_slice %393 {offsets = [0, 64], sizes = [8, 32], strides = [1, 1]} : vector<8x96xf32> to vector<8x32xf32>
    %414 = vector.extract_strided_slice %396 {offsets = [0, 64], sizes = [8, 32], strides = [1, 1]} : vector<8x96xf32> to vector<8x32xf32>
    %415 = arith.mulf %404, %414 : vector<8x32xf32>
    %416 = arith.addf %413, %415 : vector<8x32xf32>
    %417 = math.tanh %416 : vector<8x32xf32>
    %cst_84 = arith.constant 1.000000e+00 : f32
    %418 = vector.broadcast %cst_84 : f32 to vector<8x32xf32>
    %419 = arith.subf %418, %412 : vector<8x32xf32>
    %420 = arith.mulf %419, %417 : vector<8x32xf32>
    %421 = arith.mulf %412, %392 : vector<8x32xf32>
    %422 = arith.addf %420, %421 : vector<8x32xf32>
    %423 = vector.extract_strided_slice %325 {offsets = [24, 0], sizes = [8, 96], strides = [1, 1]} : vector<40x192xf32> to vector<8x96xf32>
    %cst_85 = arith.constant dense<0.000000e+00> : vector<8x96xf32>
    %424 = tpu.matmul %422, %327, %cst_85 {dimension_numbers = #tpu.dot_dimension_numbers<[1], [0], [0], [1], [0, 0, 1, 1], [], []>} : vector<8x32xf32>, vector<32x96xf32>, vector<8x96xf32> -> vector<8x96xf32>
    %425 = vector.broadcast %330 : vector<1x96xf32> to vector<8x96xf32>
    %426 = arith.addf %424, %425 : vector<8x96xf32>
    %427 = vector.extract_strided_slice %423 {offsets = [0, 0], sizes = [8, 32], strides = [1, 1]} : vector<8x96xf32> to vector<8x32xf32>
    %428 = vector.extract_strided_slice %426 {offsets = [0, 0], sizes = [8, 32], strides = [1, 1]} : vector<8x96xf32> to vector<8x32xf32>
    %429 = arith.addf %427, %428 : vector<8x32xf32>
    %430 = arith.negf %429 : vector<8x32xf32>
    %431 = math.exp %430 : vector<8x32xf32>
    %cst_86 = arith.constant 1.000000e+00 : f32
    %432 = vector.broadcast %cst_86 : f32 to vector<8x32xf32>
    %433 = arith.addf %432, %431 : vector<8x32xf32>
    %434 = arith.divf %432, %433 : vector<8x32xf32>
    %435 = vector.extract_strided_slice %423 {offsets = [0, 32], sizes = [8, 32], strides = [1, 1]} : vector<8x96xf32> to vector<8x32xf32>
    %436 = vector.extract_strided_slice %426 {offsets = [0, 32], sizes = [8, 32], strides = [1, 1]} : vector<8x96xf32> to vector<8x32xf32>
    %437 = arith.addf %435, %436 : vector<8x32xf32>
    %438 = arith.negf %437 : vector<8x32xf32>
    %439 = math.exp %438 : vector<8x32xf32>
    %cst_87 = arith.constant 1.000000e+00 : f32
    %440 = vector.broadcast %cst_87 : f32 to vector<8x32xf32>
    %441 = arith.addf %440, %439 : vector<8x32xf32>
    %442 = arith.divf %440, %441 : vector<8x32xf32>
    %443 = vector.extract_strided_slice %423 {offsets = [0, 64], sizes = [8, 32], strides = [1, 1]} : vector<8x96xf32> to vector<8x32xf32>
    %444 = vector.extract_strided_slice %426 {offsets = [0, 64], sizes = [8, 32], strides = [1, 1]} : vector<8x96xf32> to vector<8x32xf32>
    %445 = arith.mulf %434, %444 : vector<8x32xf32>
    %446 = arith.addf %443, %445 : vector<8x32xf32>
    %447 = math.tanh %446 : vector<8x32xf32>
    %cst_88 = arith.constant 1.000000e+00 : f32
    %448 = vector.broadcast %cst_88 : f32 to vector<8x32xf32>
    %449 = arith.subf %448, %442 : vector<8x32xf32>
    %450 = arith.mulf %449, %447 : vector<8x32xf32>
    %451 = arith.mulf %442, %422 : vector<8x32xf32>
    %452 = arith.addf %450, %451 : vector<8x32xf32>
    %453 = vector.extract_strided_slice %325 {offsets = [32, 0], sizes = [8, 96], strides = [1, 1]} : vector<40x192xf32> to vector<8x96xf32>
    %cst_89 = arith.constant dense<0.000000e+00> : vector<8x96xf32>
    %454 = tpu.matmul %452, %327, %cst_89 {dimension_numbers = #tpu.dot_dimension_numbers<[1], [0], [0], [1], [0, 0, 1, 1], [], []>} : vector<8x32xf32>, vector<32x96xf32>, vector<8x96xf32> -> vector<8x96xf32>
    %455 = vector.broadcast %330 : vector<1x96xf32> to vector<8x96xf32>
    %456 = arith.addf %454, %455 : vector<8x96xf32>
    %457 = vector.extract_strided_slice %453 {offsets = [0, 0], sizes = [8, 32], strides = [1, 1]} : vector<8x96xf32> to vector<8x32xf32>
    %458 = vector.extract_strided_slice %456 {offsets = [0, 0], sizes = [8, 32], strides = [1, 1]} : vector<8x96xf32> to vector<8x32xf32>
    %459 = arith.addf %457, %458 : vector<8x32xf32>
    %460 = arith.negf %459 : vector<8x32xf32>
    %461 = math.exp %460 : vector<8x32xf32>
    %cst_90 = arith.constant 1.000000e+00 : f32
    %462 = vector.broadcast %cst_90 : f32 to vector<8x32xf32>
    %463 = arith.addf %462, %461 : vector<8x32xf32>
    %464 = arith.divf %462, %463 : vector<8x32xf32>
    %465 = vector.extract_strided_slice %453 {offsets = [0, 32], sizes = [8, 32], strides = [1, 1]} : vector<8x96xf32> to vector<8x32xf32>
    %466 = vector.extract_strided_slice %456 {offsets = [0, 32], sizes = [8, 32], strides = [1, 1]} : vector<8x96xf32> to vector<8x32xf32>
    %467 = arith.addf %465, %466 : vector<8x32xf32>
    %468 = arith.negf %467 : vector<8x32xf32>
    %469 = math.exp %468 : vector<8x32xf32>
    %cst_91 = arith.constant 1.000000e+00 : f32
    %470 = vector.broadcast %cst_91 : f32 to vector<8x32xf32>
    %471 = arith.addf %470, %469 : vector<8x32xf32>
    %472 = arith.divf %470, %471 : vector<8x32xf32>
    %473 = vector.extract_strided_slice %453 {offsets = [0, 64], sizes = [8, 32], strides = [1, 1]} : vector<8x96xf32> to vector<8x32xf32>
    %474 = vector.extract_strided_slice %456 {offsets = [0, 64], sizes = [8, 32], strides = [1, 1]} : vector<8x96xf32> to vector<8x32xf32>
    %475 = arith.mulf %464, %474 : vector<8x32xf32>
    %476 = arith.addf %473, %475 : vector<8x32xf32>
    %477 = math.tanh %476 : vector<8x32xf32>
    %cst_92 = arith.constant 1.000000e+00 : f32
    %478 = vector.broadcast %cst_92 : f32 to vector<8x32xf32>
    %479 = arith.subf %478, %472 : vector<8x32xf32>
    %480 = arith.mulf %479, %477 : vector<8x32xf32>
    %481 = arith.mulf %472, %452 : vector<8x32xf32>
    %482 = arith.addf %480, %481 : vector<8x32xf32>
    %cst_93 = arith.constant 0.000000e+00 : f32
    %483 = vector.broadcast %cst_93 : f32 to vector<8x32xf32>
    %484 = vector.extract_strided_slice %325 {offsets = [32, 96], sizes = [8, 96], strides = [1, 1]} : vector<40x192xf32> to vector<8x96xf32>
    %cst_94 = arith.constant dense<0.000000e+00> : vector<8x96xf32>
    %485 = tpu.matmul %483, %329, %cst_94 {dimension_numbers = #tpu.dot_dimension_numbers<[1], [0], [0], [1], [0, 0, 1, 1], [], []>} : vector<8x32xf32>, vector<32x96xf32>, vector<8x96xf32> -> vector<8x96xf32>
    %486 = vector.broadcast %331 : vector<1x96xf32> to vector<8x96xf32>
    %487 = arith.addf %485, %486 : vector<8x96xf32>
    %488 = vector.extract_strided_slice %484 {offsets = [0, 0], sizes = [8, 32], strides = [1, 1]} : vector<8x96xf32> to vector<8x32xf32>
    %489 = vector.extract_strided_slice %487 {offsets = [0, 0], sizes = [8, 32], strides = [1, 1]} : vector<8x96xf32> to vector<8x32xf32>
    %490 = arith.addf %488, %489 : vector<8x32xf32>
    %491 = arith.negf %490 : vector<8x32xf32>
    %492 = math.exp %491 : vector<8x32xf32>
    %cst_95 = arith.constant 1.000000e+00 : f32
    %493 = vector.broadcast %cst_95 : f32 to vector<8x32xf32>
    %494 = arith.addf %493, %492 : vector<8x32xf32>
    %495 = arith.divf %493, %494 : vector<8x32xf32>
    %496 = vector.extract_strided_slice %484 {offsets = [0, 32], sizes = [8, 32], strides = [1, 1]} : vector<8x96xf32> to vector<8x32xf32>
    %497 = vector.extract_strided_slice %487 {offsets = [0, 32], sizes = [8, 32], strides = [1, 1]} : vector<8x96xf32> to vector<8x32xf32>
    %498 = arith.addf %496, %497 : vector<8x32xf32>
    %499 = arith.negf %498 : vector<8x32xf32>
    %500 = math.exp %499 : vector<8x32xf32>
    %cst_96 = arith.constant 1.000000e+00 : f32
    %501 = vector.broadcast %cst_96 : f32 to vector<8x32xf32>
    %502 = arith.addf %501, %500 : vector<8x32xf32>
    %503 = arith.divf %501, %502 : vector<8x32xf32>
    %504 = vector.extract_strided_slice %484 {offsets = [0, 64], sizes = [8, 32], strides = [1, 1]} : vector<8x96xf32> to vector<8x32xf32>
    %505 = vector.extract_strided_slice %487 {offsets = [0, 64], sizes = [8, 32], strides = [1, 1]} : vector<8x96xf32> to vector<8x32xf32>
    %506 = arith.mulf %495, %505 : vector<8x32xf32>
    %507 = arith.addf %504, %506 : vector<8x32xf32>
    %508 = math.tanh %507 : vector<8x32xf32>
    %cst_97 = arith.constant 1.000000e+00 : f32
    %509 = vector.broadcast %cst_97 : f32 to vector<8x32xf32>
    %510 = arith.subf %509, %503 : vector<8x32xf32>
    %511 = arith.mulf %510, %508 : vector<8x32xf32>
    %512 = arith.mulf %503, %483 : vector<8x32xf32>
    %513 = arith.addf %511, %512 : vector<8x32xf32>
    %514 = vector.extract_strided_slice %325 {offsets = [24, 96], sizes = [8, 96], strides = [1, 1]} : vector<40x192xf32> to vector<8x96xf32>
    %cst_98 = arith.constant dense<0.000000e+00> : vector<8x96xf32>
    %515 = tpu.matmul %513, %329, %cst_98 {dimension_numbers = #tpu.dot_dimension_numbers<[1], [0], [0], [1], [0, 0, 1, 1], [], []>} : vector<8x32xf32>, vector<32x96xf32>, vector<8x96xf32> -> vector<8x96xf32>
    %516 = vector.broadcast %331 : vector<1x96xf32> to vector<8x96xf32>
    %517 = arith.addf %515, %516 : vector<8x96xf32>
    %518 = vector.extract_strided_slice %514 {offsets = [0, 0], sizes = [8, 32], strides = [1, 1]} : vector<8x96xf32> to vector<8x32xf32>
    %519 = vector.extract_strided_slice %517 {offsets = [0, 0], sizes = [8, 32], strides = [1, 1]} : vector<8x96xf32> to vector<8x32xf32>
    %520 = arith.addf %518, %519 : vector<8x32xf32>
    %521 = arith.negf %520 : vector<8x32xf32>
    %522 = math.exp %521 : vector<8x32xf32>
    %cst_99 = arith.constant 1.000000e+00 : f32
    %523 = vector.broadcast %cst_99 : f32 to vector<8x32xf32>
    %524 = arith.addf %523, %522 : vector<8x32xf32>
    %525 = arith.divf %523, %524 : vector<8x32xf32>
    %526 = vector.extract_strided_slice %514 {offsets = [0, 32], sizes = [8, 32], strides = [1, 1]} : vector<8x96xf32> to vector<8x32xf32>
    %527 = vector.extract_strided_slice %517 {offsets = [0, 32], sizes = [8, 32], strides = [1, 1]} : vector<8x96xf32> to vector<8x32xf32>
    %528 = arith.addf %526, %527 : vector<8x32xf32>
    %529 = arith.negf %528 : vector<8x32xf32>
    %530 = math.exp %529 : vector<8x32xf32>
    %cst_100 = arith.constant 1.000000e+00 : f32
    %531 = vector.broadcast %cst_100 : f32 to vector<8x32xf32>
    %532 = arith.addf %531, %530 : vector<8x32xf32>
    %533 = arith.divf %531, %532 : vector<8x32xf32>
    %534 = vector.extract_strided_slice %514 {offsets = [0, 64], sizes = [8, 32], strides = [1, 1]} : vector<8x96xf32> to vector<8x32xf32>
    %535 = vector.extract_strided_slice %517 {offsets = [0, 64], sizes = [8, 32], strides = [1, 1]} : vector<8x96xf32> to vector<8x32xf32>
    %536 = arith.mulf %525, %535 : vector<8x32xf32>
    %537 = arith.addf %534, %536 : vector<8x32xf32>
    %538 = math.tanh %537 : vector<8x32xf32>
    %cst_101 = arith.constant 1.000000e+00 : f32
    %539 = vector.broadcast %cst_101 : f32 to vector<8x32xf32>
    %540 = arith.subf %539, %533 : vector<8x32xf32>
    %541 = arith.mulf %540, %538 : vector<8x32xf32>
    %542 = arith.mulf %533, %513 : vector<8x32xf32>
    %543 = arith.addf %541, %542 : vector<8x32xf32>
    %544 = vector.extract_strided_slice %325 {offsets = [16, 96], sizes = [8, 96], strides = [1, 1]} : vector<40x192xf32> to vector<8x96xf32>
    %cst_102 = arith.constant dense<0.000000e+00> : vector<8x96xf32>
    %545 = tpu.matmul %543, %329, %cst_102 {dimension_numbers = #tpu.dot_dimension_numbers<[1], [0], [0], [1], [0, 0, 1, 1], [], []>} : vector<8x32xf32>, vector<32x96xf32>, vector<8x96xf32> -> vector<8x96xf32>
    %546 = vector.broadcast %331 : vector<1x96xf32> to vector<8x96xf32>
    %547 = arith.addf %545, %546 : vector<8x96xf32>
    %548 = vector.extract_strided_slice %544 {offsets = [0, 0], sizes = [8, 32], strides = [1, 1]} : vector<8x96xf32> to vector<8x32xf32>
    %549 = vector.extract_strided_slice %547 {offsets = [0, 0], sizes = [8, 32], strides = [1, 1]} : vector<8x96xf32> to vector<8x32xf32>
    %550 = arith.addf %548, %549 : vector<8x32xf32>
    %551 = arith.negf %550 : vector<8x32xf32>
    %552 = math.exp %551 : vector<8x32xf32>
    %cst_103 = arith.constant 1.000000e+00 : f32
    %553 = vector.broadcast %cst_103 : f32 to vector<8x32xf32>
    %554 = arith.addf %553, %552 : vector<8x32xf32>
    %555 = arith.divf %553, %554 : vector<8x32xf32>
    %556 = vector.extract_strided_slice %544 {offsets = [0, 32], sizes = [8, 32], strides = [1, 1]} : vector<8x96xf32> to vector<8x32xf32>
    %557 = vector.extract_strided_slice %547 {offsets = [0, 32], sizes = [8, 32], strides = [1, 1]} : vector<8x96xf32> to vector<8x32xf32>
    %558 = arith.addf %556, %557 : vector<8x32xf32>
    %559 = arith.negf %558 : vector<8x32xf32>
    %560 = math.exp %559 : vector<8x32xf32>
    %cst_104 = arith.constant 1.000000e+00 : f32
    %561 = vector.broadcast %cst_104 : f32 to vector<8x32xf32>
    %562 = arith.addf %561, %560 : vector<8x32xf32>
    %563 = arith.divf %561, %562 : vector<8x32xf32>
    %564 = vector.extract_strided_slice %544 {offsets = [0, 64], sizes = [8, 32], strides = [1, 1]} : vector<8x96xf32> to vector<8x32xf32>
    %565 = vector.extract_strided_slice %547 {offsets = [0, 64], sizes = [8, 32], strides = [1, 1]} : vector<8x96xf32> to vector<8x32xf32>
    %566 = arith.mulf %555, %565 : vector<8x32xf32>
    %567 = arith.addf %564, %566 : vector<8x32xf32>
    %568 = math.tanh %567 : vector<8x32xf32>
    %cst_105 = arith.constant 1.000000e+00 : f32
    %569 = vector.broadcast %cst_105 : f32 to vector<8x32xf32>
    %570 = arith.subf %569, %563 : vector<8x32xf32>
    %571 = arith.mulf %570, %568 : vector<8x32xf32>
    %572 = arith.mulf %563, %543 : vector<8x32xf32>
    %573 = arith.addf %571, %572 : vector<8x32xf32>
    %574 = vector.extract_strided_slice %325 {offsets = [8, 96], sizes = [8, 96], strides = [1, 1]} : vector<40x192xf32> to vector<8x96xf32>
    %cst_106 = arith.constant dense<0.000000e+00> : vector<8x96xf32>
    %575 = tpu.matmul %573, %329, %cst_106 {dimension_numbers = #tpu.dot_dimension_numbers<[1], [0], [0], [1], [0, 0, 1, 1], [], []>} : vector<8x32xf32>, vector<32x96xf32>, vector<8x96xf32> -> vector<8x96xf32>
    %576 = vector.broadcast %331 : vector<1x96xf32> to vector<8x96xf32>
    %577 = arith.addf %575, %576 : vector<8x96xf32>
    %578 = vector.extract_strided_slice %574 {offsets = [0, 0], sizes = [8, 32], strides = [1, 1]} : vector<8x96xf32> to vector<8x32xf32>
    %579 = vector.extract_strided_slice %577 {offsets = [0, 0], sizes = [8, 32], strides = [1, 1]} : vector<8x96xf32> to vector<8x32xf32>
    %580 = arith.addf %578, %579 : vector<8x32xf32>
    %581 = arith.negf %580 : vector<8x32xf32>
    %582 = math.exp %581 : vector<8x32xf32>
    %cst_107 = arith.constant 1.000000e+00 : f32
    %583 = vector.broadcast %cst_107 : f32 to vector<8x32xf32>
    %584 = arith.addf %583, %582 : vector<8x32xf32>
    %585 = arith.divf %583, %584 : vector<8x32xf32>
    %586 = vector.extract_strided_slice %574 {offsets = [0, 32], sizes = [8, 32], strides = [1, 1]} : vector<8x96xf32> to vector<8x32xf32>
    %587 = vector.extract_strided_slice %577 {offsets = [0, 32], sizes = [8, 32], strides = [1, 1]} : vector<8x96xf32> to vector<8x32xf32>
    %588 = arith.addf %586, %587 : vector<8x32xf32>
    %589 = arith.negf %588 : vector<8x32xf32>
    %590 = math.exp %589 : vector<8x32xf32>
    %cst_108 = arith.constant 1.000000e+00 : f32
    %591 = vector.broadcast %cst_108 : f32 to vector<8x32xf32>
    %592 = arith.addf %591, %590 : vector<8x32xf32>
    %593 = arith.divf %591, %592 : vector<8x32xf32>
    %594 = vector.extract_strided_slice %574 {offsets = [0, 64], sizes = [8, 32], strides = [1, 1]} : vector<8x96xf32> to vector<8x32xf32>
    %595 = vector.extract_strided_slice %577 {offsets = [0, 64], sizes = [8, 32], strides = [1, 1]} : vector<8x96xf32> to vector<8x32xf32>
    %596 = arith.mulf %585, %595 : vector<8x32xf32>
    %597 = arith.addf %594, %596 : vector<8x32xf32>
    %598 = math.tanh %597 : vector<8x32xf32>
    %cst_109 = arith.constant 1.000000e+00 : f32
    %599 = vector.broadcast %cst_109 : f32 to vector<8x32xf32>
    %600 = arith.subf %599, %593 : vector<8x32xf32>
    %601 = arith.mulf %600, %598 : vector<8x32xf32>
    %602 = arith.mulf %593, %573 : vector<8x32xf32>
    %603 = arith.addf %601, %602 : vector<8x32xf32>
    %604 = vector.extract_strided_slice %325 {offsets = [0, 96], sizes = [8, 96], strides = [1, 1]} : vector<40x192xf32> to vector<8x96xf32>
    %cst_110 = arith.constant dense<0.000000e+00> : vector<8x96xf32>
    %605 = tpu.matmul %603, %329, %cst_110 {dimension_numbers = #tpu.dot_dimension_numbers<[1], [0], [0], [1], [0, 0, 1, 1], [], []>} : vector<8x32xf32>, vector<32x96xf32>, vector<8x96xf32> -> vector<8x96xf32>
    %606 = vector.broadcast %331 : vector<1x96xf32> to vector<8x96xf32>
    %607 = arith.addf %605, %606 : vector<8x96xf32>
    %608 = vector.extract_strided_slice %604 {offsets = [0, 0], sizes = [8, 32], strides = [1, 1]} : vector<8x96xf32> to vector<8x32xf32>
    %609 = vector.extract_strided_slice %607 {offsets = [0, 0], sizes = [8, 32], strides = [1, 1]} : vector<8x96xf32> to vector<8x32xf32>
    %610 = arith.addf %608, %609 : vector<8x32xf32>
    %611 = arith.negf %610 : vector<8x32xf32>
    %612 = math.exp %611 : vector<8x32xf32>
    %cst_111 = arith.constant 1.000000e+00 : f32
    %613 = vector.broadcast %cst_111 : f32 to vector<8x32xf32>
    %614 = arith.addf %613, %612 : vector<8x32xf32>
    %615 = arith.divf %613, %614 : vector<8x32xf32>
    %616 = vector.extract_strided_slice %604 {offsets = [0, 32], sizes = [8, 32], strides = [1, 1]} : vector<8x96xf32> to vector<8x32xf32>
    %617 = vector.extract_strided_slice %607 {offsets = [0, 32], sizes = [8, 32], strides = [1, 1]} : vector<8x96xf32> to vector<8x32xf32>
    %618 = arith.addf %616, %617 : vector<8x32xf32>
    %619 = arith.negf %618 : vector<8x32xf32>
    %620 = math.exp %619 : vector<8x32xf32>
    %cst_112 = arith.constant 1.000000e+00 : f32
    %621 = vector.broadcast %cst_112 : f32 to vector<8x32xf32>
    %622 = arith.addf %621, %620 : vector<8x32xf32>
    %623 = arith.divf %621, %622 : vector<8x32xf32>
    %624 = vector.extract_strided_slice %604 {offsets = [0, 64], sizes = [8, 32], strides = [1, 1]} : vector<8x96xf32> to vector<8x32xf32>
    %625 = vector.extract_strided_slice %607 {offsets = [0, 64], sizes = [8, 32], strides = [1, 1]} : vector<8x96xf32> to vector<8x32xf32>
    %626 = arith.mulf %615, %625 : vector<8x32xf32>
    %627 = arith.addf %624, %626 : vector<8x32xf32>
    %628 = math.tanh %627 : vector<8x32xf32>
    %cst_113 = arith.constant 1.000000e+00 : f32
    %629 = vector.broadcast %cst_113 : f32 to vector<8x32xf32>
    %630 = arith.subf %629, %623 : vector<8x32xf32>
    %631 = arith.mulf %630, %628 : vector<8x32xf32>
    %632 = arith.mulf %623, %603 : vector<8x32xf32>
    %633 = arith.addf %631, %632 : vector<8x32xf32>
    %634 = tpu.concatenate %362, %633 in 1 : vector<8x32xf32>, vector<8x32xf32> -> vector<8x64xf32>
    %635 = tpu.concatenate %392, %603 in 1 : vector<8x32xf32>, vector<8x32xf32> -> vector<8x64xf32>
    %636 = tpu.concatenate %422, %573 in 1 : vector<8x32xf32>, vector<8x32xf32> -> vector<8x64xf32>
    %637 = tpu.concatenate %452, %543 in 1 : vector<8x32xf32>, vector<8x32xf32> -> vector<8x64xf32>
    %638 = tpu.concatenate %482, %513 in 1 : vector<8x32xf32>, vector<8x32xf32> -> vector<8x64xf32>
    %c0_114 = arith.constant 0 : index
    %639 = memref.load %arg9[%c0_114] : memref<6xf32, #tpu.memory_space<smem>>
    %640 = vector.broadcast %639 : f32 to vector<8x64xf32>
    %641 = arith.mulf %640, %634 : vector<8x64xf32>
    %c1_115 = arith.constant 1 : index
    %642 = memref.load %arg9[%c1_115] : memref<6xf32, #tpu.memory_space<smem>>
    %643 = vector.broadcast %642 : f32 to vector<8x64xf32>
    %644 = arith.mulf %643, %635 : vector<8x64xf32>
    %645 = arith.addf %641, %644 : vector<8x64xf32>
    %c2 = arith.constant 2 : index
    %646 = memref.load %arg9[%c2] : memref<6xf32, #tpu.memory_space<smem>>
    %647 = vector.broadcast %646 : f32 to vector<8x64xf32>
    %648 = arith.mulf %647, %636 : vector<8x64xf32>
    %649 = arith.addf %645, %648 : vector<8x64xf32>
    %c3 = arith.constant 3 : index
    %650 = memref.load %arg9[%c3] : memref<6xf32, #tpu.memory_space<smem>>
    %651 = vector.broadcast %650 : f32 to vector<8x64xf32>
    %652 = arith.mulf %651, %637 : vector<8x64xf32>
    %653 = arith.addf %649, %652 : vector<8x64xf32>
    %c4 = arith.constant 4 : index
    %654 = memref.load %arg9[%c4] : memref<6xf32, #tpu.memory_space<smem>>
    %655 = vector.broadcast %654 : f32 to vector<8x64xf32>
    %656 = arith.mulf %655, %638 : vector<8x64xf32>
    %657 = arith.addf %653, %656 : vector<8x64xf32>
    %c5 = arith.constant 5 : index
    %658 = memref.load %arg9[%c5] : memref<6xf32, #tpu.memory_space<smem>>
    %659 = vector.broadcast %658 : f32 to vector<8x64xf32>
    %660 = arith.addf %657, %659 : vector<8x64xf32>
    %c0_116 = arith.constant 0 : index
    %c0_117 = arith.constant 0 : index
    %661 = vector.load %arg17[%c0_116, %c0_117] : memref<8x64xf32, #tpu.memory_space<vmem>>, vector<8x64xf32>
    tpu.vector_store %arg17[%c0_116, %c0_117], %660 {strides = array<i32>} : memref<8x64xf32, #tpu.memory_space<vmem>>, vector<8x64xf32>,
    %c0_118 = arith.constant 0 : index
    %c0_119 = arith.constant 0 : index
    %662 = vector.load %arg10[%c0_118, %c0_119] : memref<2x64xf32, #tpu.memory_space<vmem>>, vector<1x64xf32>
    %c1_120 = arith.constant 1 : index
    %c0_121 = arith.constant 0 : index
    %663 = vector.load %arg10[%c1_120, %c0_121] : memref<2x64xf32, #tpu.memory_space<vmem>>, vector<1x64xf32>
    %cst_122 = arith.constant dense<0.000000e+00> : vector<64xf32>
    %664 = vector.multi_reduction <add>, %660, %cst_122 [0] : vector<8x64xf32> to vector<64xf32>
    %665 = vector.shape_cast %664 : vector<64xf32> to vector<1x64xf32>
    %cst_123 = arith.constant 8.000000e+00 : f32
    %666 = vector.broadcast %cst_123 : f32 to vector<1x64xf32>
    %667 = arith.divf %665, %666 : vector<1x64xf32>
    %668 = vector.broadcast %667 : vector<1x64xf32> to vector<8x64xf32>
    %669 = arith.subf %660, %668 : vector<8x64xf32>
    %670 = arith.mulf %669, %669 : vector<8x64xf32>
    %cst_124 = arith.constant dense<0.000000e+00> : vector<64xf32>
    %671 = vector.multi_reduction <add>, %670, %cst_124 [0] : vector<8x64xf32> to vector<64xf32>
    %672 = vector.shape_cast %671 : vector<64xf32> to vector<1x64xf32>
    %cst_125 = arith.constant 8.000000e+00 : f32
    %673 = vector.broadcast %cst_125 : f32 to vector<1x64xf32>
    %674 = arith.divf %672, %673 : vector<1x64xf32>
    %675 = vector.broadcast %667 : vector<1x64xf32> to vector<8x64xf32>
    %676 = arith.subf %660, %675 : vector<8x64xf32>
    %cst_126 = arith.constant 9.99999974E-6 : f32
    %677 = vector.broadcast %cst_126 : f32 to vector<1x64xf32>
    %678 = arith.addf %674, %677 : vector<1x64xf32>
    %679 = math.rsqrt %678 : vector<1x64xf32>
    %680 = vector.broadcast %679 : vector<1x64xf32> to vector<8x64xf32>
    %681 = arith.mulf %676, %680 : vector<8x64xf32>
    %682 = vector.broadcast %662 : vector<1x64xf32> to vector<8x64xf32>
    %683 = arith.mulf %681, %682 : vector<8x64xf32>
    %684 = vector.broadcast %663 : vector<1x64xf32> to vector<8x64xf32>
    %685 = arith.addf %683, %684 : vector<8x64xf32>
    %c0_127 = arith.constant 0 : index
    %c0_128 = arith.constant 0 : index
    %686 = vector.load %arg11[%c0_127, %c0_128] : memref<64x32xf32, #tpu.memory_space<vmem>>, vector<64x32xf32>
    %cst_129 = arith.constant dense<0.000000e+00> : vector<8x32xf32>
    %687 = tpu.matmul %685, %686, %cst_129 {dimension_numbers = #tpu.dot_dimension_numbers<[1], [0], [0], [1], [0, 0, 1, 1], [], []>} : vector<8x64xf32>, vector<64x32xf32>, vector<8x32xf32> -> vector<8x32xf32>
    %c0_130 = arith.constant 0 : index
    %c0_131 = arith.constant 0 : index
    %688 = vector.load %arg12[%c0_130, %c0_131] : memref<3x32xf32, #tpu.memory_space<vmem>>, vector<1x32xf32>
    %689 = vector.broadcast %688 : vector<1x32xf32> to vector<8x32xf32>
    %690 = arith.addf %687, %689 : vector<8x32xf32>
    %c1_132 = arith.constant 1 : index
    %c0_133 = arith.constant 0 : index
    %691 = vector.load %arg12[%c1_132, %c0_133] : memref<3x32xf32, #tpu.memory_space<vmem>>, vector<1x32xf32>
    %c2_134 = arith.constant 2 : index
    %c0_135 = arith.constant 0 : index
    %692 = vector.load %arg12[%c2_134, %c0_135] : memref<3x32xf32, #tpu.memory_space<vmem>>, vector<1x32xf32>
    %cst_136 = arith.constant dense<0.000000e+00> : vector<32xf32>
    %693 = vector.multi_reduction <add>, %690, %cst_136 [0] : vector<8x32xf32> to vector<32xf32>
    %694 = vector.shape_cast %693 : vector<32xf32> to vector<1x32xf32>
    %cst_137 = arith.constant 8.000000e+00 : f32
    %695 = vector.broadcast %cst_137 : f32 to vector<1x32xf32>
    %696 = arith.divf %694, %695 : vector<1x32xf32>
    %697 = vector.broadcast %696 : vector<1x32xf32> to vector<8x32xf32>
    %698 = arith.subf %690, %697 : vector<8x32xf32>
    %699 = arith.mulf %698, %698 : vector<8x32xf32>
    %cst_138 = arith.constant dense<0.000000e+00> : vector<32xf32>
    %700 = vector.multi_reduction <add>, %699, %cst_138 [0] : vector<8x32xf32> to vector<32xf32>
    %701 = vector.shape_cast %700 : vector<32xf32> to vector<1x32xf32>
    %cst_139 = arith.constant 8.000000e+00 : f32
    %702 = vector.broadcast %cst_139 : f32 to vector<1x32xf32>
    %703 = arith.divf %701, %702 : vector<1x32xf32>
    %704 = vector.broadcast %696 : vector<1x32xf32> to vector<8x32xf32>
    %705 = arith.subf %690, %704 : vector<8x32xf32>
    %cst_140 = arith.constant 9.99999974E-6 : f32
    %706 = vector.broadcast %cst_140 : f32 to vector<1x32xf32>
    %707 = arith.addf %703, %706 : vector<1x32xf32>
    %708 = math.rsqrt %707 : vector<1x32xf32>
    %709 = vector.broadcast %708 : vector<1x32xf32> to vector<8x32xf32>
    %710 = arith.mulf %705, %709 : vector<8x32xf32>
    %711 = vector.broadcast %691 : vector<1x32xf32> to vector<8x32xf32>
    %712 = arith.mulf %710, %711 : vector<8x32xf32>
    %713 = vector.broadcast %692 : vector<1x32xf32> to vector<8x32xf32>
    %714 = arith.addf %712, %713 : vector<8x32xf32>
    %cst_141 = arith.constant 0.000000e+00 : f32
    %715 = vector.broadcast %cst_141 : f32 to vector<8x32xf32>
    %716 = arith.cmpf ogt, %714, %715 : vector<8x32xf32>
    %cst_142 = arith.constant 0.00999999977 : f32
    %717 = vector.broadcast %cst_142 : f32 to vector<8x32xf32>
    %718 = arith.mulf %717, %714 : vector<8x32xf32>
    %719 = arith.select %716, %714, %718 : vector<8x32xi1>, vector<8x32xf32>
    %c0_143 = arith.constant 0 : index
    %c0_144 = arith.constant 0 : index
    %720 = vector.load %arg13[%c0_143, %c0_144] : memref<32x8xf32, #tpu.memory_space<vmem>>, vector<32x8xf32>
    %cst_145 = arith.constant dense<0.000000e+00> : vector<8x8xf32>
    %721 = tpu.matmul %719, %720, %cst_145 {dimension_numbers = #tpu.dot_dimension_numbers<[1], [0], [0], [1], [0, 0, 1, 1], [], []>} : vector<8x32xf32>, vector<32x8xf32>, vector<8x8xf32> -> vector<8x8xf32>
    %c0_146 = arith.constant 0 : index
    %c0_147 = arith.constant 0 : index
    %722 = vector.load %arg14[%c0_146, %c0_147] : memref<3x8xf32, #tpu.memory_space<vmem>>, vector<1x8xf32>
    %723 = vector.broadcast %722 : vector<1x8xf32> to vector<8x8xf32>
    %724 = arith.addf %721, %723 : vector<8x8xf32>
    %c1_148 = arith.constant 1 : index
    %c0_149 = arith.constant 0 : index
    %725 = vector.load %arg14[%c1_148, %c0_149] : memref<3x8xf32, #tpu.memory_space<vmem>>, vector<1x8xf32>
    %c2_150 = arith.constant 2 : index
    %c0_151 = arith.constant 0 : index
    %726 = vector.load %arg14[%c2_150, %c0_151] : memref<3x8xf32, #tpu.memory_space<vmem>>, vector<1x8xf32>
    %cst_152 = arith.constant dense<0.000000e+00> : vector<8xf32>
    %727 = vector.multi_reduction <add>, %724, %cst_152 [0] : vector<8x8xf32> to vector<8xf32>
    %728 = vector.shape_cast %727 : vector<8xf32> to vector<1x8xf32>
    %cst_153 = arith.constant 8.000000e+00 : f32
    %729 = vector.broadcast %cst_153 : f32 to vector<1x8xf32>
    %730 = arith.divf %728, %729 : vector<1x8xf32>
    %731 = vector.broadcast %730 : vector<1x8xf32> to vector<8x8xf32>
    %732 = arith.subf %724, %731 : vector<8x8xf32>
    %733 = arith.mulf %732, %732 : vector<8x8xf32>
    %cst_154 = arith.constant dense<0.000000e+00> : vector<8xf32>
    %734 = vector.multi_reduction <add>, %733, %cst_154 [0] : vector<8x8xf32> to vector<8xf32>
    %735 = vector.shape_cast %734 : vector<8xf32> to vector<1x8xf32>
    %cst_155 = arith.constant 8.000000e+00 : f32
    %736 = vector.broadcast %cst_155 : f32 to vector<1x8xf32>
    %737 = arith.divf %735, %736 : vector<1x8xf32>
    %738 = vector.broadcast %730 : vector<1x8xf32> to vector<8x8xf32>
    %739 = arith.subf %724, %738 : vector<8x8xf32>
    %cst_156 = arith.constant 9.99999974E-6 : f32
    %740 = vector.broadcast %cst_156 : f32 to vector<1x8xf32>
    %741 = arith.addf %737, %740 : vector<1x8xf32>
    %742 = math.rsqrt %741 : vector<1x8xf32>
    %743 = vector.broadcast %742 : vector<1x8xf32> to vector<8x8xf32>
    %744 = arith.mulf %739, %743 : vector<8x8xf32>
    %745 = vector.broadcast %725 : vector<1x8xf32> to vector<8x8xf32>
    %746 = arith.mulf %744, %745 : vector<8x8xf32>
    %747 = vector.broadcast %726 : vector<1x8xf32> to vector<8x8xf32>
    %748 = arith.addf %746, %747 : vector<8x8xf32>
    %cst_157 = arith.constant 0.000000e+00 : f32
    %749 = vector.broadcast %cst_157 : f32 to vector<8x8xf32>
    %750 = arith.cmpf ogt, %748, %749 : vector<8x8xf32>
    %cst_158 = arith.constant 0.00999999977 : f32
    %751 = vector.broadcast %cst_158 : f32 to vector<8x8xf32>
    %752 = arith.mulf %751, %748 : vector<8x8xf32>
    %753 = arith.select %750, %748, %752 : vector<8x8xi1>, vector<8x8xf32>
    %c0_159 = arith.constant 0 : index
    %c0_160 = arith.constant 0 : index
    %754 = vector.load %arg15[%c0_159, %c0_160] : memref<8x2xf32, #tpu.memory_space<vmem>>, vector<8x2xf32>
    %cst_161 = arith.constant dense<0.000000e+00> : vector<8x2xf32>
    %755 = tpu.matmul %753, %754, %cst_161 {dimension_numbers = #tpu.dot_dimension_numbers<[1], [0], [0], [1], [0, 0, 1, 1], [], []>} : vector<8x8xf32>, vector<8x2xf32>, vector<8x2xf32> -> vector<8x2xf32>
    %c0_162 = arith.constant 0 : index
    %c0_163 = arith.constant 0 : index
    %756 = vector.load %arg16[%c0_162, %c0_163] : memref<1x2xf32, #tpu.memory_space<vmem>>, vector<1x2xf32>
    %757 = vector.broadcast %756 : vector<1x2xf32> to vector<8x2xf32>
    %758 = arith.addf %755, %757 : vector<8x2xf32>
    %c0_164 = arith.constant 0 : index
    %c0_165 = arith.constant 0 : index
    %759 = vector.load %arg18[%c0_164, %c0_165] : memref<8x2xf32, #tpu.memory_space<vmem>>, vector<8x2xf32>
    tpu.vector_store %arg18[%c0_164, %c0_165], %758 {strides = array<i32>} : memref<8x2xf32, #tpu.memory_space<vmem>>, vector<8x2xf32>,
    return
  }
}

</mosaic_0001>

<llo_original>
// kernel: model_tn_forward.3
$region0: #{model_tn_forward.3}
  #allocation0 [shape = 'u32[]', space=smem, size = 0x4, offset = 0x4, fixed_abs, tag = 'smem constant byte address 0x4 - core index']
  #allocation1 [shape = 'u32[144,128]{1,0:T(1,128)}', space=vmem, size = 0x12000, scoped, tag = 'internal scratch']
  %s0 = inlined_call_operand.vmem [shape: f32[5,8,86], index: 0, kind: input, shape index: {}]
  %s1 = inlined_call_operand.vmem [shape: f32[86,192], index: 1, kind: input, shape index: {}]
  %s2 = inlined_call_operand.vmem [shape: f32[1,192], index: 2, kind: input, shape index: {}]
  %s3 = inlined_call_operand.vmem [shape: f32[2,32,96], index: 3, kind: input, shape index: {}]
  %s4 = inlined_call_operand.vmem [shape: f32[2,96], index: 4, kind: input, shape index: {}]
  %s5 = inlined_call_operand.vmem [shape: f32[64,192], index: 5, kind: input, shape index: {}]
  %s6 = inlined_call_operand.vmem [shape: f32[1,192], index: 6, kind: input, shape index: {}]
  %s7 = inlined_call_operand.vmem [shape: f32[2,32,96], index: 7, kind: input, shape index: {}]
  %s8 = inlined_call_operand.vmem [shape: f32[2,96], index: 8, kind: input, shape index: {}]
  %s9 = inlined_call_operand.vmem [shape: f32[6], index: 9, kind: input, shape index: {}]
  %s10 = inlined_call_operand.vmem [shape: f32[2,64], index: 10, kind: input, shape index: {}]
  %s11 = inlined_call_operand.vmem [shape: f32[64,32], index: 11, kind: input, shape index: {}]
  %s12 = inlined_call_operand.vmem [shape: f32[3,32], index: 12, kind: input, shape index: {}]
  %s13 = inlined_call_operand.vmem [shape: f32[32,8], index: 13, kind: input, shape index: {}]
  %s14 = inlined_call_operand.vmem [shape: f32[3,8], index: 14, kind: input, shape index: {}]
  %s15 = inlined_call_operand.vmem [shape: f32[8,2], index: 15, kind: input, shape index: {}]
  %s16 = inlined_call_operand.vmem [shape: f32[1,2], index: 16, kind: input, shape index: {}]
  %s17 = inlined_call_operand.hbm [shape: f32[8,64], index: 17, kind: output, shape index: {0}]
  %s18 = inlined_call_operand.vmem [shape: f32[8,2], index: 18, kind: output, shape index: {1}]
  %19 = xla_tuple %s17, %s18
  %s20 = sld [smem:[#allocation0]]
  $region90: #{model_tn_forward.3} parent=0
    _
  %s22 = ssub.s32 1, %s20
  %s23 = scalar_select 0, %s22, %s20
  $region1: #{model_tn_forward.3} parent=0
    #allocation2 [shape = 'u8[512]{0}', space=smem, size = 0x200, scoped, tag = 'input window, operand 9, single buffered']
    #allocation3 [shape = 's32[1]{0}', space=sflag, size = 0x4, scoped, tag = 'scoped memory for model_tn_forward.3']
    #allocation4 [shape = 's32[1]{0}', space=sflag, size = 0x4, scoped, tag = 'scoped memory for model_tn_forward.3']
    #allocation5 [shape = 'u8[4096]{0}', space=vmem, size = 0x1000, scoped, tag = 'output window, operand 0, single buffered']
    %24 = vsyncpa [#allocation4], 0
    %25 = vsyncpa [#allocation3], 0
    // Predicated region
    $region2: #{model_tn_forward.3} parent=1 // pred_check
      _
    $region3: #{model_tn_forward.3} parent=1 // pred_check_branch
      %27 = sbr.rel (0) target = $region5
    $region4: #{model_tn_forward.3} parent=1 // pred_region
      _
    $region5: #{model_tn_forward.3} parent=1 // pred_fallthru
      _
    // Predicated region
    $region6: #{model_tn_forward.3} parent=1 // pred_check
      _
    $region7: #{model_tn_forward.3} parent=1 // pred_check_branch
      %29 = sbr.rel (0) target = $region9
    $region8: #{model_tn_forward.3} parent=1 // pred_region
      _
    $region9: #{model_tn_forward.3} parent=1 // pred_fallthru
      _
    // Predicated region
    $region10: #{model_tn_forward.3} parent=1 // pred_check
      _
    $region11: #{model_tn_forward.3} parent=1 // pred_check_branch
      %31 = sbr.rel (0) target = $region13
    $region12: #{model_tn_forward.3} parent=1 // pred_region
      _
    $region13: #{model_tn_forward.3} parent=1 // pred_fallthru
      _
    // Predicated region
    $region14: #{model_tn_forward.3} parent=1 // pred_check
      _
    $region15: #{model_tn_forward.3} parent=1 // pred_check_branch
      %33 = sbr.rel (0) target = $region17
    $region16: #{model_tn_forward.3} parent=1 // pred_region
      _
    $region17: #{model_tn_forward.3} parent=1 // pred_fallthru
      _
    // Predicated region
    $region18: #{model_tn_forward.3} parent=1 // pred_check
      _
    $region19: #{model_tn_forward.3} parent=1 // pred_check_branch
      %35 = sbr.rel (0) target = $region21
    $region20: #{model_tn_forward.3} parent=1 // pred_region
      _
    $region21: #{model_tn_forward.3} parent=1 // pred_fallthru
      _
    // Predicated region
    $region22: #{model_tn_forward.3} parent=1 // pred_check
      _
    $region23: #{model_tn_forward.3} parent=1 // pred_check_branch
      %37 = sbr.rel (0) target = $region25
    $region24: #{model_tn_forward.3} parent=1 // pred_region
      _
    $region25: #{model_tn_forward.3} parent=1 // pred_fallthru
      _
    // Predicated region
    $region26: #{model_tn_forward.3} parent=1 // pred_check
      _
    $region27: #{model_tn_forward.3} parent=1 // pred_check_branch
      %39 = sbr.rel (0) target = $region29
    $region28: #{model_tn_forward.3} parent=1 // pred_region
      _
    $region29: #{model_tn_forward.3} parent=1 // pred_fallthru
      _
    // Predicated region
    $region30: #{model_tn_forward.3} parent=1 // pred_check
      _
    $region31: #{model_tn_forward.3} parent=1 // pred_check_branch
      %41 = sbr.rel (0) target = $region33
    $region32: #{model_tn_forward.3} parent=1 // pred_region
      _
    $region33: #{model_tn_forward.3} parent=1 // pred_fallthru
      _
    // Predicated region
    $region34: #{model_tn_forward.3} parent=1 // pred_check
      _
    $region35: #{model_tn_forward.3} parent=1 // pred_check_branch
      %43 = sbr.rel (0) target = $region37
    $region36: #{model_tn_forward.3} parent=1 // pred_region
      _
    $region37: #{model_tn_forward.3} parent=1 // pred_fallthru
      _
    // Predicated region
    $region38: #{model_tn_forward.3} parent=1 // pred_check
      _
    $region39: #{model_tn_forward.3} parent=1 // pred_check_branch
      %45 = sbr.rel (0) target = $region41
    $region40: #{model_tn_forward.3} parent=1 // pred_region
      %s47 = ssub.s32 16, 16
      %48 = vsyncadd [#allocation4], %s47
      %s50 = sshll.u32 %s9, 4
      %s51 = int_to_ptr.vmem [resolvable:$true] %s50
      %53 = dma.vmem_to_smem %s51, 16, [#allocation2], [#allocation4]
    $region41: #{model_tn_forward.3} parent=1 // pred_fallthru
      _
    // Predicated region
    $region42: #{model_tn_forward.3} parent=1 // pred_check
      _
    $region43: #{model_tn_forward.3} parent=1 // pred_check_branch
      %55 = sbr.rel (0) target = $region45
    $region44: #{model_tn_forward.3} parent=1 // pred_region
      _
    $region45: #{model_tn_forward.3} parent=1 // pred_fallthru
      _
    // Predicated region
    $region46: #{model_tn_forward.3} parent=1 // pred_check
      _
    $region47: #{model_tn_forward.3} parent=1 // pred_check_branch
      %57 = sbr.rel (0) target = $region49
    $region48: #{model_tn_forward.3} parent=1 // pred_region
      _
    $region49: #{model_tn_forward.3} parent=1 // pred_fallthru
      _
    // Predicated region
    $region50: #{model_tn_forward.3} parent=1 // pred_check
      _
    $region51: #{model_tn_forward.3} parent=1 // pred_check_branch
      %59 = sbr.rel (0) target = $region53
    $region52: #{model_tn_forward.3} parent=1 // pred_region
      _
    $region53: #{model_tn_forward.3} parent=1 // pred_fallthru
      _
    // Predicated region
    $region54: #{model_tn_forward.3} parent=1 // pred_check
      _
    $region55: #{model_tn_forward.3} parent=1 // pred_check_branch
      %61 = sbr.rel (0) target = $region57
    $region56: #{model_tn_forward.3} parent=1 // pred_region
      _
    $region57: #{model_tn_forward.3} parent=1 // pred_fallthru
      _
    // Predicated region
    $region58: #{model_tn_forward.3} parent=1 // pred_check
      _
    $region59: #{model_tn_forward.3} parent=1 // pred_check_branch
      %63 = sbr.rel (0) target = $region61
    $region60: #{model_tn_forward.3} parent=1 // pred_region
      _
    $region61: #{model_tn_forward.3} parent=1 // pred_fallthru
      _
    // Predicated region
    $region62: #{model_tn_forward.3} parent=1 // pred_check
      _
    $region63: #{model_tn_forward.3} parent=1 // pred_check_branch
      %65 = sbr.rel (0) target = $region65
    $region64: #{model_tn_forward.3} parent=1 // pred_region
      _
    $region65: #{model_tn_forward.3} parent=1 // pred_fallthru
      _
    // Predicated region
    $region66: #{model_tn_forward.3} parent=1 // pred_check
      _
    $region67: #{model_tn_forward.3} parent=1 // pred_check_branch
      %67 = sbr.rel (0) target = $region69
    $region68: #{model_tn_forward.3} parent=1 // pred_region
      _
    $region69: #{model_tn_forward.3} parent=1 // pred_fallthru
      _
    // Predicated region
    $region70: #{model_tn_forward.3} parent=1 // pred_check
      _
    $region71: #{model_tn_forward.3} parent=1 // pred_check_branch
      %69 = sbr.rel (0) target = $region73
    $region72: #{model_tn_forward.3} parent=1 // pred_region
      %70 = dma.done [#allocation4], 16
    $region73: #{model_tn_forward.3} parent=1 // pred_fallthru
      _
    %71 = sfence
    %v72 = vld [vmem:[%s0] sm:$0xff]
    %v73 = vld [vmem:[%s0 + $0x8] sm:$0xff]
    %v74 = vld [vmem:[%s0 + $0x10] sm:$0xff]
    %v75 = vld [vmem:[%s0 + $0x18] sm:$0xff]
    %v76 = vld [vmem:[%s0 + $0x20] sm:$0xff]
    %v77 = vld [vmem:[%s1] sm:$0xff]
    %v78 = vld [vmem:[%s1 + $0x8] sm:$0xff]
    %v79 = vld [vmem:[%s1 + $0x10] sm:$0xff]
    %v80 = vld [vmem:[%s1 + $0x18] sm:$0xff]
    %v81 = vld [vmem:[%s1 + $0x20] sm:$0xff]
    %v82 = vld [vmem:[%s1 + $0x28] sm:$0xff]
    %v83 = vld [vmem:[%s1 + $0x30] sm:$0xff]
    %v84 = vld [vmem:[%s1 + $0x38] sm:$0xff]
    %v85 = vld [vmem:[%s1 + $0x40] sm:$0xff]
    %v86 = vld [vmem:[%s1 + $0x48] sm:$0xff]
    %v87 = vld [vmem:[%s1 + $0x50] sm:$0xff]
    %v88 = vld [vmem:[%s1 + $0x58] sm:$0xff]
    %v89 = vld [vmem:[%s1 + $0x60] sm:$0xff]
    %v90 = vld [vmem:[%s1 + $0x68] sm:$0xff]
    %v91 = vld [vmem:[%s1 + $0x70] sm:$0xff]
    %v92 = vld [vmem:[%s1 + $0x78] sm:$0xff]
    %v93 = vld [vmem:[%s1 + $0x80] sm:$0xff]
    %v94 = vld [vmem:[%s1 + $0x88] sm:$0xff]
    %v95 = vld [vmem:[%s1 + $0x90] sm:$0xff]
    %v96 = vld [vmem:[%s1 + $0x98] sm:$0xff]
    %v97 = vld [vmem:[%s1 + $0xa0] sm:$0x3f]
    %v98 = vld [vmem:[%s1 + $0xa8] sm:$0x3f]
    %v99 = vld [vmem:[%s2] sm:$0x3]
    %v101 = vlaneseq
    %v102 = vshrl.u32 %v101, 7
    %v103 = vsub.s32 0, %v102
    %v104 = vrot.slane %v99, %v103
    %v105 = vlaneseq
    %v106 = vshrl.u32 %v105, 7
    %v107 = vsub.s32 1, %v106
    %v108 = vrot.slane %v99, %v107
    %vm111 = vcmask 703488
    %v113 = vsel %vm111, %v72, 0
    %v116 = vsel %vm111, %v73, 0
    %v119 = vsel %vm111, %v74, 0
    %v122 = vsel %vm111, %v75, 0
    %v125 = vsel %vm111, %v76, 0
    %vm127 = vcmask 1045504
    %v129 = vsel %vm127, %v97, 0
    %v132 = vsel %vm127, %v98, 0
    %134 = vmatprep.subr.mxu0 %v78
    %135 = vmatpush1.msra.mxu0 %v77
    %136 = vmatprep.subr.mxu0 %v80
    %137 = vmatpush1.msra.mxu0 %v79
    %138 = vmatprep.subr.mxu0 %v82
    %139 = vmatpush1.msra.mxu0 %v81
    %140 = vmatprep.subr.mxu0 %v84
    %141 = vmatpush1.msra.mxu0 %v83
    %142 = vmatprep.subr.mxu0 %v86
    %143 = vmatpush1.msra.mxu0 %v85
    %144 = vmatprep.subr.mxu0 %v88
    %145 = vmatpush1.msra.mxu0 %v87
    %146 = vmatprep.subr.mxu0 %v90
    %147 = vmatpush1.msra.mxu0 %v89
    %148 = vmatprep.subr.mxu0 %v92
    %149 = vmatpush1.msra.mxu0 %v91
    %150 = vmatprep.subr.mxu0 %v94
    %151 = vmatpush1.msra.mxu0 %v93
    %152 = vmatprep.subr.mxu0 %v96
    %153 = vmatpush1.msra.mxu0 %v95
    %154 = vmatprep.subr.mxu0 %v132
    %155 = vmatpush1.msra.mxu0 %v129
    %156 = vmatprep.subr.mxu0 0.0
    %157 = vmatpush1.msra.mxu0 0.0
    %158 = vmatprep.subr.mxu0 0.0
    %159 = vmatpush1.msra.mxu0 0.0
    %160 = vmatprep.subr.mxu0 0.0
    %161 = vmatpush1.msra.mxu0 0.0
    %162 = vmatprep.subr.mxu0 0.0
    %163 = vmatpush1.msra.mxu0 0.0
    %164 = vmatprep.subr.mxu0 0.0
    %165 = vmatpush1.msra.mxu0 0.0
    %166 = vmatprep.subr.mxu0 0.0
    %167 = vmatpush1.msra.mxu0 0.0
    %168 = vmatprep.subr.mxu0 0.0
    %169 = vmatpush1.msra.mxu0 0.0
    %170 = vmatprep.subr.mxu0 0.0
    %171 = vmatpush1.msra.mxu0 0.0
    %172 = vmatprep.subr.mxu0 0.0
    %173 = vmatpush1.msra.mxu0 0.0
    %174 = vmatprep.subr.mxu0 0.0
    %175 = vmatpush1.msra.mxu0 0.0
    %176 = vmatprep.subr.mxu0 0.0
    %177 = vmatpush1.msra.mxu0 0.0
    %178 = vmatprep.subr.mxu0 0.0
    %179 = vmatpush1.msra.mxu0 0.0
    %180 = vmatprep.subr.mxu0 0.0
    %181 = vmatpush1.msra.mxu0 0.0
    %182 = vmatprep.subr.mxu0 0.0
    %183 = vmatpush1.msra.mxu0 0.0
    %184 = vmatprep.subr.mxu0 0.0
    %185 = vmatpush1.msra.mxu0 0.0
    %186 = vmatprep.subr.mxu0 0.0
    %187 = vmatpush1.msra.mxu0 0.0
    %188 = vmatprep.subr.mxu0 0.0
    %189 = vmatpush1.msra.mxu0 0.0
    %190 = vmatprep.subr.mxu0 0.0
    %191 = vmatpush1.msra.mxu0 0.0
    %192 = vmatprep.subr.mxu0 0.0
    %193 = vmatpush1.msra.mxu0 0.0
    %194 = vmatprep.subr.mxu0 0.0
    %195 = vmatpush1.msra.mxu0 0.0
    %196 = vmatprep.subr.mxu0 0.0
    %197 = vmatpush1.msra.mxu0 0.0
    %198 = vmatprep.mubr.f32.mxu0 0.0
    %199 = vmatmul.mubr.f32.gmra.mrb[0].mxu0 %v113
    %v200 = vpop.f32.mrb[0].mxu0
    %v201 = vadd.f32 %v104, %v200
    %v202 = vpop.f32.mrb[0].mxu0
    %v203 = vadd.f32 %v108, %v202
    %204 = vmatprep.mubr.f32.mxu0 0.0
    %205 = vmatmul.mubr.f32.gmra.mrb[0].mxu0 %v116
    %v206 = vpop.f32.mrb[0].mxu0
    %v207 = vadd.f32 %v104, %v206
    %v208 = vpop.f32.mrb[0].mxu0
    %v209 = vadd.f32 %v108, %v208
    %210 = vmatprep.mubr.f32.mxu0 0.0
    %211 = vmatmul.mubr.f32.gmra.mrb[0].mxu0 %v119
    %v212 = vpop.f32.mrb[0].mxu0
    %v213 = vadd.f32 %v104, %v212
    %v214 = vpop.f32.mrb[0].mxu0
    %v215 = vadd.f32 %v108, %v214
    %216 = vmatprep.mubr.f32.mxu0 0.0
    %217 = vmatmul.mubr.f32.gmra.mrb[0].mxu0 %v122
    %v218 = vpop.f32.mrb[0].mxu0
    %v219 = vadd.f32 %v104, %v218
    %v220 = vpop.f32.mrb[0].mxu0
    %v221 = vadd.f32 %v108, %v220
    %222 = vmatprep.mubr.f32.mxu0 0.0
    %223 = vmatmul.mubr.f32.gmra.mrb[0].mxu0 %v125
    %v224 = vpop.f32.mrb[0].mxu0
    %v225 = vadd.f32 %v104, %v224
    %v226 = vpop.f32.mrb[0].mxu0
    %v227 = vadd.f32 %v108, %v226
    %228 = vdwg.mxu0
    %v229 = vld [vmem:[%s3] sm:$0xff]
    %v230 = vld [vmem:[%s3 + $0x8] sm:$0xff]
    %v231 = vld [vmem:[%s3 + $0x10] sm:$0xff]
    %v232 = vld [vmem:[%s3 + $0x18] sm:$0xff]
    %s233 = scalar_lea.vmem %s3, 32
    %v234 = vld [vmem:[%s233] sm:$0xff]
    %v235 = vld [vmem:[%s233 + $0x8] sm:$0xff]
    %v236 = vld [vmem:[%s233 + $0x10] sm:$0xff]
    %v237 = vld [vmem:[%s233 + $0x18] sm:$0xff]
    %v238 = vld [vmem:[%s4] sm:$0x1]
    %v239 = vld [vmem:[%s4 + $0x1] sm:$0x1]
    %v240 = vlaneseq
    %v241 = vshrl.u32 %v240, 7
    %v242 = vsub.s32 0, %v241
    %v243 = vrot.slane %v238, %v242
    %vm244 = vcmask 261120
    %v246 = vsel %vm244, 0.0, 0
    %248 = vmatprep.subr.mxu0 0.0
    %249 = vmatpush1.msra.mxu0 %v229
    %250 = vmatprep.subr.mxu0 0.0
    %251 = vmatpush1.msra.mxu0 %v230
    %252 = vmatprep.subr.mxu0 0.0
    %253 = vmatpush1.msra.mxu0 %v231
    %254 = vmatprep.subr.mxu0 0.0
    %255 = vmatpush1.msra.mxu0 %v232
    %256 = vmatprep.subr.mxu0 0.0
    %257 = vmatpush1.msra.mxu0 0.0
    %258 = vmatprep.subr.mxu0 0.0
    %259 = vmatpush1.msra.mxu0 0.0
    %260 = vmatprep.subr.mxu0 0.0
    %261 = vmatpush1.msra.mxu0 0.0
    %262 = vmatprep.subr.mxu0 0.0
    %263 = vmatpush1.msra.mxu0 0.0
    %264 = vmatprep.subr.mxu0 0.0
    %265 = vmatpush1.msra.mxu0 0.0
    %266 = vmatprep.subr.mxu0 0.0
    %267 = vmatpush1.msra.mxu0 0.0
    %268 = vmatprep.subr.mxu0 0.0
    %269 = vmatpush1.msra.mxu0 0.0
    %270 = vmatprep.subr.mxu0 0.0
    %271 = vmatpush1.msra.mxu0 0.0
    %272 = vmatprep.subr.mxu0 0.0
    %273 = vmatpush1.msra.mxu0 0.0
    %274 = vmatprep.subr.mxu0 0.0
    %275 = vmatpush1.msra.mxu0 0.0
    %276 = vmatprep.subr.mxu0 0.0
    %277 = vmatpush1.msra.mxu0 0.0
    %278 = vmatprep.subr.mxu0 0.0
    %279 = vmatpush1.msra.mxu0 0.0
    %280 = vmatprep.subr.mxu0 0.0
    %281 = vmatpush1.msra.mxu0 0.0
    %282 = vmatprep.subr.mxu0 0.0
    %283 = vmatpush1.msra.mxu0 0.0
    %284 = vmatprep.subr.mxu0 0.0
    %285 = vmatpush1.msra.mxu0 0.0
    %286 = vmatprep.subr.mxu0 0.0
    %287 = vmatpush1.msra.mxu0 0.0
    %288 = vmatprep.subr.mxu0 0.0
    %289 = vmatpush1.msra.mxu0 0.0
    %290 = vmatprep.subr.mxu0 0.0
    %291 = vmatpush1.msra.mxu0 0.0
    %292 = vmatprep.subr.mxu0 0.0
    %293 = vmatpush1.msra.mxu0 0.0
    %294 = vmatprep.subr.mxu0 0.0
    %295 = vmatpush1.msra.mxu0 0.0
    %296 = vmatprep.subr.mxu0 0.0
    %297 = vmatpush1.msra.mxu0 0.0
    %298 = vmatprep.subr.mxu0 0.0
    %299 = vmatpush1.msra.mxu0 0.0
    %300 = vmatprep.subr.mxu0 0.0
    %301 = vmatpush1.msra.mxu0 0.0
    %302 = vmatprep.subr.mxu0 0.0
    %303 = vmatpush1.msra.mxu0 0.0
    %304 = vmatprep.subr.mxu0 0.0
    %305 = vmatpush1.msra.mxu0 0.0
    %306 = vmatprep.subr.mxu0 0.0
    %307 = vmatpush1.msra.mxu0 0.0
    %308 = vmatprep.subr.mxu0 0.0
    %309 = vmatpush1.msra.mxu0 0.0
    %310 = vmatprep.subr.mxu0 0.0
    %311 = vmatpush1.msra.mxu0 0.0
    %312 = vmatprep.mubr.f32.mxu0 0.0
    %313 = vmatmul.mubr.f32.gmra.mrb[0].mxu0 %v246
    %v314 = vpop.f32.mrb[0].mxu0
    %v315 = vadd.f32 %v243, %v314
    %v316 = vpop.f32.mrb[0].mxu0
    %317 = vdwg.mxu0
    %v318 = vadd.f32 %v201, %v315
    %v319 = vxor.u32 %v318, 2147483648
    %v320 = vmul.f32 %v319, 1.442695
    %v321 = vpow.pop %v320
    %v322 = vadd.f32 %v321, 1.0
    %v323 = vrcp.pop %v322
    %v324 = vmul.f32 1.0, %v323
    %326 = vrot.lane.b32.xlu0 %v315, 64
    %v327 = vpop.permute.xlu0 %326
    %v329 = vmul.f32 %v324, %v327
    %331 = vrot.lane.b32.xlu0 %v329, 64
    %v332 = vpop.permute.xlu0 %331
    %v334 = vadd.f32 %v201, %v332
    %v335 = vtanh.pop %v334
    %v336 = vsub.f32 1.0, %v324
    %338 = vrot.lane.b32.xlu0 %v335, 96
    %v339 = vpop.permute.xlu0 %338
    %v341 = vmul.f32 %v336, %v339
    %v342 = vmul.f32 %v324, 0.0
    %v343 = vadd.f32 %v341, %v342
    %345 = vrot.lane.b32.xlu0 %v343, 96
    %v346 = vpop.permute.xlu0 %345
    %v347 = vsel %vm244, %v346, 0
    %349 = vmatprep.subr.mxu0 0.0
    %350 = vmatpush1.msra.mxu0 %v229
    %351 = vmatprep.subr.mxu0 0.0
    %352 = vmatpush1.msra.mxu0 %v230
    %353 = vmatprep.subr.mxu0 0.0
    %354 = vmatpush1.msra.mxu0 %v231
    %355 = vmatprep.subr.mxu0 0.0
    %356 = vmatpush1.msra.mxu0 %v232
    %357 = vmatprep.subr.mxu0 0.0
    %358 = vmatpush1.msra.mxu0 0.0
    %359 = vmatprep.subr.mxu0 0.0
    %360 = vmatpush1.msra.mxu0 0.0
    %361 = vmatprep.subr.mxu0 0.0
    %362 = vmatpush1.msra.mxu0 0.0
    %363 = vmatprep.subr.mxu0 0.0
    %364 = vmatpush1.msra.mxu0 0.0
    %365 = vmatprep.subr.mxu0 0.0
    %366 = vmatpush1.msra.mxu0 0.0
    %367 = vmatprep.subr.mxu0 0.0
    %368 = vmatpush1.msra.mxu0 0.0
    %369 = vmatprep.subr.mxu0 0.0
    %370 = vmatpush1.msra.mxu0 0.0
    %371 = vmatprep.subr.mxu0 0.0
    %372 = vmatpush1.msra.mxu0 0.0
    %373 = vmatprep.subr.mxu0 0.0
    %374 = vmatpush1.msra.mxu0 0.0
    %375 = vmatprep.subr.mxu0 0.0
    %376 = vmatpush1.msra.mxu0 0.0
    %377 = vmatprep.subr.mxu0 0.0
    %378 = vmatpush1.msra.mxu0 0.0
    %379 = vmatprep.subr.mxu0 0.0
    %380 = vmatpush1.msra.mxu0 0.0
    %381 = vmatprep.subr.mxu0 0.0
    %382 = vmatpush1.msra.mxu0 0.0
    %383 = vmatprep.subr.mxu0 0.0
    %384 = vmatpush1.msra.mxu0 0.0
    %385 = vmatprep.subr.mxu0 0.0
    %386 = vmatpush1.msra.mxu0 0.0
    %387 = vmatprep.subr.mxu0 0.0
    %388 = vmatpush1.msra.mxu0 0.0
    %389 = vmatprep.subr.mxu0 0.0
    %390 = vmatpush1.msra.mxu0 0.0
    %391 = vmatprep.subr.mxu0 0.0
    %392 = vmatpush1.msra.mxu0 0.0
    %393 = vmatprep.subr.mxu0 0.0
    %394 = vmatpush1.msra.mxu0 0.0
    %395 = vmatprep.subr.mxu0 0.0
    %396 = vmatpush1.msra.mxu0 0.0
    %397 = vmatprep.subr.mxu0 0.0
    %398 = vmatpush1.msra.mxu0 0.0
    %399 = vmatprep.subr.mxu0 0.0
    %400 = vmatpush1.msra.mxu0 0.0
    %401 = vmatprep.subr.mxu0 0.0
    %402 = vmatpush1.msra.mxu0 0.0
    %403 = vmatprep.subr.mxu0 0.0
    %404 = vmatpush1.msra.mxu0 0.0
    %405 = vmatprep.subr.mxu0 0.0
    %406 = vmatpush1.msra.mxu0 0.0
    %407 = vmatprep.subr.mxu0 0.0
    %408 = vmatpush1.msra.mxu0 0.0
    %409 = vmatprep.subr.mxu0 0.0
    %410 = vmatpush1.msra.mxu0 0.0
    %411 = vmatprep.subr.mxu0 0.0
    %412 = vmatpush1.msra.mxu0 0.0
    %413 = vmatprep.mubr.f32.mxu0 0.0
    %414 = vmatmul.mubr.f32.gmra.mrb[0].mxu0 %v347
    %v415 = vpop.f32.mrb[0].mxu0
    %v416 = vadd.f32 %v243, %v415
    %v417 = vpop.f32.mrb[0].mxu0
    %418 = vdwg.mxu0
    %v419 = vadd.f32 %v207, %v416
    %v420 = vxor.u32 %v419, 2147483648
    %v421 = vmul.f32 %v420, 1.442695
    %v422 = vpow.pop %v421
    %v423 = vadd.f32 %v422, 1.0
    %v424 = vrcp.pop %v423
    %v425 = vmul.f32 1.0, %v424
    %427 = vrot.lane.b32.xlu0 %v416, 64
    %v428 = vpop.permute.xlu0 %427
    %v430 = vmul.f32 %v425, %v428
    %432 = vrot.lane.b32.xlu0 %v430, 64
    %v433 = vpop.permute.xlu0 %432
    %v435 = vadd.f32 %v207, %v433
    %v436 = vtanh.pop %v435
    %v437 = vsub.f32 1.0, %v425
    %439 = vrot.lane.b32.xlu0 %v436, 96
    %v440 = vpop.permute.xlu0 %439
    %v442 = vmul.f32 %v437, %v440
    %v443 = vmul.f32 %v425, %v343
    %v444 = vadd.f32 %v442, %v443
    %446 = vrot.lane.b32.xlu0 %v444, 96
    %v447 = vpop.permute.xlu0 %446
    %v448 = vsel %vm244, %v447, 0
    %450 = vmatprep.subr.mxu0 0.0
    %451 = vmatpush1.msra.mxu0 %v229
    %452 = vmatprep.subr.mxu0 0.0
    %453 = vmatpush1.msra.mxu0 %v230
    %454 = vmatprep.subr.mxu0 0.0
    %455 = vmatpush1.msra.mxu0 %v231
    %456 = vmatprep.subr.mxu0 0.0
    %457 = vmatpush1.msra.mxu0 %v232
    %458 = vmatprep.subr.mxu0 0.0
    %459 = vmatpush1.msra.mxu0 0.0
    %460 = vmatprep.subr.mxu0 0.0
    %461 = vmatpush1.msra.mxu0 0.0
    %462 = vmatprep.subr.mxu0 0.0
    %463 = vmatpush1.msra.mxu0 0.0
    %464 = vmatprep.subr.mxu0 0.0
    %465 = vmatpush1.msra.mxu0 0.0
    %466 = vmatprep.subr.mxu0 0.0
    %467 = vmatpush1.msra.mxu0 0.0
    %468 = vmatprep.subr.mxu0 0.0
    %469 = vmatpush1.msra.mxu0 0.0
    %470 = vmatprep.subr.mxu0 0.0
    %471 = vmatpush1.msra.mxu0 0.0
    %472 = vmatprep.subr.mxu0 0.0
    %473 = vmatpush1.msra.mxu0 0.0
    %474 = vmatprep.subr.mxu0 0.0
    %475 = vmatpush1.msra.mxu0 0.0
    %476 = vmatprep.subr.mxu0 0.0
    %477 = vmatpush1.msra.mxu0 0.0
    %478 = vmatprep.subr.mxu0 0.0
    %479 = vmatpush1.msra.mxu0 0.0
    %480 = vmatprep.subr.mxu0 0.0
    %481 = vmatpush1.msra.mxu0 0.0
    %482 = vmatprep.subr.mxu0 0.0
    %483 = vmatpush1.msra.mxu0 0.0
    %484 = vmatprep.subr.mxu0 0.0
    %485 = vmatpush1.msra.mxu0 0.0
    %486 = vmatprep.subr.mxu0 0.0
    %487 = vmatpush1.msra.mxu0 0.0
    %488 = vmatprep.subr.mxu0 0.0
    %489 = vmatpush1.msra.mxu0 0.0
    %490 = vmatprep.subr.mxu0 0.0
    %491 = vmatpush1.msra.mxu0 0.0
    %492 = vmatprep.subr.mxu0 0.0
    %493 = vmatpush1.msra.mxu0 0.0
    %494 = vmatprep.subr.mxu0 0.0
    %495 = vmatpush1.msra.mxu0 0.0
    %496 = vmatprep.subr.mxu0 0.0
    %497 = vmatpush1.msra.mxu0 0.0
    %498 = vmatprep.subr.mxu0 0.0
    %499 = vmatpush1.msra.mxu0 0.0
    %500 = vmatprep.subr.mxu0 0.0
    %501 = vmatpush1.msra.mxu0 0.0
    %502 = vmatprep.subr.mxu0 0.0
    %503 = vmatpush1.msra.mxu0 0.0
    %504 = vmatprep.subr.mxu0 0.0
    %505 = vmatpush1.msra.mxu0 0.0
    %506 = vmatprep.subr.mxu0 0.0
    %507 = vmatpush1.msra.mxu0 0.0
    %508 = vmatprep.subr.mxu0 0.0
    %509 = vmatpush1.msra.mxu0 0.0
    %510 = vmatprep.subr.mxu0 0.0
    %511 = vmatpush1.msra.mxu0 0.0
    %512 = vmatprep.subr.mxu0 0.0
    %513 = vmatpush1.msra.mxu0 0.0
    %514 = vmatprep.mubr.f32.mxu0 0.0
    %515 = vmatmul.mubr.f32.gmra.mrb[0].mxu0 %v448
    %v516 = vpop.f32.mrb[0].mxu0
    %v517 = vadd.f32 %v243, %v516
    %v518 = vpop.f32.mrb[0].mxu0
    %519 = vdwg.mxu0
    %v520 = vadd.f32 %v213, %v517
    %v521 = vxor.u32 %v520, 2147483648
    %v522 = vmul.f32 %v521, 1.442695
    %v523 = vpow.pop %v522
    %v524 = vadd.f32 %v523, 1.0
    %v525 = vrcp.pop %v524
    %v526 = vmul.f32 1.0, %v525
    %528 = vrot.lane.b32.xlu0 %v517, 64
    %v529 = vpop.permute.xlu0 %528
    %v531 = vmul.f32 %v526, %v529
    %533 = vrot.lane.b32.xlu0 %v531, 64
    %v534 = vpop.permute.xlu0 %533
    %v536 = vadd.f32 %v213, %v534
    %v537 = vtanh.pop %v536
    %v538 = vsub.f32 1.0, %v526
    %540 = vrot.lane.b32.xlu0 %v537, 96
    %v541 = vpop.permute.xlu0 %540
    %v543 = vmul.f32 %v538, %v541
    %v544 = vmul.f32 %v526, %v444
    %v545 = vadd.f32 %v543, %v544
    %547 = vrot.lane.b32.xlu0 %v545, 96
    %v548 = vpop.permute.xlu0 %547
    %v549 = vsel %vm244, %v548, 0
    %551 = vmatprep.subr.mxu0 0.0
    %552 = vmatpush1.msra.mxu0 %v229
    %553 = vmatprep.subr.mxu0 0.0
    %554 = vmatpush1.msra.mxu0 %v230
    %555 = vmatprep.subr.mxu0 0.0
    %556 = vmatpush1.msra.mxu0 %v231
    %557 = vmatprep.subr.mxu0 0.0
    %558 = vmatpush1.msra.mxu0 %v232
    %559 = vmatprep.subr.mxu0 0.0
    %560 = vmatpush1.msra.mxu0 0.0
    %561 = vmatprep.subr.mxu0 0.0
    %562 = vmatpush1.msra.mxu0 0.0
    %563 = vmatprep.subr.mxu0 0.0
    %564 = vmatpush1.msra.mxu0 0.0
    %565 = vmatprep.subr.mxu0 0.0
    %566 = vmatpush1.msra.mxu0 0.0
    %567 = vmatprep.subr.mxu0 0.0
    %568 = vmatpush1.msra.mxu0 0.0
    %569 = vmatprep.subr.mxu0 0.0
    %570 = vmatpush1.msra.mxu0 0.0
    %571 = vmatprep.subr.mxu0 0.0
    %572 = vmatpush1.msra.mxu0 0.0
    %573 = vmatprep.subr.mxu0 0.0
    %574 = vmatpush1.msra.mxu0 0.0
    %575 = vmatprep.subr.mxu0 0.0
    %576 = vmatpush1.msra.mxu0 0.0
    %577 = vmatprep.subr.mxu0 0.0
    %578 = vmatpush1.msra.mxu0 0.0
    %579 = vmatprep.subr.mxu0 0.0
    %580 = vmatpush1.msra.mxu0 0.0
    %581 = vmatprep.subr.mxu0 0.0
    %582 = vmatpush1.msra.mxu0 0.0
    %583 = vmatprep.subr.mxu0 0.0
    %584 = vmatpush1.msra.mxu0 0.0
    %585 = vmatprep.subr.mxu0 0.0
    %586 = vmatpush1.msra.mxu0 0.0
    %587 = vmatprep.subr.mxu0 0.0
    %588 = vmatpush1.msra.mxu0 0.0
    %589 = vmatprep.subr.mxu0 0.0
    %590 = vmatpush1.msra.mxu0 0.0
    %591 = vmatprep.subr.mxu0 0.0
    %592 = vmatpush1.msra.mxu0 0.0
    %593 = vmatprep.subr.mxu0 0.0
    %594 = vmatpush1.msra.mxu0 0.0
    %595 = vmatprep.subr.mxu0 0.0
    %596 = vmatpush1.msra.mxu0 0.0
    %597 = vmatprep.subr.mxu0 0.0
    %598 = vmatpush1.msra.mxu0 0.0
    %599 = vmatprep.subr.mxu0 0.0
    %600 = vmatpush1.msra.mxu0 0.0
    %601 = vmatprep.subr.mxu0 0.0
    %602 = vmatpush1.msra.mxu0 0.0
    %603 = vmatprep.subr.mxu0 0.0
    %604 = vmatpush1.msra.mxu0 0.0
    %605 = vmatprep.subr.mxu0 0.0
    %606 = vmatpush1.msra.mxu0 0.0
    %607 = vmatprep.subr.mxu0 0.0
    %608 = vmatpush1.msra.mxu0 0.0
    %609 = vmatprep.subr.mxu0 0.0
    %610 = vmatpush1.msra.mxu0 0.0
    %611 = vmatprep.subr.mxu0 0.0
    %612 = vmatpush1.msra.mxu0 0.0
    %613 = vmatprep.subr.mxu0 0.0
    %614 = vmatpush1.msra.mxu0 0.0
    %615 = vmatprep.mubr.f32.mxu0 0.0
    %616 = vmatmul.mubr.f32.gmra.mrb[0].mxu0 %v549
    %v617 = vpop.f32.mrb[0].mxu0
    %v618 = vadd.f32 %v243, %v617
    %v619 = vpop.f32.mrb[0].mxu0
    %620 = vdwg.mxu0
    %v621 = vadd.f32 %v219, %v618
    %v622 = vxor.u32 %v621, 2147483648
    %v623 = vmul.f32 %v622, 1.442695
    %v624 = vpow.pop %v623
    %v625 = vadd.f32 %v624, 1.0
    %v626 = vrcp.pop %v625
    %v627 = vmul.f32 1.0, %v626
    %629 = vrot.lane.b32.xlu0 %v618, 64
    %v630 = vpop.permute.xlu0 %629
    %v632 = vmul.f32 %v627, %v630
    %634 = vrot.lane.b32.xlu0 %v632, 64
    %v635 = vpop.permute.xlu0 %634
    %v637 = vadd.f32 %v219, %v635
    %v638 = vtanh.pop %v637
    %v639 = vsub.f32 1.0, %v627
    %641 = vrot.lane.b32.xlu0 %v638, 96
    %v642 = vpop.permute.xlu0 %641
    %v644 = vmul.f32 %v639, %v642
    %v645 = vmul.f32 %v627, %v545
    %v646 = vadd.f32 %v644, %v645
    %648 = vrot.lane.b32.xlu0 %v646, 96
    %v649 = vpop.permute.xlu0 %648
    %v650 = vsel %vm244, %v649, 0
    %652 = vmatprep.subr.mxu0 0.0
    %653 = vmatpush1.msra.mxu0 %v229
    %654 = vmatprep.subr.mxu0 0.0
    %655 = vmatpush1.msra.mxu0 %v230
    %656 = vmatprep.subr.mxu0 0.0
    %657 = vmatpush1.msra.mxu0 %v231
    %658 = vmatprep.subr.mxu0 0.0
    %659 = vmatpush1.msra.mxu0 %v232
    %660 = vmatprep.subr.mxu0 0.0
    %661 = vmatpush1.msra.mxu0 0.0
    %662 = vmatprep.subr.mxu0 0.0
    %663 = vmatpush1.msra.mxu0 0.0
    %664 = vmatprep.subr.mxu0 0.0
    %665 = vmatpush1.msra.mxu0 0.0
    %666 = vmatprep.subr.mxu0 0.0
    %667 = vmatpush1.msra.mxu0 0.0
    %668 = vmatprep.subr.mxu0 0.0
    %669 = vmatpush1.msra.mxu0 0.0
    %670 = vmatprep.subr.mxu0 0.0
    %671 = vmatpush1.msra.mxu0 0.0
    %672 = vmatprep.subr.mxu0 0.0
    %673 = vmatpush1.msra.mxu0 0.0
    %674 = vmatprep.subr.mxu0 0.0
    %675 = vmatpush1.msra.mxu0 0.0
    %676 = vmatprep.subr.mxu0 0.0
    %677 = vmatpush1.msra.mxu0 0.0
    %678 = vmatprep.subr.mxu0 0.0
    %679 = vmatpush1.msra.mxu0 0.0
    %680 = vmatprep.subr.mxu0 0.0
    %681 = vmatpush1.msra.mxu0 0.0
    %682 = vmatprep.subr.mxu0 0.0
    %683 = vmatpush1.msra.mxu0 0.0
    %684 = vmatprep.subr.mxu0 0.0
    %685 = vmatpush1.msra.mxu0 0.0
    %686 = vmatprep.subr.mxu0 0.0
    %687 = vmatpush1.msra.mxu0 0.0
    %688 = vmatprep.subr.mxu0 0.0
    %689 = vmatpush1.msra.mxu0 0.0
    %690 = vmatprep.subr.mxu0 0.0
    %691 = vmatpush1.msra.mxu0 0.0
    %692 = vmatprep.subr.mxu0 0.0
    %693 = vmatpush1.msra.mxu0 0.0
    %694 = vmatprep.subr.mxu0 0.0
    %695 = vmatpush1.msra.mxu0 0.0
    %696 = vmatprep.subr.mxu0 0.0
    %697 = vmatpush1.msra.mxu0 0.0
    %698 = vmatprep.subr.mxu0 0.0
    %699 = vmatpush1.msra.mxu0 0.0
    %700 = vmatprep.subr.mxu0 0.0
    %701 = vmatpush1.msra.mxu0 0.0
    %702 = vmatprep.subr.mxu0 0.0
    %703 = vmatpush1.msra.mxu0 0.0
    %704 = vmatprep.subr.mxu0 0.0
    %705 = vmatpush1.msra.mxu0 0.0
    %706 = vmatprep.subr.mxu0 0.0
    %707 = vmatpush1.msra.mxu0 0.0
    %708 = vmatprep.subr.mxu0 0.0
    %709 = vmatpush1.msra.mxu0 0.0
    %710 = vmatprep.subr.mxu0 0.0
    %711 = vmatpush1.msra.mxu0 0.0
    %712 = vmatprep.subr.mxu0 0.0
    %713 = vmatpush1.msra.mxu0 0.0
    %714 = vmatprep.subr.mxu0 0.0
    %715 = vmatpush1.msra.mxu0 0.0
    %716 = vmatprep.mubr.f32.mxu0 0.0
    %717 = vmatmul.mubr.f32.gmra.mrb[0].mxu0 %v650
    %v718 = vpop.f32.mrb[0].mxu0
    %v719 = vadd.f32 %v243, %v718
    %v720 = vpop.f32.mrb[0].mxu0
    %721 = vdwg.mxu0
    %v722 = vadd.f32 %v225, %v719
    %v723 = vxor.u32 %v722, 2147483648
    %v724 = vmul.f32 %v723, 1.442695
    %v725 = vpow.pop %v724
    %v726 = vadd.f32 %v725, 1.0
    %v727 = vrcp.pop %v726
    %v728 = vmul.f32 1.0, %v727
    %730 = vrot.lane.b32.xlu0 %v719, 64
    %v731 = vpop.permute.xlu0 %730
    %v733 = vmul.f32 %v728, %v731
    %735 = vrot.lane.b32.xlu0 %v733, 64
    %v736 = vpop.permute.xlu0 %735
    %v738 = vadd.f32 %v225, %v736
    %v739 = vtanh.pop %v738
    %v740 = vsub.f32 1.0, %v728
    %742 = vrot.lane.b32.xlu0 %v739, 96
    %v743 = vpop.permute.xlu0 %742
    %v745 = vmul.f32 %v740, %v743
    %v746 = vmul.f32 %v728, %v646
    %v747 = vadd.f32 %v745, %v746
    %v748 = vlaneseq
    %v749 = vshrl.u32 %v748, 7
    %v750 = vsub.s32 0, %v749
    %v751 = vrot.slane %v239, %v750
    %752 = vmatprep.subr.mxu0 0.0
    %753 = vmatpush1.msra.mxu0 %v234
    %754 = vmatprep.subr.mxu0 0.0
    %755 = vmatpush1.msra.mxu0 %v235
    %756 = vmatprep.subr.mxu0 0.0
    %757 = vmatpush1.msra.mxu0 %v236
    %758 = vmatprep.subr.mxu0 0.0
    %759 = vmatpush1.msra.mxu0 %v237
    %760 = vmatprep.subr.mxu0 0.0
    %761 = vmatpush1.msra.mxu0 0.0
    %762 = vmatprep.subr.mxu0 0.0
    %763 = vmatpush1.msra.mxu0 0.0
    %764 = vmatprep.subr.mxu0 0.0
    %765 = vmatpush1.msra.mxu0 0.0
    %766 = vmatprep.subr.mxu0 0.0
    %767 = vmatpush1.msra.mxu0 0.0
    %768 = vmatprep.subr.mxu0 0.0
    %769 = vmatpush1.msra.mxu0 0.0
    %770 = vmatprep.subr.mxu0 0.0
    %771 = vmatpush1.msra.mxu0 0.0
    %772 = vmatprep.subr.mxu0 0.0
    %773 = vmatpush1.msra.mxu0 0.0
    %774 = vmatprep.subr.mxu0 0.0
    %775 = vmatpush1.msra.mxu0 0.0
    %776 = vmatprep.subr.mxu0 0.0
    %777 = vmatpush1.msra.mxu0 0.0
    %778 = vmatprep.subr.mxu0 0.0
    %779 = vmatpush1.msra.mxu0 0.0
    %780 = vmatprep.subr.mxu0 0.0
    %781 = vmatpush1.msra.mxu0 0.0
    %782 = vmatprep.subr.mxu0 0.0
    %783 = vmatpush1.msra.mxu0 0.0
    %784 = vmatprep.subr.mxu0 0.0
    %785 = vmatpush1.msra.mxu0 0.0
    %786 = vmatprep.subr.mxu0 0.0
    %787 = vmatpush1.msra.mxu0 0.0
    %788 = vmatprep.subr.mxu0 0.0
    %789 = vmatpush1.msra.mxu0 0.0
    %790 = vmatprep.subr.mxu0 0.0
    %791 = vmatpush1.msra.mxu0 0.0
    %792 = vmatprep.subr.mxu0 0.0
    %793 = vmatpush1.msra.mxu0 0.0
    %794 = vmatprep.subr.mxu0 0.0
    %795 = vmatpush1.msra.mxu0 0.0
    %796 = vmatprep.subr.mxu0 0.0
    %797 = vmatpush1.msra.mxu0 0.0
    %798 = vmatprep.subr.mxu0 0.0
    %799 = vmatpush1.msra.mxu0 0.0
    %800 = vmatprep.subr.mxu0 0.0
    %801 = vmatpush1.msra.mxu0 0.0
    %802 = vmatprep.subr.mxu0 0.0
    %803 = vmatpush1.msra.mxu0 0.0
    %804 = vmatprep.subr.mxu0 0.0
    %805 = vmatpush1.msra.mxu0 0.0
    %806 = vmatprep.subr.mxu0 0.0
    %807 = vmatpush1.msra.mxu0 0.0
    %808 = vmatprep.subr.mxu0 0.0
    %809 = vmatpush1.msra.mxu0 0.0
    %810 = vmatprep.subr.mxu0 0.0
    %811 = vmatpush1.msra.mxu0 0.0
    %812 = vmatprep.subr.mxu0 0.0
    %813 = vmatpush1.msra.mxu0 0.0
    %814 = vmatprep.subr.mxu0 0.0
    %815 = vmatpush1.msra.mxu0 0.0
    %816 = vmatprep.mubr.f32.mxu0 0.0
    %817 = vmatmul.mubr.f32.gmra.mrb[0].mxu0 %v246
    %v818 = vpop.f32.mrb[0].mxu0
    %v819 = vadd.f32 %v751, %v818
    %v820 = vpop.f32.mrb[0].mxu0
    %821 = vdwg.mxu0
    %823 = vrot.lane.b32.xlu0 %v819, 96
    %v824 = vpop.permute.xlu0 %823
    %v826 = vadd.f32 %v225, %v824
    %v827 = vxor.u32 %v826, 2147483648
    %v828 = vmul.f32 %v827, 1.442695
    %v829 = vpow.pop %v828
    %v830 = vadd.f32 %v829, 1.0
    %v831 = vrcp.pop %v830
    %v832 = vmul.f32 1.0, %v831
    %v833 = vadd.f32 %v227, %v824
    %v834 = vxor.u32 %v833, 2147483648
    %v835 = vmul.f32 %v834, 1.442695
    %v836 = vpow.pop %v835
    %v837 = vadd.f32 %v836, 1.0
    %v838 = vrcp.pop %v837
    %v839 = vmul.f32 1.0, %v838
    %840 = vrot.lane.b32.xlu0 %v819, 32
    %v841 = vpop.permute.xlu0 %840
    %v843 = vmul.f32 %v832, %v841
    %845 = vrot.lane.b32.xlu0 %v843, 64
    %v846 = vpop.permute.xlu0 %845
    %v848 = vadd.f32 %v227, %v846
    %v849 = vtanh.pop %v848
    %v850 = vsub.f32 1.0, %v839
    %852 = vrot.lane.b32.xlu0 %v849, 96
    %v853 = vpop.permute.xlu0 %852
    %v855 = vmul.f32 %v850, %v853
    %v856 = vmul.f32 %v839, 0.0
    %v857 = vadd.f32 %v855, %v856
    %v859 = vsel %vm244, %v857, 0
    %861 = vmatprep.subr.mxu0 0.0
    %862 = vmatpush1.msra.mxu0 %v234
    %863 = vmatprep.subr.mxu0 0.0
    %864 = vmatpush1.msra.mxu0 %v235
    %865 = vmatprep.subr.mxu0 0.0
    %866 = vmatpush1.msra.mxu0 %v236
    %867 = vmatprep.subr.mxu0 0.0
    %868 = vmatpush1.msra.mxu0 %v237
    %869 = vmatprep.subr.mxu0 0.0
    %870 = vmatpush1.msra.mxu0 0.0
    %871 = vmatprep.subr.mxu0 0.0
    %872 = vmatpush1.msra.mxu0 0.0
    %873 = vmatprep.subr.mxu0 0.0
    %874 = vmatpush1.msra.mxu0 0.0
    %875 = vmatprep.subr.mxu0 0.0
    %876 = vmatpush1.msra.mxu0 0.0
    %877 = vmatprep.subr.mxu0 0.0
    %878 = vmatpush1.msra.mxu0 0.0
    %879 = vmatprep.subr.mxu0 0.0
    %880 = vmatpush1.msra.mxu0 0.0
    %881 = vmatprep.subr.mxu0 0.0
    %882 = vmatpush1.msra.mxu0 0.0
    %883 = vmatprep.subr.mxu0 0.0
    %884 = vmatpush1.msra.mxu0 0.0
    %885 = vmatprep.subr.mxu0 0.0
    %886 = vmatpush1.msra.mxu0 0.0
    %887 = vmatprep.subr.mxu0 0.0
    %888 = vmatpush1.msra.mxu0 0.0
    %889 = vmatprep.subr.mxu0 0.0
    %890 = vmatpush1.msra.mxu0 0.0
    %891 = vmatprep.subr.mxu0 0.0
    %892 = vmatpush1.msra.mxu0 0.0
    %893 = vmatprep.subr.mxu0 0.0
    %894 = vmatpush1.msra.mxu0 0.0
    %895 = vmatprep.subr.mxu0 0.0
    %896 = vmatpush1.msra.mxu0 0.0
    %897 = vmatprep.subr.mxu0 0.0
    %898 = vmatpush1.msra.mxu0 0.0
    %899 = vmatprep.subr.mxu0 0.0
    %900 = vmatpush1.msra.mxu0 0.0
    %901 = vmatprep.subr.mxu0 0.0
    %902 = vmatpush1.msra.mxu0 0.0
    %903 = vmatprep.subr.mxu0 0.0
    %904 = vmatpush1.msra.mxu0 0.0
    %905 = vmatprep.subr.mxu0 0.0
    %906 = vmatpush1.msra.mxu0 0.0
    %907 = vmatprep.subr.mxu0 0.0
    %908 = vmatpush1.msra.mxu0 0.0
    %909 = vmatprep.subr.mxu0 0.0
    %910 = vmatpush1.msra.mxu0 0.0
    %911 = vmatprep.subr.mxu0 0.0
    %912 = vmatpush1.msra.mxu0 0.0
    %913 = vmatprep.subr.mxu0 0.0
    %914 = vmatpush1.msra.mxu0 0.0
    %915 = vmatprep.subr.mxu0 0.0
    %916 = vmatpush1.msra.mxu0 0.0
    %917 = vmatprep.subr.mxu0 0.0
    %918 = vmatpush1.msra.mxu0 0.0
    %919 = vmatprep.subr.mxu0 0.0
    %920 = vmatpush1.msra.mxu0 0.0
    %921 = vmatprep.subr.mxu0 0.0
    %922 = vmatpush1.msra.mxu0 0.0
    %923 = vmatprep.subr.mxu0 0.0
    %924 = vmatpush1.msra.mxu0 0.0
    %925 = vmatprep.mubr.f32.mxu0 0.0
    %926 = vmatmul.mubr.f32.gmra.mrb[0].mxu0 %v859
    %v927 = vpop.f32.mrb[0].mxu0
    %v928 = vadd.f32 %v751, %v927
    %v929 = vpop.f32.mrb[0].mxu0
    %930 = vdwg.mxu0
    %932 = vrot.lane.b32.xlu0 %v928, 96
    %v933 = vpop.permute.xlu0 %932
    %v935 = vadd.f32 %v219, %v933
    %v936 = vxor.u32 %v935, 2147483648
    %v937 = vmul.f32 %v936, 1.442695
    %v938 = vpow.pop %v937
    %v939 = vadd.f32 %v938, 1.0
    %v940 = vrcp.pop %v939
    %v941 = vmul.f32 1.0, %v940
    %v942 = vadd.f32 %v221, %v933
    %v943 = vxor.u32 %v942, 2147483648
    %v944 = vmul.f32 %v943, 1.442695
    %v945 = vpow.pop %v944
    %v946 = vadd.f32 %v945, 1.0
    %v947 = vrcp.pop %v946
    %v948 = vmul.f32 1.0, %v947
    %949 = vrot.lane.b32.xlu0 %v928, 32
    %v950 = vpop.permute.xlu0 %949
    %v952 = vmul.f32 %v941, %v950
    %954 = vrot.lane.b32.xlu0 %v952, 64
    %v955 = vpop.permute.xlu0 %954
    %v957 = vadd.f32 %v221, %v955
    %v958 = vtanh.pop %v957
    %v959 = vsub.f32 1.0, %v948
    %961 = vrot.lane.b32.xlu0 %v958, 96
    %v962 = vpop.permute.xlu0 %961
    %v964 = vmul.f32 %v959, %v962
    %v965 = vmul.f32 %v948, %v857
    %v966 = vadd.f32 %v964, %v965
    %v968 = vsel %vm244, %v966, 0
    %970 = vmatprep.subr.mxu0 0.0
    %971 = vmatpush1.msra.mxu0 %v234
    %972 = vmatprep.subr.mxu0 0.0
    %973 = vmatpush1.msra.mxu0 %v235
    %974 = vmatprep.subr.mxu0 0.0
    %975 = vmatpush1.msra.mxu0 %v236
    %976 = vmatprep.subr.mxu0 0.0
    %977 = vmatpush1.msra.mxu0 %v237
    %978 = vmatprep.subr.mxu0 0.0
    %979 = vmatpush1.msra.mxu0 0.0
    %980 = vmatprep.subr.mxu0 0.0
    %981 = vmatpush1.msra.mxu0 0.0
    %982 = vmatprep.subr.mxu0 0.0
    %983 = vmatpush1.msra.mxu0 0.0
    %984 = vmatprep.subr.mxu0 0.0
    %985 = vmatpush1.msra.mxu0 0.0
    %986 = vmatprep.subr.mxu0 0.0
    %987 = vmatpush1.msra.mxu0 0.0
    %988 = vmatprep.subr.mxu0 0.0
    %989 = vmatpush1.msra.mxu0 0.0
    %990 = vmatprep.subr.mxu0 0.0
    %991 = vmatpush1.msra.mxu0 0.0
    %992 = vmatprep.subr.mxu0 0.0
    %993 = vmatpush1.msra.mxu0 0.0
    %994 = vmatprep.subr.mxu0 0.0
    %995 = vmatpush1.msra.mxu0 0.0
    %996 = vmatprep.subr.mxu0 0.0
    %997 = vmatpush1.msra.mxu0 0.0
    %998 = vmatprep.subr.mxu0 0.0
    %999 = vmatpush1.msra.mxu0 0.0
    %1000 = vmatprep.subr.mxu0 0.0
    %1001 = vmatpush1.msra.mxu0 0.0
    %1002 = vmatprep.subr.mxu0 0.0
    %1003 = vmatpush1.msra.mxu0 0.0
    %1004 = vmatprep.subr.mxu0 0.0
    %1005 = vmatpush1.msra.mxu0 0.0
    %1006 = vmatprep.subr.mxu0 0.0
    %1007 = vmatpush1.msra.mxu0 0.0
    %1008 = vmatprep.subr.mxu0 0.0
    %1009 = vmatpush1.msra.mxu0 0.0
    %1010 = vmatprep.subr.mxu0 0.0
    %1011 = vmatpush1.msra.mxu0 0.0
    %1012 = vmatprep.subr.mxu0 0.0
    %1013 = vmatpush1.msra.mxu0 0.0
    %1014 = vmatprep.subr.mxu0 0.0
    %1015 = vmatpush1.msra.mxu0 0.0
    %1016 = vmatprep.subr.mxu0 0.0
    %1017 = vmatpush1.msra.mxu0 0.0
    %1018 = vmatprep.subr.mxu0 0.0
    %1019 = vmatpush1.msra.mxu0 0.0
    %1020 = vmatprep.subr.mxu0 0.0
    %1021 = vmatpush1.msra.mxu0 0.0
    %1022 = vmatprep.subr.mxu0 0.0
    %1023 = vmatpush1.msra.mxu0 0.0
    %1024 = vmatprep.subr.mxu0 0.0
    %1025 = vmatpush1.msra.mxu0 0.0
    %1026 = vmatprep.subr.mxu0 0.0
    %1027 = vmatpush1.msra.mxu0 0.0
    %1028 = vmatprep.subr.mxu0 0.0
    %1029 = vmatpush1.msra.mxu0 0.0
    %1030 = vmatprep.subr.mxu0 0.0
    %1031 = vmatpush1.msra.mxu0 0.0
    %1032 = vmatprep.subr.mxu0 0.0
    %1033 = vmatpush1.msra.mxu0 0.0
    %1034 = vmatprep.mubr.f32.mxu0 0.0
    %1035 = vmatmul.mubr.f32.gmra.mrb[0].mxu0 %v968
    %v1036 = vpop.f32.mrb[0].mxu0
    %v1037 = vadd.f32 %v751, %v1036
    %v1038 = vpop.f32.mrb[0].mxu0
    %1039 = vdwg.mxu0
    %1041 = vrot.lane.b32.xlu0 %v1037, 96
    %v1042 = vpop.permute.xlu0 %1041
    %v1044 = vadd.f32 %v213, %v1042
    %v1045 = vxor.u32 %v1044, 2147483648
    %v1046 = vmul.f32 %v1045, 1.442695
    %v1047 = vpow.pop %v1046
    %v1048 = vadd.f32 %v1047, 1.0
    %v1049 = vrcp.pop %v1048
    %v1050 = vmul.f32 1.0, %v1049
    %v1051 = vadd.f32 %v215, %v1042
    %v1052 = vxor.u32 %v1051, 2147483648
    %v1053 = vmul.f32 %v1052, 1.442695
    %v1054 = vpow.pop %v1053
    %v1055 = vadd.f32 %v1054, 1.0
    %v1056 = vrcp.pop %v1055
    %v1057 = vmul.f32 1.0, %v1056
    %1058 = vrot.lane.b32.xlu0 %v1037, 32
    %v1059 = vpop.permute.xlu0 %1058
    %v1061 = vmul.f32 %v1050, %v1059
    %1063 = vrot.lane.b32.xlu0 %v1061, 64
    %v1064 = vpop.permute.xlu0 %1063
    %v1066 = vadd.f32 %v215, %v1064
    %v1067 = vtanh.pop %v1066
    %v1068 = vsub.f32 1.0, %v1057
    %1070 = vrot.lane.b32.xlu0 %v1067, 96
    %v1071 = vpop.permute.xlu0 %1070
    %v1073 = vmul.f32 %v1068, %v1071
    %v1074 = vmul.f32 %v1057, %v966
    %v1075 = vadd.f32 %v1073, %v1074
    %v1077 = vsel %vm244, %v1075, 0
    %1079 = vmatprep.subr.mxu0 0.0
    %1080 = vmatpush1.msra.mxu0 %v234
    %1081 = vmatprep.subr.mxu0 0.0
    %1082 = vmatpush1.msra.mxu0 %v235
    %1083 = vmatprep.subr.mxu0 0.0
    %1084 = vmatpush1.msra.mxu0 %v236
    %1085 = vmatprep.subr.mxu0 0.0
    %1086 = vmatpush1.msra.mxu0 %v237
    %1087 = vmatprep.subr.mxu0 0.0
    %1088 = vmatpush1.msra.mxu0 0.0
    %1089 = vmatprep.subr.mxu0 0.0
    %1090 = vmatpush1.msra.mxu0 0.0
    %1091 = vmatprep.subr.mxu0 0.0
    %1092 = vmatpush1.msra.mxu0 0.0
    %1093 = vmatprep.subr.mxu0 0.0
    %1094 = vmatpush1.msra.mxu0 0.0
    %1095 = vmatprep.subr.mxu0 0.0
    %1096 = vmatpush1.msra.mxu0 0.0
    %1097 = vmatprep.subr.mxu0 0.0
    %1098 = vmatpush1.msra.mxu0 0.0
    %1099 = vmatprep.subr.mxu0 0.0
    %1100 = vmatpush1.msra.mxu0 0.0
    %1101 = vmatprep.subr.mxu0 0.0
    %1102 = vmatpush1.msra.mxu0 0.0
    %1103 = vmatprep.subr.mxu0 0.0
    %1104 = vmatpush1.msra.mxu0 0.0
    %1105 = vmatprep.subr.mxu0 0.0
    %1106 = vmatpush1.msra.mxu0 0.0
    %1107 = vmatprep.subr.mxu0 0.0
    %1108 = vmatpush1.msra.mxu0 0.0
    %1109 = vmatprep.subr.mxu0 0.0
    %1110 = vmatpush1.msra.mxu0 0.0
    %1111 = vmatprep.subr.mxu0 0.0
    %1112 = vmatpush1.msra.mxu0 0.0
    %1113 = vmatprep.subr.mxu0 0.0
    %1114 = vmatpush1.msra.mxu0 0.0
    %1115 = vmatprep.subr.mxu0 0.0
    %1116 = vmatpush1.msra.mxu0 0.0
    %1117 = vmatprep.subr.mxu0 0.0
    %1118 = vmatpush1.msra.mxu0 0.0
    %1119 = vmatprep.subr.mxu0 0.0
    %1120 = vmatpush1.msra.mxu0 0.0
    %1121 = vmatprep.subr.mxu0 0.0
    %1122 = vmatpush1.msra.mxu0 0.0
    %1123 = vmatprep.subr.mxu0 0.0
    %1124 = vmatpush1.msra.mxu0 0.0
    %1125 = vmatprep.subr.mxu0 0.0
    %1126 = vmatpush1.msra.mxu0 0.0
    %1127 = vmatprep.subr.mxu0 0.0
    %1128 = vmatpush1.msra.mxu0 0.0
    %1129 = vmatprep.subr.mxu0 0.0
    %1130 = vmatpush1.msra.mxu0 0.0
    %1131 = vmatprep.subr.mxu0 0.0
    %1132 = vmatpush1.msra.mxu0 0.0
    %1133 = vmatprep.subr.mxu0 0.0
    %1134 = vmatpush1.msra.mxu0 0.0
    %1135 = vmatprep.subr.mxu0 0.0
    %1136 = vmatpush1.msra.mxu0 0.0
    %1137 = vmatprep.subr.mxu0 0.0
    %1138 = vmatpush1.msra.mxu0 0.0
    %1139 = vmatprep.subr.mxu0 0.0
    %1140 = vmatpush1.msra.mxu0 0.0
    %1141 = vmatprep.subr.mxu0 0.0
    %1142 = vmatpush1.msra.mxu0 0.0
    %1143 = vmatprep.mubr.f32.mxu0 0.0
    %1144 = vmatmul.mubr.f32.gmra.mrb[0].mxu0 %v1077
    %v1145 = vpop.f32.mrb[0].mxu0
    %v1146 = vadd.f32 %v751, %v1145
    %v1147 = vpop.f32.mrb[0].mxu0
    %1148 = vdwg.mxu0
    %1150 = vrot.lane.b32.xlu0 %v1146, 96
    %v1151 = vpop.permute.xlu0 %1150
    %v1153 = vadd.f32 %v207, %v1151
    %v1154 = vxor.u32 %v1153, 2147483648
    %v1155 = vmul.f32 %v1154, 1.442695
    %v1156 = vpow.pop %v1155
    %v1157 = vadd.f32 %v1156, 1.0
    %v1158 = vrcp.pop %v1157
    %v1159 = vmul.f32 1.0, %v1158
    %v1160 = vadd.f32 %v209, %v1151
    %v1161 = vxor.u32 %v1160, 2147483648
    %v1162 = vmul.f32 %v1161, 1.442695
    %v1163 = vpow.pop %v1162
    %v1164 = vadd.f32 %v1163, 1.0
    %v1165 = vrcp.pop %v1164
    %v1166 = vmul.f32 1.0, %v1165
    %1167 = vrot.lane.b32.xlu0 %v1146, 32
    %v1168 = vpop.permute.xlu0 %1167
    %v1170 = vmul.f32 %v1159, %v1168
    %1172 = vrot.lane.b32.xlu0 %v1170, 64
    %v1173 = vpop.permute.xlu0 %1172
    %v1175 = vadd.f32 %v209, %v1173
    %v1176 = vtanh.pop %v1175
    %v1177 = vsub.f32 1.0, %v1166
    %1179 = vrot.lane.b32.xlu0 %v1176, 96
    %v1180 = vpop.permute.xlu0 %1179
    %v1182 = vmul.f32 %v1177, %v1180
    %v1183 = vmul.f32 %v1166, %v1075
    %v1184 = vadd.f32 %v1182, %v1183
    %v1186 = vsel %vm244, %v1184, 0
    %1188 = vmatprep.subr.mxu0 0.0
    %1189 = vmatpush1.msra.mxu0 %v234
    %1190 = vmatprep.subr.mxu0 0.0
    %1191 = vmatpush1.msra.mxu0 %v235
    %1192 = vmatprep.subr.mxu0 0.0
    %1193 = vmatpush1.msra.mxu0 %v236
    %1194 = vmatprep.subr.mxu0 0.0
    %1195 = vmatpush1.msra.mxu0 %v237
    %1196 = vmatprep.subr.mxu0 0.0
    %1197 = vmatpush1.msra.mxu0 0.0
    %1198 = vmatprep.subr.mxu0 0.0
    %1199 = vmatpush1.msra.mxu0 0.0
    %1200 = vmatprep.subr.mxu0 0.0
    %1201 = vmatpush1.msra.mxu0 0.0
    %1202 = vmatprep.subr.mxu0 0.0
    %1203 = vmatpush1.msra.mxu0 0.0
    %1204 = vmatprep.subr.mxu0 0.0
    %1205 = vmatpush1.msra.mxu0 0.0
    %1206 = vmatprep.subr.mxu0 0.0
    %1207 = vmatpush1.msra.mxu0 0.0
    %1208 = vmatprep.subr.mxu0 0.0
    %1209 = vmatpush1.msra.mxu0 0.0
    %1210 = vmatprep.subr.mxu0 0.0
    %1211 = vmatpush1.msra.mxu0 0.0
    %1212 = vmatprep.subr.mxu0 0.0
    %1213 = vmatpush1.msra.mxu0 0.0
    %1214 = vmatprep.subr.mxu0 0.0
    %1215 = vmatpush1.msra.mxu0 0.0
    %1216 = vmatprep.subr.mxu0 0.0
    %1217 = vmatpush1.msra.mxu0 0.0
    %1218 = vmatprep.subr.mxu0 0.0
    %1219 = vmatpush1.msra.mxu0 0.0
    %1220 = vmatprep.subr.mxu0 0.0
    %1221 = vmatpush1.msra.mxu0 0.0
    %1222 = vmatprep.subr.mxu0 0.0
    %1223 = vmatpush1.msra.mxu0 0.0
    %1224 = vmatprep.subr.mxu0 0.0
    %1225 = vmatpush1.msra.mxu0 0.0
    %1226 = vmatprep.subr.mxu0 0.0
    %1227 = vmatpush1.msra.mxu0 0.0
    %1228 = vmatprep.subr.mxu0 0.0
    %1229 = vmatpush1.msra.mxu0 0.0
    %1230 = vmatprep.subr.mxu0 0.0
    %1231 = vmatpush1.msra.mxu0 0.0
    %1232 = vmatprep.subr.mxu0 0.0
    %1233 = vmatpush1.msra.mxu0 0.0
    %1234 = vmatprep.subr.mxu0 0.0
    %1235 = vmatpush1.msra.mxu0 0.0
    %1236 = vmatprep.subr.mxu0 0.0
    %1237 = vmatpush1.msra.mxu0 0.0
    %1238 = vmatprep.subr.mxu0 0.0
    %1239 = vmatpush1.msra.mxu0 0.0
    %1240 = vmatprep.subr.mxu0 0.0
    %1241 = vmatpush1.msra.mxu0 0.0
    %1242 = vmatprep.subr.mxu0 0.0
    %1243 = vmatpush1.msra.mxu0 0.0
    %1244 = vmatprep.subr.mxu0 0.0
    %1245 = vmatpush1.msra.mxu0 0.0
    %1246 = vmatprep.subr.mxu0 0.0
    %1247 = vmatpush1.msra.mxu0 0.0
    %1248 = vmatprep.subr.mxu0 0.0
    %1249 = vmatpush1.msra.mxu0 0.0
    %1250 = vmatprep.subr.mxu0 0.0
    %1251 = vmatpush1.msra.mxu0 0.0
    %1252 = vmatprep.mubr.f32.mxu0 0.0
    %1253 = vmatmul.mubr.f32.gmra.mrb[0].mxu0 %v1186
    %v1254 = vpop.f32.mrb[0].mxu0
    %v1255 = vadd.f32 %v751, %v1254
    %v1256 = vpop.f32.mrb[0].mxu0
    %1257 = vdwg.mxu0
    %1259 = vrot.lane.b32.xlu0 %v1255, 96
    %v1260 = vpop.permute.xlu0 %1259
    %v1262 = vadd.f32 %v201, %v1260
    %v1263 = vxor.u32 %v1262, 2147483648
    %v1264 = vmul.f32 %v1263, 1.442695
    %v1265 = vpow.pop %v1264
    %v1266 = vadd.f32 %v1265, 1.0
    %v1267 = vrcp.pop %v1266
    %v1268 = vmul.f32 1.0, %v1267
    %v1269 = vadd.f32 %v203, %v1260
    %v1270 = vxor.u32 %v1269, 2147483648
    %v1271 = vmul.f32 %v1270, 1.442695
    %v1272 = vpow.pop %v1271
    %v1273 = vadd.f32 %v1272, 1.0
    %v1274 = vrcp.pop %v1273
    %v1275 = vmul.f32 1.0, %v1274
    %1276 = vrot.lane.b32.xlu0 %v1255, 32
    %v1277 = vpop.permute.xlu0 %1276
    %v1279 = vmul.f32 %v1268, %v1277
    %1281 = vrot.lane.b32.xlu0 %v1279, 64
    %v1282 = vpop.permute.xlu0 %1281
    %v1284 = vadd.f32 %v203, %v1282
    %v1285 = vtanh.pop %v1284
    %v1286 = vsub.f32 1.0, %v1275
    %1288 = vrot.lane.b32.xlu0 %v1285, 96
    %v1289 = vpop.permute.xlu0 %1288
    %v1291 = vmul.f32 %v1286, %v1289
    %v1292 = vmul.f32 %v1275, %v1184
    %v1293 = vadd.f32 %v1291, %v1292
    %1296 = vrot.lane.b32.xlu0 %v1293, 32
    %v1297 = vpop.permute.xlu0 %1296
    %v1299 = vsel %vm244, %v346, %v1297
    %1301 = vrot.lane.b32.xlu0 %v1184, 32
    %v1302 = vpop.permute.xlu0 %1301
    %v1304 = vsel %vm244, %v447, %v1302
    %1306 = vrot.lane.b32.xlu0 %v1075, 32
    %v1307 = vpop.permute.xlu0 %1306
    %v1309 = vsel %vm244, %v548, %v1307
    %1311 = vrot.lane.b32.xlu0 %v966, 32
    %v1312 = vpop.permute.xlu0 %1311
    %v1314 = vsel %vm244, %v649, %v1312
    %1316 = vrot.lane.b32.xlu0 %v747, 96
    %v1317 = vpop.permute.xlu0 %1316
    %1319 = vrot.lane.b32.xlu0 %v857, 32
    %v1320 = vpop.permute.xlu0 %1319
    %v1322 = vsel %vm244, %v1317, %v1320
    %v1323 = vld [vmem:[%s5] sm:$0xff]
    %v1324 = vld [vmem:[%s5 + $0x8] sm:$0xff]
    %v1325 = vld [vmem:[%s5 + $0x10] sm:$0xff]
    %v1326 = vld [vmem:[%s5 + $0x18] sm:$0xff]
    %v1327 = vld [vmem:[%s5 + $0x20] sm:$0xff]
    %v1328 = vld [vmem:[%s5 + $0x28] sm:$0xff]
    %v1329 = vld [vmem:[%s5 + $0x30] sm:$0xff]
    %v1330 = vld [vmem:[%s5 + $0x38] sm:$0xff]
    %v1331 = vld [vmem:[%s5 + $0x40] sm:$0xff]
    %v1332 = vld [vmem:[%s5 + $0x48] sm:$0xff]
    %v1333 = vld [vmem:[%s5 + $0x50] sm:$0xff]
    %v1334 = vld [vmem:[%s5 + $0x58] sm:$0xff]
    %v1335 = vld [vmem:[%s5 + $0x60] sm:$0xff]
    %v1336 = vld [vmem:[%s5 + $0x68] sm:$0xff]
    %v1337 = vld [vmem:[%s5 + $0x70] sm:$0xff]
    %v1338 = vld [vmem:[%s5 + $0x78] sm:$0xff]
    %v1339 = vld [vmem:[%s6] sm:$0x3]
    %v1341 = vlaneseq
    %v1342 = vshrl.u32 %v1341, 7
    %v1343 = vsub.s32 0, %v1342
    %v1344 = vrot.slane %v1339, %v1343
    %v1345 = vlaneseq
    %v1346 = vshrl.u32 %v1345, 7
    %v1347 = vsub.s32 1, %v1346
    %v1348 = vrot.slane %v1339, %v1347
    %vm1351 = vcmask 523264
    %v1353 = vsel %vm1351, %v1299, 0
    %v1356 = vsel %vm1351, %v1304, 0
    %v1359 = vsel %vm1351, %v1309, 0
    %v1362 = vsel %vm1351, %v1314, 0
    %v1365 = vsel %vm1351, %v1322, 0
    %1367 = vmatprep.subr.mxu0 %v1324
    %1368 = vmatpush1.msra.mxu0 %v1323
    %1369 = vmatprep.subr.mxu0 %v1326
    %1370 = vmatpush1.msra.mxu0 %v1325
    %1371 = vmatprep.subr.mxu0 %v1328
    %1372 = vmatpush1.msra.mxu0 %v1327
    %1373 = vmatprep.subr.mxu0 %v1330
    %1374 = vmatpush1.msra.mxu0 %v1329
    %1375 = vmatprep.subr.mxu0 %v1332
    %1376 = vmatpush1.msra.mxu0 %v1331
    %1377 = vmatprep.subr.mxu0 %v1334
    %1378 = vmatpush1.msra.mxu0 %v1333
    %1379 = vmatprep.subr.mxu0 %v1336
    %1380 = vmatpush1.msra.mxu0 %v1335
    %1381 = vmatprep.subr.mxu0 %v1338
    %1382 = vmatpush1.msra.mxu0 %v1337
    %1383 = vmatprep.subr.mxu0 0.0
    %1384 = vmatpush1.msra.mxu0 0.0
    %1385 = vmatprep.subr.mxu0 0.0
    %1386 = vmatpush1.msra.mxu0 0.0
    %1387 = vmatprep.subr.mxu0 0.0
    %1388 = vmatpush1.msra.mxu0 0.0
    %1389 = vmatprep.subr.mxu0 0.0
    %1390 = vmatpush1.msra.mxu0 0.0
    %1391 = vmatprep.subr.mxu0 0.0
    %1392 = vmatpush1.msra.mxu0 0.0
    %1393 = vmatprep.subr.mxu0 0.0
    %1394 = vmatpush1.msra.mxu0 0.0
    %1395 = vmatprep.subr.mxu0 0.0
    %1396 = vmatpush1.msra.mxu0 0.0
    %1397 = vmatprep.subr.mxu0 0.0
    %1398 = vmatpush1.msra.mxu0 0.0
    %1399 = vmatprep.subr.mxu0 0.0
    %1400 = vmatpush1.msra.mxu0 0.0
    %1401 = vmatprep.subr.mxu0 0.0
    %1402 = vmatpush1.msra.mxu0 0.0
    %1403 = vmatprep.subr.mxu0 0.0
    %1404 = vmatpush1.msra.mxu0 0.0
    %1405 = vmatprep.subr.mxu0 0.0
    %1406 = vmatpush1.msra.mxu0 0.0
    %1407 = vmatprep.subr.mxu0 0.0
    %1408 = vmatpush1.msra.mxu0 0.0
    %1409 = vmatprep.subr.mxu0 0.0
    %1410 = vmatpush1.msra.mxu0 0.0
    %1411 = vmatprep.subr.mxu0 0.0
    %1412 = vmatpush1.msra.mxu0 0.0
    %1413 = vmatprep.subr.mxu0 0.0
    %1414 = vmatpush1.msra.mxu0 0.0
    %1415 = vmatprep.subr.mxu0 0.0
    %1416 = vmatpush1.msra.mxu0 0.0
    %1417 = vmatprep.subr.mxu0 0.0
    %1418 = vmatpush1.msra.mxu0 0.0
    %1419 = vmatprep.subr.mxu0 0.0
    %1420 = vmatpush1.msra.mxu0 0.0
    %1421 = vmatprep.subr.mxu0 0.0
    %1422 = vmatpush1.msra.mxu0 0.0
    %1423 = vmatprep.subr.mxu0 0.0
    %1424 = vmatpush1.msra.mxu0 0.0
    %1425 = vmatprep.subr.mxu0 0.0
    %1426 = vmatpush1.msra.mxu0 0.0
    %1427 = vmatprep.subr.mxu0 0.0
    %1428 = vmatpush1.msra.mxu0 0.0
    %1429 = vmatprep.subr.mxu0 0.0
    %1430 = vmatpush1.msra.mxu0 0.0
    %1431 = vmatprep.mubr.f32.mxu0 0.0
    %1432 = vmatmul.mubr.f32.gmra.mrb[0].mxu0 %v1353
    %v1433 = vpop.f32.mrb[0].mxu0
    %v1434 = vadd.f32 %v1344, %v1433
    %v1435 = vpop.f32.mrb[0].mxu0
    %v1436 = vadd.f32 %v1348, %v1435
    %1437 = vmatprep.mubr.f32.mxu0 0.0
    %1438 = vmatmul.mubr.f32.gmra.mrb[0].mxu0 %v1356
    %v1439 = vpop.f32.mrb[0].mxu0
    %v1440 = vadd.f32 %v1344, %v1439
    %v1441 = vpop.f32.mrb[0].mxu0
    %v1442 = vadd.f32 %v1348, %v1441
    %1443 = vmatprep.mubr.f32.mxu0 0.0
    %1444 = vmatmul.mubr.f32.gmra.mrb[0].mxu0 %v1359
    %v1445 = vpop.f32.mrb[0].mxu0
    %v1446 = vadd.f32 %v1344, %v1445
    %v1447 = vpop.f32.mrb[0].mxu0
    %v1448 = vadd.f32 %v1348, %v1447
    %1449 = vmatprep.mubr.f32.mxu0 0.0
    %1450 = vmatmul.mubr.f32.gmra.mrb[0].mxu0 %v1362
    %v1451 = vpop.f32.mrb[0].mxu0
    %v1452 = vadd.f32 %v1344, %v1451
    %v1453 = vpop.f32.mrb[0].mxu0
    %v1454 = vadd.f32 %v1348, %v1453
    %1455 = vmatprep.mubr.f32.mxu0 0.0
    %1456 = vmatmul.mubr.f32.gmra.mrb[0].mxu0 %v1365
    %v1457 = vpop.f32.mrb[0].mxu0
    %v1458 = vadd.f32 %v1344, %v1457
    %v1459 = vpop.f32.mrb[0].mxu0
    %v1460 = vadd.f32 %v1348, %v1459
    %1461 = vdwg.mxu0
    %v1462 = vld [vmem:[%s7] sm:$0xff]
    %v1463 = vld [vmem:[%s7 + $0x8] sm:$0xff]
    %v1464 = vld [vmem:[%s7 + $0x10] sm:$0xff]
    %v1465 = vld [vmem:[%s7 + $0x18] sm:$0xff]
    %s1466 = scalar_lea.vmem %s7, 32
    %v1467 = vld [vmem:[%s1466] sm:$0xff]
    %v1468 = vld [vmem:[%s1466 + $0x8] sm:$0xff]
    %v1469 = vld [vmem:[%s1466 + $0x10] sm:$0xff]
    %v1470 = vld [vmem:[%s1466 + $0x18] sm:$0xff]
    %v1471 = vld [vmem:[%s8] sm:$0x1]
    %v1472 = vld [vmem:[%s8 + $0x1] sm:$0x1]
    %v1473 = vlaneseq
    %v1474 = vshrl.u32 %v1473, 7
    %v1475 = vsub.s32 0, %v1474
    %v1476 = vrot.slane %v1471, %v1475
    %1477 = vmatprep.subr.mxu0 0.0
    %1478 = vmatpush1.msra.mxu0 %v1462
    %1479 = vmatprep.subr.mxu0 0.0
    %1480 = vmatpush1.msra.mxu0 %v1463
    %1481 = vmatprep.subr.mxu0 0.0
    %1482 = vmatpush1.msra.mxu0 %v1464
    %1483 = vmatprep.subr.mxu0 0.0
    %1484 = vmatpush1.msra.mxu0 %v1465
    %1485 = vmatprep.subr.mxu0 0.0
    %1486 = vmatpush1.msra.mxu0 0.0
    %1487 = vmatprep.subr.mxu0 0.0
    %1488 = vmatpush1.msra.mxu0 0.0
    %1489 = vmatprep.subr.mxu0 0.0
    %1490 = vmatpush1.msra.mxu0 0.0
    %1491 = vmatprep.subr.mxu0 0.0
    %1492 = vmatpush1.msra.mxu0 0.0
    %1493 = vmatprep.subr.mxu0 0.0
    %1494 = vmatpush1.msra.mxu0 0.0
    %1495 = vmatprep.subr.mxu0 0.0
    %1496 = vmatpush1.msra.mxu0 0.0
    %1497 = vmatprep.subr.mxu0 0.0
    %1498 = vmatpush1.msra.mxu0 0.0
    %1499 = vmatprep.subr.mxu0 0.0
    %1500 = vmatpush1.msra.mxu0 0.0
    %1501 = vmatprep.subr.mxu0 0.0
    %1502 = vmatpush1.msra.mxu0 0.0
    %1503 = vmatprep.subr.mxu0 0.0
    %1504 = vmatpush1.msra.mxu0 0.0
    %1505 = vmatprep.subr.mxu0 0.0
    %1506 = vmatpush1.msra.mxu0 0.0
    %1507 = vmatprep.subr.mxu0 0.0
    %1508 = vmatpush1.msra.mxu0 0.0
    %1509 = vmatprep.subr.mxu0 0.0
    %1510 = vmatpush1.msra.mxu0 0.0
    %1511 = vmatprep.subr.mxu0 0.0
    %1512 = vmatpush1.msra.mxu0 0.0
    %1513 = vmatprep.subr.mxu0 0.0
    %1514 = vmatpush1.msra.mxu0 0.0
    %1515 = vmatprep.subr.mxu0 0.0
    %1516 = vmatpush1.msra.mxu0 0.0
    %1517 = vmatprep.subr.mxu0 0.0
    %1518 = vmatpush1.msra.mxu0 0.0
    %1519 = vmatprep.subr.mxu0 0.0
    %1520 = vmatpush1.msra.mxu0 0.0
    %1521 = vmatprep.subr.mxu0 0.0
    %1522 = vmatpush1.msra.mxu0 0.0
    %1523 = vmatprep.subr.mxu0 0.0
    %1524 = vmatpush1.msra.mxu0 0.0
    %1525 = vmatprep.subr.mxu0 0.0
    %1526 = vmatpush1.msra.mxu0 0.0
    %1527 = vmatprep.subr.mxu0 0.0
    %1528 = vmatpush1.msra.mxu0 0.0
    %1529 = vmatprep.subr.mxu0 0.0
    %1530 = vmatpush1.msra.mxu0 0.0
    %1531 = vmatprep.subr.mxu0 0.0
    %1532 = vmatpush1.msra.mxu0 0.0
    %1533 = vmatprep.subr.mxu0 0.0
    %1534 = vmatpush1.msra.mxu0 0.0
    %1535 = vmatprep.subr.mxu0 0.0
    %1536 = vmatpush1.msra.mxu0 0.0
    %1537 = vmatprep.subr.mxu0 0.0
    %1538 = vmatpush1.msra.mxu0 0.0
    %1539 = vmatprep.subr.mxu0 0.0
    %1540 = vmatpush1.msra.mxu0 0.0
    %1541 = vmatprep.mubr.f32.mxu0 0.0
    %1542 = vmatmul.mubr.f32.gmra.mrb[0].mxu0 %v246
    %v1543 = vpop.f32.mrb[0].mxu0
    %v1544 = vadd.f32 %v1476, %v1543
    %v1545 = vpop.f32.mrb[0].mxu0
    %1546 = vdwg.mxu0
    %v1547 = vadd.f32 %v1434, %v1544
    %v1548 = vxor.u32 %v1547, 2147483648
    %v1549 = vmul.f32 %v1548, 1.442695
    %v1550 = vpow.pop %v1549
    %v1551 = vadd.f32 %v1550, 1.0
    %v1552 = vrcp.pop %v1551
    %v1553 = vmul.f32 1.0, %v1552
    %1555 = vrot.lane.b32.xlu0 %v1544, 64
    %v1556 = vpop.permute.xlu0 %1555
    %v1558 = vmul.f32 %v1553, %v1556
    %1560 = vrot.lane.b32.xlu0 %v1558, 64
    %v1561 = vpop.permute.xlu0 %1560
    %v1563 = vadd.f32 %v1434, %v1561
    %v1564 = vtanh.pop %v1563
    %v1565 = vsub.f32 1.0, %v1553
    %1567 = vrot.lane.b32.xlu0 %v1564, 96
    %v1568 = vpop.permute.xlu0 %1567
    %v1570 = vmul.f32 %v1565, %v1568
    %v1571 = vmul.f32 %v1553, 0.0
    %v1572 = vadd.f32 %v1570, %v1571
    %1574 = vrot.lane.b32.xlu0 %v1572, 96
    %v1575 = vpop.permute.xlu0 %1574
    %v1576 = vsel %vm244, %v1575, 0
    %1578 = vmatprep.subr.mxu0 0.0
    %1579 = vmatpush1.msra.mxu0 %v1462
    %1580 = vmatprep.subr.mxu0 0.0
    %1581 = vmatpush1.msra.mxu0 %v1463
    %1582 = vmatprep.subr.mxu0 0.0
    %1583 = vmatpush1.msra.mxu0 %v1464
    %1584 = vmatprep.subr.mxu0 0.0
    %1585 = vmatpush1.msra.mxu0 %v1465
    %1586 = vmatprep.subr.mxu0 0.0
    %1587 = vmatpush1.msra.mxu0 0.0
    %1588 = vmatprep.subr.mxu0 0.0
    %1589 = vmatpush1.msra.mxu0 0.0
    %1590 = vmatprep.subr.mxu0 0.0
    %1591 = vmatpush1.msra.mxu0 0.0
    %1592 = vmatprep.subr.mxu0 0.0
    %1593 = vmatpush1.msra.mxu0 0.0
    %1594 = vmatprep.subr.mxu0 0.0
    %1595 = vmatpush1.msra.mxu0 0.0
    %1596 = vmatprep.subr.mxu0 0.0
    %1597 = vmatpush1.msra.mxu0 0.0
    %1598 = vmatprep.subr.mxu0 0.0
    %1599 = vmatpush1.msra.mxu0 0.0
    %1600 = vmatprep.subr.mxu0 0.0
    %1601 = vmatpush1.msra.mxu0 0.0
    %1602 = vmatprep.subr.mxu0 0.0
    %1603 = vmatpush1.msra.mxu0 0.0
    %1604 = vmatprep.subr.mxu0 0.0
    %1605 = vmatpush1.msra.mxu0 0.0
    %1606 = vmatprep.subr.mxu0 0.0
    %1607 = vmatpush1.msra.mxu0 0.0
    %1608 = vmatprep.subr.mxu0 0.0
    %1609 = vmatpush1.msra.mxu0 0.0
    %1610 = vmatprep.subr.mxu0 0.0
    %1611 = vmatpush1.msra.mxu0 0.0
    %1612 = vmatprep.subr.mxu0 0.0
    %1613 = vmatpush1.msra.mxu0 0.0
    %1614 = vmatprep.subr.mxu0 0.0
    %1615 = vmatpush1.msra.mxu0 0.0
    %1616 = vmatprep.subr.mxu0 0.0
    %1617 = vmatpush1.msra.mxu0 0.0
    %1618 = vmatprep.subr.mxu0 0.0
    %1619 = vmatpush1.msra.mxu0 0.0
    %1620 = vmatprep.subr.mxu0 0.0
    %1621 = vmatpush1.msra.mxu0 0.0
    %1622 = vmatprep.subr.mxu0 0.0
    %1623 = vmatpush1.msra.mxu0 0.0
    %1624 = vmatprep.subr.mxu0 0.0
    %1625 = vmatpush1.msra.mxu0 0.0
    %1626 = vmatprep.subr.mxu0 0.0
    %1627 = vmatpush1.msra.mxu0 0.0
    %1628 = vmatprep.subr.mxu0 0.0
    %1629 = vmatpush1.msra.mxu0 0.0
    %1630 = vmatprep.subr.mxu0 0.0
    %1631 = vmatpush1.msra.mxu0 0.0
    %1632 = vmatprep.subr.mxu0 0.0
    %1633 = vmatpush1.msra.mxu0 0.0
    %1634 = vmatprep.subr.mxu0 0.0
    %1635 = vmatpush1.msra.mxu0 0.0
    %1636 = vmatprep.subr.mxu0 0.0
    %1637 = vmatpush1.msra.mxu0 0.0
    %1638 = vmatprep.subr.mxu0 0.0
    %1639 = vmatpush1.msra.mxu0 0.0
    %1640 = vmatprep.subr.mxu0 0.0
    %1641 = vmatpush1.msra.mxu0 0.0
    %1642 = vmatprep.mubr.f32.mxu0 0.0
    %1643 = vmatmul.mubr.f32.gmra.mrb[0].mxu0 %v1576
    %v1644 = vpop.f32.mrb[0].mxu0
    %v1645 = vadd.f32 %v1476, %v1644
    %v1646 = vpop.f32.mrb[0].mxu0
    %1647 = vdwg.mxu0
    %v1648 = vadd.f32 %v1440, %v1645
    %v1649 = vxor.u32 %v1648, 2147483648
    %v1650 = vmul.f32 %v1649, 1.442695
    %v1651 = vpow.pop %v1650
    %v1652 = vadd.f32 %v1651, 1.0
    %v1653 = vrcp.pop %v1652
    %v1654 = vmul.f32 1.0, %v1653
    %1656 = vrot.lane.b32.xlu0 %v1645, 64
    %v1657 = vpop.permute.xlu0 %1656
    %v1659 = vmul.f32 %v1654, %v1657
    %1661 = vrot.lane.b32.xlu0 %v1659, 64
    %v1662 = vpop.permute.xlu0 %1661
    %v1664 = vadd.f32 %v1440, %v1662
    %v1665 = vtanh.pop %v1664
    %v1666 = vsub.f32 1.0, %v1654
    %1668 = vrot.lane.b32.xlu0 %v1665, 96
    %v1669 = vpop.permute.xlu0 %1668
    %v1671 = vmul.f32 %v1666, %v1669
    %v1672 = vmul.f32 %v1654, %v1572
    %v1673 = vadd.f32 %v1671, %v1672
    %1675 = vrot.lane.b32.xlu0 %v1673, 96
    %v1676 = vpop.permute.xlu0 %1675
    %v1677 = vsel %vm244, %v1676, 0
    %1679 = vmatprep.subr.mxu0 0.0
    %1680 = vmatpush1.msra.mxu0 %v1462
    %1681 = vmatprep.subr.mxu0 0.0
    %1682 = vmatpush1.msra.mxu0 %v1463
    %1683 = vmatprep.subr.mxu0 0.0
    %1684 = vmatpush1.msra.mxu0 %v1464
    %1685 = vmatprep.subr.mxu0 0.0
    %1686 = vmatpush1.msra.mxu0 %v1465
    %1687 = vmatprep.subr.mxu0 0.0
    %1688 = vmatpush1.msra.mxu0 0.0
    %1689 = vmatprep.subr.mxu0 0.0
    %1690 = vmatpush1.msra.mxu0 0.0
    %1691 = vmatprep.subr.mxu0 0.0
    %1692 = vmatpush1.msra.mxu0 0.0
    %1693 = vmatprep.subr.mxu0 0.0
    %1694 = vmatpush1.msra.mxu0 0.0
    %1695 = vmatprep.subr.mxu0 0.0
    %1696 = vmatpush1.msra.mxu0 0.0
    %1697 = vmatprep.subr.mxu0 0.0
    %1698 = vmatpush1.msra.mxu0 0.0
    %1699 = vmatprep.subr.mxu0 0.0
    %1700 = vmatpush1.msra.mxu0 0.0
    %1701 = vmatprep.subr.mxu0 0.0
    %1702 = vmatpush1.msra.mxu0 0.0
    %1703 = vmatprep.subr.mxu0 0.0
    %1704 = vmatpush1.msra.mxu0 0.0
    %1705 = vmatprep.subr.mxu0 0.0
    %1706 = vmatpush1.msra.mxu0 0.0
    %1707 = vmatprep.subr.mxu0 0.0
    %1708 = vmatpush1.msra.mxu0 0.0
    %1709 = vmatprep.subr.mxu0 0.0
    %1710 = vmatpush1.msra.mxu0 0.0
    %1711 = vmatprep.subr.mxu0 0.0
    %1712 = vmatpush1.msra.mxu0 0.0
    %1713 = vmatprep.subr.mxu0 0.0
    %1714 = vmatpush1.msra.mxu0 0.0
    %1715 = vmatprep.subr.mxu0 0.0
    %1716 = vmatpush1.msra.mxu0 0.0
    %1717 = vmatprep.subr.mxu0 0.0
    %1718 = vmatpush1.msra.mxu0 0.0
    %1719 = vmatprep.subr.mxu0 0.0
    %1720 = vmatpush1.msra.mxu0 0.0
    %1721 = vmatprep.subr.mxu0 0.0
    %1722 = vmatpush1.msra.mxu0 0.0
    %1723 = vmatprep.subr.mxu0 0.0
    %1724 = vmatpush1.msra.mxu0 0.0
    %1725 = vmatprep.subr.mxu0 0.0
    %1726 = vmatpush1.msra.mxu0 0.0
    %1727 = vmatprep.subr.mxu0 0.0
    %1728 = vmatpush1.msra.mxu0 0.0
    %1729 = vmatprep.subr.mxu0 0.0
    %1730 = vmatpush1.msra.mxu0 0.0
    %1731 = vmatprep.subr.mxu0 0.0
    %1732 = vmatpush1.msra.mxu0 0.0
    %1733 = vmatprep.subr.mxu0 0.0
    %1734 = vmatpush1.msra.mxu0 0.0
    %1735 = vmatprep.subr.mxu0 0.0
    %1736 = vmatpush1.msra.mxu0 0.0
    %1737 = vmatprep.subr.mxu0 0.0
    %1738 = vmatpush1.msra.mxu0 0.0
    %1739 = vmatprep.subr.mxu0 0.0
    %1740 = vmatpush1.msra.mxu0 0.0
    %1741 = vmatprep.subr.mxu0 0.0
    %1742 = vmatpush1.msra.mxu0 0.0
    %1743 = vmatprep.mubr.f32.mxu0 0.0
    %1744 = vmatmul.mubr.f32.gmra.mrb[0].mxu0 %v1677
    %v1745 = vpop.f32.mrb[0].mxu0
    %v1746 = vadd.f32 %v1476, %v1745
    %v1747 = vpop.f32.mrb[0].mxu0
    %1748 = vdwg.mxu0
    %v1749 = vadd.f32 %v1446, %v1746
    %v1750 = vxor.u32 %v1749, 2147483648
    %v1751 = vmul.f32 %v1750, 1.442695
    %v1752 = vpow.pop %v1751
    %v1753 = vadd.f32 %v1752, 1.0
    %v1754 = vrcp.pop %v1753
    %v1755 = vmul.f32 1.0, %v1754
    %1757 = vrot.lane.b32.xlu0 %v1746, 64
    %v1758 = vpop.permute.xlu0 %1757
    %v1760 = vmul.f32 %v1755, %v1758
    %1762 = vrot.lane.b32.xlu0 %v1760, 64
    %v1763 = vpop.permute.xlu0 %1762
    %v1765 = vadd.f32 %v1446, %v1763
    %v1766 = vtanh.pop %v1765
    %v1767 = vsub.f32 1.0, %v1755
    %1769 = vrot.lane.b32.xlu0 %v1766, 96
    %v1770 = vpop.permute.xlu0 %1769
    %v1772 = vmul.f32 %v1767, %v1770
    %v1773 = vmul.f32 %v1755, %v1673
    %v1774 = vadd.f32 %v1772, %v1773
    %1776 = vrot.lane.b32.xlu0 %v1774, 96
    %v1777 = vpop.permute.xlu0 %1776
    %v1778 = vsel %vm244, %v1777, 0
    %1780 = vmatprep.subr.mxu0 0.0
    %1781 = vmatpush1.msra.mxu0 %v1462
    %1782 = vmatprep.subr.mxu0 0.0
    %1783 = vmatpush1.msra.mxu0 %v1463
    %1784 = vmatprep.subr.mxu0 0.0
    %1785 = vmatpush1.msra.mxu0 %v1464
    %1786 = vmatprep.subr.mxu0 0.0
    %1787 = vmatpush1.msra.mxu0 %v1465
    %1788 = vmatprep.subr.mxu0 0.0
    %1789 = vmatpush1.msra.mxu0 0.0
    %1790 = vmatprep.subr.mxu0 0.0
    %1791 = vmatpush1.msra.mxu0 0.0
    %1792 = vmatprep.subr.mxu0 0.0
    %1793 = vmatpush1.msra.mxu0 0.0
    %1794 = vmatprep.subr.mxu0 0.0
    %1795 = vmatpush1.msra.mxu0 0.0
    %1796 = vmatprep.subr.mxu0 0.0
    %1797 = vmatpush1.msra.mxu0 0.0
    %1798 = vmatprep.subr.mxu0 0.0
    %1799 = vmatpush1.msra.mxu0 0.0
    %1800 = vmatprep.subr.mxu0 0.0
    %1801 = vmatpush1.msra.mxu0 0.0
    %1802 = vmatprep.subr.mxu0 0.0
    %1803 = vmatpush1.msra.mxu0 0.0
    %1804 = vmatprep.subr.mxu0 0.0
    %1805 = vmatpush1.msra.mxu0 0.0
    %1806 = vmatprep.subr.mxu0 0.0
    %1807 = vmatpush1.msra.mxu0 0.0
    %1808 = vmatprep.subr.mxu0 0.0
    %1809 = vmatpush1.msra.mxu0 0.0
    %1810 = vmatprep.subr.mxu0 0.0
    %1811 = vmatpush1.msra.mxu0 0.0
    %1812 = vmatprep.subr.mxu0 0.0
    %1813 = vmatpush1.msra.mxu0 0.0
    %1814 = vmatprep.subr.mxu0 0.0
    %1815 = vmatpush1.msra.mxu0 0.0
    %1816 = vmatprep.subr.mxu0 0.0
    %1817 = vmatpush1.msra.mxu0 0.0
    %1818 = vmatprep.subr.mxu0 0.0
    %1819 = vmatpush1.msra.mxu0 0.0
    %1820 = vmatprep.subr.mxu0 0.0
    %1821 = vmatpush1.msra.mxu0 0.0
    %1822 = vmatprep.subr.mxu0 0.0
    %1823 = vmatpush1.msra.mxu0 0.0
    %1824 = vmatprep.subr.mxu0 0.0
    %1825 = vmatpush1.msra.mxu0 0.0
    %1826 = vmatprep.subr.mxu0 0.0
    %1827 = vmatpush1.msra.mxu0 0.0
    %1828 = vmatprep.subr.mxu0 0.0
    %1829 = vmatpush1.msra.mxu0 0.0
    %1830 = vmatprep.subr.mxu0 0.0
    %1831 = vmatpush1.msra.mxu0 0.0
    %1832 = vmatprep.subr.mxu0 0.0
    %1833 = vmatpush1.msra.mxu0 0.0
    %1834 = vmatprep.subr.mxu0 0.0
    %1835 = vmatpush1.msra.mxu0 0.0
    %1836 = vmatprep.subr.mxu0 0.0
    %1837 = vmatpush1.msra.mxu0 0.0
    %1838 = vmatprep.subr.mxu0 0.0
    %1839 = vmatpush1.msra.mxu0 0.0
    %1840 = vmatprep.subr.mxu0 0.0
    %1841 = vmatpush1.msra.mxu0 0.0
    %1842 = vmatprep.subr.mxu0 0.0
    %1843 = vmatpush1.msra.mxu0 0.0
    %1844 = vmatprep.mubr.f32.mxu0 0.0
    %1845 = vmatmul.mubr.f32.gmra.mrb[0].mxu0 %v1778
    %v1846 = vpop.f32.mrb[0].mxu0
    %v1847 = vadd.f32 %v1476, %v1846
    %v1848 = vpop.f32.mrb[0].mxu0
    %1849 = vdwg.mxu0
    %v1850 = vadd.f32 %v1452, %v1847
    %v1851 = vxor.u32 %v1850, 2147483648
    %v1852 = vmul.f32 %v1851, 1.442695
    %v1853 = vpow.pop %v1852
    %v1854 = vadd.f32 %v1853, 1.0
    %v1855 = vrcp.pop %v1854
    %v1856 = vmul.f32 1.0, %v1855
    %1858 = vrot.lane.b32.xlu0 %v1847, 64
    %v1859 = vpop.permute.xlu0 %1858
    %v1861 = vmul.f32 %v1856, %v1859
    %1863 = vrot.lane.b32.xlu0 %v1861, 64
    %v1864 = vpop.permute.xlu0 %1863
    %v1866 = vadd.f32 %v1452, %v1864
    %v1867 = vtanh.pop %v1866
    %v1868 = vsub.f32 1.0, %v1856
    %1870 = vrot.lane.b32.xlu0 %v1867, 96
    %v1871 = vpop.permute.xlu0 %1870
    %v1873 = vmul.f32 %v1868, %v1871
    %v1874 = vmul.f32 %v1856, %v1774
    %v1875 = vadd.f32 %v1873, %v1874
    %1877 = vrot.lane.b32.xlu0 %v1875, 96
    %v1878 = vpop.permute.xlu0 %1877
    %v1879 = vsel %vm244, %v1878, 0
    %1881 = vmatprep.subr.mxu0 0.0
    %1882 = vmatpush1.msra.mxu0 %v1462
    %1883 = vmatprep.subr.mxu0 0.0
    %1884 = vmatpush1.msra.mxu0 %v1463
    %1885 = vmatprep.subr.mxu0 0.0
    %1886 = vmatpush1.msra.mxu0 %v1464
    %1887 = vmatprep.subr.mxu0 0.0
    %1888 = vmatpush1.msra.mxu0 %v1465
    %1889 = vmatprep.subr.mxu0 0.0
    %1890 = vmatpush1.msra.mxu0 0.0
    %1891 = vmatprep.subr.mxu0 0.0
    %1892 = vmatpush1.msra.mxu0 0.0
    %1893 = vmatprep.subr.mxu0 0.0
    %1894 = vmatpush1.msra.mxu0 0.0
    %1895 = vmatprep.subr.mxu0 0.0
    %1896 = vmatpush1.msra.mxu0 0.0
    %1897 = vmatprep.subr.mxu0 0.0
    %1898 = vmatpush1.msra.mxu0 0.0
    %1899 = vmatprep.subr.mxu0 0.0
    %1900 = vmatpush1.msra.mxu0 0.0
    %1901 = vmatprep.subr.mxu0 0.0
    %1902 = vmatpush1.msra.mxu0 0.0
    %1903 = vmatprep.subr.mxu0 0.0
    %1904 = vmatpush1.msra.mxu0 0.0
    %1905 = vmatprep.subr.mxu0 0.0
    %1906 = vmatpush1.msra.mxu0 0.0
    %1907 = vmatprep.subr.mxu0 0.0
    %1908 = vmatpush1.msra.mxu0 0.0
    %1909 = vmatprep.subr.mxu0 0.0
    %1910 = vmatpush1.msra.mxu0 0.0
    %1911 = vmatprep.subr.mxu0 0.0
    %1912 = vmatpush1.msra.mxu0 0.0
    %1913 = vmatprep.subr.mxu0 0.0
    %1914 = vmatpush1.msra.mxu0 0.0
    %1915 = vmatprep.subr.mxu0 0.0
    %1916 = vmatpush1.msra.mxu0 0.0
    %1917 = vmatprep.subr.mxu0 0.0
    %1918 = vmatpush1.msra.mxu0 0.0
    %1919 = vmatprep.subr.mxu0 0.0
    %1920 = vmatpush1.msra.mxu0 0.0
    %1921 = vmatprep.subr.mxu0 0.0
    %1922 = vmatpush1.msra.mxu0 0.0
    %1923 = vmatprep.subr.mxu0 0.0
    %1924 = vmatpush1.msra.mxu0 0.0
    %1925 = vmatprep.subr.mxu0 0.0
    %1926 = vmatpush1.msra.mxu0 0.0
    %1927 = vmatprep.subr.mxu0 0.0
    %1928 = vmatpush1.msra.mxu0 0.0
    %1929 = vmatprep.subr.mxu0 0.0
    %1930 = vmatpush1.msra.mxu0 0.0
    %1931 = vmatprep.subr.mxu0 0.0
    %1932 = vmatpush1.msra.mxu0 0.0
    %1933 = vmatprep.subr.mxu0 0.0
    %1934 = vmatpush1.msra.mxu0 0.0
    %1935 = vmatprep.subr.mxu0 0.0
    %1936 = vmatpush1.msra.mxu0 0.0
    %1937 = vmatprep.subr.mxu0 0.0
    %1938 = vmatpush1.msra.mxu0 0.0
    %1939 = vmatprep.subr.mxu0 0.0
    %1940 = vmatpush1.msra.mxu0 0.0
    %1941 = vmatprep.subr.mxu0 0.0
    %1942 = vmatpush1.msra.mxu0 0.0
    %1943 = vmatprep.subr.mxu0 0.0
    %1944 = vmatpush1.msra.mxu0 0.0
    %1945 = vmatprep.mubr.f32.mxu0 0.0
    %1946 = vmatmul.mubr.f32.gmra.mrb[0].mxu0 %v1879
    %v1947 = vpop.f32.mrb[0].mxu0
    %v1948 = vadd.f32 %v1476, %v1947
    %v1949 = vpop.f32.mrb[0].mxu0
    %1950 = vdwg.mxu0
    %v1951 = vadd.f32 %v1458, %v1948
    %v1952 = vxor.u32 %v1951, 2147483648
    %v1953 = vmul.f32 %v1952, 1.442695
    %v1954 = vpow.pop %v1953
    %v1955 = vadd.f32 %v1954, 1.0
    %v1956 = vrcp.pop %v1955
    %v1957 = vmul.f32 1.0, %v1956
    %1959 = vrot.lane.b32.xlu0 %v1948, 64
    %v1960 = vpop.permute.xlu0 %1959
    %v1962 = vmul.f32 %v1957, %v1960
    %1964 = vrot.lane.b32.xlu0 %v1962, 64
    %v1965 = vpop.permute.xlu0 %1964
    %v1967 = vadd.f32 %v1458, %v1965
    %v1968 = vtanh.pop %v1967
    %v1969 = vsub.f32 1.0, %v1957
    %1971 = vrot.lane.b32.xlu0 %v1968, 96
    %v1972 = vpop.permute.xlu0 %1971
    %v1974 = vmul.f32 %v1969, %v1972
    %v1975 = vmul.f32 %v1957, %v1875
    %v1976 = vadd.f32 %v1974, %v1975
    %v1977 = vlaneseq
    %v1978 = vshrl.u32 %v1977, 7
    %v1979 = vsub.s32 0, %v1978
    %v1980 = vrot.slane %v1472, %v1979
    %1981 = vmatprep.subr.mxu0 0.0
    %1982 = vmatpush1.msra.mxu0 %v1467
    %1983 = vmatprep.subr.mxu0 0.0
    %1984 = vmatpush1.msra.mxu0 %v1468
    %1985 = vmatprep.subr.mxu0 0.0
    %1986 = vmatpush1.msra.mxu0 %v1469
    %1987 = vmatprep.subr.mxu0 0.0
    %1988 = vmatpush1.msra.mxu0 %v1470
    %1989 = vmatprep.subr.mxu0 0.0
    %1990 = vmatpush1.msra.mxu0 0.0
    %1991 = vmatprep.subr.mxu0 0.0
    %1992 = vmatpush1.msra.mxu0 0.0
    %1993 = vmatprep.subr.mxu0 0.0
    %1994 = vmatpush1.msra.mxu0 0.0
    %1995 = vmatprep.subr.mxu0 0.0
    %1996 = vmatpush1.msra.mxu0 0.0
    %1997 = vmatprep.subr.mxu0 0.0
    %1998 = vmatpush1.msra.mxu0 0.0
    %1999 = vmatprep.subr.mxu0 0.0
    %2000 = vmatpush1.msra.mxu0 0.0
    %2001 = vmatprep.subr.mxu0 0.0
    %2002 = vmatpush1.msra.mxu0 0.0
    %2003 = vmatprep.subr.mxu0 0.0
    %2004 = vmatpush1.msra.mxu0 0.0
    %2005 = vmatprep.subr.mxu0 0.0
    %2006 = vmatpush1.msra.mxu0 0.0
    %2007 = vmatprep.subr.mxu0 0.0
    %2008 = vmatpush1.msra.mxu0 0.0
    %2009 = vmatprep.subr.mxu0 0.0
    %2010 = vmatpush1.msra.mxu0 0.0
    %2011 = vmatprep.subr.mxu0 0.0
    %2012 = vmatpush1.msra.mxu0 0.0
    %2013 = vmatprep.subr.mxu0 0.0
    %2014 = vmatpush1.msra.mxu0 0.0
    %2015 = vmatprep.subr.mxu0 0.0
    %2016 = vmatpush1.msra.mxu0 0.0
    %2017 = vmatprep.subr.mxu0 0.0
    %2018 = vmatpush1.msra.mxu0 0.0
    %2019 = vmatprep.subr.mxu0 0.0
    %2020 = vmatpush1.msra.mxu0 0.0
    %2021 = vmatprep.subr.mxu0 0.0
    %2022 = vmatpush1.msra.mxu0 0.0
    %2023 = vmatprep.subr.mxu0 0.0
    %2024 = vmatpush1.msra.mxu0 0.0
    %2025 = vmatprep.subr.mxu0 0.0
    %2026 = vmatpush1.msra.mxu0 0.0
    %2027 = vmatprep.subr.mxu0 0.0
    %2028 = vmatpush1.msra.mxu0 0.0
    %2029 = vmatprep.subr.mxu0 0.0
    %2030 = vmatpush1.msra.mxu0 0.0
    %2031 = vmatprep.subr.mxu0 0.0
    %2032 = vmatpush1.msra.mxu0 0.0
    %2033 = vmatprep.subr.mxu0 0.0
    %2034 = vmatpush1.msra.mxu0 0.0
    %2035 = vmatprep.subr.mxu0 0.0
    %2036 = vmatpush1.msra.mxu0 0.0
    %2037 = vmatprep.subr.mxu0 0.0
    %2038 = vmatpush1.msra.mxu0 0.0
    %2039 = vmatprep.subr.mxu0 0.0
    %2040 = vmatpush1.msra.mxu0 0.0
    %2041 = vmatprep.subr.mxu0 0.0
    %2042 = vmatpush1.msra.mxu0 0.0
    %2043 = vmatprep.subr.mxu0 0.0
    %2044 = vmatpush1.msra.mxu0 0.0
    %2045 = vmatprep.mubr.f32.mxu0 0.0
    %2046 = vmatmul.mubr.f32.gmra.mrb[0].mxu0 %v246
    %v2047 = vpop.f32.mrb[0].mxu0
    %v2048 = vadd.f32 %v1980, %v2047
    %v2049 = vpop.f32.mrb[0].mxu0
    %2050 = vdwg.mxu0
    %2052 = vrot.lane.b32.xlu0 %v2048, 96
    %v2053 = vpop.permute.xlu0 %2052
    %v2055 = vadd.f32 %v1458, %v2053
    %v2056 = vxor.u32 %v2055, 2147483648
    %v2057 = vmul.f32 %v2056, 1.442695
    %v2058 = vpow.pop %v2057
    %v2059 = vadd.f32 %v2058, 1.0
    %v2060 = vrcp.pop %v2059
    %v2061 = vmul.f32 1.0, %v2060
    %v2062 = vadd.f32 %v1460, %v2053
    %v2063 = vxor.u32 %v2062, 2147483648
    %v2064 = vmul.f32 %v2063, 1.442695
    %v2065 = vpow.pop %v2064
    %v2066 = vadd.f32 %v2065, 1.0
    %v2067 = vrcp.pop %v2066
    %v2068 = vmul.f32 1.0, %v2067
    %2069 = vrot.lane.b32.xlu0 %v2048, 32
    %v2070 = vpop.permute.xlu0 %2069
    %v2072 = vmul.f32 %v2061, %v2070
    %2074 = vrot.lane.b32.xlu0 %v2072, 64
    %v2075 = vpop.permute.xlu0 %2074
    %v2077 = vadd.f32 %v1460, %v2075
    %v2078 = vtanh.pop %v2077
    %v2079 = vsub.f32 1.0, %v2068
    %2081 = vrot.lane.b32.xlu0 %v2078, 96
    %v2082 = vpop.permute.xlu0 %2081
    %v2084 = vmul.f32 %v2079, %v2082
    %v2085 = vmul.f32 %v2068, 0.0
    %v2086 = vadd.f32 %v2084, %v2085
    %v2088 = vsel %vm244, %v2086, 0
    %2090 = vmatprep.subr.mxu0 0.0
    %2091 = vmatpush1.msra.mxu0 %v1467
    %2092 = vmatprep.subr.mxu0 0.0
    %2093 = vmatpush1.msra.mxu0 %v1468
    %2094 = vmatprep.subr.mxu0 0.0
    %2095 = vmatpush1.msra.mxu0 %v1469
    %2096 = vmatprep.subr.mxu0 0.0
    %2097 = vmatpush1.msra.mxu0 %v1470
    %2098 = vmatprep.subr.mxu0 0.0
    %2099 = vmatpush1.msra.mxu0 0.0
    %2100 = vmatprep.subr.mxu0 0.0
    %2101 = vmatpush1.msra.mxu0 0.0
    %2102 = vmatprep.subr.mxu0 0.0
    %2103 = vmatpush1.msra.mxu0 0.0
    %2104 = vmatprep.subr.mxu0 0.0
    %2105 = vmatpush1.msra.mxu0 0.0
    %2106 = vmatprep.subr.mxu0 0.0
    %2107 = vmatpush1.msra.mxu0 0.0
    %2108 = vmatprep.subr.mxu0 0.0
    %2109 = vmatpush1.msra.mxu0 0.0
    %2110 = vmatprep.subr.mxu0 0.0
    %2111 = vmatpush1.msra.mxu0 0.0
    %2112 = vmatprep.subr.mxu0 0.0
    %2113 = vmatpush1.msra.mxu0 0.0
    %2114 = vmatprep.subr.mxu0 0.0
    %2115 = vmatpush1.msra.mxu0 0.0
    %2116 = vmatprep.subr.mxu0 0.0
    %2117 = vmatpush1.msra.mxu0 0.0
    %2118 = vmatprep.subr.mxu0 0.0
    %2119 = vmatpush1.msra.mxu0 0.0
    %2120 = vmatprep.subr.mxu0 0.0
    %2121 = vmatpush1.msra.mxu0 0.0
    %2122 = vmatprep.subr.mxu0 0.0
    %2123 = vmatpush1.msra.mxu0 0.0
    %2124 = vmatprep.subr.mxu0 0.0
    %2125 = vmatpush1.msra.mxu0 0.0
    %2126 = vmatprep.subr.mxu0 0.0
    %2127 = vmatpush1.msra.mxu0 0.0
    %2128 = vmatprep.subr.mxu0 0.0
    %2129 = vmatpush1.msra.mxu0 0.0
    %2130 = vmatprep.subr.mxu0 0.0
    %2131 = vmatpush1.msra.mxu0 0.0
    %2132 = vmatprep.subr.mxu0 0.0
    %2133 = vmatpush1.msra.mxu0 0.0
    %2134 = vmatprep.subr.mxu0 0.0
    %2135 = vmatpush1.msra.mxu0 0.0
    %2136 = vmatprep.subr.mxu0 0.0
    %2137 = vmatpush1.msra.mxu0 0.0
    %2138 = vmatprep.subr.mxu0 0.0
    %2139 = vmatpush1.msra.mxu0 0.0
    %2140 = vmatprep.subr.mxu0 0.0
    %2141 = vmatpush1.msra.mxu0 0.0
    %2142 = vmatprep.subr.mxu0 0.0
    %2143 = vmatpush1.msra.mxu0 0.0
    %2144 = vmatprep.subr.mxu0 0.0
    %2145 = vmatpush1.msra.mxu0 0.0
    %2146 = vmatprep.subr.mxu0 0.0
    %2147 = vmatpush1.msra.mxu0 0.0
    %2148 = vmatprep.subr.mxu0 0.0
    %2149 = vmatpush1.msra.mxu0 0.0
    %2150 = vmatprep.subr.mxu0 0.0
    %2151 = vmatpush1.msra.mxu0 0.0
    %2152 = vmatprep.subr.mxu0 0.0
    %2153 = vmatpush1.msra.mxu0 0.0
    %2154 = vmatprep.mubr.f32.mxu0 0.0
    %2155 = vmatmul.mubr.f32.gmra.mrb[0].mxu0 %v2088
    %v2156 = vpop.f32.mrb[0].mxu0
    %v2157 = vadd.f32 %v1980, %v2156
    %v2158 = vpop.f32.mrb[0].mxu0
    %2159 = vdwg.mxu0
    %2161 = vrot.lane.b32.xlu0 %v2157, 96
    %v2162 = vpop.permute.xlu0 %2161
    %v2164 = vadd.f32 %v1452, %v2162
    %v2165 = vxor.u32 %v2164, 2147483648
    %v2166 = vmul.f32 %v2165, 1.442695
    %v2167 = vpow.pop %v2166
    %v2168 = vadd.f32 %v2167, 1.0
    %v2169 = vrcp.pop %v2168
    %v2170 = vmul.f32 1.0, %v2169
    %v2171 = vadd.f32 %v1454, %v2162
    %v2172 = vxor.u32 %v2171, 2147483648
    %v2173 = vmul.f32 %v2172, 1.442695
    %v2174 = vpow.pop %v2173
    %v2175 = vadd.f32 %v2174, 1.0
    %v2176 = vrcp.pop %v2175
    %v2177 = vmul.f32 1.0, %v2176
    %2178 = vrot.lane.b32.xlu0 %v2157, 32
    %v2179 = vpop.permute.xlu0 %2178
    %v2181 = vmul.f32 %v2170, %v2179
    %2183 = vrot.lane.b32.xlu0 %v2181, 64
    %v2184 = vpop.permute.xlu0 %2183
    %v2186 = vadd.f32 %v1454, %v2184
    %v2187 = vtanh.pop %v2186
    %v2188 = vsub.f32 1.0, %v2177
    %2190 = vrot.lane.b32.xlu0 %v2187, 96
    %v2191 = vpop.permute.xlu0 %2190
    %v2193 = vmul.f32 %v2188, %v2191
    %v2194 = vmul.f32 %v2177, %v2086
    %v2195 = vadd.f32 %v2193, %v2194
    %v2197 = vsel %vm244, %v2195, 0
    %2199 = vmatprep.subr.mxu0 0.0
    %2200 = vmatpush1.msra.mxu0 %v1467
    %2201 = vmatprep.subr.mxu0 0.0
    %2202 = vmatpush1.msra.mxu0 %v1468
    %2203 = vmatprep.subr.mxu0 0.0
    %2204 = vmatpush1.msra.mxu0 %v1469
    %2205 = vmatprep.subr.mxu0 0.0
    %2206 = vmatpush1.msra.mxu0 %v1470
    %2207 = vmatprep.subr.mxu0 0.0
    %2208 = vmatpush1.msra.mxu0 0.0
    %2209 = vmatprep.subr.mxu0 0.0
    %2210 = vmatpush1.msra.mxu0 0.0
    %2211 = vmatprep.subr.mxu0 0.0
    %2212 = vmatpush1.msra.mxu0 0.0
    %2213 = vmatprep.subr.mxu0 0.0
    %2214 = vmatpush1.msra.mxu0 0.0
    %2215 = vmatprep.subr.mxu0 0.0
    %2216 = vmatpush1.msra.mxu0 0.0
    %2217 = vmatprep.subr.mxu0 0.0
    %2218 = vmatpush1.msra.mxu0 0.0
    %2219 = vmatprep.subr.mxu0 0.0
    %2220 = vmatpush1.msra.mxu0 0.0
    %2221 = vmatprep.subr.mxu0 0.0
    %2222 = vmatpush1.msra.mxu0 0.0
    %2223 = vmatprep.subr.mxu0 0.0
    %2224 = vmatpush1.msra.mxu0 0.0
    %2225 = vmatprep.subr.mxu0 0.0
    %2226 = vmatpush1.msra.mxu0 0.0
    %2227 = vmatprep.subr.mxu0 0.0
    %2228 = vmatpush1.msra.mxu0 0.0
    %2229 = vmatprep.subr.mxu0 0.0
    %2230 = vmatpush1.msra.mxu0 0.0
    %2231 = vmatprep.subr.mxu0 0.0
    %2232 = vmatpush1.msra.mxu0 0.0
    %2233 = vmatprep.subr.mxu0 0.0
    %2234 = vmatpush1.msra.mxu0 0.0
    %2235 = vmatprep.subr.mxu0 0.0
    %2236 = vmatpush1.msra.mxu0 0.0
    %2237 = vmatprep.subr.mxu0 0.0
    %2238 = vmatpush1.msra.mxu0 0.0
    %2239 = vmatprep.subr.mxu0 0.0
    %2240 = vmatpush1.msra.mxu0 0.0
    %2241 = vmatprep.subr.mxu0 0.0
    %2242 = vmatpush1.msra.mxu0 0.0
    %2243 = vmatprep.subr.mxu0 0.0
    %2244 = vmatpush1.msra.mxu0 0.0
    %2245 = vmatprep.subr.mxu0 0.0
    %2246 = vmatpush1.msra.mxu0 0.0
    %2247 = vmatprep.subr.mxu0 0.0
    %2248 = vmatpush1.msra.mxu0 0.0
    %2249 = vmatprep.subr.mxu0 0.0
    %2250 = vmatpush1.msra.mxu0 0.0
    %2251 = vmatprep.subr.mxu0 0.0
    %2252 = vmatpush1.msra.mxu0 0.0
    %2253 = vmatprep.subr.mxu0 0.0
    %2254 = vmatpush1.msra.mxu0 0.0
    %2255 = vmatprep.subr.mxu0 0.0
    %2256 = vmatpush1.msra.mxu0 0.0
    %2257 = vmatprep.subr.mxu0 0.0
    %2258 = vmatpush1.msra.mxu0 0.0
    %2259 = vmatprep.subr.mxu0 0.0
    %2260 = vmatpush1.msra.mxu0 0.0
    %2261 = vmatprep.subr.mxu0 0.0
    %2262 = vmatpush1.msra.mxu0 0.0
    %2263 = vmatprep.mubr.f32.mxu0 0.0
    %2264 = vmatmul.mubr.f32.gmra.mrb[0].mxu0 %v2197
    %v2265 = vpop.f32.mrb[0].mxu0
    %v2266 = vadd.f32 %v1980, %v2265
    %v2267 = vpop.f32.mrb[0].mxu0
    %2268 = vdwg.mxu0
    %2270 = vrot.lane.b32.xlu0 %v2266, 96
    %v2271 = vpop.permute.xlu0 %2270
    %v2273 = vadd.f32 %v1446, %v2271
    %v2274 = vxor.u32 %v2273, 2147483648
    %v2275 = vmul.f32 %v2274, 1.442695
    %v2276 = vpow.pop %v2275
    %v2277 = vadd.f32 %v2276, 1.0
    %v2278 = vrcp.pop %v2277
    %v2279 = vmul.f32 1.0, %v2278
    %v2280 = vadd.f32 %v1448, %v2271
    %v2281 = vxor.u32 %v2280, 2147483648
    %v2282 = vmul.f32 %v2281, 1.442695
    %v2283 = vpow.pop %v2282
    %v2284 = vadd.f32 %v2283, 1.0
    %v2285 = vrcp.pop %v2284
    %v2286 = vmul.f32 1.0, %v2285
    %2287 = vrot.lane.b32.xlu0 %v2266, 32
    %v2288 = vpop.permute.xlu0 %2287
    %v2290 = vmul.f32 %v2279, %v2288
    %2292 = vrot.lane.b32.xlu0 %v2290, 64
    %v2293 = vpop.permute.xlu0 %2292
    %v2295 = vadd.f32 %v1448, %v2293
    %v2296 = vtanh.pop %v2295
    %v2297 = vsub.f32 1.0, %v2286
    %2299 = vrot.lane.b32.xlu0 %v2296, 96
    %v2300 = vpop.permute.xlu0 %2299
    %v2302 = vmul.f32 %v2297, %v2300
    %v2303 = vmul.f32 %v2286, %v2195
    %v2304 = vadd.f32 %v2302, %v2303
    %v2306 = vsel %vm244, %v2304, 0
    %2308 = vmatprep.subr.mxu0 0.0
    %2309 = vmatpush1.msra.mxu0 %v1467
    %2310 = vmatprep.subr.mxu0 0.0
    %2311 = vmatpush1.msra.mxu0 %v1468
    %2312 = vmatprep.subr.mxu0 0.0
    %2313 = vmatpush1.msra.mxu0 %v1469
    %2314 = vmatprep.subr.mxu0 0.0
    %2315 = vmatpush1.msra.mxu0 %v1470
    %2316 = vmatprep.subr.mxu0 0.0
    %2317 = vmatpush1.msra.mxu0 0.0
    %2318 = vmatprep.subr.mxu0 0.0
    %2319 = vmatpush1.msra.mxu0 0.0
    %2320 = vmatprep.subr.mxu0 0.0
    %2321 = vmatpush1.msra.mxu0 0.0
    %2322 = vmatprep.subr.mxu0 0.0
    %2323 = vmatpush1.msra.mxu0 0.0
    %2324 = vmatprep.subr.mxu0 0.0
    %2325 = vmatpush1.msra.mxu0 0.0
    %2326 = vmatprep.subr.mxu0 0.0
    %2327 = vmatpush1.msra.mxu0 0.0
    %2328 = vmatprep.subr.mxu0 0.0
    %2329 = vmatpush1.msra.mxu0 0.0
    %2330 = vmatprep.subr.mxu0 0.0
    %2331 = vmatpush1.msra.mxu0 0.0
    %2332 = vmatprep.subr.mxu0 0.0
    %2333 = vmatpush1.msra.mxu0 0.0
    %2334 = vmatprep.subr.mxu0 0.0
    %2335 = vmatpush1.msra.mxu0 0.0
    %2336 = vmatprep.subr.mxu0 0.0
    %2337 = vmatpush1.msra.mxu0 0.0
    %2338 = vmatprep.subr.mxu0 0.0
    %2339 = vmatpush1.msra.mxu0 0.0
    %2340 = vmatprep.subr.mxu0 0.0
    %2341 = vmatpush1.msra.mxu0 0.0
    %2342 = vmatprep.subr.mxu0 0.0
    %2343 = vmatpush1.msra.mxu0 0.0
    %2344 = vmatprep.subr.mxu0 0.0
    %2345 = vmatpush1.msra.mxu0 0.0
    %2346 = vmatprep.subr.mxu0 0.0
    %2347 = vmatpush1.msra.mxu0 0.0
    %2348 = vmatprep.subr.mxu0 0.0
    %2349 = vmatpush1.msra.mxu0 0.0
    %2350 = vmatprep.subr.mxu0 0.0
    %2351 = vmatpush1.msra.mxu0 0.0
    %2352 = vmatprep.subr.mxu0 0.0
    %2353 = vmatpush1.msra.mxu0 0.0
    %2354 = vmatprep.subr.mxu0 0.0
    %2355 = vmatpush1.msra.mxu0 0.0
    %2356 = vmatprep.subr.mxu0 0.0
    %2357 = vmatpush1.msra.mxu0 0.0
    %2358 = vmatprep.subr.mxu0 0.0
    %2359 = vmatpush1.msra.mxu0 0.0
    %2360 = vmatprep.subr.mxu0 0.0
    %2361 = vmatpush1.msra.mxu0 0.0
    %2362 = vmatprep.subr.mxu0 0.0
    %2363 = vmatpush1.msra.mxu0 0.0
    %2364 = vmatprep.subr.mxu0 0.0
    %2365 = vmatpush1.msra.mxu0 0.0
    %2366 = vmatprep.subr.mxu0 0.0
    %2367 = vmatpush1.msra.mxu0 0.0
    %2368 = vmatprep.subr.mxu0 0.0
    %2369 = vmatpush1.msra.mxu0 0.0
    %2370 = vmatprep.subr.mxu0 0.0
    %2371 = vmatpush1.msra.mxu0 0.0
    %2372 = vmatprep.mubr.f32.mxu0 0.0
    %2373 = vmatmul.mubr.f32.gmra.mrb[0].mxu0 %v2306
    %v2374 = vpop.f32.mrb[0].mxu0
    %v2375 = vadd.f32 %v1980, %v2374
    %v2376 = vpop.f32.mrb[0].mxu0
    %2377 = vdwg.mxu0
    %2379 = vrot.lane.b32.xlu0 %v2375, 96
    %v2380 = vpop.permute.xlu0 %2379
    %v2382 = vadd.f32 %v1440, %v2380
    %v2383 = vxor.u32 %v2382, 2147483648
    %v2384 = vmul.f32 %v2383, 1.442695
    %v2385 = vpow.pop %v2384
    %v2386 = vadd.f32 %v2385, 1.0
    %v2387 = vrcp.pop %v2386
    %v2388 = vmul.f32 1.0, %v2387
    %v2389 = vadd.f32 %v1442, %v2380
    %v2390 = vxor.u32 %v2389, 2147483648
    %v2391 = vmul.f32 %v2390, 1.442695
    %v2392 = vpow.pop %v2391
    %v2393 = vadd.f32 %v2392, 1.0
    %v2394 = vrcp.pop %v2393
    %v2395 = vmul.f32 1.0, %v2394
    %2396 = vrot.lane.b32.xlu0 %v2375, 32
    %v2397 = vpop.permute.xlu0 %2396
    %v2399 = vmul.f32 %v2388, %v2397
    %2401 = vrot.lane.b32.xlu0 %v2399, 64
    %v2402 = vpop.permute.xlu0 %2401
    %v2404 = vadd.f32 %v1442, %v2402
    %v2405 = vtanh.pop %v2404
    %v2406 = vsub.f32 1.0, %v2395
    %2408 = vrot.lane.b32.xlu0 %v2405, 96
    %v2409 = vpop.permute.xlu0 %2408
    %v2411 = vmul.f32 %v2406, %v2409
    %v2412 = vmul.f32 %v2395, %v2304
    %v2413 = vadd.f32 %v2411, %v2412
    %v2415 = vsel %vm244, %v2413, 0
    %2417 = vmatprep.subr.mxu0 0.0
    %2418 = vmatpush1.msra.mxu0 %v1467
    %2419 = vmatprep.subr.mxu0 0.0
    %2420 = vmatpush1.msra.mxu0 %v1468
    %2421 = vmatprep.subr.mxu0 0.0
    %2422 = vmatpush1.msra.mxu0 %v1469
    %2423 = vmatprep.subr.mxu0 0.0
    %2424 = vmatpush1.msra.mxu0 %v1470
    %2425 = vmatprep.subr.mxu0 0.0
    %2426 = vmatpush1.msra.mxu0 0.0
    %2427 = vmatprep.subr.mxu0 0.0
    %2428 = vmatpush1.msra.mxu0 0.0
    %2429 = vmatprep.subr.mxu0 0.0
    %2430 = vmatpush1.msra.mxu0 0.0
    %2431 = vmatprep.subr.mxu0 0.0
    %2432 = vmatpush1.msra.mxu0 0.0
    %2433 = vmatprep.subr.mxu0 0.0
    %2434 = vmatpush1.msra.mxu0 0.0
    %2435 = vmatprep.subr.mxu0 0.0
    %2436 = vmatpush1.msra.mxu0 0.0
    %2437 = vmatprep.subr.mxu0 0.0
    %2438 = vmatpush1.msra.mxu0 0.0
    %2439 = vmatprep.subr.mxu0 0.0
    %2440 = vmatpush1.msra.mxu0 0.0
    %2441 = vmatprep.subr.mxu0 0.0
    %2442 = vmatpush1.msra.mxu0 0.0
    %2443 = vmatprep.subr.mxu0 0.0
    %2444 = vmatpush1.msra.mxu0 0.0
    %2445 = vmatprep.subr.mxu0 0.0
    %2446 = vmatpush1.msra.mxu0 0.0
    %2447 = vmatprep.subr.mxu0 0.0
    %2448 = vmatpush1.msra.mxu0 0.0
    %2449 = vmatprep.subr.mxu0 0.0
    %2450 = vmatpush1.msra.mxu0 0.0
    %2451 = vmatprep.subr.mxu0 0.0
    %2452 = vmatpush1.msra.mxu0 0.0
    %2453 = vmatprep.subr.mxu0 0.0
    %2454 = vmatpush1.msra.mxu0 0.0
    %2455 = vmatprep.subr.mxu0 0.0
    %2456 = vmatpush1.msra.mxu0 0.0
    %2457 = vmatprep.subr.mxu0 0.0
    %2458 = vmatpush1.msra.mxu0 0.0
    %2459 = vmatprep.subr.mxu0 0.0
    %2460 = vmatpush1.msra.mxu0 0.0
    %2461 = vmatprep.subr.mxu0 0.0
    %2462 = vmatpush1.msra.mxu0 0.0
    %2463 = vmatprep.subr.mxu0 0.0
    %2464 = vmatpush1.msra.mxu0 0.0
    %2465 = vmatprep.subr.mxu0 0.0
    %2466 = vmatpush1.msra.mxu0 0.0
    %2467 = vmatprep.subr.mxu0 0.0
    %2468 = vmatpush1.msra.mxu0 0.0
    %2469 = vmatprep.subr.mxu0 0.0
    %2470 = vmatpush1.msra.mxu0 0.0
    %2471 = vmatprep.subr.mxu0 0.0
    %2472 = vmatpush1.msra.mxu0 0.0
    %2473 = vmatprep.subr.mxu0 0.0
    %2474 = vmatpush1.msra.mxu0 0.0
    %2475 = vmatprep.subr.mxu0 0.0
    %2476 = vmatpush1.msra.mxu0 0.0
    %2477 = vmatprep.subr.mxu0 0.0
    %2478 = vmatpush1.msra.mxu0 0.0
    %2479 = vmatprep.subr.mxu0 0.0
    %2480 = vmatpush1.msra.mxu0 0.0
    %2481 = vmatprep.mubr.f32.mxu0 0.0
    %2482 = vmatmul.mubr.f32.gmra.mrb[0].mxu0 %v2415
    %v2483 = vpop.f32.mrb[0].mxu0
    %v2484 = vadd.f32 %v1980, %v2483
    %v2485 = vpop.f32.mrb[0].mxu0
    %2486 = vdwg.mxu0
    %2488 = vrot.lane.b32.xlu0 %v2484, 96
    %v2489 = vpop.permute.xlu0 %2488
    %v2491 = vadd.f32 %v1434, %v2489
    %v2492 = vxor.u32 %v2491, 2147483648
    %v2493 = vmul.f32 %v2492, 1.442695
    %v2494 = vpow.pop %v2493
    %v2495 = vadd.f32 %v2494, 1.0
    %v2496 = vrcp.pop %v2495
    %v2497 = vmul.f32 1.0, %v2496
    %v2498 = vadd.f32 %v1436, %v2489
    %v2499 = vxor.u32 %v2498, 2147483648
    %v2500 = vmul.f32 %v2499, 1.442695
    %v2501 = vpow.pop %v2500
    %v2502 = vadd.f32 %v2501, 1.0
    %v2503 = vrcp.pop %v2502
    %v2504 = vmul.f32 1.0, %v2503
    %2505 = vrot.lane.b32.xlu0 %v2484, 32
    %v2506 = vpop.permute.xlu0 %2505
    %v2508 = vmul.f32 %v2497, %v2506
    %2510 = vrot.lane.b32.xlu0 %v2508, 64
    %v2511 = vpop.permute.xlu0 %2510
    %v2513 = vadd.f32 %v1436, %v2511
    %v2514 = vtanh.pop %v2513
    %v2515 = vsub.f32 1.0, %v2504
    %2517 = vrot.lane.b32.xlu0 %v2514, 96
    %v2518 = vpop.permute.xlu0 %2517
    %v2520 = vmul.f32 %v2515, %v2518
    %v2521 = vmul.f32 %v2504, %v2413
    %v2522 = vadd.f32 %v2520, %v2521
    %2525 = vrot.lane.b32.xlu0 %v2522, 32
    %v2526 = vpop.permute.xlu0 %2525
    %v2528 = vsel %vm244, %v1575, %v2526
    %2530 = vrot.lane.b32.xlu0 %v2413, 32
    %v2531 = vpop.permute.xlu0 %2530
    %v2533 = vsel %vm244, %v1676, %v2531
    %2535 = vrot.lane.b32.xlu0 %v2304, 32
    %v2536 = vpop.permute.xlu0 %2535
    %v2538 = vsel %vm244, %v1777, %v2536
    %2540 = vrot.lane.b32.xlu0 %v2195, 32
    %v2541 = vpop.permute.xlu0 %2540
    %v2543 = vsel %vm244, %v1878, %v2541
    %2545 = vrot.lane.b32.xlu0 %v1976, 96
    %v2546 = vpop.permute.xlu0 %2545
    %2548 = vrot.lane.b32.xlu0 %v2086, 32
    %v2549 = vpop.permute.xlu0 %2548
    %v2551 = vsel %vm244, %v2546, %v2549
    %s2552 = sld [smem:[#allocation2]]
    %v2553 = vstv %s2552
    %v2554 = vmul.f32 %v2553, %v2528
    %s2555 = sld [smem:[#allocation2 + $0x1]]
    %v2556 = vstv %s2555
    %v2557 = vmul.f32 %v2556, %v2533
    %v2558 = vadd.f32 %v2554, %v2557
    %s2559 = sld [smem:[#allocation2 + $0x2]]
    %v2560 = vstv %s2559
    %v2561 = vmul.f32 %v2560, %v2538
    %v2562 = vadd.f32 %v2558, %v2561
    %s2563 = sld [smem:[#allocation2 + $0x3]]
    %v2564 = vstv %s2563
    %v2565 = vmul.f32 %v2564, %v2543
    %v2566 = vadd.f32 %v2562, %v2565
    %s2567 = sld [smem:[#allocation2 + $0x4]]
    %v2568 = vstv %s2567
    %v2569 = vmul.f32 %v2568, %v2551
    %v2570 = vadd.f32 %v2566, %v2569
    %s2571 = sld [smem:[#allocation2 + $0x5]]
    %v2572 = vstv %s2571
    %v2573 = vadd.f32 %v2570, %v2572
    %2574 = vst.msk [vmem:[#allocation5] sm:$0xff] %vm1351, %v2573
    %v2575 = vld [vmem:[%s10] sm:$0x1]
    %v2576 = vld [vmem:[%s10 + $0x1] sm:$0x1]
    %v2577 = vsel %vm1351, %v2573, 0.0
    %v2578 = vrot.slane %v2577, 4
    %v2579 = vadd.f32 %v2577, %v2578
    %v2580 = vrot.slane %v2579, 2
    %v2581 = vadd.f32 %v2579, %v2580
    %v2582 = vrot.slane %v2581, 1
    %v2583 = vadd.f32 %v2581, %v2582
    %v2584 = vrcp.pop 8.0
    %v2585 = vmul.f32 %v2583, %v2584
    %v2586 = vsub.f32 %v2573, %v2585
    %v2587 = vmul.f32 %v2586, %v2586
    %v2588 = vsel %vm1351, %v2587, 0.0
    %v2589 = vrot.slane %v2588, 4
    %v2590 = vadd.f32 %v2588, %v2589
    %v2591 = vrot.slane %v2590, 2
    %v2592 = vadd.f32 %v2590, %v2591
    %v2593 = vrot.slane %v2592, 1
    %v2594 = vadd.f32 %v2592, %v2593
    %v2595 = vmul.f32 %v2594, %v2584
    %v2596 = vadd.f32 %v2595, 1e-05
    %v2597 = vrsqrt.pop %v2596
    %v2598 = vmul.f32 %v2586, %v2597
    %v2599 = vlaneseq
    %v2600 = vshrl.u32 %v2599, 7
    %v2601 = vsub.s32 0, %v2600
    %v2602 = vrot.slane %v2575, %v2601
    %v2603 = vmul.f32 %v2598, %v2602
    %v2604 = vlaneseq
    %v2605 = vshrl.u32 %v2604, 7
    %v2606 = vsub.s32 0, %v2605
    %v2607 = vrot.slane %v2576, %v2606
    %v2608 = vadd.f32 %v2603, %v2607
    %v2609 = vld [vmem:[%s11] sm:$0xff]
    %v2610 = vld [vmem:[%s11 + $0x8] sm:$0xff]
    %v2611 = vld [vmem:[%s11 + $0x10] sm:$0xff]
    %v2612 = vld [vmem:[%s11 + $0x18] sm:$0xff]
    %v2613 = vld [vmem:[%s11 + $0x20] sm:$0xff]
    %v2614 = vld [vmem:[%s11 + $0x28] sm:$0xff]
    %v2615 = vld [vmem:[%s11 + $0x30] sm:$0xff]
    %v2616 = vld [vmem:[%s11 + $0x38] sm:$0xff]
    %v2617 = vld [vmem:[%s12] sm:$0x1]
    %v2618 = vlaneseq
    %v2619 = vshrl.u32 %v2618, 7
    %v2620 = vsub.s32 0, %v2619
    %v2621 = vrot.slane %v2617, %v2620
    %v2623 = vsel %vm1351, %v2608, 0
    %2625 = vmatprep.subr.mxu0 0.0
    %2626 = vmatpush1.msra.mxu0 %v2609
    %2627 = vmatprep.subr.mxu0 0.0
    %2628 = vmatpush1.msra.mxu0 %v2610
    %2629 = vmatprep.subr.mxu0 0.0
    %2630 = vmatpush1.msra.mxu0 %v2611
    %2631 = vmatprep.subr.mxu0 0.0
    %2632 = vmatpush1.msra.mxu0 %v2612
    %2633 = vmatprep.subr.mxu0 0.0
    %2634 = vmatpush1.msra.mxu0 %v2613
    %2635 = vmatprep.subr.mxu0 0.0
    %2636 = vmatpush1.msra.mxu0 %v2614
    %2637 = vmatprep.subr.mxu0 0.0
    %2638 = vmatpush1.msra.mxu0 %v2615
    %2639 = vmatprep.subr.mxu0 0.0
    %2640 = vmatpush1.msra.mxu0 %v2616
    %2641 = vmatprep.subr.mxu0 0.0
    %2642 = vmatpush1.msra.mxu0 0.0
    %2643 = vmatprep.subr.mxu0 0.0
    %2644 = vmatpush1.msra.mxu0 0.0
    %2645 = vmatprep.subr.mxu0 0.0
    %2646 = vmatpush1.msra.mxu0 0.0
    %2647 = vmatprep.subr.mxu0 0.0
    %2648 = vmatpush1.msra.mxu0 0.0
    %2649 = vmatprep.subr.mxu0 0.0
    %2650 = vmatpush1.msra.mxu0 0.0
    %2651 = vmatprep.subr.mxu0 0.0
    %2652 = vmatpush1.msra.mxu0 0.0
    %2653 = vmatprep.subr.mxu0 0.0
    %2654 = vmatpush1.msra.mxu0 0.0
    %2655 = vmatprep.subr.mxu0 0.0
    %2656 = vmatpush1.msra.mxu0 0.0
    %2657 = vmatprep.subr.mxu0 0.0
    %2658 = vmatpush1.msra.mxu0 0.0
    %2659 = vmatprep.subr.mxu0 0.0
    %2660 = vmatpush1.msra.mxu0 0.0
    %2661 = vmatprep.subr.mxu0 0.0
    %2662 = vmatpush1.msra.mxu0 0.0
    %2663 = vmatprep.subr.mxu0 0.0
    %2664 = vmatpush1.msra.mxu0 0.0
    %2665 = vmatprep.subr.mxu0 0.0
    %2666 = vmatpush1.msra.mxu0 0.0
    %2667 = vmatprep.subr.mxu0 0.0
    %2668 = vmatpush1.msra.mxu0 0.0
    %2669 = vmatprep.subr.mxu0 0.0
    %2670 = vmatpush1.msra.mxu0 0.0
    %2671 = vmatprep.subr.mxu0 0.0
    %2672 = vmatpush1.msra.mxu0 0.0
    %2673 = vmatprep.subr.mxu0 0.0
    %2674 = vmatpush1.msra.mxu0 0.0
    %2675 = vmatprep.subr.mxu0 0.0
    %2676 = vmatpush1.msra.mxu0 0.0
    %2677 = vmatprep.subr.mxu0 0.0
    %2678 = vmatpush1.msra.mxu0 0.0
    %2679 = vmatprep.subr.mxu0 0.0
    %2680 = vmatpush1.msra.mxu0 0.0
    %2681 = vmatprep.subr.mxu0 0.0
    %2682 = vmatpush1.msra.mxu0 0.0
    %2683 = vmatprep.subr.mxu0 0.0
    %2684 = vmatpush1.msra.mxu0 0.0
    %2685 = vmatprep.subr.mxu0 0.0
    %2686 = vmatpush1.msra.mxu0 0.0
    %2687 = vmatprep.subr.mxu0 0.0
    %2688 = vmatpush1.msra.mxu0 0.0
    %2689 = vmatprep.mubr.f32.mxu0 0.0
    %2690 = vmatmul.mubr.f32.gmra.mrb[0].mxu0 %v2623
    %v2691 = vpop.f32.mrb[0].mxu0
    %v2692 = vadd.f32 %v2621, %v2691
    %v2693 = vpop.f32.mrb[0].mxu0
    %2694 = vdwg.mxu0
    %v2695 = vld [vmem:[%s12 + $0x1] sm:$0x1]
    %v2696 = vld [vmem:[%s12 + $0x2] sm:$0x1]
    %v2697 = vsel %vm244, %v2692, 0.0
    %v2698 = vrot.slane %v2697, 4
    %v2699 = vadd.f32 %v2697, %v2698
    %v2700 = vrot.slane %v2699, 2
    %v2701 = vadd.f32 %v2699, %v2700
    %v2702 = vrot.slane %v2701, 1
    %v2703 = vadd.f32 %v2701, %v2702
    %v2704 = vmul.f32 %v2703, %v2584
    %v2705 = vsub.f32 %v2692, %v2704
    %v2706 = vmul.f32 %v2705, %v2705
    %v2707 = vsel %vm244, %v2706, 0.0
    %v2708 = vrot.slane %v2707, 4
    %v2709 = vadd.f32 %v2707, %v2708
    %v2710 = vrot.slane %v2709, 2
    %v2711 = vadd.f32 %v2709, %v2710
    %v2712 = vrot.slane %v2711, 1
    %v2713 = vadd.f32 %v2711, %v2712
    %v2714 = vmul.f32 %v2713, %v2584
    %v2715 = vadd.f32 %v2714, 1e-05
    %v2716 = vrsqrt.pop %v2715
    %v2717 = vmul.f32 %v2705, %v2716
    %v2718 = vlaneseq
    %v2719 = vshrl.u32 %v2718, 7
    %v2720 = vsub.s32 0, %v2719
    %v2721 = vrot.slane %v2695, %v2720
    %v2722 = vmul.f32 %v2717, %v2721
    %v2723 = vlaneseq
    %v2724 = vshrl.u32 %v2723, 7
    %v2725 = vsub.s32 0, %v2724
    %v2726 = vrot.slane %v2696, %v2725
    %v2727 = vadd.f32 %v2722, %v2726
    %vm2728 = vcmp.gt.f32.partialorder %v2727, 0.0
    %v2729 = vmul.f32 %v2727, 0.01
    %v2730 = vsel %vm2728, %v2727, %v2729
    %v2731 = vld [vmem:[%s13] sm:$0xff]
    %v2732 = vld [vmem:[%s13 + $0x8] sm:$0xff]
    %v2733 = vld [vmem:[%s13 + $0x10] sm:$0xff]
    %v2734 = vld [vmem:[%s13 + $0x18] sm:$0xff]
    %v2735 = vld [vmem:[%s14] sm:$0x1]
    %v2736 = vlaneseq
    %v2737 = vshrl.u32 %v2736, 7
    %v2738 = vsub.s32 0, %v2737
    %v2739 = vrot.slane %v2735, %v2738
    %v2741 = vsel %vm244, %v2730, 0
    %2743 = vmatprep.subr.mxu0 0.0
    %2744 = vmatpush1.msra.mxu0 %v2731
    %2745 = vmatprep.subr.mxu0 0.0
    %2746 = vmatpush1.msra.mxu0 %v2732
    %2747 = vmatprep.subr.mxu0 0.0
    %2748 = vmatpush1.msra.mxu0 %v2733
    %2749 = vmatprep.subr.mxu0 0.0
    %2750 = vmatpush1.msra.mxu0 %v2734
    %2751 = vmatprep.subr.mxu0 0.0
    %2752 = vmatpush1.msra.mxu0 0.0
    %2753 = vmatprep.subr.mxu0 0.0
    %2754 = vmatpush1.msra.mxu0 0.0
    %2755 = vmatprep.subr.mxu0 0.0
    %2756 = vmatpush1.msra.mxu0 0.0
    %2757 = vmatprep.subr.mxu0 0.0
    %2758 = vmatpush1.msra.mxu0 0.0
    %2759 = vmatprep.subr.mxu0 0.0
    %2760 = vmatpush1.msra.mxu0 0.0
    %2761 = vmatprep.subr.mxu0 0.0
    %2762 = vmatpush1.msra.mxu0 0.0
    %2763 = vmatprep.subr.mxu0 0.0
    %2764 = vmatpush1.msra.mxu0 0.0
    %2765 = vmatprep.subr.mxu0 0.0
    %2766 = vmatpush1.msra.mxu0 0.0
    %2767 = vmatprep.subr.mxu0 0.0
    %2768 = vmatpush1.msra.mxu0 0.0
    %2769 = vmatprep.subr.mxu0 0.0
    %2770 = vmatpush1.msra.mxu0 0.0
    %2771 = vmatprep.subr.mxu0 0.0
    %2772 = vmatpush1.msra.mxu0 0.0
    %2773 = vmatprep.subr.mxu0 0.0
    %2774 = vmatpush1.msra.mxu0 0.0
    %2775 = vmatprep.subr.mxu0 0.0
    %2776 = vmatpush1.msra.mxu0 0.0
    %2777 = vmatprep.subr.mxu0 0.0
    %2778 = vmatpush1.msra.mxu0 0.0
    %2779 = vmatprep.subr.mxu0 0.0
    %2780 = vmatpush1.msra.mxu0 0.0
    %2781 = vmatprep.subr.mxu0 0.0
    %2782 = vmatpush1.msra.mxu0 0.0
    %2783 = vmatprep.subr.mxu0 0.0
    %2784 = vmatpush1.msra.mxu0 0.0
    %2785 = vmatprep.subr.mxu0 0.0
    %2786 = vmatpush1.msra.mxu0 0.0
    %2787 = vmatprep.subr.mxu0 0.0
    %2788 = vmatpush1.msra.mxu0 0.0
    %2789 = vmatprep.subr.mxu0 0.0
    %2790 = vmatpush1.msra.mxu0 0.0
    %2791 = vmatprep.subr.mxu0 0.0
    %2792 = vmatpush1.msra.mxu0 0.0
    %2793 = vmatprep.subr.mxu0 0.0
    %2794 = vmatpush1.msra.mxu0 0.0
    %2795 = vmatprep.subr.mxu0 0.0
    %2796 = vmatpush1.msra.mxu0 0.0
    %2797 = vmatprep.subr.mxu0 0.0
    %2798 = vmatpush1.msra.mxu0 0.0
    %2799 = vmatprep.subr.mxu0 0.0
    %2800 = vmatpush1.msra.mxu0 0.0
    %2801 = vmatprep.subr.mxu0 0.0
    %2802 = vmatpush1.msra.mxu0 0.0
    %2803 = vmatprep.subr.mxu0 0.0
    %2804 = vmatpush1.msra.mxu0 0.0
    %2805 = vmatprep.subr.mxu0 0.0
    %2806 = vmatpush1.msra.mxu0 0.0
    %2807 = vmatprep.mubr.f32.mxu0 0.0
    %2808 = vmatmul.mubr.f32.gmra.mrb[0].mxu0 %v2741
    %v2809 = vpop.f32.mrb[0].mxu0
    %v2810 = vadd.f32 %v2739, %v2809
    %v2811 = vpop.f32.mrb[0].mxu0
    %2812 = vdwg.mxu0
    %v2813 = vld [vmem:[%s14 + $0x1] sm:$0x1]
    %v2814 = vld [vmem:[%s14 + $0x2] sm:$0x1]
    %vm2815 = vcmask 64512
    %v2816 = vsel %vm2815, %v2810, 0.0
    %v2817 = vrot.slane %v2816, 4
    %v2818 = vadd.f32 %v2816, %v2817
    %v2819 = vrot.slane %v2818, 2
    %v2820 = vadd.f32 %v2818, %v2819
    %v2821 = vrot.slane %v2820, 1
    %v2822 = vadd.f32 %v2820, %v2821
    %v2823 = vmul.f32 %v2822, %v2584
    %v2824 = vsub.f32 %v2810, %v2823
    %v2825 = vmul.f32 %v2824, %v2824
    %v2826 = vsel %vm2815, %v2825, 0.0
    %v2827 = vrot.slane %v2826, 4
    %v2828 = vadd.f32 %v2826, %v2827
    %v2829 = vrot.slane %v2828, 2
    %v2830 = vadd.f32 %v2828, %v2829
    %v2831 = vrot.slane %v2830, 1
    %v2832 = vadd.f32 %v2830, %v2831
    %v2833 = vmul.f32 %v2832, %v2584
    %v2834 = vadd.f32 %v2833, 1e-05
    %v2835 = vrsqrt.pop %v2834
    %v2836 = vmul.f32 %v2824, %v2835
    %v2837 = vlaneseq
    %v2838 = vshrl.u32 %v2837, 7
    %v2839 = vsub.s32 0, %v2838
    %v2840 = vrot.slane %v2813, %v2839
    %v2841 = vmul.f32 %v2836, %v2840
    %v2842 = vlaneseq
    %v2843 = vshrl.u32 %v2842, 7
    %v2844 = vsub.s32 0, %v2843
    %v2845 = vrot.slane %v2814, %v2844
    %v2846 = vadd.f32 %v2841, %v2845
    %vm2847 = vcmp.gt.f32.partialorder %v2846, 0.0
    %v2848 = vmul.f32 %v2846, 0.01
    %v2849 = vsel %vm2847, %v2846, %v2848
    %v2850 = vld [vmem:[%s15] sm:$0xff]
    %v2851 = vld [vmem:[%s16] sm:$0x1]
    %v2853 = vlaneseq
    %v2854 = vshrl.u32 %v2853, 7
    %v2855 = vsub.s32 0, %v2854
    %v2856 = vrot.slane %v2851, %v2855
    %v2859 = vsel %vm2815, %v2849, 0
    %2861 = vmatprep.subr.mxu0 0.0
    %2862 = vmatpush1.msra.mxu0 %v2850
    %2863 = vmatprep.subr.mxu0 0.0
    %2864 = vmatpush1.msra.mxu0 0.0
    %2865 = vmatprep.subr.mxu0 0.0
    %2866 = vmatpush1.msra.mxu0 0.0
    %2867 = vmatprep.subr.mxu0 0.0
    %2868 = vmatpush1.msra.mxu0 0.0
    %2869 = vmatprep.subr.mxu0 0.0
    %2870 = vmatpush1.msra.mxu0 0.0
    %2871 = vmatprep.subr.mxu0 0.0
    %2872 = vmatpush1.msra.mxu0 0.0
    %2873 = vmatprep.subr.mxu0 0.0
    %2874 = vmatpush1.msra.mxu0 0.0
    %2875 = vmatprep.subr.mxu0 0.0
    %2876 = vmatpush1.msra.mxu0 0.0
    %2877 = vmatprep.subr.mxu0 0.0
    %2878 = vmatpush1.msra.mxu0 0.0
    %2879 = vmatprep.subr.mxu0 0.0
    %2880 = vmatpush1.msra.mxu0 0.0
    %2881 = vmatprep.subr.mxu0 0.0
    %2882 = vmatpush1.msra.mxu0 0.0
    %2883 = vmatprep.subr.mxu0 0.0
    %2884 = vmatpush1.msra.mxu0 0.0
    %2885 = vmatprep.subr.mxu0 0.0
    %2886 = vmatpush1.msra.mxu0 0.0
    %2887 = vmatprep.subr.mxu0 0.0
    %2888 = vmatpush1.msra.mxu0 0.0
    %2889 = vmatprep.subr.mxu0 0.0
    %2890 = vmatpush1.msra.mxu0 0.0
    %2891 = vmatprep.subr.mxu0 0.0
    %2892 = vmatpush1.msra.mxu0 0.0
    %2893 = vmatprep.subr.mxu0 0.0
    %2894 = vmatpush1.msra.mxu0 0.0
    %2895 = vmatprep.subr.mxu0 0.0
    %2896 = vmatpush1.msra.mxu0 0.0
    %2897 = vmatprep.subr.mxu0 0.0
    %2898 = vmatpush1.msra.mxu0 0.0
    %2899 = vmatprep.subr.mxu0 0.0
    %2900 = vmatpush1.msra.mxu0 0.0
    %2901 = vmatprep.subr.mxu0 0.0
    %2902 = vmatpush1.msra.mxu0 0.0
    %2903 = vmatprep.subr.mxu0 0.0
    %2904 = vmatpush1.msra.mxu0 0.0
    %2905 = vmatprep.subr.mxu0 0.0
    %2906 = vmatpush1.msra.mxu0 0.0
    %2907 = vmatprep.subr.mxu0 0.0
    %2908 = vmatpush1.msra.mxu0 0.0
    %2909 = vmatprep.subr.mxu0 0.0
    %2910 = vmatpush1.msra.mxu0 0.0
    %2911 = vmatprep.subr.mxu0 0.0
    %2912 = vmatpush1.msra.mxu0 0.0
    %2913 = vmatprep.subr.mxu0 0.0
    %2914 = vmatpush1.msra.mxu0 0.0
    %2915 = vmatprep.subr.mxu0 0.0
    %2916 = vmatpush1.msra.mxu0 0.0
    %2917 = vmatprep.subr.mxu0 0.0
    %2918 = vmatpush1.msra.mxu0 0.0
    %2919 = vmatprep.subr.mxu0 0.0
    %2920 = vmatpush1.msra.mxu0 0.0
    %2921 = vmatprep.subr.mxu0 0.0
    %2922 = vmatpush1.msra.mxu0 0.0
    %2923 = vmatprep.subr.mxu0 0.0
    %2924 = vmatpush1.msra.mxu0 0.0
    %2925 = vmatprep.mubr.f32.mxu0 0.0
    %2926 = vmatmul.mubr.f32.gmra.mrb[0].mxu0 %v2859
    %v2927 = vpop.f32.mrb[0].mxu0
    %v2928 = vadd.f32 %v2856, %v2927
    %v2929 = vpop.f32.mrb[0].mxu0
    %2930 = vdwg.mxu0
    %vm2931 = vcmask 15360
    %2932 = vst.msk [vmem:[%s18] sm:$0xff] %vm2931, %v2928
    // Predicated region
    $region74: #{model_tn_forward.3} parent=1 // pred_check
      _
    $region75: #{model_tn_forward.3} parent=1 // pred_check_branch
      %2934 = sbr.rel (0) target = $region77
    $region76: #{model_tn_forward.3} parent=1 // pred_region
      %s2936 = ssub.s32 128, 128
      %2937 = vsyncadd [#allocation3], %s2936
      %s2939 = sshll.u32 [#allocation5], 4
      %s2940 = int_to_ptr.vmem [resolvable:$true] %s2939
      %2942 = dma.vmem_to_hbm [thread:$0]  %s2940, 128, %s17, [#allocation3]
    $region77: #{model_tn_forward.3} parent=1 // pred_fallthru
      _
    // Predicated region
    $region78: #{model_tn_forward.3} parent=1 // pred_check
      _
    $region79: #{model_tn_forward.3} parent=1 // pred_check_branch
      %2944 = sbr.rel (0) target = $region81
    $region80: #{model_tn_forward.3} parent=1 // pred_region
      _
    $region81: #{model_tn_forward.3} parent=1 // pred_fallthru
      _
    // Predicated region
    $region82: #{model_tn_forward.3} parent=1 // pred_check
      _
    $region83: #{model_tn_forward.3} parent=1 // pred_check_branch
      %2946 = sbr.rel (0) target = $region85
    $region84: #{model_tn_forward.3} parent=1 // pred_region
      %2947 = dma.done [#allocation3], 128
    $region85: #{model_tn_forward.3} parent=1 // pred_fallthru
      _
    // Predicated region
    $region86: #{model_tn_forward.3} parent=1 // pred_check
      _
    $region87: #{model_tn_forward.3} parent=1 // pred_check_branch
      %2949 = sbr.rel (0) target = $region89
    $region88: #{model_tn_forward.3} parent=1 // pred_region
      _
    $region89: #{model_tn_forward.3} parent=1 // pred_fallthru
      _
    %2950 = vsyncpa [#allocation3], 1
    %2951 = vsyncpa [#allocation4], 1

// kernel: model_tn_forward.2
$region0: #{model_tn_forward.2}
  #allocation0 [shape = 'u32[]', space=smem, size = 0x4, offset = 0x4, fixed_abs, tag = 'smem constant byte address 0x4 - core index']
  #allocation1 [shape = 'u32[144,128]{1,0:T(1,128)}', space=vmem, size = 0x12000, scoped, tag = 'internal scratch']
  %s0 = inlined_call_operand.vmem [shape: f32[5,16,128], index: 0, kind: input, shape index: {}]
  %s1 = inlined_call_operand.vmem [shape: f32[5,16,16], index: 1, kind: input, shape index: {}]
  %s2 = inlined_call_operand.vmem [shape: f32[5,8,22], index: 2, kind: input, shape index: {}]
  %s3 = inlined_call_operand.vmem [shape: f32[8,16], index: 3, kind: input, shape index: {}]
  %s4 = inlined_call_operand.vmem [shape: f32[8,16], index: 4, kind: input, shape index: {}]
  %s5 = inlined_call_operand.vmem [shape: f32[64,16], index: 5, kind: input, shape index: {}]
  %s6 = inlined_call_operand.vmem [shape: f32[128,144], index: 6, kind: input, shape index: {}]
  %s7 = inlined_call_operand.vmem [shape: f32[1,144], index: 7, kind: input, shape index: {}]
  %s8 = inlined_call_operand.vmem [shape: f32[64,64], index: 8, kind: input, shape index: {}]
  %s9 = inlined_call_operand.vmem [shape: f32[4,16], index: 9, kind: input, shape index: {}]
  %s10 = inlined_call_operand.vmem [shape: f32[16,144], index: 10, kind: input, shape index: {}]
  %s11 = inlined_call_operand.vmem [shape: f32[1,144], index: 11, kind: input, shape index: {}]
  %s12 = inlined_call_operand.vmem [shape: f32[64,64], index: 12, kind: input, shape index: {}]
  %s13 = inlined_call_operand.vmem [shape: f32[4,16], index: 13, kind: input, shape index: {}]
  %s14 = inlined_call_operand.vmem [shape: f32[2,86], index: 14, kind: input, shape index: {}]
  %s15 = inlined_call_operand.vmem [shape: f32[5,8,86], index: 15, kind: output, shape index: {}]
  %s16 = sld [smem:[#allocation0]]
  $region93: #{model_tn_forward.2} parent=0
    _
  %s18 = ssub.s32 1, %s16
  %s19 = scalar_select 0, %s18, %s16
  loop: start=0, step=1, limit=7
  $region2: #{model_tn_forward.2} parent=0 // loop_pre_header
    _
  $region3: #{model_tn_forward.2} parent=0 // loop_header
    %s21 = sphi 0, %s25
    %p22 = scmp.ge.s32.totalorder %s21, 7
    %s31 = sphi 0, %s33
    %s34 = sphi 0, %s31
    %s35 = sphi 0, %s34
    %s51 = sphi 0, %s35
    %s57 = sphi 0, %s59
    %s60 = sphi 0, %s57
    %s61 = sphi 0, %s60
    %s77 = sphi 0, %s61
    %s83 = sphi 0, %s85
    %s86 = sphi 0, %s83
    %s87 = sphi 0, %s86
    %s103 = sphi 0, %s87
    %s107 = sphi 0, %s107
    %s109 = sphi 0, %s107
    %s110 = sphi 0, %s109
    %s124 = sphi 0, %s110
    %s128 = sphi 0, %s128
    %s130 = sphi 0, %s128
    %s131 = sphi 0, %s130
    %s145 = sphi 0, %s131
    %s149 = sphi 0, %s149
    %s151 = sphi 0, %s149
    %s152 = sphi 0, %s151
    %s166 = sphi 0, %s152
    %s170 = sphi 0, %s170
    %s172 = sphi 0, %s170
    %s173 = sphi 0, %s172
    %s187 = sphi 0, %s173
    %s191 = sphi 0, %s191
    %s193 = sphi 0, %s191
    %s194 = sphi 0, %s193
    %s208 = sphi 0, %s194
    %s212 = sphi 0, %s212
    %s214 = sphi 0, %s212
    %s215 = sphi 0, %s214
    %s229 = sphi 0, %s215
    %s233 = sphi 0, %s233
    %s235 = sphi 0, %s233
    %s236 = sphi 0, %s235
    %s250 = sphi 0, %s236
    %s254 = sphi 0, %s254
    %s256 = sphi 0, %s254
    %s257 = sphi 0, %s256
    %s271 = sphi 0, %s257
    %s275 = sphi 0, %s275
    %s277 = sphi 0, %s275
    %s278 = sphi 0, %s277
    %s292 = sphi 0, %s278
    %s296 = sphi 0, %s296
    %s298 = sphi 0, %s296
    %s299 = sphi 0, %s298
    %s313 = sphi 0, %s299
    %s317 = sphi 0, %s317
    %s319 = sphi 0, %s317
    %s320 = sphi 0, %s319
    %s334 = sphi 0, %s320
    %s338 = sphi 0, %s338
    %s340 = sphi 0, %s338
    %s341 = sphi 0, %s340
    %s355 = sphi 0, %s341
    %s361 = sphi 0, %s363
    %s364 = sphi 0, %s361
    %s365 = sphi 0, %s364
    %s381 = sphi 0, %s365
  $region4: #{model_tn_forward.2} parent=0 // loop_header_branch
    %24 = sbr.rel (%p22) target = $region8
  $region5: #{model_tn_forward.2} parent=0 // loop_body
    %s26 = ssub.s32 %s21, 1
    %s27 = ssub.s32 %s21, 2
    %s28 = sadd.s32 %s21, 1
    %s29 = ssub.s32 %s21, %s28
    %p30 = scmp.eq.s32.totalorder %s29, 0
    %s32 = sadd.s32 %s31, 1
    %s33 = scalar_select %p30, %s31, %s32
    %p36 = pneg %p30
    %p37 = scmp.eq.s32.totalorder %s21, 4
    %p38 = por %p36, %p37
    %p39 = scmp.ne.s32.totalorder %s31, %s34
    %p40 = scmp.eq.s32.totalorder %s21, 0
    %p41 = por %p39, %p40
    %p42 = scmp.ne.s32.totalorder %s31, %s34
    %p43 = scmp.eq.s32.totalorder %s26, 4
    %p44 = por %p42, %p43
    %p45 = scmp.ne.s32.totalorder %s34, %s35
    %p46 = scmp.eq.s32.totalorder %s26, 0
    %p47 = por %p45, %p46
    %p48 = scmp.ne.s32.totalorder %s34, %s35
    %p49 = scmp.eq.s32.totalorder %s27, 4
    %p50 = por %p48, %p49
    %p52 = scmp.ne.s32.totalorder %s35, %s51
    %p53 = scmp.eq.s32.totalorder %s27, 0
    %p54 = por %p52, %p53
    %s55 = ssub.s32 %s21, %s28
    %p56 = scmp.eq.s32.totalorder %s55, 0
    %s58 = sadd.s32 %s57, 1
    %s59 = scalar_select %p56, %s57, %s58
    %p62 = pneg %p56
    %p63 = scmp.eq.s32.totalorder %s21, 4
    %p64 = por %p62, %p63
    %p65 = scmp.ne.s32.totalorder %s57, %s60
    %p66 = scmp.eq.s32.totalorder %s21, 0
    %p67 = por %p65, %p66
    %p68 = scmp.ne.s32.totalorder %s57, %s60
    %p69 = scmp.eq.s32.totalorder %s26, 4
    %p70 = por %p68, %p69
    %p71 = scmp.ne.s32.totalorder %s60, %s61
    %p72 = scmp.eq.s32.totalorder %s26, 0
    %p73 = por %p71, %p72
    %p74 = scmp.ne.s32.totalorder %s60, %s61
    %p75 = scmp.eq.s32.totalorder %s27, 4
    %p76 = por %p74, %p75
    %p78 = scmp.ne.s32.totalorder %s61, %s77
    %p79 = scmp.eq.s32.totalorder %s27, 0
    %p80 = por %p78, %p79
    %s81 = ssub.s32 %s21, %s28
    %p82 = scmp.eq.s32.totalorder %s81, 0
    %s84 = sadd.s32 %s83, 1
    %s85 = scalar_select %p82, %s83, %s84
    %p88 = pneg %p82
    %p89 = scmp.eq.s32.totalorder %s21, 4
    %p90 = por %p88, %p89
    %p91 = scmp.ne.s32.totalorder %s83, %s86
    %p92 = scmp.eq.s32.totalorder %s21, 0
    %p93 = por %p91, %p92
    %p94 = scmp.ne.s32.totalorder %s83, %s86
    %p95 = scmp.eq.s32.totalorder %s26, 4
    %p96 = por %p94, %p95
    %p97 = scmp.ne.s32.totalorder %s86, %s87
    %p98 = scmp.eq.s32.totalorder %s26, 0
    %p99 = por %p97, %p98
    %p100 = scmp.ne.s32.totalorder %s86, %s87
    %p101 = scmp.eq.s32.totalorder %s27, 4
    %p102 = por %p100, %p101
    %p104 = scmp.ne.s32.totalorder %s87, %s103
    %p105 = scmp.eq.s32.totalorder %s27, 0
    %p106 = por %p104, %p105
    %s108 = sadd.s32 %s107, 1
    %p111 = scmp.eq.s32.totalorder %s21, 4
    %p112 = scmp.ne.s32.totalorder %s107, %s109
    %p113 = scmp.eq.s32.totalorder %s21, 0
    %p114 = por %p112, %p113
    %p115 = scmp.ne.s32.totalorder %s107, %s109
    %p116 = scmp.eq.s32.totalorder %s26, 4
    %p117 = por %p115, %p116
    %p118 = scmp.ne.s32.totalorder %s109, %s110
    %p119 = scmp.eq.s32.totalorder %s26, 0
    %p120 = por %p118, %p119
    %p121 = scmp.ne.s32.totalorder %s109, %s110
    %p122 = scmp.eq.s32.totalorder %s27, 4
    %p123 = por %p121, %p122
    %p125 = scmp.ne.s32.totalorder %s110, %s124
    %p126 = scmp.eq.s32.totalorder %s27, 0
    %p127 = por %p125, %p126
    %s129 = sadd.s32 %s128, 1
    %p132 = scmp.eq.s32.totalorder %s21, 4
    %p133 = scmp.ne.s32.totalorder %s128, %s130
    %p134 = scmp.eq.s32.totalorder %s21, 0
    %p135 = por %p133, %p134
    %p136 = scmp.ne.s32.totalorder %s128, %s130
    %p137 = scmp.eq.s32.totalorder %s26, 4
    %p138 = por %p136, %p137
    %p139 = scmp.ne.s32.totalorder %s130, %s131
    %p140 = scmp.eq.s32.totalorder %s26, 0
    %p141 = por %p139, %p140
    %p142 = scmp.ne.s32.totalorder %s130, %s131
    %p143 = scmp.eq.s32.totalorder %s27, 4
    %p144 = por %p142, %p143
    %p146 = scmp.ne.s32.totalorder %s131, %s145
    %p147 = scmp.eq.s32.totalorder %s27, 0
    %p148 = por %p146, %p147
    %s150 = sadd.s32 %s149, 1
    %p153 = scmp.eq.s32.totalorder %s21, 4
    %p154 = scmp.ne.s32.totalorder %s149, %s151
    %p155 = scmp.eq.s32.totalorder %s21, 0
    %p156 = por %p154, %p155
    %p157 = scmp.ne.s32.totalorder %s149, %s151
    %p158 = scmp.eq.s32.totalorder %s26, 4
    %p159 = por %p157, %p158
    %p160 = scmp.ne.s32.totalorder %s151, %s152
    %p161 = scmp.eq.s32.totalorder %s26, 0
    %p162 = por %p160, %p161
    %p163 = scmp.ne.s32.totalorder %s151, %s152
    %p164 = scmp.eq.s32.totalorder %s27, 4
    %p165 = por %p163, %p164
    %p167 = scmp.ne.s32.totalorder %s152, %s166
    %p168 = scmp.eq.s32.totalorder %s27, 0
    %p169 = por %p167, %p168
    %s171 = sadd.s32 %s170, 1
    %p174 = scmp.eq.s32.totalorder %s21, 4
    %p175 = scmp.ne.s32.totalorder %s170, %s172
    %p176 = scmp.eq.s32.totalorder %s21, 0
    %p177 = por %p175, %p176
    %p178 = scmp.ne.s32.totalorder %s170, %s172
    %p179 = scmp.eq.s32.totalorder %s26, 4
    %p180 = por %p178, %p179
    %p181 = scmp.ne.s32.totalorder %s172, %s173
    %p182 = scmp.eq.s32.totalorder %s26, 0
    %p183 = por %p181, %p182
    %p184 = scmp.ne.s32.totalorder %s172, %s173
    %p185 = scmp.eq.s32.totalorder %s27, 4
    %p186 = por %p184, %p185
    %p188 = scmp.ne.s32.totalorder %s173, %s187
    %p189 = scmp.eq.s32.totalorder %s27, 0
    %p190 = por %p188, %p189
    %s192 = sadd.s32 %s191, 1
    %p195 = scmp.eq.s32.totalorder %s21, 4
    %p196 = scmp.ne.s32.totalorder %s191, %s193
    %p197 = scmp.eq.s32.totalorder %s21, 0
    %p198 = por %p196, %p197
    %p199 = scmp.ne.s32.totalorder %s191, %s193
    %p200 = scmp.eq.s32.totalorder %s26, 4
    %p201 = por %p199, %p200
    %p202 = scmp.ne.s32.totalorder %s193, %s194
    %p203 = scmp.eq.s32.totalorder %s26, 0
    %p204 = por %p202, %p203
    %p205 = scmp.ne.s32.totalorder %s193, %s194
    %p206 = scmp.eq.s32.totalorder %s27, 4
    %p207 = por %p205, %p206
    %p209 = scmp.ne.s32.totalorder %s194, %s208
    %p210 = scmp.eq.s32.totalorder %s27, 0
    %p211 = por %p209, %p210
    %s213 = sadd.s32 %s212, 1
    %p216 = scmp.eq.s32.totalorder %s21, 4
    %p217 = scmp.ne.s32.totalorder %s212, %s214
    %p218 = scmp.eq.s32.totalorder %s21, 0
    %p219 = por %p217, %p218
    %p220 = scmp.ne.s32.totalorder %s212, %s214
    %p221 = scmp.eq.s32.totalorder %s26, 4
    %p222 = por %p220, %p221
    %p223 = scmp.ne.s32.totalorder %s214, %s215
    %p224 = scmp.eq.s32.totalorder %s26, 0
    %p225 = por %p223, %p224
    %p226 = scmp.ne.s32.totalorder %s214, %s215
    %p227 = scmp.eq.s32.totalorder %s27, 4
    %p228 = por %p226, %p227
    %p230 = scmp.ne.s32.totalorder %s215, %s229
    %p231 = scmp.eq.s32.totalorder %s27, 0
    %p232 = por %p230, %p231
    %s234 = sadd.s32 %s233, 1
    %p237 = scmp.eq.s32.totalorder %s21, 4
    %p238 = scmp.ne.s32.totalorder %s233, %s235
    %p239 = scmp.eq.s32.totalorder %s21, 0
    %p240 = por %p238, %p239
    %p241 = scmp.ne.s32.totalorder %s233, %s235
    %p242 = scmp.eq.s32.totalorder %s26, 4
    %p243 = por %p241, %p242
    %p244 = scmp.ne.s32.totalorder %s235, %s236
    %p245 = scmp.eq.s32.totalorder %s26, 0
    %p246 = por %p244, %p245
    %p247 = scmp.ne.s32.totalorder %s235, %s236
    %p248 = scmp.eq.s32.totalorder %s27, 4
    %p249 = por %p247, %p248
    %p251 = scmp.ne.s32.totalorder %s236, %s250
    %p252 = scmp.eq.s32.totalorder %s27, 0
    %p253 = por %p251, %p252
    %s255 = sadd.s32 %s254, 1
    %p258 = scmp.eq.s32.totalorder %s21, 4
    %p259 = scmp.ne.s32.totalorder %s254, %s256
    %p260 = scmp.eq.s32.totalorder %s21, 0
    %p261 = por %p259, %p260
    %p262 = scmp.ne.s32.totalorder %s254, %s256
    %p263 = scmp.eq.s32.totalorder %s26, 4
    %p264 = por %p262, %p263
    %p265 = scmp.ne.s32.totalorder %s256, %s257
    %p266 = scmp.eq.s32.totalorder %s26, 0
    %p267 = por %p265, %p266
    %p268 = scmp.ne.s32.totalorder %s256, %s257
    %p269 = scmp.eq.s32.totalorder %s27, 4
    %p270 = por %p268, %p269
    %p272 = scmp.ne.s32.totalorder %s257, %s271
    %p273 = scmp.eq.s32.totalorder %s27, 0
    %p274 = por %p272, %p273
    %s276 = sadd.s32 %s275, 1
    %p279 = scmp.eq.s32.totalorder %s21, 4
    %p280 = scmp.ne.s32.totalorder %s275, %s277
    %p281 = scmp.eq.s32.totalorder %s21, 0
    %p282 = por %p280, %p281
    %p283 = scmp.ne.s32.totalorder %s275, %s277
    %p284 = scmp.eq.s32.totalorder %s26, 4
    %p285 = por %p283, %p284
    %p286 = scmp.ne.s32.totalorder %s277, %s278
    %p287 = scmp.eq.s32.totalorder %s26, 0
    %p288 = por %p286, %p287
    %p289 = scmp.ne.s32.totalorder %s277, %s278
    %p290 = scmp.eq.s32.totalorder %s27, 4
    %p291 = por %p289, %p290
    %p293 = scmp.ne.s32.totalorder %s278, %s292
    %p294 = scmp.eq.s32.totalorder %s27, 0
    %p295 = por %p293, %p294
    %s297 = sadd.s32 %s296, 1
    %p300 = scmp.eq.s32.totalorder %s21, 4
    %p301 = scmp.ne.s32.totalorder %s296, %s298
    %p302 = scmp.eq.s32.totalorder %s21, 0
    %p303 = por %p301, %p302
    %p304 = scmp.ne.s32.totalorder %s296, %s298
    %p305 = scmp.eq.s32.totalorder %s26, 4
    %p306 = por %p304, %p305
    %p307 = scmp.ne.s32.totalorder %s298, %s299
    %p308 = scmp.eq.s32.totalorder %s26, 0
    %p309 = por %p307, %p308
    %p310 = scmp.ne.s32.totalorder %s298, %s299
    %p311 = scmp.eq.s32.totalorder %s27, 4
    %p312 = por %p310, %p311
    %p314 = scmp.ne.s32.totalorder %s299, %s313
    %p315 = scmp.eq.s32.totalorder %s27, 0
    %p316 = por %p314, %p315
    %s318 = sadd.s32 %s317, 1
    %p321 = scmp.eq.s32.totalorder %s21, 4
    %p322 = scmp.ne.s32.totalorder %s317, %s319
    %p323 = scmp.eq.s32.totalorder %s21, 0
    %p324 = por %p322, %p323
    %p325 = scmp.ne.s32.totalorder %s317, %s319
    %p326 = scmp.eq.s32.totalorder %s26, 4
    %p327 = por %p325, %p326
    %p328 = scmp.ne.s32.totalorder %s319, %s320
    %p329 = scmp.eq.s32.totalorder %s26, 0
    %p330 = por %p328, %p329
    %p331 = scmp.ne.s32.totalorder %s319, %s320
    %p332 = scmp.eq.s32.totalorder %s27, 4
    %p333 = por %p331, %p332
    %p335 = scmp.ne.s32.totalorder %s320, %s334
    %p336 = scmp.eq.s32.totalorder %s27, 0
    %p337 = por %p335, %p336
    %s339 = sadd.s32 %s338, 1
    %p342 = scmp.eq.s32.totalorder %s21, 4
    %p343 = scmp.ne.s32.totalorder %s338, %s340
    %p344 = scmp.eq.s32.totalorder %s21, 0
    %p345 = por %p343, %p344
    %p346 = scmp.ne.s32.totalorder %s338, %s340
    %p347 = scmp.eq.s32.totalorder %s26, 4
    %p348 = por %p346, %p347
    %p349 = scmp.ne.s32.totalorder %s340, %s341
    %p350 = scmp.eq.s32.totalorder %s26, 0
    %p351 = por %p349, %p350
    %p352 = scmp.ne.s32.totalorder %s340, %s341
    %p353 = scmp.eq.s32.totalorder %s27, 4
    %p354 = por %p352, %p353
    %p356 = scmp.ne.s32.totalorder %s341, %s355
    %p357 = scmp.eq.s32.totalorder %s27, 0
    %p358 = por %p356, %p357
    %s359 = ssub.s32 %s21, %s28
    %p360 = scmp.eq.s32.totalorder %s359, 0
    %s362 = sadd.s32 %s361, 1
    %s363 = scalar_select %p360, %s361, %s362
    %p366 = pneg %p360
    %p367 = scmp.eq.s32.totalorder %s21, 4
    %p368 = por %p366, %p367
    %p369 = scmp.ne.s32.totalorder %s361, %s364
    %p370 = scmp.eq.s32.totalorder %s21, 0
    %p371 = por %p369, %p370
    %p372 = scmp.ne.s32.totalorder %s361, %s364
    %p373 = scmp.eq.s32.totalorder %s26, 4
    %p374 = por %p372, %p373
    %p375 = scmp.ne.s32.totalorder %s364, %s365
    %p376 = scmp.eq.s32.totalorder %s26, 0
    %p377 = por %p375, %p376
    %p378 = scmp.ne.s32.totalorder %s364, %s365
    %p379 = scmp.eq.s32.totalorder %s27, 4
    %p380 = por %p378, %p379
    %p382 = scmp.ne.s32.totalorder %s365, %s381
    %p383 = scmp.eq.s32.totalorder %s27, 0
    %p384 = por %p382, %p383
    %p385 = scmp.le.s32.totalorder 1, %s21
    %p386 = scmp.lt.s32.totalorder %s21, 6
    %p387 = pnand %p385, %p386
    %p388 = pneg %p387
    // Predicated region
    $region9: #{model_tn_forward.2} parent=5 // pred_check
      _
    $region10: #{model_tn_forward.2} parent=5 // pred_check_branch
      %390 = sbr.rel (%p387) target = $region12
    $region11: #{model_tn_forward.2} parent=5 // pred_region
      %s391 = ssub.s32 %s21, 1
      // Predicated region
      $region13: #{model_tn_forward.2} parent=11 // pred_check
        %p392 = pneg %p120
      $region14: #{model_tn_forward.2} parent=11 // pred_check_branch
        %394 = sbr.rel (%p392) target = $region16
      $region15: #{model_tn_forward.2} parent=11 // pred_region
        _
      $region16: #{model_tn_forward.2} parent=11 // pred_fallthru
        _
      // Predicated region
      $region17: #{model_tn_forward.2} parent=11 // pred_check
        %p395 = pneg %p141
      $region18: #{model_tn_forward.2} parent=11 // pred_check_branch
        %397 = sbr.rel (%p395) target = $region20
      $region19: #{model_tn_forward.2} parent=11 // pred_region
        _
      $region20: #{model_tn_forward.2} parent=11 // pred_fallthru
        _
      // Predicated region
      $region21: #{model_tn_forward.2} parent=11 // pred_check
        %p398 = pneg %p162
      $region22: #{model_tn_forward.2} parent=11 // pred_check_branch
        %400 = sbr.rel (%p398) target = $region24
      $region23: #{model_tn_forward.2} parent=11 // pred_region
        _
      $region24: #{model_tn_forward.2} parent=11 // pred_fallthru
        _
      // Predicated region
      $region25: #{model_tn_forward.2} parent=11 // pred_check
        %p401 = pneg %p183
      $region26: #{model_tn_forward.2} parent=11 // pred_check_branch
        %403 = sbr.rel (%p401) target = $region28
      $region27: #{model_tn_forward.2} parent=11 // pred_region
        _
      $region28: #{model_tn_forward.2} parent=11 // pred_fallthru
        _
      // Predicated region
      $region29: #{model_tn_forward.2} parent=11 // pred_check
        %p404 = pneg %p204
      $region30: #{model_tn_forward.2} parent=11 // pred_check_branch
        %406 = sbr.rel (%p404) target = $region32
      $region31: #{model_tn_forward.2} parent=11 // pred_region
        _
      $region32: #{model_tn_forward.2} parent=11 // pred_fallthru
        _
      // Predicated region
      $region33: #{model_tn_forward.2} parent=11 // pred_check
        %p407 = pneg %p225
      $region34: #{model_tn_forward.2} parent=11 // pred_check_branch
        %409 = sbr.rel (%p407) target = $region36
      $region35: #{model_tn_forward.2} parent=11 // pred_region
        _
      $region36: #{model_tn_forward.2} parent=11 // pred_fallthru
        _
      // Predicated region
      $region37: #{model_tn_forward.2} parent=11 // pred_check
        %p410 = pneg %p246
      $region38: #{model_tn_forward.2} parent=11 // pred_check_branch
        %412 = sbr.rel (%p410) target = $region40
      $region39: #{model_tn_forward.2} parent=11 // pred_region
        _
      $region40: #{model_tn_forward.2} parent=11 // pred_fallthru
        _
      // Predicated region
      $region41: #{model_tn_forward.2} parent=11 // pred_check
        %p413 = pneg %p267
      $region42: #{model_tn_forward.2} parent=11 // pred_check_branch
        %415 = sbr.rel (%p413) target = $region44
      $region43: #{model_tn_forward.2} parent=11 // pred_region
        _
      $region44: #{model_tn_forward.2} parent=11 // pred_fallthru
        _
      // Predicated region
      $region45: #{model_tn_forward.2} parent=11 // pred_check
        %p416 = pneg %p288
      $region46: #{model_tn_forward.2} parent=11 // pred_check_branch
        %418 = sbr.rel (%p416) target = $region48
      $region47: #{model_tn_forward.2} parent=11 // pred_region
        _
      $region48: #{model_tn_forward.2} parent=11 // pred_fallthru
        _
      // Predicated region
      $region49: #{model_tn_forward.2} parent=11 // pred_check
        %p419 = pneg %p309
      $region50: #{model_tn_forward.2} parent=11 // pred_check_branch
        %421 = sbr.rel (%p419) target = $region52
      $region51: #{model_tn_forward.2} parent=11 // pred_region
        _
      $region52: #{model_tn_forward.2} parent=11 // pred_fallthru
        _
      // Predicated region
      $region53: #{model_tn_forward.2} parent=11 // pred_check
        %p422 = pneg %p330
      $region54: #{model_tn_forward.2} parent=11 // pred_check_branch
        %424 = sbr.rel (%p422) target = $region56
      $region55: #{model_tn_forward.2} parent=11 // pred_region
        _
      $region56: #{model_tn_forward.2} parent=11 // pred_fallthru
        _
      // Predicated region
      $region57: #{model_tn_forward.2} parent=11 // pred_check
        %p425 = pneg %p351
      $region58: #{model_tn_forward.2} parent=11 // pred_check_branch
        %427 = sbr.rel (%p425) target = $region60
      $region59: #{model_tn_forward.2} parent=11 // pred_region
        _
      $region60: #{model_tn_forward.2} parent=11 // pred_fallthru
        _
    $region12: #{model_tn_forward.2} parent=5 // pred_fallthru
      _
    %p428 = scmp.lt.s32.totalorder %s21, 5
    // Predicated region
    $region61: #{model_tn_forward.2} parent=5 // pred_check
      %p429 = pneg %p428
    $region62: #{model_tn_forward.2} parent=5 // pred_check_branch
      %431 = sbr.rel (%p429) target = $region64
    $region63: #{model_tn_forward.2} parent=5 // pred_region
      // Predicated region
      $region65: #{model_tn_forward.2} parent=63 // pred_check
        %p432 = pneg %p41
      $region66: #{model_tn_forward.2} parent=63 // pred_check_branch
        %434 = sbr.rel (%p432) target = $region68
      $region67: #{model_tn_forward.2} parent=63 // pred_region
        %p435 = scmp.lt.s32.totalorder %s21, 4
        %s436 = scalar_select %p435, %s21, 4
        %s437 = smul.addr %s436, 2
        %s438 = smul.addr %s437, 8
        %s439 = scalar_lea.vmem %s0, %s438
      $region68: #{model_tn_forward.2} parent=63 // pred_fallthru
        _
      // Predicated region
      $region69: #{model_tn_forward.2} parent=63 // pred_check
        %p440 = pneg %p67
      $region70: #{model_tn_forward.2} parent=63 // pred_check_branch
        %442 = sbr.rel (%p440) target = $region72
      $region71: #{model_tn_forward.2} parent=63 // pred_region
        %p443 = scmp.lt.s32.totalorder %s21, 4
        %s444 = scalar_select %p443, %s21, 4
        %s445 = smul.addr %s444, 2
        %s446 = smul.addr %s445, 8
        %s447 = scalar_lea.vmem %s1, %s446
      $region72: #{model_tn_forward.2} parent=63 // pred_fallthru
        _
      // Predicated region
      $region73: #{model_tn_forward.2} parent=63 // pred_check
        %p448 = pneg %p93
      $region74: #{model_tn_forward.2} parent=63 // pred_check_branch
        %450 = sbr.rel (%p448) target = $region76
      $region75: #{model_tn_forward.2} parent=63 // pred_region
        %p451 = scmp.lt.s32.totalorder %s21, 4
        %s452 = scalar_select %p451, %s21, 4
        %s453 = smul.addr %s452, 8
        %s454 = scalar_lea.vmem %s2, %s453
      $region76: #{model_tn_forward.2} parent=63 // pred_fallthru
        _
    $region64: #{model_tn_forward.2} parent=5 // pred_fallthru
      _
    %p455 = scmp.le.s32.totalorder 1, %s21
    %p456 = scmp.lt.s32.totalorder %s21, 6
    %p457 = pnand %p455, %p456
    %p458 = pneg %p457
    // Predicated region
    $region77: #{model_tn_forward.2} parent=5 // pred_check
      _
    $region78: #{model_tn_forward.2} parent=5 // pred_check_branch
      %460 = sbr.rel (%p457) target = $region80
    $region79: #{model_tn_forward.2} parent=5 // pred_region
      %s461 = ssub.s32 %s21, 1
      %p462 = scmp.lt.s32.totalorder %s26, 4
      %s463 = scalar_select %p462, %s26, 4
      %s464 = smul.addr %s463, 2
      %s465 = smul.addr %s464, 8
      %s466 = scalar_lea.vmem %s0, %s465
      %p467 = pneg %p47
      %p468 = pneg %p44
      %p469 = scmp.lt.s32.totalorder %s26, 4
      %s470 = scalar_select %p469, %s26, 4
      %s471 = smul.addr %s470, 2
      %s472 = smul.addr %s471, 8
      %s473 = scalar_lea.vmem %s1, %s472
      %p474 = pneg %p73
      %p475 = pneg %p70
      %p476 = scmp.lt.s32.totalorder %s26, 4
      %s477 = scalar_select %p476, %s26, 4
      %s478 = smul.addr %s477, 8
      %s479 = scalar_lea.vmem %s2, %s478
      %p480 = pneg %p99
      %p481 = pneg %p96
      %p482 = pneg %p120
      %p483 = pneg %p117
      %p484 = pneg %p141
      %p485 = pneg %p138
      %p486 = pneg %p162
      %p487 = pneg %p159
      %p488 = pneg %p183
      %p489 = pneg %p180
      %p490 = pneg %p204
      %p491 = pneg %p201
      %p492 = pneg %p225
      %p493 = pneg %p222
      %p494 = pneg %p246
      %p495 = pneg %p243
      %p496 = pneg %p267
      %p497 = pneg %p264
      %p498 = pneg %p288
      %p499 = pneg %p285
      %p500 = pneg %p309
      %p501 = pneg %p306
      %p502 = pneg %p330
      %p503 = pneg %p327
      %p504 = pneg %p351
      %p505 = pneg %p348
      %p506 = pneg %p377
      %p507 = pneg %p374
      %p508 = scmp.lt.s32.totalorder %s26, 4
      %s509 = scalar_select %p508, %s26, 4
      %s510 = smul.addr %s509, 8
      %s511 = scalar_lea.vmem %s15, %s510
      %p512 = scmp.lt.s32.totalorder %s26, 4
      %s513 = scalar_select %p512, %s26, 4
      %s514 = smul.addr %s513, 2
      %s515 = smul.addr %s514, 8
      %s516 = scalar_lea.vmem %s0, %s515
      %p517 = scmp.lt.s32.totalorder %s26, 4
      %s518 = scalar_select %p517, %s26, 4
      %s519 = smul.addr %s518, 2
      %s520 = smul.addr %s519, 8
      %s521 = scalar_lea.vmem %s1, %s520
      %p522 = scmp.lt.s32.totalorder %s26, 4
      %s523 = scalar_select %p522, %s26, 4
      %s524 = smul.addr %s523, 8
      %s525 = scalar_lea.vmem %s2, %s524
      %p526 = scmp.lt.s32.totalorder %s26, 4
      %s527 = scalar_select %p526, %s26, 4
      %s528 = smul.addr %s527, 8
      %s529 = scalar_lea.vmem %s15, %s528
      %v530 = vld [vmem:[%s516] sm:$0xff]
      %v531 = vld [vmem:[%s516 + $0x8] sm:$0xff]
      %v532 = vld [vmem:[%s521] sm:$0xff]
      %v533 = vld [vmem:[%s521 + $0x8] sm:$0xff]
      %v534 = vld [vmem:[%s5] sm:$0xff]
      %v535 = vld [vmem:[%s5 + $0x8] sm:$0xff]
      %v536 = vld [vmem:[%s5 + $0x10] sm:$0xff]
      %v537 = vld [vmem:[%s5 + $0x18] sm:$0xff]
      %v538 = vld [vmem:[%s5 + $0x20] sm:$0xff]
      %v539 = vld [vmem:[%s5 + $0x28] sm:$0xff]
      %v540 = vld [vmem:[%s5 + $0x30] sm:$0xff]
      %v541 = vld [vmem:[%s5 + $0x38] sm:$0xff]
      %v542 = vlaneseq
      %v543 = vshrl.u32 %v542, 7
      %v544 = vsub.s32 0, %v543
      %v545 = vrot.slane %v532, %v544
      %547 = vbcast.lane.b32.xlu0 %v545, 256
      %v548 = vpop.permute.xlu0 %547
      %s550 = sor.u32 256, 8
      %551 = vbcast.lane.b32.xlu0 %v545, %s550
      %v552 = vpop.permute.xlu0 %551
      %v553 = vlaneseq
      %v554 = vshrl.u32 %v553, 7
      %v555 = vsub.s32 1, %v554
      %v556 = vrot.slane %v532, %v555
      %558 = vbcast.lane.b32.xlu0 %v556, 256
      %v559 = vpop.permute.xlu0 %558
      %s561 = sor.u32 256, 8
      %562 = vbcast.lane.b32.xlu0 %v556, %s561
      %v563 = vpop.permute.xlu0 %562
      %v564 = vlaneseq
      %v565 = vshrl.u32 %v564, 7
      %v566 = vsub.s32 2, %v565
      %v567 = vrot.slane %v532, %v566
      %569 = vbcast.lane.b32.xlu0 %v567, 256
      %v570 = vpop.permute.xlu0 %569
      %s572 = sor.u32 256, 8
      %573 = vbcast.lane.b32.xlu0 %v567, %s572
      %v574 = vpop.permute.xlu0 %573
      %v575 = vlaneseq
      %v576 = vshrl.u32 %v575, 7
      %v577 = vsub.s32 3, %v576
      %v578 = vrot.slane %v532, %v577
      %580 = vbcast.lane.b32.xlu0 %v578, 256
      %v581 = vpop.permute.xlu0 %580
      %s583 = sor.u32 256, 8
      %584 = vbcast.lane.b32.xlu0 %v578, %s583
      %v585 = vpop.permute.xlu0 %584
      %v586 = vlaneseq
      %v587 = vshrl.u32 %v586, 7
      %v588 = vsub.s32 4, %v587
      %v589 = vrot.slane %v532, %v588
      %591 = vbcast.lane.b32.xlu0 %v589, 256
      %v592 = vpop.permute.xlu0 %591
      %s594 = sor.u32 256, 8
      %595 = vbcast.lane.b32.xlu0 %v589, %s594
      %v596 = vpop.permute.xlu0 %595
      %v597 = vlaneseq
      %v598 = vshrl.u32 %v597, 7
      %v599 = vsub.s32 5, %v598
      %v600 = vrot.slane %v532, %v599
      %602 = vbcast.lane.b32.xlu0 %v600, 256
      %v603 = vpop.permute.xlu0 %602
      %s605 = sor.u32 256, 8
      %606 = vbcast.lane.b32.xlu0 %v600, %s605
      %v607 = vpop.permute.xlu0 %606
      %v608 = vlaneseq
      %v609 = vshrl.u32 %v608, 7
      %v610 = vsub.s32 6, %v609
      %v611 = vrot.slane %v532, %v610
      %613 = vbcast.lane.b32.xlu0 %v611, 256
      %v614 = vpop.permute.xlu0 %613
      %s616 = sor.u32 256, 8
      %617 = vbcast.lane.b32.xlu0 %v611, %s616
      %v618 = vpop.permute.xlu0 %617
      %v619 = vlaneseq
      %v620 = vshrl.u32 %v619, 7
      %v621 = vsub.s32 7, %v620
      %v622 = vrot.slane %v532, %v621
      %624 = vbcast.lane.b32.xlu0 %v622, 256
      %v625 = vpop.permute.xlu0 %624
      %s627 = sor.u32 256, 8
      %628 = vbcast.lane.b32.xlu0 %v622, %s627
      %v629 = vpop.permute.xlu0 %628
      %v630 = vlaneseq
      %v631 = vshrl.u32 %v630, 7
      %v632 = vsub.s32 0, %v631
      %v633 = vrot.slane %v533, %v632
      %635 = vbcast.lane.b32.xlu0 %v633, 256
      %v636 = vpop.permute.xlu0 %635
      %s638 = sor.u32 256, 8
      %639 = vbcast.lane.b32.xlu0 %v633, %s638
      %v640 = vpop.permute.xlu0 %639
      %v641 = vlaneseq
      %v642 = vshrl.u32 %v641, 7
      %v643 = vsub.s32 1, %v642
      %v644 = vrot.slane %v533, %v643
      %646 = vbcast.lane.b32.xlu0 %v644, 256
      %v647 = vpop.permute.xlu0 %646
      %s649 = sor.u32 256, 8
      %650 = vbcast.lane.b32.xlu0 %v644, %s649
      %v651 = vpop.permute.xlu0 %650
      %v652 = vlaneseq
      %v653 = vshrl.u32 %v652, 7
      %v654 = vsub.s32 2, %v653
      %v655 = vrot.slane %v533, %v654
      %657 = vbcast.lane.b32.xlu0 %v655, 256
      %v658 = vpop.permute.xlu0 %657
      %s660 = sor.u32 256, 8
      %661 = vbcast.lane.b32.xlu0 %v655, %s660
      %v662 = vpop.permute.xlu0 %661
      %v663 = vlaneseq
      %v664 = vshrl.u32 %v663, 7
      %v665 = vsub.s32 3, %v664
      %v666 = vrot.slane %v533, %v665
      %668 = vbcast.lane.b32.xlu0 %v666, 256
      %v669 = vpop.permute.xlu0 %668
      %s671 = sor.u32 256, 8
      %672 = vbcast.lane.b32.xlu0 %v666, %s671
      %v673 = vpop.permute.xlu0 %672
      %v674 = vlaneseq
      %v675 = vshrl.u32 %v674, 7
      %v676 = vsub.s32 4, %v675
      %v677 = vrot.slane %v533, %v676
      %679 = vbcast.lane.b32.xlu0 %v677, 256
      %v680 = vpop.permute.xlu0 %679
      %s682 = sor.u32 256, 8
      %683 = vbcast.lane.b32.xlu0 %v677, %s682
      %v684 = vpop.permute.xlu0 %683
      %v685 = vlaneseq
      %v686 = vshrl.u32 %v685, 7
      %v687 = vsub.s32 5, %v686
      %v688 = vrot.slane %v533, %v687
      %690 = vbcast.lane.b32.xlu0 %v688, 256
      %v691 = vpop.permute.xlu0 %690
      %s693 = sor.u32 256, 8
      %694 = vbcast.lane.b32.xlu0 %v688, %s693
      %v695 = vpop.permute.xlu0 %694
      %v696 = vlaneseq
      %v697 = vshrl.u32 %v696, 7
      %v698 = vsub.s32 6, %v697
      %v699 = vrot.slane %v533, %v698
      %701 = vbcast.lane.b32.xlu0 %v699, 256
      %v702 = vpop.permute.xlu0 %701
      %s704 = sor.u32 256, 8
      %705 = vbcast.lane.b32.xlu0 %v699, %s704
      %v706 = vpop.permute.xlu0 %705
      %v707 = vlaneseq
      %v708 = vshrl.u32 %v707, 7
      %v709 = vsub.s32 7, %v708
      %v710 = vrot.slane %v533, %v709
      %712 = vbcast.lane.b32.xlu0 %v710, 256
      %v713 = vpop.permute.xlu0 %712
      %s715 = sor.u32 256, 8
      %716 = vbcast.lane.b32.xlu0 %v710, %s715
      %v717 = vpop.permute.xlu0 %716
      %v718 = vld [vmem:[%s6] sm:$0xff]
      %v719 = vld [vmem:[%s6 + $0x8] sm:$0xff]
      %v720 = vld [vmem:[%s6 + $0x10] sm:$0xff]
      %v721 = vld [vmem:[%s6 + $0x18] sm:$0xff]
      %v722 = vld [vmem:[%s6 + $0x20] sm:$0xff]
      %v723 = vld [vmem:[%s6 + $0x28] sm:$0xff]
      %v724 = vld [vmem:[%s6 + $0x30] sm:$0xff]
      %v725 = vld [vmem:[%s6 + $0x38] sm:$0xff]
      %v726 = vld [vmem:[%s6 + $0x40] sm:$0xff]
      %v727 = vld [vmem:[%s6 + $0x48] sm:$0xff]
      %v728 = vld [vmem:[%s6 + $0x50] sm:$0xff]
      %v729 = vld [vmem:[%s6 + $0x58] sm:$0xff]
      %v730 = vld [vmem:[%s6 + $0x60] sm:$0xff]
      %v731 = vld [vmem:[%s6 + $0x68] sm:$0xff]
      %v732 = vld [vmem:[%s6 + $0x70] sm:$0xff]
      %v733 = vld [vmem:[%s6 + $0x78] sm:$0xff]
      %v734 = vld [vmem:[%s6 + $0x80] sm:$0xff]
      %v735 = vld [vmem:[%s6 + $0x88] sm:$0xff]
      %v736 = vld [vmem:[%s6 + $0x90] sm:$0xff]
      %v737 = vld [vmem:[%s6 + $0x98] sm:$0xff]
      %v738 = vld [vmem:[%s6 + $0xa0] sm:$0xff]
      %v739 = vld [vmem:[%s6 + $0xa8] sm:$0xff]
      %v740 = vld [vmem:[%s6 + $0xb0] sm:$0xff]
      %v741 = vld [vmem:[%s6 + $0xb8] sm:$0xff]
      %v742 = vld [vmem:[%s6 + $0xc0] sm:$0xff]
      %v743 = vld [vmem:[%s6 + $0xc8] sm:$0xff]
      %v744 = vld [vmem:[%s6 + $0xd0] sm:$0xff]
      %v745 = vld [vmem:[%s6 + $0xd8] sm:$0xff]
      %v746 = vld [vmem:[%s6 + $0xe0] sm:$0xff]
      %v747 = vld [vmem:[%s6 + $0xe8] sm:$0xff]
      %v748 = vld [vmem:[%s6 + $0xf0] sm:$0xff]
      %v749 = vld [vmem:[%s6 + $0xf8] sm:$0xff]
      %v750 = vld [vmem:[%s7] sm:$0x3]
      %v752 = vlaneseq
      %v753 = vshrl.u32 %v752, 7
      %v754 = vsub.s32 0, %v753
      %v755 = vrot.slane %v750, %v754
      %v756 = vlaneseq
      %v757 = vshrl.u32 %v756, 7
      %v758 = vsub.s32 1, %v757
      %v759 = vrot.slane %v750, %v758
      %762 = vmatprep.subr.mxu0 %v719
      %763 = vmatpush1.msra.mxu0 %v718
      %764 = vmatprep.subr.mxu0 %v721
      %765 = vmatpush1.msra.mxu0 %v720
      %766 = vmatprep.subr.mxu0 %v723
      %767 = vmatpush1.msra.mxu0 %v722
      %768 = vmatprep.subr.mxu0 %v725
      %769 = vmatpush1.msra.mxu0 %v724
      %770 = vmatprep.subr.mxu0 %v727
      %771 = vmatpush1.msra.mxu0 %v726
      %772 = vmatprep.subr.mxu0 %v729
      %773 = vmatpush1.msra.mxu0 %v728
      %774 = vmatprep.subr.mxu0 %v731
      %775 = vmatpush1.msra.mxu0 %v730
      %776 = vmatprep.subr.mxu0 %v733
      %777 = vmatpush1.msra.mxu0 %v732
      %778 = vmatprep.subr.mxu0 %v735
      %779 = vmatpush1.msra.mxu0 %v734
      %780 = vmatprep.subr.mxu0 %v737
      %781 = vmatpush1.msra.mxu0 %v736
      %782 = vmatprep.subr.mxu0 %v739
      %783 = vmatpush1.msra.mxu0 %v738
      %784 = vmatprep.subr.mxu0 %v741
      %785 = vmatpush1.msra.mxu0 %v740
      %786 = vmatprep.subr.mxu0 %v743
      %787 = vmatpush1.msra.mxu0 %v742
      %788 = vmatprep.subr.mxu0 %v745
      %789 = vmatpush1.msra.mxu0 %v744
      %790 = vmatprep.subr.mxu0 %v747
      %791 = vmatpush1.msra.mxu0 %v746
      %792 = vmatprep.subr.mxu0 %v749
      %793 = vmatpush1.msra.mxu0 %v748
      %794 = vmatprep.subr.mxu0 0.0
      %795 = vmatpush1.msra.mxu0 0.0
      %796 = vmatprep.subr.mxu0 0.0
      %797 = vmatpush1.msra.mxu0 0.0
      %798 = vmatprep.subr.mxu0 0.0
      %799 = vmatpush1.msra.mxu0 0.0
      %800 = vmatprep.subr.mxu0 0.0
      %801 = vmatpush1.msra.mxu0 0.0
      %802 = vmatprep.subr.mxu0 0.0
      %803 = vmatpush1.msra.mxu0 0.0
      %804 = vmatprep.subr.mxu0 0.0
      %805 = vmatpush1.msra.mxu0 0.0
      %806 = vmatprep.subr.mxu0 0.0
      %807 = vmatpush1.msra.mxu0 0.0
      %808 = vmatprep.subr.mxu0 0.0
      %809 = vmatpush1.msra.mxu0 0.0
      %810 = vmatprep.subr.mxu0 0.0
      %811 = vmatpush1.msra.mxu0 0.0
      %812 = vmatprep.subr.mxu0 0.0
      %813 = vmatpush1.msra.mxu0 0.0
      %814 = vmatprep.subr.mxu0 0.0
      %815 = vmatpush1.msra.mxu0 0.0
      %816 = vmatprep.subr.mxu0 0.0
      %817 = vmatpush1.msra.mxu0 0.0
      %818 = vmatprep.subr.mxu0 0.0
      %819 = vmatpush1.msra.mxu0 0.0
      %820 = vmatprep.subr.mxu0 0.0
      %821 = vmatpush1.msra.mxu0 0.0
      %822 = vmatprep.subr.mxu0 0.0
      %823 = vmatpush1.msra.mxu0 0.0
      %824 = vmatprep.subr.mxu0 0.0
      %825 = vmatpush1.msra.mxu0 0.0
      %826 = vmatprep.mubr.f32.mxu0 0.0
      %827 = vmatmul.mubr.f32.gmra.mrb[0].mxu0 %v530
      %v828 = vpop.f32.mrb[0].mxu0
      %v829 = vadd.f32 %v755, %v828
      %v830 = vpop.f32.mrb[0].mxu0
      %v831 = vadd.f32 %v759, %v830
      %832 = vmatprep.mubr.f32.mxu0 0.0
      %833 = vmatmul.mubr.f32.gmra.mrb[0].mxu0 %v531
      %v834 = vpop.f32.mrb[0].mxu0
      %v835 = vadd.f32 %v755, %v834
      %v836 = vpop.f32.mrb[0].mxu0
      %v837 = vadd.f32 %v759, %v836
      %838 = vdwg.mxu0
      %v841 = vcombine.high %v829, %v829
      %v843 = vunpack.c.l.s4 1966171168
      %v844 = vunpack.c.0.s8 %v843
      %v845 = vlaneseq
      %v846 = vshrl.u32 %v845, 7
      %v847 = vsub.s32 %v844, %v846
      %v848 = vrot.slane %v829, %v847
      %v850 = vunpack.c.l.s4 1966171168
      %v851 = vunpack.c.0.s8 %v850
      %v852 = vlaneseq
      %v853 = vshrl.u32 %v852, 7
      %v854 = vsub.s32 %v851, %v853
      %v855 = vrot.slane %v841, %v854
      %v856 = vcombine.high %v848, %v848
      %v857 = vcombine.high %v855, %v855
      %v859 = vunpack.c.l.s4 1966171168
      %v860 = vunpack.c.0.s8 %v859
      %v861 = vlaneseq
      %v862 = vshrl.u32 %v861, 7
      %v863 = vsub.s32 %v860, %v862
      %v864 = vrot.slane %v848, %v863
      %v866 = vunpack.c.l.s4 1966171168
      %v867 = vunpack.c.0.s8 %v866
      %v868 = vlaneseq
      %v869 = vshrl.u32 %v868, 7
      %v870 = vsub.s32 %v867, %v869
      %v871 = vrot.slane %v855, %v870
      %v873 = vunpack.c.l.s4 1966171168
      %v874 = vunpack.c.0.s8 %v873
      %v875 = vlaneseq
      %v876 = vshrl.u32 %v875, 7
      %v877 = vsub.s32 %v874, %v876
      %v878 = vrot.slane %v856, %v877
      %v880 = vunpack.c.l.s4 1966171168
      %v881 = vunpack.c.0.s8 %v880
      %v882 = vlaneseq
      %v883 = vshrl.u32 %v882, 7
      %v884 = vsub.s32 %v881, %v883
      %v885 = vrot.slane %v857, %v884
      %v886 = vcombine.high %v864, %v864
      %v887 = vcombine.high %v871, %v871
      %v888 = vcombine.high %v878, %v878
      %v889 = vcombine.high %v885, %v885
      %v890 = vcombine.high %v835, %v835
      %v892 = vunpack.c.l.s4 1966171168
      %v893 = vunpack.c.0.s8 %v892
      %v894 = vlaneseq
      %v895 = vshrl.u32 %v894, 7
      %v896 = vsub.s32 %v893, %v895
      %v897 = vrot.slane %v835, %v896
      %v899 = vunpack.c.l.s4 1966171168
      %v900 = vunpack.c.0.s8 %v899
      %v901 = vlaneseq
      %v902 = vshrl.u32 %v901, 7
      %v903 = vsub.s32 %v900, %v902
      %v904 = vrot.slane %v890, %v903
      %v905 = vcombine.high %v897, %v897
      %v906 = vcombine.high %v904, %v904
      %v908 = vunpack.c.l.s4 1966171168
      %v909 = vunpack.c.0.s8 %v908
      %v910 = vlaneseq
      %v911 = vshrl.u32 %v910, 7
      %v912 = vsub.s32 %v909, %v911
      %v913 = vrot.slane %v897, %v912
      %v915 = vunpack.c.l.s4 1966171168
      %v916 = vunpack.c.0.s8 %v915
      %v917 = vlaneseq
      %v918 = vshrl.u32 %v917, 7
      %v919 = vsub.s32 %v916, %v918
      %v920 = vrot.slane %v904, %v919
      %v922 = vunpack.c.l.s4 1966171168
      %v923 = vunpack.c.0.s8 %v922
      %v924 = vlaneseq
      %v925 = vshrl.u32 %v924, 7
      %v926 = vsub.s32 %v923, %v925
      %v927 = vrot.slane %v905, %v926
      %v929 = vunpack.c.l.s4 1966171168
      %v930 = vunpack.c.0.s8 %v929
      %v931 = vlaneseq
      %v932 = vshrl.u32 %v931, 7
      %v933 = vsub.s32 %v930, %v932
      %v934 = vrot.slane %v906, %v933
      %v935 = vcombine.high %v913, %v913
      %v936 = vcombine.high %v920, %v920
      %v937 = vcombine.high %v927, %v927
      %v938 = vcombine.high %v934, %v934
      %v939 = vlaneseq
      %v940 = vshrl.u32 %v939, 7
      %v941 = vsub.s32 0, %v940
      %v942 = vrot.slane %v864, %v941
      %v943 = vlaneseq
      %v944 = vshrl.u32 %v943, 7
      %v945 = vsub.s32 0, %v944
      %v946 = vrot.slane %v878, %v945
      %v947 = vlaneseq
      %v948 = vshrl.u32 %v947, 7
      %v949 = vsub.s32 0, %v948
      %v950 = vrot.slane %v886, %v949
      %v951 = vlaneseq
      %v952 = vshrl.u32 %v951, 7
      %v953 = vsub.s32 0, %v952
      %v954 = vrot.slane %v888, %v953
      %v955 = vlaneseq
      %v956 = vshrl.u32 %v955, 7
      %v957 = vsub.s32 0, %v956
      %v958 = vrot.slane %v871, %v957
      %v959 = vlaneseq
      %v960 = vshrl.u32 %v959, 7
      %v961 = vsub.s32 0, %v960
      %v962 = vrot.slane %v885, %v961
      %v963 = vlaneseq
      %v964 = vshrl.u32 %v963, 7
      %v965 = vsub.s32 0, %v964
      %v966 = vrot.slane %v887, %v965
      %v967 = vlaneseq
      %v968 = vshrl.u32 %v967, 7
      %v969 = vsub.s32 0, %v968
      %v970 = vrot.slane %v889, %v969
      %v971 = vlaneseq
      %v972 = vshrl.u32 %v971, 7
      %v973 = vsub.s32 0, %v972
      %v974 = vrot.slane %v913, %v973
      %v975 = vlaneseq
      %v976 = vshrl.u32 %v975, 7
      %v977 = vsub.s32 0, %v976
      %v978 = vrot.slane %v927, %v977
      %v979 = vlaneseq
      %v980 = vshrl.u32 %v979, 7
      %v981 = vsub.s32 0, %v980
      %v982 = vrot.slane %v935, %v981
      %v983 = vlaneseq
      %v984 = vshrl.u32 %v983, 7
      %v985 = vsub.s32 0, %v984
      %v986 = vrot.slane %v937, %v985
      %v987 = vlaneseq
      %v988 = vshrl.u32 %v987, 7
      %v989 = vsub.s32 0, %v988
      %v990 = vrot.slane %v920, %v989
      %v991 = vlaneseq
      %v992 = vshrl.u32 %v991, 7
      %v993 = vsub.s32 0, %v992
      %v994 = vrot.slane %v934, %v993
      %v995 = vlaneseq
      %v996 = vshrl.u32 %v995, 7
      %v997 = vsub.s32 0, %v996
      %v998 = vrot.slane %v936, %v997
      %v999 = vlaneseq
      %v1000 = vshrl.u32 %v999, 7
      %v1001 = vsub.s32 0, %v1000
      %v1002 = vrot.slane %v938, %v1001
      %1019 = vrot.lane.b32.xlu0 %v829, 64
      %v1020 = vpop.permute.xlu0 %1019
      %1021 = vrot.lane.b32.xlu0 %v835, 64
      %v1022 = vpop.permute.xlu0 %1021
      %v1025 = vadd.f32 %v942, %v1020
      %v1026 = vadd.f32 %v942, %v1022
      %v1027 = vadd.f32 %v946, %v1020
      %v1028 = vadd.f32 %v946, %v1022
      %v1029 = vadd.f32 %v950, %v1020
      %v1030 = vadd.f32 %v950, %v1022
      %v1031 = vadd.f32 %v954, %v1020
      %v1032 = vadd.f32 %v954, %v1022
      %v1033 = vadd.f32 %v958, %v1020
      %v1034 = vadd.f32 %v958, %v1022
      %v1035 = vadd.f32 %v962, %v1020
      %v1036 = vadd.f32 %v962, %v1022
      %v1037 = vadd.f32 %v966, %v1020
      %v1038 = vadd.f32 %v966, %v1022
      %v1039 = vadd.f32 %v970, %v1020
      %v1040 = vadd.f32 %v970, %v1022
      %v1041 = vadd.f32 %v974, %v1020
      %v1042 = vadd.f32 %v974, %v1022
      %v1043 = vadd.f32 %v978, %v1020
      %v1044 = vadd.f32 %v978, %v1022
      %v1045 = vadd.f32 %v982, %v1020
      %v1046 = vadd.f32 %v982, %v1022
      %v1047 = vadd.f32 %v986, %v1020
      %v1048 = vadd.f32 %v986, %v1022
      %v1049 = vadd.f32 %v990, %v1020
      %v1050 = vadd.f32 %v990, %v1022
      %v1051 = vadd.f32 %v994, %v1020
      %v1052 = vadd.f32 %v994, %v1022
      %v1053 = vadd.f32 %v998, %v1020
      %v1054 = vadd.f32 %v998, %v1022
      %v1055 = vadd.f32 %v1002, %v1020
      %v1056 = vadd.f32 %v1002, %v1022
      %vm1057 = vcmp.gt.f32.partialorder %v1025, 0.0
      %vm1058 = vcmp.gt.f32.partialorder %v1026, 0.0
      %vm1059 = vcmp.gt.f32.partialorder %v1027, 0.0
      %vm1060 = vcmp.gt.f32.partialorder %v1028, 0.0
      %vm1061 = vcmp.gt.f32.partialorder %v1029, 0.0
      %vm1062 = vcmp.gt.f32.partialorder %v1030, 0.0
      %vm1063 = vcmp.gt.f32.partialorder %v1031, 0.0
      %vm1064 = vcmp.gt.f32.partialorder %v1032, 0.0
      %vm1065 = vcmp.gt.f32.partialorder %v1033, 0.0
      %vm1066 = vcmp.gt.f32.partialorder %v1034, 0.0
      %vm1067 = vcmp.gt.f32.partialorder %v1035, 0.0
      %vm1068 = vcmp.gt.f32.partialorder %v1036, 0.0
      %vm1069 = vcmp.gt.f32.partialorder %v1037, 0.0
      %vm1070 = vcmp.gt.f32.partialorder %v1038, 0.0
      %vm1071 = vcmp.gt.f32.partialorder %v1039, 0.0
      %vm1072 = vcmp.gt.f32.partialorder %v1040, 0.0
      %vm1073 = vcmp.gt.f32.partialorder %v1041, 0.0
      %vm1074 = vcmp.gt.f32.partialorder %v1042, 0.0
      %vm1075 = vcmp.gt.f32.partialorder %v1043, 0.0
      %vm1076 = vcmp.gt.f32.partialorder %v1044, 0.0
      %vm1077 = vcmp.gt.f32.partialorder %v1045, 0.0
      %vm1078 = vcmp.gt.f32.partialorder %v1046, 0.0
      %vm1079 = vcmp.gt.f32.partialorder %v1047, 0.0
      %vm1080 = vcmp.gt.f32.partialorder %v1048, 0.0
      %vm1081 = vcmp.gt.f32.partialorder %v1049, 0.0
      %vm1082 = vcmp.gt.f32.partialorder %v1050, 0.0
      %vm1083 = vcmp.gt.f32.partialorder %v1051, 0.0
      %vm1084 = vcmp.gt.f32.partialorder %v1052, 0.0
      %vm1085 = vcmp.gt.f32.partialorder %v1053, 0.0
      %vm1086 = vcmp.gt.f32.partialorder %v1054, 0.0
      %vm1087 = vcmp.gt.f32.partialorder %v1055, 0.0
      %vm1088 = vcmp.gt.f32.partialorder %v1056, 0.0
      %v1089 = vmul.f32 %v1025, 0.2
      %v1090 = vmul.f32 %v1026, 0.2
      %v1091 = vmul.f32 %v1027, 0.2
      %v1092 = vmul.f32 %v1028, 0.2
      %v1093 = vmul.f32 %v1029, 0.2
      %v1094 = vmul.f32 %v1030, 0.2
      %v1095 = vmul.f32 %v1031, 0.2
      %v1096 = vmul.f32 %v1032, 0.2
      %v1097 = vmul.f32 %v1033, 0.2
      %v1098 = vmul.f32 %v1034, 0.2
      %v1099 = vmul.f32 %v1035, 0.2
      %v1100 = vmul.f32 %v1036, 0.2
      %v1101 = vmul.f32 %v1037, 0.2
      %v1102 = vmul.f32 %v1038, 0.2
      %v1103 = vmul.f32 %v1039, 0.2
      %v1104 = vmul.f32 %v1040, 0.2
      %v1105 = vmul.f32 %v1041, 0.2
      %v1106 = vmul.f32 %v1042, 0.2
      %v1107 = vmul.f32 %v1043, 0.2
      %v1108 = vmul.f32 %v1044, 0.2
      %v1109 = vmul.f32 %v1045, 0.2
      %v1110 = vmul.f32 %v1046, 0.2
      %v1111 = vmul.f32 %v1047, 0.2
      %v1112 = vmul.f32 %v1048, 0.2
      %v1113 = vmul.f32 %v1049, 0.2
      %v1114 = vmul.f32 %v1050, 0.2
      %v1115 = vmul.f32 %v1051, 0.2
      %v1116 = vmul.f32 %v1052, 0.2
      %v1117 = vmul.f32 %v1053, 0.2
      %v1118 = vmul.f32 %v1054, 0.2
      %v1119 = vmul.f32 %v1055, 0.2
      %v1120 = vmul.f32 %v1056, 0.2
      %v1121 = vsel %vm1057, %v1025, %v1089
      %v1122 = vsel %vm1058, %v1026, %v1090
      %v1123 = vsel %vm1059, %v1027, %v1091
      %v1124 = vsel %vm1060, %v1028, %v1092
      %v1125 = vsel %vm1061, %v1029, %v1093
      %v1126 = vsel %vm1062, %v1030, %v1094
      %v1127 = vsel %vm1063, %v1031, %v1095
      %v1128 = vsel %vm1064, %v1032, %v1096
      %v1129 = vsel %vm1065, %v1033, %v1097
      %v1130 = vsel %vm1066, %v1034, %v1098
      %v1131 = vsel %vm1067, %v1035, %v1099
      %v1132 = vsel %vm1068, %v1036, %v1100
      %v1133 = vsel %vm1069, %v1037, %v1101
      %v1134 = vsel %vm1070, %v1038, %v1102
      %v1135 = vsel %vm1071, %v1039, %v1103
      %v1136 = vsel %vm1072, %v1040, %v1104
      %v1137 = vsel %vm1073, %v1041, %v1105
      %v1138 = vsel %vm1074, %v1042, %v1106
      %v1139 = vsel %vm1075, %v1043, %v1107
      %v1140 = vsel %vm1076, %v1044, %v1108
      %v1141 = vsel %vm1077, %v1045, %v1109
      %v1142 = vsel %vm1078, %v1046, %v1110
      %v1143 = vsel %vm1079, %v1047, %v1111
      %v1144 = vsel %vm1080, %v1048, %v1112
      %v1145 = vsel %vm1081, %v1049, %v1113
      %v1146 = vsel %vm1082, %v1050, %v1114
      %v1147 = vsel %vm1083, %v1051, %v1115
      %v1148 = vsel %vm1084, %v1052, %v1116
      %v1149 = vsel %vm1085, %v1053, %v1117
      %v1150 = vsel %vm1086, %v1054, %v1118
      %v1151 = vsel %vm1087, %v1055, %v1119
      %v1152 = vsel %vm1088, %v1056, %v1120
      %v1153 = vld [vmem:[%s8] sm:$0xff]
      %v1154 = vld [vmem:[%s8 + $0x8] sm:$0xff]
      %v1155 = vld [vmem:[%s8 + $0x10] sm:$0xff]
      %v1156 = vld [vmem:[%s8 + $0x18] sm:$0xff]
      %v1157 = vld [vmem:[%s8 + $0x20] sm:$0xff]
      %v1158 = vld [vmem:[%s8 + $0x28] sm:$0xff]
      %v1159 = vld [vmem:[%s8 + $0x30] sm:$0xff]
      %v1160 = vld [vmem:[%s8 + $0x38] sm:$0xff]
      %1193 = vrot.lane.b32.xlu0 %v1121, 64
      %v1194 = vpop.permute.xlu0 %1193
      %1195 = vrot.lane.b32.xlu0 %v1122, 64
      %v1196 = vpop.permute.xlu0 %1195
      %1197 = vrot.lane.b32.xlu0 %v1123, 64
      %v1198 = vpop.permute.xlu0 %1197
      %1199 = vrot.lane.b32.xlu0 %v1124, 64
      %v1200 = vpop.permute.xlu0 %1199
      %1201 = vrot.lane.b32.xlu0 %v1125, 64
      %v1202 = vpop.permute.xlu0 %1201
      %1203 = vrot.lane.b32.xlu0 %v1126, 64
      %v1204 = vpop.permute.xlu0 %1203
      %1205 = vrot.lane.b32.xlu0 %v1127, 64
      %v1206 = vpop.permute.xlu0 %1205
      %1207 = vrot.lane.b32.xlu0 %v1128, 64
      %v1208 = vpop.permute.xlu0 %1207
      %1209 = vrot.lane.b32.xlu0 %v1129, 64
      %v1210 = vpop.permute.xlu0 %1209
      %1211 = vrot.lane.b32.xlu0 %v1130, 64
      %v1212 = vpop.permute.xlu0 %1211
      %1213 = vrot.lane.b32.xlu0 %v1131, 64
      %v1214 = vpop.permute.xlu0 %1213
      %1215 = vrot.lane.b32.xlu0 %v1132, 64
      %v1216 = vpop.permute.xlu0 %1215
      %1217 = vrot.lane.b32.xlu0 %v1133, 64
      %v1218 = vpop.permute.xlu0 %1217
      %1219 = vrot.lane.b32.xlu0 %v1134, 64
      %v1220 = vpop.permute.xlu0 %1219
      %1221 = vrot.lane.b32.xlu0 %v1135, 64
      %v1222 = vpop.permute.xlu0 %1221
      %1223 = vrot.lane.b32.xlu0 %v1136, 64
      %v1224 = vpop.permute.xlu0 %1223
      %1225 = vrot.lane.b32.xlu0 %v1137, 64
      %v1226 = vpop.permute.xlu0 %1225
      %1227 = vrot.lane.b32.xlu0 %v1138, 64
      %v1228 = vpop.permute.xlu0 %1227
      %1229 = vrot.lane.b32.xlu0 %v1139, 64
      %v1230 = vpop.permute.xlu0 %1229
      %1231 = vrot.lane.b32.xlu0 %v1140, 64
      %v1232 = vpop.permute.xlu0 %1231
      %1233 = vrot.lane.b32.xlu0 %v1141, 64
      %v1234 = vpop.permute.xlu0 %1233
      %1235 = vrot.lane.b32.xlu0 %v1142, 64
      %v1236 = vpop.permute.xlu0 %1235
      %1237 = vrot.lane.b32.xlu0 %v1143, 64
      %v1238 = vpop.permute.xlu0 %1237
      %1239 = vrot.lane.b32.xlu0 %v1144, 64
      %v1240 = vpop.permute.xlu0 %1239
      %1241 = vrot.lane.b32.xlu0 %v1145, 64
      %v1242 = vpop.permute.xlu0 %1241
      %1243 = vrot.lane.b32.xlu0 %v1146, 64
      %v1244 = vpop.permute.xlu0 %1243
      %1245 = vrot.lane.b32.xlu0 %v1147, 64
      %v1246 = vpop.permute.xlu0 %1245
      %1247 = vrot.lane.b32.xlu0 %v1148, 64
      %v1248 = vpop.permute.xlu0 %1247
      %1249 = vrot.lane.b32.xlu0 %v1149, 64
      %v1250 = vpop.permute.xlu0 %1249
      %1251 = vrot.lane.b32.xlu0 %v1150, 64
      %v1252 = vpop.permute.xlu0 %1251
      %1253 = vrot.lane.b32.xlu0 %v1151, 64
      %v1254 = vpop.permute.xlu0 %1253
      %1255 = vrot.lane.b32.xlu0 %v1152, 64
      %v1256 = vpop.permute.xlu0 %1255
      %vm1257 = vcmask 523264
      %v1258 = vsel %vm1257, %v1194, 0
      %v1260 = vsel %vm1257, %v1196, 0
      %v1262 = vsel %vm1257, %v1198, 0
      %v1264 = vsel %vm1257, %v1200, 0
      %v1266 = vsel %vm1257, %v1202, 0
      %v1268 = vsel %vm1257, %v1204, 0
      %v1270 = vsel %vm1257, %v1206, 0
      %v1272 = vsel %vm1257, %v1208, 0
      %v1274 = vsel %vm1257, %v1210, 0
      %v1276 = vsel %vm1257, %v1212, 0
      %v1278 = vsel %vm1257, %v1214, 0
      %v1280 = vsel %vm1257, %v1216, 0
      %v1282 = vsel %vm1257, %v1218, 0
      %v1284 = vsel %vm1257, %v1220, 0
      %v1286 = vsel %vm1257, %v1222, 0
      %v1288 = vsel %vm1257, %v1224, 0
      %v1290 = vsel %vm1257, %v1226, 0
      %v1292 = vsel %vm1257, %v1228, 0
      %v1294 = vsel %vm1257, %v1230, 0
      %v1296 = vsel %vm1257, %v1232, 0
      %v1298 = vsel %vm1257, %v1234, 0
      %v1300 = vsel %vm1257, %v1236, 0
      %v1302 = vsel %vm1257, %v1238, 0
      %v1304 = vsel %vm1257, %v1240, 0
      %v1306 = vsel %vm1257, %v1242, 0
      %v1308 = vsel %vm1257, %v1244, 0
      %v1310 = vsel %vm1257, %v1246, 0
      %v1312 = vsel %vm1257, %v1248, 0
      %v1314 = vsel %vm1257, %v1250, 0
      %v1316 = vsel %vm1257, %v1252, 0
      %v1318 = vsel %vm1257, %v1254, 0
      %v1320 = vsel %vm1257, %v1256, 0
      %1322 = vmatprep.subr.mxu0 0.0
      %1323 = vmatpush1.msra.mxu0 %v1153
      %1324 = vmatprep.subr.mxu0 0.0
      %1325 = vmatpush1.msra.mxu0 %v1154
      %1326 = vmatprep.subr.mxu0 0.0
      %1327 = vmatpush1.msra.mxu0 %v1155
      %1328 = vmatprep.subr.mxu0 0.0
      %1329 = vmatpush1.msra.mxu0 %v1156
      %1330 = vmatprep.subr.mxu0 0.0
      %1331 = vmatpush1.msra.mxu0 %v1157
      %1332 = vmatprep.subr.mxu0 0.0
      %1333 = vmatpush1.msra.mxu0 %v1158
      %1334 = vmatprep.subr.mxu0 0.0
      %1335 = vmatpush1.msra.mxu0 %v1159
      %1336 = vmatprep.subr.mxu0 0.0
      %1337 = vmatpush1.msra.mxu0 %v1160
      %1338 = vmatprep.subr.mxu0 0.0
      %1339 = vmatpush1.msra.mxu0 0.0
      %1340 = vmatprep.subr.mxu0 0.0
      %1341 = vmatpush1.msra.mxu0 0.0
      %1342 = vmatprep.subr.mxu0 0.0
      %1343 = vmatpush1.msra.mxu0 0.0
      %1344 = vmatprep.subr.mxu0 0.0
      %1345 = vmatpush1.msra.mxu0 0.0
      %1346 = vmatprep.subr.mxu0 0.0
      %1347 = vmatpush1.msra.mxu0 0.0
      %1348 = vmatprep.subr.mxu0 0.0
      %1349 = vmatpush1.msra.mxu0 0.0
      %1350 = vmatprep.subr.mxu0 0.0
      %1351 = vmatpush1.msra.mxu0 0.0
      %1352 = vmatprep.subr.mxu0 0.0
      %1353 = vmatpush1.msra.mxu0 0.0
      %1354 = vmatprep.subr.mxu0 0.0
      %1355 = vmatpush1.msra.mxu0 0.0
      %1356 = vmatprep.subr.mxu0 0.0
      %1357 = vmatpush1.msra.mxu0 0.0
      %1358 = vmatprep.subr.mxu0 0.0
      %1359 = vmatpush1.msra.mxu0 0.0
      %1360 = vmatprep.subr.mxu0 0.0
      %1361 = vmatpush1.msra.mxu0 0.0
      %1362 = vmatprep.subr.mxu0 0.0
      %1363 = vmatpush1.msra.mxu0 0.0
      %1364 = vmatprep.subr.mxu0 0.0
      %1365 = vmatpush1.msra.mxu0 0.0
      %1366 = vmatprep.subr.mxu0 0.0
      %1367 = vmatpush1.msra.mxu0 0.0
      %1368 = vmatprep.subr.mxu0 0.0
      %1369 = vmatpush1.msra.mxu0 0.0
      %1370 = vmatprep.subr.mxu0 0.0
      %1371 = vmatpush1.msra.mxu0 0.0
      %1372 = vmatprep.subr.mxu0 0.0
      %1373 = vmatpush1.msra.mxu0 0.0
      %1374 = vmatprep.subr.mxu0 0.0
      %1375 = vmatpush1.msra.mxu0 0.0
      %1376 = vmatprep.subr.mxu0 0.0
      %1377 = vmatpush1.msra.mxu0 0.0
      %1378 = vmatprep.subr.mxu0 0.0
      %1379 = vmatpush1.msra.mxu0 0.0
      %1380 = vmatprep.subr.mxu0 0.0
      %1381 = vmatpush1.msra.mxu0 0.0
      %1382 = vmatprep.subr.mxu0 0.0
      %1383 = vmatpush1.msra.mxu0 0.0
      %1384 = vmatprep.subr.mxu0 0.0
      %1385 = vmatpush1.msra.mxu0 0.0
      %1386 = vmatprep.mubr.f32.mxu0 0.0
      %1387 = vmatmul.mubr.f32.gmra.mrb[0].mxu0 %v1258
      %v1388 = vpop.f32.mrb[0].mxu0
      %v1389 = vadd.f32 0.0, %v1388
      %v1390 = vpop.f32.mrb[0].mxu0
      %1391 = vmatprep.mubr.f32.mxu0 0.0
      %1392 = vmatmul.mubr.f32.gmra.mrb[0].mxu0 %v1260
      %v1393 = vpop.f32.mrb[0].mxu0
      %v1394 = vadd.f32 0.0, %v1393
      %v1395 = vpop.f32.mrb[0].mxu0
      %1396 = vmatprep.mubr.f32.mxu0 0.0
      %1397 = vmatmul.mubr.f32.gmra.mrb[0].mxu0 %v1262
      %v1398 = vpop.f32.mrb[0].mxu0
      %v1399 = vadd.f32 0.0, %v1398
      %v1400 = vpop.f32.mrb[0].mxu0
      %1401 = vmatprep.mubr.f32.mxu0 0.0
      %1402 = vmatmul.mubr.f32.gmra.mrb[0].mxu0 %v1264
      %v1403 = vpop.f32.mrb[0].mxu0
      %v1404 = vadd.f32 0.0, %v1403
      %v1405 = vpop.f32.mrb[0].mxu0
      %1406 = vmatprep.mubr.f32.mxu0 0.0
      %1407 = vmatmul.mubr.f32.gmra.mrb[0].mxu0 %v1266
      %v1408 = vpop.f32.mrb[0].mxu0
      %v1409 = vadd.f32 0.0, %v1408
      %v1410 = vpop.f32.mrb[0].mxu0
      %1411 = vmatprep.mubr.f32.mxu0 0.0
      %1412 = vmatmul.mubr.f32.gmra.mrb[0].mxu0 %v1268
      %v1413 = vpop.f32.mrb[0].mxu0
      %v1414 = vadd.f32 0.0, %v1413
      %v1415 = vpop.f32.mrb[0].mxu0
      %1416 = vmatprep.mubr.f32.mxu0 0.0
      %1417 = vmatmul.mubr.f32.gmra.mrb[0].mxu0 %v1270
      %v1418 = vpop.f32.mrb[0].mxu0
      %v1419 = vadd.f32 0.0, %v1418
      %v1420 = vpop.f32.mrb[0].mxu0
      %1421 = vmatprep.mubr.f32.mxu0 0.0
      %1422 = vmatmul.mubr.f32.gmra.mrb[0].mxu0 %v1272
      %v1423 = vpop.f32.mrb[0].mxu0
      %v1424 = vadd.f32 0.0, %v1423
      %v1425 = vpop.f32.mrb[0].mxu0
      %1426 = vmatprep.mubr.f32.mxu0 0.0
      %1427 = vmatmul.mubr.f32.gmra.mrb[0].mxu0 %v1274
      %v1428 = vpop.f32.mrb[0].mxu0
      %v1429 = vadd.f32 0.0, %v1428
      %v1430 = vpop.f32.mrb[0].mxu0
      %1431 = vmatprep.mubr.f32.mxu0 0.0
      %1432 = vmatmul.mubr.f32.gmra.mrb[0].mxu0 %v1276
      %v1433 = vpop.f32.mrb[0].mxu0
      %v1434 = vadd.f32 0.0, %v1433
      %v1435 = vpop.f32.mrb[0].mxu0
      %1436 = vmatprep.mubr.f32.mxu0 0.0
      %1437 = vmatmul.mubr.f32.gmra.mrb[0].mxu0 %v1278
      %v1438 = vpop.f32.mrb[0].mxu0
      %v1439 = vadd.f32 0.0, %v1438
      %v1440 = vpop.f32.mrb[0].mxu0
      %1441 = vmatprep.mubr.f32.mxu0 0.0
      %1442 = vmatmul.mubr.f32.gmra.mrb[0].mxu0 %v1280
      %v1443 = vpop.f32.mrb[0].mxu0
      %v1444 = vadd.f32 0.0, %v1443
      %v1445 = vpop.f32.mrb[0].mxu0
      %1446 = vmatprep.mubr.f32.mxu0 0.0
      %1447 = vmatmul.mubr.f32.gmra.mrb[0].mxu0 %v1282
      %v1448 = vpop.f32.mrb[0].mxu0
      %v1449 = vadd.f32 0.0, %v1448
      %v1450 = vpop.f32.mrb[0].mxu0
      %1451 = vmatprep.mubr.f32.mxu0 0.0
      %1452 = vmatmul.mubr.f32.gmra.mrb[0].mxu0 %v1284
      %v1453 = vpop.f32.mrb[0].mxu0
      %v1454 = vadd.f32 0.0, %v1453
      %v1455 = vpop.f32.mrb[0].mxu0
      %1456 = vmatprep.mubr.f32.mxu0 0.0
      %1457 = vmatmul.mubr.f32.gmra.mrb[0].mxu0 %v1286
      %v1458 = vpop.f32.mrb[0].mxu0
      %v1459 = vadd.f32 0.0, %v1458
      %v1460 = vpop.f32.mrb[0].mxu0
      %1461 = vmatprep.mubr.f32.mxu0 0.0
      %1462 = vmatmul.mubr.f32.gmra.mrb[0].mxu0 %v1288
      %v1463 = vpop.f32.mrb[0].mxu0
      %v1464 = vadd.f32 0.0, %v1463
      %v1465 = vpop.f32.mrb[0].mxu0
      %1466 = vmatprep.mubr.f32.mxu0 0.0
      %1467 = vmatmul.mubr.f32.gmra.mrb[0].mxu0 %v1290
      %v1468 = vpop.f32.mrb[0].mxu0
      %v1469 = vadd.f32 0.0, %v1468
      %v1470 = vpop.f32.mrb[0].mxu0
      %1471 = vmatprep.mubr.f32.mxu0 0.0
      %1472 = vmatmul.mubr.f32.gmra.mrb[0].mxu0 %v1292
      %v1473 = vpop.f32.mrb[0].mxu0
      %v1474 = vadd.f32 0.0, %v1473
      %v1475 = vpop.f32.mrb[0].mxu0
      %1476 = vmatprep.mubr.f32.mxu0 0.0
      %1477 = vmatmul.mubr.f32.gmra.mrb[0].mxu0 %v1294
      %v1478 = vpop.f32.mrb[0].mxu0
      %v1479 = vadd.f32 0.0, %v1478
      %v1480 = vpop.f32.mrb[0].mxu0
      %1481 = vmatprep.mubr.f32.mxu0 0.0
      %1482 = vmatmul.mubr.f32.gmra.mrb[0].mxu0 %v1296
      %v1483 = vpop.f32.mrb[0].mxu0
      %v1484 = vadd.f32 0.0, %v1483
      %v1485 = vpop.f32.mrb[0].mxu0
      %1486 = vmatprep.mubr.f32.mxu0 0.0
      %1487 = vmatmul.mubr.f32.gmra.mrb[0].mxu0 %v1298
      %v1488 = vpop.f32.mrb[0].mxu0
      %v1489 = vadd.f32 0.0, %v1488
      %v1490 = vpop.f32.mrb[0].mxu0
      %1491 = vmatprep.mubr.f32.mxu0 0.0
      %1492 = vmatmul.mubr.f32.gmra.mrb[0].mxu0 %v1300
      %v1493 = vpop.f32.mrb[0].mxu0
      %v1494 = vadd.f32 0.0, %v1493
      %v1495 = vpop.f32.mrb[0].mxu0
      %1496 = vmatprep.mubr.f32.mxu0 0.0
      %1497 = vmatmul.mubr.f32.gmra.mrb[0].mxu0 %v1302
      %v1498 = vpop.f32.mrb[0].mxu0
      %v1499 = vadd.f32 0.0, %v1498
      %v1500 = vpop.f32.mrb[0].mxu0
      %1501 = vmatprep.mubr.f32.mxu0 0.0
      %1502 = vmatmul.mubr.f32.gmra.mrb[0].mxu0 %v1304
      %v1503 = vpop.f32.mrb[0].mxu0
      %v1504 = vadd.f32 0.0, %v1503
      %v1505 = vpop.f32.mrb[0].mxu0
      %1506 = vmatprep.mubr.f32.mxu0 0.0
      %1507 = vmatmul.mubr.f32.gmra.mrb[0].mxu0 %v1306
      %v1508 = vpop.f32.mrb[0].mxu0
      %v1509 = vadd.f32 0.0, %v1508
      %v1510 = vpop.f32.mrb[0].mxu0
      %1511 = vmatprep.mubr.f32.mxu0 0.0
      %1512 = vmatmul.mubr.f32.gmra.mrb[0].mxu0 %v1308
      %v1513 = vpop.f32.mrb[0].mxu0
      %v1514 = vadd.f32 0.0, %v1513
      %v1515 = vpop.f32.mrb[0].mxu0
      %1516 = vmatprep.mubr.f32.mxu0 0.0
      %1517 = vmatmul.mubr.f32.gmra.mrb[0].mxu0 %v1310
      %v1518 = vpop.f32.mrb[0].mxu0
      %v1519 = vadd.f32 0.0, %v1518
      %v1520 = vpop.f32.mrb[0].mxu0
      %1521 = vmatprep.mubr.f32.mxu0 0.0
      %1522 = vmatmul.mubr.f32.gmra.mrb[0].mxu0 %v1312
      %v1523 = vpop.f32.mrb[0].mxu0
      %v1524 = vadd.f32 0.0, %v1523
      %v1525 = vpop.f32.mrb[0].mxu0
      %1526 = vmatprep.mubr.f32.mxu0 0.0
      %1527 = vmatmul.mubr.f32.gmra.mrb[0].mxu0 %v1314
      %v1528 = vpop.f32.mrb[0].mxu0
      %v1529 = vadd.f32 0.0, %v1528
      %v1530 = vpop.f32.mrb[0].mxu0
      %1531 = vmatprep.mubr.f32.mxu0 0.0
      %1532 = vmatmul.mubr.f32.gmra.mrb[0].mxu0 %v1316
      %v1533 = vpop.f32.mrb[0].mxu0
      %v1534 = vadd.f32 0.0, %v1533
      %v1535 = vpop.f32.mrb[0].mxu0
      %1536 = vmatprep.mubr.f32.mxu0 0.0
      %1537 = vmatmul.mubr.f32.gmra.mrb[0].mxu0 %v1318
      %v1538 = vpop.f32.mrb[0].mxu0
      %v1539 = vadd.f32 0.0, %v1538
      %v1540 = vpop.f32.mrb[0].mxu0
      %1541 = vmatprep.mubr.f32.mxu0 0.0
      %1542 = vmatmul.mubr.f32.gmra.mrb[0].mxu0 %v1320
      %v1543 = vpop.f32.mrb[0].mxu0
      %v1544 = vadd.f32 0.0, %v1543
      %v1545 = vpop.f32.mrb[0].mxu0
      %1546 = vdwg.mxu0
      %vm1547 = vcmp.gt.f32.partialorder %v548, 0.0
      %vm1548 = vcmp.gt.f32.partialorder %v552, 0.0
      %vm1549 = vcmp.gt.f32.partialorder %v559, 0.0
      %vm1550 = vcmp.gt.f32.partialorder %v563, 0.0
      %vm1551 = vcmp.gt.f32.partialorder %v570, 0.0
      %vm1552 = vcmp.gt.f32.partialorder %v574, 0.0
      %vm1553 = vcmp.gt.f32.partialorder %v581, 0.0
      %vm1554 = vcmp.gt.f32.partialorder %v585, 0.0
      %vm1555 = vcmp.gt.f32.partialorder %v592, 0.0
      %vm1556 = vcmp.gt.f32.partialorder %v596, 0.0
      %vm1557 = vcmp.gt.f32.partialorder %v603, 0.0
      %vm1558 = vcmp.gt.f32.partialorder %v607, 0.0
      %vm1559 = vcmp.gt.f32.partialorder %v614, 0.0
      %vm1560 = vcmp.gt.f32.partialorder %v618, 0.0
      %vm1561 = vcmp.gt.f32.partialorder %v625, 0.0
      %vm1562 = vcmp.gt.f32.partialorder %v629, 0.0
      %vm1563 = vcmp.gt.f32.partialorder %v636, 0.0
      %vm1564 = vcmp.gt.f32.partialorder %v640, 0.0
      %vm1565 = vcmp.gt.f32.partialorder %v647, 0.0
      %vm1566 = vcmp.gt.f32.partialorder %v651, 0.0
      %vm1567 = vcmp.gt.f32.partialorder %v658, 0.0
      %vm1568 = vcmp.gt.f32.partialorder %v662, 0.0
      %vm1569 = vcmp.gt.f32.partialorder %v669, 0.0
      %vm1570 = vcmp.gt.f32.partialorder %v673, 0.0
      %vm1571 = vcmp.gt.f32.partialorder %v680, 0.0
      %vm1572 = vcmp.gt.f32.partialorder %v684, 0.0
      %vm1573 = vcmp.gt.f32.partialorder %v691, 0.0
      %vm1574 = vcmp.gt.f32.partialorder %v695, 0.0
      %vm1575 = vcmp.gt.f32.partialorder %v702, 0.0
      %vm1576 = vcmp.gt.f32.partialorder %v706, 0.0
      %vm1577 = vcmp.gt.f32.partialorder %v713, 0.0
      %vm1578 = vcmp.gt.f32.partialorder %v717, 0.0
      %v1579 = vsel %vm1547, 1, 0
      %v1580 = vsel %vm1548, 1, 0
      %v1581 = vsel %vm1549, 1, 0
      %v1582 = vsel %vm1550, 1, 0
      %v1583 = vsel %vm1551, 1, 0
      %v1584 = vsel %vm1552, 1, 0
      %v1585 = vsel %vm1553, 1, 0
      %v1586 = vsel %vm1554, 1, 0
      %v1587 = vsel %vm1555, 1, 0
      %v1588 = vsel %vm1556, 1, 0
      %v1589 = vsel %vm1557, 1, 0
      %v1590 = vsel %vm1558, 1, 0
      %v1591 = vsel %vm1559, 1, 0
      %v1592 = vsel %vm1560, 1, 0
      %v1593 = vsel %vm1561, 1, 0
      %v1594 = vsel %vm1562, 1, 0
      %v1595 = vsel %vm1563, 1, 0
      %v1596 = vsel %vm1564, 1, 0
      %v1597 = vsel %vm1565, 1, 0
      %v1598 = vsel %vm1566, 1, 0
      %v1599 = vsel %vm1567, 1, 0
      %v1600 = vsel %vm1568, 1, 0
      %v1601 = vsel %vm1569, 1, 0
      %v1602 = vsel %vm1570, 1, 0
      %v1603 = vsel %vm1571, 1, 0
      %v1604 = vsel %vm1572, 1, 0
      %v1605 = vsel %vm1573, 1, 0
      %v1606 = vsel %vm1574, 1, 0
      %v1607 = vsel %vm1575, 1, 0
      %v1608 = vsel %vm1576, 1, 0
      %v1609 = vsel %vm1577, 1, 0
      %v1610 = vsel %vm1578, 1, 0
      %vm1611 = vcmp.eq.s32.totalorder %v1579, 1
      %vm1612 = vcmp.eq.s32.totalorder %v1580, 1
      %vm1613 = vcmp.eq.s32.totalorder %v1581, 1
      %vm1614 = vcmp.eq.s32.totalorder %v1582, 1
      %vm1615 = vcmp.eq.s32.totalorder %v1583, 1
      %vm1616 = vcmp.eq.s32.totalorder %v1584, 1
      %vm1617 = vcmp.eq.s32.totalorder %v1585, 1
      %vm1618 = vcmp.eq.s32.totalorder %v1586, 1
      %vm1619 = vcmp.eq.s32.totalorder %v1587, 1
      %vm1620 = vcmp.eq.s32.totalorder %v1588, 1
      %vm1621 = vcmp.eq.s32.totalorder %v1589, 1
      %vm1622 = vcmp.eq.s32.totalorder %v1590, 1
      %vm1623 = vcmp.eq.s32.totalorder %v1591, 1
      %vm1624 = vcmp.eq.s32.totalorder %v1592, 1
      %vm1625 = vcmp.eq.s32.totalorder %v1593, 1
      %vm1626 = vcmp.eq.s32.totalorder %v1594, 1
      %vm1627 = vcmp.eq.s32.totalorder %v1595, 1
      %vm1628 = vcmp.eq.s32.totalorder %v1596, 1
      %vm1629 = vcmp.eq.s32.totalorder %v1597, 1
      %vm1630 = vcmp.eq.s32.totalorder %v1598, 1
      %vm1631 = vcmp.eq.s32.totalorder %v1599, 1
      %vm1632 = vcmp.eq.s32.totalorder %v1600, 1
      %vm1633 = vcmp.eq.s32.totalorder %v1601, 1
      %vm1634 = vcmp.eq.s32.totalorder %v1602, 1
      %vm1635 = vcmp.eq.s32.totalorder %v1603, 1
      %vm1636 = vcmp.eq.s32.totalorder %v1604, 1
      %vm1637 = vcmp.eq.s32.totalorder %v1605, 1
      %vm1638 = vcmp.eq.s32.totalorder %v1606, 1
      %vm1639 = vcmp.eq.s32.totalorder %v1607, 1
      %vm1640 = vcmp.eq.s32.totalorder %v1608, 1
      %vm1641 = vcmp.eq.s32.totalorder %v1609, 1
      %vm1642 = vcmp.eq.s32.totalorder %v1610, 1
      %v1643 = vsel %vm1611, %v1389, -1e+30
      %v1644 = vsel %vm1612, %v1394, -1e+30
      %v1645 = vsel %vm1613, %v1399, -1e+30
      %v1646 = vsel %vm1614, %v1404, -1e+30
      %v1647 = vsel %vm1615, %v1409, -1e+30
      %v1648 = vsel %vm1616, %v1414, -1e+30
      %v1649 = vsel %vm1617, %v1419, -1e+30
      %v1650 = vsel %vm1618, %v1424, -1e+30
      %v1651 = vsel %vm1619, %v1429, -1e+30
      %v1652 = vsel %vm1620, %v1434, -1e+30
      %v1653 = vsel %vm1621, %v1439, -1e+30
      %v1654 = vsel %vm1622, %v1444, -1e+30
      %v1655 = vsel %vm1623, %v1449, -1e+30
      %v1656 = vsel %vm1624, %v1454, -1e+30
      %v1657 = vsel %vm1625, %v1459, -1e+30
      %v1658 = vsel %vm1626, %v1464, -1e+30
      %v1659 = vsel %vm1627, %v1469, -1e+30
      %v1660 = vsel %vm1628, %v1474, -1e+30
      %v1661 = vsel %vm1629, %v1479, -1e+30
      %v1662 = vsel %vm1630, %v1484, -1e+30
      %v1663 = vsel %vm1631, %v1489, -1e+30
      %v1664 = vsel %vm1632, %v1494, -1e+30
      %v1665 = vsel %vm1633, %v1499, -1e+30
      %v1666 = vsel %vm1634, %v1504, -1e+30
      %v1667 = vsel %vm1635, %v1509, -1e+30
      %v1668 = vsel %vm1636, %v1514, -1e+30
      %v1669 = vsel %vm1637, %v1519, -1e+30
      %v1670 = vsel %vm1638, %v1524, -1e+30
      %v1671 = vsel %vm1639, %v1529, -1e+30
      %v1672 = vsel %vm1640, %v1534, -1e+30
      %v1673 = vsel %vm1641, %v1539, -1e+30
      %v1674 = vsel %vm1642, %v1544, -1e+30
      %v1675 = vsel %vm1257, %v1643, -inf
      %v1676 = vsel %vm1257, %v1644, -inf
      %v1677 = vmax.f32 %v1675, %v1676
      %v1678 = vrot.slane %v1677, 4
      %v1679 = vmax.f32 %v1677, %v1678
      %v1680 = vrot.slane %v1679, 2
      %v1681 = vmax.f32 %v1679, %v1680
      %v1682 = vrot.slane %v1681, 1
      %v1683 = vmax.f32 %v1681, %v1682
      %v1684 = vsel %vm1257, %v1645, -inf
      %v1685 = vsel %vm1257, %v1646, -inf
      %v1686 = vmax.f32 %v1684, %v1685
      %v1687 = vrot.slane %v1686, 4
      %v1688 = vmax.f32 %v1686, %v1687
      %v1689 = vrot.slane %v1688, 2
      %v1690 = vmax.f32 %v1688, %v1689
      %v1691 = vrot.slane %v1690, 1
      %v1692 = vmax.f32 %v1690, %v1691
      %v1693 = vsel %vm1257, %v1647, -inf
      %v1694 = vsel %vm1257, %v1648, -inf
      %v1695 = vmax.f32 %v1693, %v1694
      %v1696 = vrot.slane %v1695, 4
      %v1697 = vmax.f32 %v1695, %v1696
      %v1698 = vrot.slane %v1697, 2
      %v1699 = vmax.f32 %v1697, %v1698
      %v1700 = vrot.slane %v1699, 1
      %v1701 = vmax.f32 %v1699, %v1700
      %v1702 = vsel %vm1257, %v1649, -inf
      %v1703 = vsel %vm1257, %v1650, -inf
      %v1704 = vmax.f32 %v1702, %v1703
      %v1705 = vrot.slane %v1704, 4
      %v1706 = vmax.f32 %v1704, %v1705
      %v1707 = vrot.slane %v1706, 2
      %v1708 = vmax.f32 %v1706, %v1707
      %v1709 = vrot.slane %v1708, 1
      %v1710 = vmax.f32 %v1708, %v1709
      %v1711 = vsel %vm1257, %v1651, -inf
      %v1712 = vsel %vm1257, %v1652, -inf
      %v1713 = vmax.f32 %v1711, %v1712
      %v1714 = vrot.slane %v1713, 4
      %v1715 = vmax.f32 %v1713, %v1714
      %v1716 = vrot.slane %v1715, 2
      %v1717 = vmax.f32 %v1715, %v1716
      %v1718 = vrot.slane %v1717, 1
      %v1719 = vmax.f32 %v1717, %v1718
      %v1720 = vsel %vm1257, %v1653, -inf
      %v1721 = vsel %vm1257, %v1654, -inf
      %v1722 = vmax.f32 %v1720, %v1721
      %v1723 = vrot.slane %v1722, 4
      %v1724 = vmax.f32 %v1722, %v1723
      %v1725 = vrot.slane %v1724, 2
      %v1726 = vmax.f32 %v1724, %v1725
      %v1727 = vrot.slane %v1726, 1
      %v1728 = vmax.f32 %v1726, %v1727
      %v1729 = vsel %vm1257, %v1655, -inf
      %v1730 = vsel %vm1257, %v1656, -inf
      %v1731 = vmax.f32 %v1729, %v1730
      %v1732 = vrot.slane %v1731, 4
      %v1733 = vmax.f32 %v1731, %v1732
      %v1734 = vrot.slane %v1733, 2
      %v1735 = vmax.f32 %v1733, %v1734
      %v1736 = vrot.slane %v1735, 1
      %v1737 = vmax.f32 %v1735, %v1736
      %v1738 = vsel %vm1257, %v1657, -inf
      %v1739 = vsel %vm1257, %v1658, -inf
      %v1740 = vmax.f32 %v1738, %v1739
      %v1741 = vrot.slane %v1740, 4
      %v1742 = vmax.f32 %v1740, %v1741
      %v1743 = vrot.slane %v1742, 2
      %v1744 = vmax.f32 %v1742, %v1743
      %v1745 = vrot.slane %v1744, 1
      %v1746 = vmax.f32 %v1744, %v1745
      %v1747 = vsel %vm1257, %v1659, -inf
      %v1748 = vsel %vm1257, %v1660, -inf
      %v1749 = vmax.f32 %v1747, %v1748
      %v1750 = vrot.slane %v1749, 4
      %v1751 = vmax.f32 %v1749, %v1750
      %v1752 = vrot.slane %v1751, 2
      %v1753 = vmax.f32 %v1751, %v1752
      %v1754 = vrot.slane %v1753, 1
      %v1755 = vmax.f32 %v1753, %v1754
      %v1756 = vsel %vm1257, %v1661, -inf
      %v1757 = vsel %vm1257, %v1662, -inf
      %v1758 = vmax.f32 %v1756, %v1757
      %v1759 = vrot.slane %v1758, 4
      %v1760 = vmax.f32 %v1758, %v1759
      %v1761 = vrot.slane %v1760, 2
      %v1762 = vmax.f32 %v1760, %v1761
      %v1763 = vrot.slane %v1762, 1
      %v1764 = vmax.f32 %v1762, %v1763
      %v1765 = vsel %vm1257, %v1663, -inf
      %v1766 = vsel %vm1257, %v1664, -inf
      %v1767 = vmax.f32 %v1765, %v1766
      %v1768 = vrot.slane %v1767, 4
      %v1769 = vmax.f32 %v1767, %v1768
      %v1770 = vrot.slane %v1769, 2
      %v1771 = vmax.f32 %v1769, %v1770
      %v1772 = vrot.slane %v1771, 1
      %v1773 = vmax.f32 %v1771, %v1772
      %v1774 = vsel %vm1257, %v1665, -inf
      %v1775 = vsel %vm1257, %v1666, -inf
      %v1776 = vmax.f32 %v1774, %v1775
      %v1777 = vrot.slane %v1776, 4
      %v1778 = vmax.f32 %v1776, %v1777
      %v1779 = vrot.slane %v1778, 2
      %v1780 = vmax.f32 %v1778, %v1779
      %v1781 = vrot.slane %v1780, 1
      %v1782 = vmax.f32 %v1780, %v1781
      %v1783 = vsel %vm1257, %v1667, -inf
      %v1784 = vsel %vm1257, %v1668, -inf
      %v1785 = vmax.f32 %v1783, %v1784
      %v1786 = vrot.slane %v1785, 4
      %v1787 = vmax.f32 %v1785, %v1786
      %v1788 = vrot.slane %v1787, 2
      %v1789 = vmax.f32 %v1787, %v1788
      %v1790 = vrot.slane %v1789, 1
      %v1791 = vmax.f32 %v1789, %v1790
      %v1792 = vsel %vm1257, %v1669, -inf
      %v1793 = vsel %vm1257, %v1670, -inf
      %v1794 = vmax.f32 %v1792, %v1793
      %v1795 = vrot.slane %v1794, 4
      %v1796 = vmax.f32 %v1794, %v1795
      %v1797 = vrot.slane %v1796, 2
      %v1798 = vmax.f32 %v1796, %v1797
      %v1799 = vrot.slane %v1798, 1
      %v1800 = vmax.f32 %v1798, %v1799
      %v1801 = vsel %vm1257, %v1671, -inf
      %v1802 = vsel %vm1257, %v1672, -inf
      %v1803 = vmax.f32 %v1801, %v1802
      %v1804 = vrot.slane %v1803, 4
      %v1805 = vmax.f32 %v1803, %v1804
      %v1806 = vrot.slane %v1805, 2
      %v1807 = vmax.f32 %v1805, %v1806
      %v1808 = vrot.slane %v1807, 1
      %v1809 = vmax.f32 %v1807, %v1808
      %v1810 = vsel %vm1257, %v1673, -inf
      %v1811 = vsel %vm1257, %v1674, -inf
      %v1812 = vmax.f32 %v1810, %v1811
      %v1813 = vrot.slane %v1812, 4
      %v1814 = vmax.f32 %v1812, %v1813
      %v1815 = vrot.slane %v1814, 2
      %v1816 = vmax.f32 %v1814, %v1815
      %v1817 = vrot.slane %v1816, 1
      %v1818 = vmax.f32 %v1816, %v1817
      %v1819 = vsub.f32 %v1643, %v1683
      %v1820 = vsub.f32 %v1644, %v1683
      %v1821 = vsub.f32 %v1645, %v1692
      %v1822 = vsub.f32 %v1646, %v1692
      %v1823 = vsub.f32 %v1647, %v1701
      %v1824 = vsub.f32 %v1648, %v1701
      %v1825 = vsub.f32 %v1649, %v1710
      %v1826 = vsub.f32 %v1650, %v1710
      %v1827 = vsub.f32 %v1651, %v1719
      %v1828 = vsub.f32 %v1652, %v1719
      %v1829 = vsub.f32 %v1653, %v1728
      %v1830 = vsub.f32 %v1654, %v1728
      %v1831 = vsub.f32 %v1655, %v1737
      %v1832 = vsub.f32 %v1656, %v1737
      %v1833 = vsub.f32 %v1657, %v1746
      %v1834 = vsub.f32 %v1658, %v1746
      %v1835 = vsub.f32 %v1659, %v1755
      %v1836 = vsub.f32 %v1660, %v1755
      %v1837 = vsub.f32 %v1661, %v1764
      %v1838 = vsub.f32 %v1662, %v1764
      %v1839 = vsub.f32 %v1663, %v1773
      %v1840 = vsub.f32 %v1664, %v1773
      %v1841 = vsub.f32 %v1665, %v1782
      %v1842 = vsub.f32 %v1666, %v1782
      %v1843 = vsub.f32 %v1667, %v1791
      %v1844 = vsub.f32 %v1668, %v1791
      %v1845 = vsub.f32 %v1669, %v1800
      %v1846 = vsub.f32 %v1670, %v1800
      %v1847 = vsub.f32 %v1671, %v1809
      %v1848 = vsub.f32 %v1672, %v1809
      %v1849 = vsub.f32 %v1673, %v1818
      %v1850 = vsub.f32 %v1674, %v1818
      %v1851 = vmul.f32 %v1819, 1.442695
      %v1852 = vpow.pop %v1851
      %v1853 = vmul.f32 %v1820, 1.442695
      %v1854 = vpow.pop %v1853
      %v1855 = vmul.f32 %v1821, 1.442695
      %v1856 = vpow.pop %v1855
      %v1857 = vmul.f32 %v1822, 1.442695
      %v1858 = vpow.pop %v1857
      %v1859 = vmul.f32 %v1823, 1.442695
      %v1860 = vpow.pop %v1859
      %v1861 = vmul.f32 %v1824, 1.442695
      %v1862 = vpow.pop %v1861
      %v1863 = vmul.f32 %v1825, 1.442695
      %v1864 = vpow.pop %v1863
      %v1865 = vmul.f32 %v1826, 1.442695
      %v1866 = vpow.pop %v1865
      %v1867 = vmul.f32 %v1827, 1.442695
      %v1868 = vpow.pop %v1867
      %v1869 = vmul.f32 %v1828, 1.442695
      %v1870 = vpow.pop %v1869
      %v1871 = vmul.f32 %v1829, 1.442695
      %v1872 = vpow.pop %v1871
      %v1873 = vmul.f32 %v1830, 1.442695
      %v1874 = vpow.pop %v1873
      %v1875 = vmul.f32 %v1831, 1.442695
      %v1876 = vpow.pop %v1875
      %v1877 = vmul.f32 %v1832, 1.442695
      %v1878 = vpow.pop %v1877
      %v1879 = vmul.f32 %v1833, 1.442695
      %v1880 = vpow.pop %v1879
      %v1881 = vmul.f32 %v1834, 1.442695
      %v1882 = vpow.pop %v1881
      %v1883 = vmul.f32 %v1835, 1.442695
      %v1884 = vpow.pop %v1883
      %v1885 = vmul.f32 %v1836, 1.442695
      %v1886 = vpow.pop %v1885
      %v1887 = vmul.f32 %v1837, 1.442695
      %v1888 = vpow.pop %v1887
      %v1889 = vmul.f32 %v1838, 1.442695
      %v1890 = vpow.pop %v1889
      %v1891 = vmul.f32 %v1839, 1.442695
      %v1892 = vpow.pop %v1891
      %v1893 = vmul.f32 %v1840, 1.442695
      %v1894 = vpow.pop %v1893
      %v1895 = vmul.f32 %v1841, 1.442695
      %v1896 = vpow.pop %v1895
      %v1897 = vmul.f32 %v1842, 1.442695
      %v1898 = vpow.pop %v1897
      %v1899 = vmul.f32 %v1843, 1.442695
      %v1900 = vpow.pop %v1899
      %v1901 = vmul.f32 %v1844, 1.442695
      %v1902 = vpow.pop %v1901
      %v1903 = vmul.f32 %v1845, 1.442695
      %v1904 = vpow.pop %v1903
      %v1905 = vmul.f32 %v1846, 1.442695
      %v1906 = vpow.pop %v1905
      %v1907 = vmul.f32 %v1847, 1.442695
      %v1908 = vpow.pop %v1907
      %v1909 = vmul.f32 %v1848, 1.442695
      %v1910 = vpow.pop %v1909
      %v1911 = vmul.f32 %v1849, 1.442695
      %v1912 = vpow.pop %v1911
      %v1913 = vmul.f32 %v1850, 1.442695
      %v1914 = vpow.pop %v1913
      %v1915 = vmul.f32 %v548, %v1852
      %v1916 = vmul.f32 %v552, %v1854
      %v1917 = vmul.f32 %v559, %v1856
      %v1918 = vmul.f32 %v563, %v1858
      %v1919 = vmul.f32 %v570, %v1860
      %v1920 = vmul.f32 %v574, %v1862
      %v1921 = vmul.f32 %v581, %v1864
      %v1922 = vmul.f32 %v585, %v1866
      %v1923 = vmul.f32 %v592, %v1868
      %v1924 = vmul.f32 %v596, %v1870
      %v1925 = vmul.f32 %v603, %v1872
      %v1926 = vmul.f32 %v607, %v1874
      %v1927 = vmul.f32 %v614, %v1876
      %v1928 = vmul.f32 %v618, %v1878
      %v1929 = vmul.f32 %v625, %v1880
      %v1930 = vmul.f32 %v629, %v1882
      %v1931 = vmul.f32 %v636, %v1884
      %v1932 = vmul.f32 %v640, %v1886
      %v1933 = vmul.f32 %v647, %v1888
      %v1934 = vmul.f32 %v651, %v1890
      %v1935 = vmul.f32 %v658, %v1892
      %v1936 = vmul.f32 %v662, %v1894
      %v1937 = vmul.f32 %v669, %v1896
      %v1938 = vmul.f32 %v673, %v1898
      %v1939 = vmul.f32 %v680, %v1900
      %v1940 = vmul.f32 %v684, %v1902
      %v1941 = vmul.f32 %v691, %v1904
      %v1942 = vmul.f32 %v695, %v1906
      %v1943 = vmul.f32 %v702, %v1908
      %v1944 = vmul.f32 %v706, %v1910
      %v1945 = vmul.f32 %v713, %v1912
      %v1946 = vmul.f32 %v717, %v1914
      %v1947 = vsel %vm1257, %v1915, 0.0
      %v1948 = vsel %vm1257, %v1916, 0.0
      %v1949 = vadd.f32 %v1947, %v1948
      %v1950 = vrot.slane %v1949, 4
      %v1951 = vadd.f32 %v1949, %v1950
      %v1952 = vrot.slane %v1951, 2
      %v1953 = vadd.f32 %v1951, %v1952
      %v1954 = vrot.slane %v1953, 1
      %v1955 = vadd.f32 %v1953, %v1954
      %v1956 = vsel %vm1257, %v1917, 0.0
      %v1957 = vsel %vm1257, %v1918, 0.0
      %v1958 = vadd.f32 %v1956, %v1957
      %v1959 = vrot.slane %v1958, 4
      %v1960 = vadd.f32 %v1958, %v1959
      %v1961 = vrot.slane %v1960, 2
      %v1962 = vadd.f32 %v1960, %v1961
      %v1963 = vrot.slane %v1962, 1
      %v1964 = vadd.f32 %v1962, %v1963
      %v1965 = vsel %vm1257, %v1919, 0.0
      %v1966 = vsel %vm1257, %v1920, 0.0
      %v1967 = vadd.f32 %v1965, %v1966
      %v1968 = vrot.slane %v1967, 4
      %v1969 = vadd.f32 %v1967, %v1968
      %v1970 = vrot.slane %v1969, 2
      %v1971 = vadd.f32 %v1969, %v1970
      %v1972 = vrot.slane %v1971, 1
      %v1973 = vadd.f32 %v1971, %v1972
      %v1974 = vsel %vm1257, %v1921, 0.0
      %v1975 = vsel %vm1257, %v1922, 0.0
      %v1976 = vadd.f32 %v1974, %v1975
      %v1977 = vrot.slane %v1976, 4
      %v1978 = vadd.f32 %v1976, %v1977
      %v1979 = vrot.slane %v1978, 2
      %v1980 = vadd.f32 %v1978, %v1979
      %v1981 = vrot.slane %v1980, 1
      %v1982 = vadd.f32 %v1980, %v1981
      %v1983 = vsel %vm1257, %v1923, 0.0
      %v1984 = vsel %vm1257, %v1924, 0.0
      %v1985 = vadd.f32 %v1983, %v1984
      %v1986 = vrot.slane %v1985, 4
      %v1987 = vadd.f32 %v1985, %v1986
      %v1988 = vrot.slane %v1987, 2
      %v1989 = vadd.f32 %v1987, %v1988
      %v1990 = vrot.slane %v1989, 1
      %v1991 = vadd.f32 %v1989, %v1990
      %v1992 = vsel %vm1257, %v1925, 0.0
      %v1993 = vsel %vm1257, %v1926, 0.0
      %v1994 = vadd.f32 %v1992, %v1993
      %v1995 = vrot.slane %v1994, 4
      %v1996 = vadd.f32 %v1994, %v1995
      %v1997 = vrot.slane %v1996, 2
      %v1998 = vadd.f32 %v1996, %v1997
      %v1999 = vrot.slane %v1998, 1
      %v2000 = vadd.f32 %v1998, %v1999
      %v2001 = vsel %vm1257, %v1927, 0.0
      %v2002 = vsel %vm1257, %v1928, 0.0
      %v2003 = vadd.f32 %v2001, %v2002
      %v2004 = vrot.slane %v2003, 4
      %v2005 = vadd.f32 %v2003, %v2004
      %v2006 = vrot.slane %v2005, 2
      %v2007 = vadd.f32 %v2005, %v2006
      %v2008 = vrot.slane %v2007, 1
      %v2009 = vadd.f32 %v2007, %v2008
      %v2010 = vsel %vm1257, %v1929, 0.0
      %v2011 = vsel %vm1257, %v1930, 0.0
      %v2012 = vadd.f32 %v2010, %v2011
      %v2013 = vrot.slane %v2012, 4
      %v2014 = vadd.f32 %v2012, %v2013
      %v2015 = vrot.slane %v2014, 2
      %v2016 = vadd.f32 %v2014, %v2015
      %v2017 = vrot.slane %v2016, 1
      %v2018 = vadd.f32 %v2016, %v2017
      %v2019 = vsel %vm1257, %v1931, 0.0
      %v2020 = vsel %vm1257, %v1932, 0.0
      %v2021 = vadd.f32 %v2019, %v2020
      %v2022 = vrot.slane %v2021, 4
      %v2023 = vadd.f32 %v2021, %v2022
      %v2024 = vrot.slane %v2023, 2
      %v2025 = vadd.f32 %v2023, %v2024
      %v2026 = vrot.slane %v2025, 1
      %v2027 = vadd.f32 %v2025, %v2026
      %v2028 = vsel %vm1257, %v1933, 0.0
      %v2029 = vsel %vm1257, %v1934, 0.0
      %v2030 = vadd.f32 %v2028, %v2029
      %v2031 = vrot.slane %v2030, 4
      %v2032 = vadd.f32 %v2030, %v2031
      %v2033 = vrot.slane %v2032, 2
      %v2034 = vadd.f32 %v2032, %v2033
      %v2035 = vrot.slane %v2034, 1
      %v2036 = vadd.f32 %v2034, %v2035
      %v2037 = vsel %vm1257, %v1935, 0.0
      %v2038 = vsel %vm1257, %v1936, 0.0
      %v2039 = vadd.f32 %v2037, %v2038
      %v2040 = vrot.slane %v2039, 4
      %v2041 = vadd.f32 %v2039, %v2040
      %v2042 = vrot.slane %v2041, 2
      %v2043 = vadd.f32 %v2041, %v2042
      %v2044 = vrot.slane %v2043, 1
      %v2045 = vadd.f32 %v2043, %v2044
      %v2046 = vsel %vm1257, %v1937, 0.0
      %v2047 = vsel %vm1257, %v1938, 0.0
      %v2048 = vadd.f32 %v2046, %v2047
      %v2049 = vrot.slane %v2048, 4
      %v2050 = vadd.f32 %v2048, %v2049
      %v2051 = vrot.slane %v2050, 2
      %v2052 = vadd.f32 %v2050, %v2051
      %v2053 = vrot.slane %v2052, 1
      %v2054 = vadd.f32 %v2052, %v2053
      %v2055 = vsel %vm1257, %v1939, 0.0
      %v2056 = vsel %vm1257, %v1940, 0.0
      %v2057 = vadd.f32 %v2055, %v2056
      %v2058 = vrot.slane %v2057, 4
      %v2059 = vadd.f32 %v2057, %v2058
      %v2060 = vrot.slane %v2059, 2
      %v2061 = vadd.f32 %v2059, %v2060
      %v2062 = vrot.slane %v2061, 1
      %v2063 = vadd.f32 %v2061, %v2062
      %v2064 = vsel %vm1257, %v1941, 0.0
      %v2065 = vsel %vm1257, %v1942, 0.0
      %v2066 = vadd.f32 %v2064, %v2065
      %v2067 = vrot.slane %v2066, 4
      %v2068 = vadd.f32 %v2066, %v2067
      %v2069 = vrot.slane %v2068, 2
      %v2070 = vadd.f32 %v2068, %v2069
      %v2071 = vrot.slane %v2070, 1
      %v2072 = vadd.f32 %v2070, %v2071
      %v2073 = vsel %vm1257, %v1943, 0.0
      %v2074 = vsel %vm1257, %v1944, 0.0
      %v2075 = vadd.f32 %v2073, %v2074
      %v2076 = vrot.slane %v2075, 4
      %v2077 = vadd.f32 %v2075, %v2076
      %v2078 = vrot.slane %v2077, 2
      %v2079 = vadd.f32 %v2077, %v2078
      %v2080 = vrot.slane %v2079, 1
      %v2081 = vadd.f32 %v2079, %v2080
      %v2082 = vsel %vm1257, %v1945, 0.0
      %v2083 = vsel %vm1257, %v1946, 0.0
      %v2084 = vadd.f32 %v2082, %v2083
      %v2085 = vrot.slane %v2084, 4
      %v2086 = vadd.f32 %v2084, %v2085
      %v2087 = vrot.slane %v2086, 2
      %v2088 = vadd.f32 %v2086, %v2087
      %v2089 = vrot.slane %v2088, 1
      %v2090 = vadd.f32 %v2088, %v2089
      %v2091 = vrcp.pop %v1955
      %v2092 = vmul.f32 %v1915, %v2091
      %v2093 = vmul.f32 %v1916, %v2091
      %v2094 = vrcp.pop %v1964
      %v2095 = vmul.f32 %v1917, %v2094
      %v2096 = vmul.f32 %v1918, %v2094
      %v2097 = vrcp.pop %v1973
      %v2098 = vmul.f32 %v1919, %v2097
      %v2099 = vmul.f32 %v1920, %v2097
      %v2100 = vrcp.pop %v1982
      %v2101 = vmul.f32 %v1921, %v2100
      %v2102 = vmul.f32 %v1922, %v2100
      %v2103 = vrcp.pop %v1991
      %v2104 = vmul.f32 %v1923, %v2103
      %v2105 = vmul.f32 %v1924, %v2103
      %v2106 = vrcp.pop %v2000
      %v2107 = vmul.f32 %v1925, %v2106
      %v2108 = vmul.f32 %v1926, %v2106
      %v2109 = vrcp.pop %v2009
      %v2110 = vmul.f32 %v1927, %v2109
      %v2111 = vmul.f32 %v1928, %v2109
      %v2112 = vrcp.pop %v2018
      %v2113 = vmul.f32 %v1929, %v2112
      %v2114 = vmul.f32 %v1930, %v2112
      %v2115 = vrcp.pop %v2027
      %v2116 = vmul.f32 %v1931, %v2115
      %v2117 = vmul.f32 %v1932, %v2115
      %v2118 = vrcp.pop %v2036
      %v2119 = vmul.f32 %v1933, %v2118
      %v2120 = vmul.f32 %v1934, %v2118
      %v2121 = vrcp.pop %v2045
      %v2122 = vmul.f32 %v1935, %v2121
      %v2123 = vmul.f32 %v1936, %v2121
      %v2124 = vrcp.pop %v2054
      %v2125 = vmul.f32 %v1937, %v2124
      %v2126 = vmul.f32 %v1938, %v2124
      %v2127 = vrcp.pop %v2063
      %v2128 = vmul.f32 %v1939, %v2127
      %v2129 = vmul.f32 %v1940, %v2127
      %v2130 = vrcp.pop %v2072
      %v2131 = vmul.f32 %v1941, %v2130
      %v2132 = vmul.f32 %v1942, %v2130
      %v2133 = vrcp.pop %v2081
      %v2134 = vmul.f32 %v1943, %v2133
      %v2135 = vmul.f32 %v1944, %v2133
      %v2136 = vrcp.pop %v2090
      %v2137 = vmul.f32 %v1945, %v2136
      %v2138 = vmul.f32 %v1946, %v2136
      %v2139 = vmul.f32 %v2092, %v829
      %v2140 = vmul.f32 %v2093, %v835
      %v2141 = vmul.f32 %v2095, %v829
      %v2142 = vmul.f32 %v2096, %v835
      %v2143 = vmul.f32 %v2098, %v829
      %v2144 = vmul.f32 %v2099, %v835
      %v2145 = vmul.f32 %v2101, %v829
      %v2146 = vmul.f32 %v2102, %v835
      %v2147 = vmul.f32 %v2104, %v829
      %v2148 = vmul.f32 %v2105, %v835
      %v2149 = vmul.f32 %v2107, %v829
      %v2150 = vmul.f32 %v2108, %v835
      %v2151 = vmul.f32 %v2110, %v829
      %v2152 = vmul.f32 %v2111, %v835
      %v2153 = vmul.f32 %v2113, %v829
      %v2154 = vmul.f32 %v2114, %v835
      %v2155 = vmul.f32 %v2116, %v829
      %v2156 = vmul.f32 %v2117, %v835
      %v2157 = vmul.f32 %v2119, %v829
      %v2158 = vmul.f32 %v2120, %v835
      %v2159 = vmul.f32 %v2122, %v829
      %v2160 = vmul.f32 %v2123, %v835
      %v2161 = vmul.f32 %v2125, %v829
      %v2162 = vmul.f32 %v2126, %v835
      %v2163 = vmul.f32 %v2128, %v829
      %v2164 = vmul.f32 %v2129, %v835
      %v2165 = vmul.f32 %v2131, %v829
      %v2166 = vmul.f32 %v2132, %v835
      %v2167 = vmul.f32 %v2134, %v829
      %v2168 = vmul.f32 %v2135, %v835
      %v2169 = vmul.f32 %v2137, %v829
      %v2170 = vmul.f32 %v2138, %v835
      %v2171 = vsel %vm1257, %v2139, 0.0
      %v2172 = vsel %vm1257, %v2140, 0.0
      %v2173 = vadd.f32 %v2171, %v2172
      %v2174 = vrot.slane %v2173, 4
      %v2175 = vadd.f32 %v2173, %v2174
      %v2176 = vrot.slane %v2175, 2
      %v2177 = vadd.f32 %v2175, %v2176
      %v2178 = vrot.slane %v2177, 1
      %v2179 = vadd.f32 %v2177, %v2178
      %v2180 = vsel %vm1257, %v2141, 0.0
      %v2181 = vsel %vm1257, %v2142, 0.0
      %v2182 = vadd.f32 %v2180, %v2181
      %v2183 = vrot.slane %v2182, 4
      %v2184 = vadd.f32 %v2182, %v2183
      %v2185 = vrot.slane %v2184, 2
      %v2186 = vadd.f32 %v2184, %v2185
      %v2187 = vrot.slane %v2186, 1
      %v2188 = vadd.f32 %v2186, %v2187
      %v2189 = vsel %vm1257, %v2143, 0.0
      %v2190 = vsel %vm1257, %v2144, 0.0
      %v2191 = vadd.f32 %v2189, %v2190
      %v2192 = vrot.slane %v2191, 4
      %v2193 = vadd.f32 %v2191, %v2192
      %v2194 = vrot.slane %v2193, 2
      %v2195 = vadd.f32 %v2193, %v2194
      %v2196 = vrot.slane %v2195, 1
      %v2197 = vadd.f32 %v2195, %v2196
      %v2198 = vsel %vm1257, %v2145, 0.0
      %v2199 = vsel %vm1257, %v2146, 0.0
      %v2200 = vadd.f32 %v2198, %v2199
      %v2201 = vrot.slane %v2200, 4
      %v2202 = vadd.f32 %v2200, %v2201
      %v2203 = vrot.slane %v2202, 2
      %v2204 = vadd.f32 %v2202, %v2203
      %v2205 = vrot.slane %v2204, 1
      %v2206 = vadd.f32 %v2204, %v2205
      %v2207 = vsel %vm1257, %v2147, 0.0
      %v2208 = vsel %vm1257, %v2148, 0.0
      %v2209 = vadd.f32 %v2207, %v2208
      %v2210 = vrot.slane %v2209, 4
      %v2211 = vadd.f32 %v2209, %v2210
      %v2212 = vrot.slane %v2211, 2
      %v2213 = vadd.f32 %v2211, %v2212
      %v2214 = vrot.slane %v2213, 1
      %v2215 = vadd.f32 %v2213, %v2214
      %v2216 = vsel %vm1257, %v2149, 0.0
      %v2217 = vsel %vm1257, %v2150, 0.0
      %v2218 = vadd.f32 %v2216, %v2217
      %v2219 = vrot.slane %v2218, 4
      %v2220 = vadd.f32 %v2218, %v2219
      %v2221 = vrot.slane %v2220, 2
      %v2222 = vadd.f32 %v2220, %v2221
      %v2223 = vrot.slane %v2222, 1
      %v2224 = vadd.f32 %v2222, %v2223
      %v2225 = vsel %vm1257, %v2151, 0.0
      %v2226 = vsel %vm1257, %v2152, 0.0
      %v2227 = vadd.f32 %v2225, %v2226
      %v2228 = vrot.slane %v2227, 4
      %v2229 = vadd.f32 %v2227, %v2228
      %v2230 = vrot.slane %v2229, 2
      %v2231 = vadd.f32 %v2229, %v2230
      %v2232 = vrot.slane %v2231, 1
      %v2233 = vadd.f32 %v2231, %v2232
      %v2234 = vsel %vm1257, %v2153, 0.0
      %v2235 = vsel %vm1257, %v2154, 0.0
      %v2236 = vadd.f32 %v2234, %v2235
      %v2237 = vrot.slane %v2236, 4
      %v2238 = vadd.f32 %v2236, %v2237
      %v2239 = vrot.slane %v2238, 2
      %v2240 = vadd.f32 %v2238, %v2239
      %v2241 = vrot.slane %v2240, 1
      %v2242 = vadd.f32 %v2240, %v2241
      %v2243 = vsel %vm1257, %v2155, 0.0
      %v2244 = vsel %vm1257, %v2156, 0.0
      %v2245 = vadd.f32 %v2243, %v2244
      %v2246 = vrot.slane %v2245, 4
      %v2247 = vadd.f32 %v2245, %v2246
      %v2248 = vrot.slane %v2247, 2
      %v2249 = vadd.f32 %v2247, %v2248
      %v2250 = vrot.slane %v2249, 1
      %v2251 = vadd.f32 %v2249, %v2250
      %v2252 = vsel %vm1257, %v2157, 0.0
      %v2253 = vsel %vm1257, %v2158, 0.0
      %v2254 = vadd.f32 %v2252, %v2253
      %v2255 = vrot.slane %v2254, 4
      %v2256 = vadd.f32 %v2254, %v2255
      %v2257 = vrot.slane %v2256, 2
      %v2258 = vadd.f32 %v2256, %v2257
      %v2259 = vrot.slane %v2258, 1
      %v2260 = vadd.f32 %v2258, %v2259
      %v2261 = vsel %vm1257, %v2159, 0.0
      %v2262 = vsel %vm1257, %v2160, 0.0
      %v2263 = vadd.f32 %v2261, %v2262
      %v2264 = vrot.slane %v2263, 4
      %v2265 = vadd.f32 %v2263, %v2264
      %v2266 = vrot.slane %v2265, 2
      %v2267 = vadd.f32 %v2265, %v2266
      %v2268 = vrot.slane %v2267, 1
      %v2269 = vadd.f32 %v2267, %v2268
      %v2270 = vsel %vm1257, %v2161, 0.0
      %v2271 = vsel %vm1257, %v2162, 0.0
      %v2272 = vadd.f32 %v2270, %v2271
      %v2273 = vrot.slane %v2272, 4
      %v2274 = vadd.f32 %v2272, %v2273
      %v2275 = vrot.slane %v2274, 2
      %v2276 = vadd.f32 %v2274, %v2275
      %v2277 = vrot.slane %v2276, 1
      %v2278 = vadd.f32 %v2276, %v2277
      %v2279 = vsel %vm1257, %v2163, 0.0
      %v2280 = vsel %vm1257, %v2164, 0.0
      %v2281 = vadd.f32 %v2279, %v2280
      %v2282 = vrot.slane %v2281, 4
      %v2283 = vadd.f32 %v2281, %v2282
      %v2284 = vrot.slane %v2283, 2
      %v2285 = vadd.f32 %v2283, %v2284
      %v2286 = vrot.slane %v2285, 1
      %v2287 = vadd.f32 %v2285, %v2286
      %v2288 = vsel %vm1257, %v2165, 0.0
      %v2289 = vsel %vm1257, %v2166, 0.0
      %v2290 = vadd.f32 %v2288, %v2289
      %v2291 = vrot.slane %v2290, 4
      %v2292 = vadd.f32 %v2290, %v2291
      %v2293 = vrot.slane %v2292, 2
      %v2294 = vadd.f32 %v2292, %v2293
      %v2295 = vrot.slane %v2294, 1
      %v2296 = vadd.f32 %v2294, %v2295
      %v2297 = vsel %vm1257, %v2167, 0.0
      %v2298 = vsel %vm1257, %v2168, 0.0
      %v2299 = vadd.f32 %v2297, %v2298
      %v2300 = vrot.slane %v2299, 4
      %v2301 = vadd.f32 %v2299, %v2300
      %v2302 = vrot.slane %v2301, 2
      %v2303 = vadd.f32 %v2301, %v2302
      %v2304 = vrot.slane %v2303, 1
      %v2305 = vadd.f32 %v2303, %v2304
      %v2306 = vsel %vm1257, %v2169, 0.0
      %v2307 = vsel %vm1257, %v2170, 0.0
      %v2308 = vadd.f32 %v2306, %v2307
      %v2309 = vrot.slane %v2308, 4
      %v2310 = vadd.f32 %v2308, %v2309
      %v2311 = vrot.slane %v2310, 2
      %v2312 = vadd.f32 %v2310, %v2311
      %v2313 = vrot.slane %v2312, 1
      %v2314 = vadd.f32 %v2312, %v2313
      %vm2331 = vcmask 1041409
      %v2332 = vsel %vm2331, %v2188, %v2179
      %vm2333 = vcmask 1042434
      %v2334 = vsel %vm2333, %v2197, %v2332
      %vm2335 = vcmask 1043459
      %v2336 = vsel %vm2335, %v2206, %v2334
      %vm2337 = vcmask 1044484
      %v2338 = vsel %vm2337, %v2215, %v2336
      %vm2339 = vcmask 1045509
      %v2340 = vsel %vm2339, %v2224, %v2338
      %vm2341 = vcmask 1046534
      %v2342 = vsel %vm2341, %v2233, %v2340
      %vm2343 = vcmask 1047559
      %v2344 = vsel %vm2343, %v2242, %v2342
      %v2345 = vsel %vm2331, %v2260, %v2251
      %v2346 = vsel %vm2333, %v2269, %v2345
      %v2347 = vsel %vm2335, %v2278, %v2346
      %v2348 = vsel %vm2337, %v2287, %v2347
      %v2349 = vsel %vm2339, %v2296, %v2348
      %v2350 = vsel %vm2341, %v2305, %v2349
      %v2351 = vsel %vm2343, %v2314, %v2350
      %v2352 = vsel %vm1257, %v2344, 0
      %v2354 = vsel %vm1257, %v2351, 0
      %2356 = vmatprep.subr.mxu0 0.0
      %2357 = vmatpush1.msra.mxu0 %v534
      %2358 = vmatprep.subr.mxu0 0.0
      %2359 = vmatpush1.msra.mxu0 %v535
      %2360 = vmatprep.subr.mxu0 0.0
      %2361 = vmatpush1.msra.mxu0 %v536
      %2362 = vmatprep.subr.mxu0 0.0
      %2363 = vmatpush1.msra.mxu0 %v537
      %2364 = vmatprep.subr.mxu0 0.0
      %2365 = vmatpush1.msra.mxu0 %v538
      %2366 = vmatprep.subr.mxu0 0.0
      %2367 = vmatpush1.msra.mxu0 %v539
      %2368 = vmatprep.subr.mxu0 0.0
      %2369 = vmatpush1.msra.mxu0 %v540
      %2370 = vmatprep.subr.mxu0 0.0
      %2371 = vmatpush1.msra.mxu0 %v541
      %2372 = vmatprep.subr.mxu0 0.0
      %2373 = vmatpush1.msra.mxu0 0.0
      %2374 = vmatprep.subr.mxu0 0.0
      %2375 = vmatpush1.msra.mxu0 0.0
      %2376 = vmatprep.subr.mxu0 0.0
      %2377 = vmatpush1.msra.mxu0 0.0
      %2378 = vmatprep.subr.mxu0 0.0
      %2379 = vmatpush1.msra.mxu0 0.0
      %2380 = vmatprep.subr.mxu0 0.0
      %2381 = vmatpush1.msra.mxu0 0.0
      %2382 = vmatprep.subr.mxu0 0.0
      %2383 = vmatpush1.msra.mxu0 0.0
      %2384 = vmatprep.subr.mxu0 0.0
      %2385 = vmatpush1.msra.mxu0 0.0
      %2386 = vmatprep.subr.mxu0 0.0
      %2387 = vmatpush1.msra.mxu0 0.0
      %2388 = vmatprep.subr.mxu0 0.0
      %2389 = vmatpush1.msra.mxu0 0.0
      %2390 = vmatprep.subr.mxu0 0.0
      %2391 = vmatpush1.msra.mxu0 0.0
      %2392 = vmatprep.subr.mxu0 0.0
      %2393 = vmatpush1.msra.mxu0 0.0
      %2394 = vmatprep.subr.mxu0 0.0
      %2395 = vmatpush1.msra.mxu0 0.0
      %2396 = vmatprep.subr.mxu0 0.0
      %2397 = vmatpush1.msra.mxu0 0.0
      %2398 = vmatprep.subr.mxu0 0.0
      %2399 = vmatpush1.msra.mxu0 0.0
      %2400 = vmatprep.subr.mxu0 0.0
      %2401 = vmatpush1.msra.mxu0 0.0
      %2402 = vmatprep.subr.mxu0 0.0
      %2403 = vmatpush1.msra.mxu0 0.0
      %2404 = vmatprep.subr.mxu0 0.0
      %2405 = vmatpush1.msra.mxu0 0.0
      %2406 = vmatprep.subr.mxu0 0.0
      %2407 = vmatpush1.msra.mxu0 0.0
      %2408 = vmatprep.subr.mxu0 0.0
      %2409 = vmatpush1.msra.mxu0 0.0
      %2410 = vmatprep.subr.mxu0 0.0
      %2411 = vmatpush1.msra.mxu0 0.0
      %2412 = vmatprep.subr.mxu0 0.0
      %2413 = vmatpush1.msra.mxu0 0.0
      %2414 = vmatprep.subr.mxu0 0.0
      %2415 = vmatpush1.msra.mxu0 0.0
      %2416 = vmatprep.subr.mxu0 0.0
      %2417 = vmatpush1.msra.mxu0 0.0
      %2418 = vmatprep.subr.mxu0 0.0
      %2419 = vmatpush1.msra.mxu0 0.0
      %2420 = vmatprep.mubr.f32.mxu0 0.0
      %2421 = vmatmul.mubr.f32.gmra.mrb[0].mxu0 %v2352
      %v2422 = vpop.f32.mrb[0].mxu0
      %v2423 = vadd.f32 0.0, %v2422
      %v2424 = vpop.f32.mrb[0].mxu0
      %2425 = vmatprep.mubr.f32.mxu0 0.0
      %2426 = vmatmul.mubr.f32.gmra.mrb[0].mxu0 %v2354
      %v2427 = vpop.f32.mrb[0].mxu0
      %v2428 = vadd.f32 0.0, %v2427
      %v2429 = vpop.f32.mrb[0].mxu0
      %2430 = vdwg.mxu0
      %v2431 = vrcp.pop 4.0
      %v2432 = vmul.f32 %v2423, %v2431
      %v2433 = vmul.f32 %v2428, %v2431
      %v2434 = vadd.f32 %v2432, %v831
      %v2435 = vadd.f32 %v2433, %v837
      %v2436 = vld [vmem:[%s9] sm:$0x1]
      %v2437 = vlaneseq
      %v2438 = vshrl.u32 %v2437, 7
      %v2439 = vsub.s32 0, %v2438
      %v2440 = vrot.slane %v2436, %v2439
      %v2441 = vadd.f32 %v2434, %v2440
      %v2442 = vadd.f32 %v2435, %v2440
      %vm2443 = vcmask 130048
      %v2444 = vsel %vm2443, %v2441, 0.0
      %v2445 = vsel %vm2443, %v2442, 0.0
      %v2446 = vadd.f32 %v2444, %v2445
      %v2447 = vrot.slane %v2446, 4
      %v2448 = vadd.f32 %v2446, %v2447
      %v2449 = vrot.slane %v2448, 2
      %v2450 = vadd.f32 %v2448, %v2449
      %v2451 = vrot.slane %v2450, 1
      %v2452 = vadd.f32 %v2450, %v2451
      %v2453 = vrcp.pop 16.0
      %v2454 = vmul.f32 %v2452, %v2453
      %v2455 = vsub.f32 %v2441, %v2454
      %v2456 = vsub.f32 %v2442, %v2454
      %v2457 = vmul.f32 %v2455, %v2455
      %v2458 = vmul.f32 %v2456, %v2456
      %v2459 = vsel %vm2443, %v2457, 0.0
      %v2460 = vsel %vm2443, %v2458, 0.0
      %v2461 = vadd.f32 %v2459, %v2460
      %v2462 = vrot.slane %v2461, 4
      %v2463 = vadd.f32 %v2461, %v2462
      %v2464 = vrot.slane %v2463, 2
      %v2465 = vadd.f32 %v2463, %v2464
      %v2466 = vrot.slane %v2465, 1
      %v2467 = vadd.f32 %v2465, %v2466
      %v2468 = vmul.f32 %v2467, %v2453
      %v2469 = vadd.f32 %v2468, 1e-05
      %v2470 = vrsqrt.pop %v2469
      %v2471 = vmul.f32 %v2455, %v2470
      %v2472 = vmul.f32 %v2456, %v2470
      %v2473 = vld [vmem:[%s9 + $0x1] sm:$0x1]
      %v2474 = vlaneseq
      %v2475 = vshrl.u32 %v2474, 7
      %v2476 = vsub.s32 0, %v2475
      %v2477 = vrot.slane %v2473, %v2476
      %v2478 = vmul.f32 %v2471, %v2477
      %v2479 = vmul.f32 %v2472, %v2477
      %v2480 = vld [vmem:[%s9 + $0x2] sm:$0x1]
      %v2481 = vlaneseq
      %v2482 = vshrl.u32 %v2481, 7
      %v2483 = vsub.s32 0, %v2482
      %v2484 = vrot.slane %v2480, %v2483
      %v2485 = vadd.f32 %v2478, %v2484
      %v2486 = vadd.f32 %v2479, %v2484
      %vm2487 = vcmp.gt.f32.partialorder %v2485, 0.0
      %vm2488 = vcmp.gt.f32.partialorder %v2486, 0.0
      %v2489 = vld [vmem:[%s9 + $0x3] sm:$0x1]
      %v2490 = vlaneseq
      %v2491 = vshrl.u32 %v2490, 7
      %v2492 = vsub.s32 0, %v2491
      %v2493 = vrot.slane %v2489, %v2492
      %v2494 = vmul.f32 %v2493, %v2485
      %v2495 = vmul.f32 %v2493, %v2486
      %v2496 = vsel %vm2487, %v2485, %v2494
      %v2497 = vsel %vm2488, %v2486, %v2495
      %v2498 = vld [vmem:[%s10] sm:$0xff]
      %v2499 = vld [vmem:[%s10 + $0x8] sm:$0xff]
      %v2500 = vld [vmem:[%s10 + $0x10] sm:$0xff]
      %v2501 = vld [vmem:[%s10 + $0x18] sm:$0xff]
      %v2502 = vld [vmem:[%s11] sm:$0x3]
      %v2504 = vlaneseq
      %v2505 = vshrl.u32 %v2504, 7
      %v2506 = vsub.s32 0, %v2505
      %v2507 = vrot.slane %v2502, %v2506
      %v2508 = vlaneseq
      %v2509 = vshrl.u32 %v2508, 7
      %v2510 = vsub.s32 1, %v2509
      %v2511 = vrot.slane %v2502, %v2510
      %v2515 = vsel %vm2443, %v2496, 0
      %v2518 = vsel %vm2443, %v2497, 0
      %2520 = vmatprep.subr.mxu0 %v2499
      %2521 = vmatpush1.msra.mxu0 %v2498
      %2522 = vmatprep.subr.mxu0 %v2501
      %2523 = vmatpush1.msra.mxu0 %v2500
      %2524 = vmatprep.subr.mxu0 0.0
      %2525 = vmatpush1.msra.mxu0 0.0
      %2526 = vmatprep.subr.mxu0 0.0
      %2527 = vmatpush1.msra.mxu0 0.0
      %2528 = vmatprep.subr.mxu0 0.0
      %2529 = vmatpush1.msra.mxu0 0.0
      %2530 = vmatprep.subr.mxu0 0.0
      %2531 = vmatpush1.msra.mxu0 0.0
      %2532 = vmatprep.subr.mxu0 0.0
      %2533 = vmatpush1.msra.mxu0 0.0
      %2534 = vmatprep.subr.mxu0 0.0
      %2535 = vmatpush1.msra.mxu0 0.0
      %2536 = vmatprep.subr.mxu0 0.0
      %2537 = vmatpush1.msra.mxu0 0.0
      %2538 = vmatprep.subr.mxu0 0.0
      %2539 = vmatpush1.msra.mxu0 0.0
      %2540 = vmatprep.subr.mxu0 0.0
      %2541 = vmatpush1.msra.mxu0 0.0
      %2542 = vmatprep.subr.mxu0 0.0
      %2543 = vmatpush1.msra.mxu0 0.0
      %2544 = vmatprep.subr.mxu0 0.0
      %2545 = vmatpush1.msra.mxu0 0.0
      %2546 = vmatprep.subr.mxu0 0.0
      %2547 = vmatpush1.msra.mxu0 0.0
      %2548 = vmatprep.subr.mxu0 0.0
      %2549 = vmatpush1.msra.mxu0 0.0
      %2550 = vmatprep.subr.mxu0 0.0
      %2551 = vmatpush1.msra.mxu0 0.0
      %2552 = vmatprep.subr.mxu0 0.0
      %2553 = vmatpush1.msra.mxu0 0.0
      %2554 = vmatprep.subr.mxu0 0.0
      %2555 = vmatpush1.msra.mxu0 0.0
      %2556 = vmatprep.subr.mxu0 0.0
      %2557 = vmatpush1.msra.mxu0 0.0
      %2558 = vmatprep.subr.mxu0 0.0
      %2559 = vmatpush1.msra.mxu0 0.0
      %2560 = vmatprep.subr.mxu0 0.0
      %2561 = vmatpush1.msra.mxu0 0.0
      %2562 = vmatprep.subr.mxu0 0.0
      %2563 = vmatpush1.msra.mxu0 0.0
      %2564 = vmatprep.subr.mxu0 0.0
      %2565 = vmatpush1.msra.mxu0 0.0
      %2566 = vmatprep.subr.mxu0 0.0
      %2567 = vmatpush1.msra.mxu0 0.0
      %2568 = vmatprep.subr.mxu0 0.0
      %2569 = vmatpush1.msra.mxu0 0.0
      %2570 = vmatprep.subr.mxu0 0.0
      %2571 = vmatpush1.msra.mxu0 0.0
      %2572 = vmatprep.subr.mxu0 0.0
      %2573 = vmatpush1.msra.mxu0 0.0
      %2574 = vmatprep.subr.mxu0 0.0
      %2575 = vmatpush1.msra.mxu0 0.0
      %2576 = vmatprep.subr.mxu0 0.0
      %2577 = vmatpush1.msra.mxu0 0.0
      %2578 = vmatprep.subr.mxu0 0.0
      %2579 = vmatpush1.msra.mxu0 0.0
      %2580 = vmatprep.subr.mxu0 0.0
      %2581 = vmatpush1.msra.mxu0 0.0
      %2582 = vmatprep.subr.mxu0 0.0
      %2583 = vmatpush1.msra.mxu0 0.0
      %2584 = vmatprep.mubr.f32.mxu0 0.0
      %2585 = vmatmul.mubr.f32.gmra.mrb[0].mxu0 %v2515
      %v2586 = vpop.f32.mrb[0].mxu0
      %v2587 = vadd.f32 %v2507, %v2586
      %v2588 = vpop.f32.mrb[0].mxu0
      %v2589 = vadd.f32 %v2511, %v2588
      %2590 = vmatprep.mubr.f32.mxu0 0.0
      %2591 = vmatmul.mubr.f32.gmra.mrb[0].mxu0 %v2518
      %v2592 = vpop.f32.mrb[0].mxu0
      %v2593 = vadd.f32 %v2507, %v2592
      %v2594 = vpop.f32.mrb[0].mxu0
      %v2595 = vadd.f32 %v2511, %v2594
      %2596 = vdwg.mxu0
      %v2599 = vcombine.high %v2587, %v2587
      %v2601 = vunpack.c.l.s4 1966171168
      %v2602 = vunpack.c.0.s8 %v2601
      %v2603 = vlaneseq
      %v2604 = vshrl.u32 %v2603, 7
      %v2605 = vsub.s32 %v2602, %v2604
      %v2606 = vrot.slane %v2587, %v2605
      %v2608 = vunpack.c.l.s4 1966171168
      %v2609 = vunpack.c.0.s8 %v2608
      %v2610 = vlaneseq
      %v2611 = vshrl.u32 %v2610, 7
      %v2612 = vsub.s32 %v2609, %v2611
      %v2613 = vrot.slane %v2599, %v2612
      %v2614 = vcombine.high %v2606, %v2606
      %v2615 = vcombine.high %v2613, %v2613
      %v2617 = vunpack.c.l.s4 1966171168
      %v2618 = vunpack.c.0.s8 %v2617
      %v2619 = vlaneseq
      %v2620 = vshrl.u32 %v2619, 7
      %v2621 = vsub.s32 %v2618, %v2620
      %v2622 = vrot.slane %v2606, %v2621
      %v2624 = vunpack.c.l.s4 1966171168
      %v2625 = vunpack.c.0.s8 %v2624
      %v2626 = vlaneseq
      %v2627 = vshrl.u32 %v2626, 7
      %v2628 = vsub.s32 %v2625, %v2627
      %v2629 = vrot.slane %v2613, %v2628
      %v2631 = vunpack.c.l.s4 1966171168
      %v2632 = vunpack.c.0.s8 %v2631
      %v2633 = vlaneseq
      %v2634 = vshrl.u32 %v2633, 7
      %v2635 = vsub.s32 %v2632, %v2634
      %v2636 = vrot.slane %v2614, %v2635
      %v2638 = vunpack.c.l.s4 1966171168
      %v2639 = vunpack.c.0.s8 %v2638
      %v2640 = vlaneseq
      %v2641 = vshrl.u32 %v2640, 7
      %v2642 = vsub.s32 %v2639, %v2641
      %v2643 = vrot.slane %v2615, %v2642
      %v2644 = vcombine.high %v2622, %v2622
      %v2645 = vcombine.high %v2629, %v2629
      %v2646 = vcombine.high %v2636, %v2636
      %v2647 = vcombine.high %v2643, %v2643
      %v2648 = vcombine.high %v2593, %v2593
      %v2650 = vunpack.c.l.s4 1966171168
      %v2651 = vunpack.c.0.s8 %v2650
      %v2652 = vlaneseq
      %v2653 = vshrl.u32 %v2652, 7
      %v2654 = vsub.s32 %v2651, %v2653
      %v2655 = vrot.slane %v2593, %v2654
      %v2657 = vunpack.c.l.s4 1966171168
      %v2658 = vunpack.c.0.s8 %v2657
      %v2659 = vlaneseq
      %v2660 = vshrl.u32 %v2659, 7
      %v2661 = vsub.s32 %v2658, %v2660
      %v2662 = vrot.slane %v2648, %v2661
      %v2663 = vcombine.high %v2655, %v2655
      %v2664 = vcombine.high %v2662, %v2662
      %v2666 = vunpack.c.l.s4 1966171168
      %v2667 = vunpack.c.0.s8 %v2666
      %v2668 = vlaneseq
      %v2669 = vshrl.u32 %v2668, 7
      %v2670 = vsub.s32 %v2667, %v2669
      %v2671 = vrot.slane %v2655, %v2670
      %v2673 = vunpack.c.l.s4 1966171168
      %v2674 = vunpack.c.0.s8 %v2673
      %v2675 = vlaneseq
      %v2676 = vshrl.u32 %v2675, 7
      %v2677 = vsub.s32 %v2674, %v2676
      %v2678 = vrot.slane %v2662, %v2677
      %v2680 = vunpack.c.l.s4 1966171168
      %v2681 = vunpack.c.0.s8 %v2680
      %v2682 = vlaneseq
      %v2683 = vshrl.u32 %v2682, 7
      %v2684 = vsub.s32 %v2681, %v2683
      %v2685 = vrot.slane %v2663, %v2684
      %v2687 = vunpack.c.l.s4 1966171168
      %v2688 = vunpack.c.0.s8 %v2687
      %v2689 = vlaneseq
      %v2690 = vshrl.u32 %v2689, 7
      %v2691 = vsub.s32 %v2688, %v2690
      %v2692 = vrot.slane %v2664, %v2691
      %v2693 = vcombine.high %v2671, %v2671
      %v2694 = vcombine.high %v2678, %v2678
      %v2695 = vcombine.high %v2685, %v2685
      %v2696 = vcombine.high %v2692, %v2692
      %v2697 = vlaneseq
      %v2698 = vshrl.u32 %v2697, 7
      %v2699 = vsub.s32 0, %v2698
      %v2700 = vrot.slane %v2622, %v2699
      %v2701 = vlaneseq
      %v2702 = vshrl.u32 %v2701, 7
      %v2703 = vsub.s32 0, %v2702
      %v2704 = vrot.slane %v2636, %v2703
      %v2705 = vlaneseq
      %v2706 = vshrl.u32 %v2705, 7
      %v2707 = vsub.s32 0, %v2706
      %v2708 = vrot.slane %v2644, %v2707
      %v2709 = vlaneseq
      %v2710 = vshrl.u32 %v2709, 7
      %v2711 = vsub.s32 0, %v2710
      %v2712 = vrot.slane %v2646, %v2711
      %v2713 = vlaneseq
      %v2714 = vshrl.u32 %v2713, 7
      %v2715 = vsub.s32 0, %v2714
      %v2716 = vrot.slane %v2629, %v2715
      %v2717 = vlaneseq
      %v2718 = vshrl.u32 %v2717, 7
      %v2719 = vsub.s32 0, %v2718
      %v2720 = vrot.slane %v2643, %v2719
      %v2721 = vlaneseq
      %v2722 = vshrl.u32 %v2721, 7
      %v2723 = vsub.s32 0, %v2722
      %v2724 = vrot.slane %v2645, %v2723
      %v2725 = vlaneseq
      %v2726 = vshrl.u32 %v2725, 7
      %v2727 = vsub.s32 0, %v2726
      %v2728 = vrot.slane %v2647, %v2727
      %v2729 = vlaneseq
      %v2730 = vshrl.u32 %v2729, 7
      %v2731 = vsub.s32 0, %v2730
      %v2732 = vrot.slane %v2671, %v2731
      %v2733 = vlaneseq
      %v2734 = vshrl.u32 %v2733, 7
      %v2735 = vsub.s32 0, %v2734
      %v2736 = vrot.slane %v2685, %v2735
      %v2737 = vlaneseq
      %v2738 = vshrl.u32 %v2737, 7
      %v2739 = vsub.s32 0, %v2738
      %v2740 = vrot.slane %v2693, %v2739
      %v2741 = vlaneseq
      %v2742 = vshrl.u32 %v2741, 7
      %v2743 = vsub.s32 0, %v2742
      %v2744 = vrot.slane %v2695, %v2743
      %v2745 = vlaneseq
      %v2746 = vshrl.u32 %v2745, 7
      %v2747 = vsub.s32 0, %v2746
      %v2748 = vrot.slane %v2678, %v2747
      %v2749 = vlaneseq
      %v2750 = vshrl.u32 %v2749, 7
      %v2751 = vsub.s32 0, %v2750
      %v2752 = vrot.slane %v2692, %v2751
      %v2753 = vlaneseq
      %v2754 = vshrl.u32 %v2753, 7
      %v2755 = vsub.s32 0, %v2754
      %v2756 = vrot.slane %v2694, %v2755
      %v2757 = vlaneseq
      %v2758 = vshrl.u32 %v2757, 7
      %v2759 = vsub.s32 0, %v2758
      %v2760 = vrot.slane %v2696, %v2759
      %2777 = vrot.lane.b32.xlu0 %v2587, 64
      %v2778 = vpop.permute.xlu0 %2777
      %2779 = vrot.lane.b32.xlu0 %v2593, 64
      %v2780 = vpop.permute.xlu0 %2779
      %v2783 = vadd.f32 %v2700, %v2778
      %v2784 = vadd.f32 %v2700, %v2780
      %v2785 = vadd.f32 %v2704, %v2778
      %v2786 = vadd.f32 %v2704, %v2780
      %v2787 = vadd.f32 %v2708, %v2778
      %v2788 = vadd.f32 %v2708, %v2780
      %v2789 = vadd.f32 %v2712, %v2778
      %v2790 = vadd.f32 %v2712, %v2780
      %v2791 = vadd.f32 %v2716, %v2778
      %v2792 = vadd.f32 %v2716, %v2780
      %v2793 = vadd.f32 %v2720, %v2778
      %v2794 = vadd.f32 %v2720, %v2780
      %v2795 = vadd.f32 %v2724, %v2778
      %v2796 = vadd.f32 %v2724, %v2780
      %v2797 = vadd.f32 %v2728, %v2778
      %v2798 = vadd.f32 %v2728, %v2780
      %v2799 = vadd.f32 %v2732, %v2778
      %v2800 = vadd.f32 %v2732, %v2780
      %v2801 = vadd.f32 %v2736, %v2778
      %v2802 = vadd.f32 %v2736, %v2780
      %v2803 = vadd.f32 %v2740, %v2778
      %v2804 = vadd.f32 %v2740, %v2780
      %v2805 = vadd.f32 %v2744, %v2778
      %v2806 = vadd.f32 %v2744, %v2780
      %v2807 = vadd.f32 %v2748, %v2778
      %v2808 = vadd.f32 %v2748, %v2780
      %v2809 = vadd.f32 %v2752, %v2778
      %v2810 = vadd.f32 %v2752, %v2780
      %v2811 = vadd.f32 %v2756, %v2778
      %v2812 = vadd.f32 %v2756, %v2780
      %v2813 = vadd.f32 %v2760, %v2778
      %v2814 = vadd.f32 %v2760, %v2780
      %vm2815 = vcmp.gt.f32.partialorder %v2783, 0.0
      %vm2816 = vcmp.gt.f32.partialorder %v2784, 0.0
      %vm2817 = vcmp.gt.f32.partialorder %v2785, 0.0
      %vm2818 = vcmp.gt.f32.partialorder %v2786, 0.0
      %vm2819 = vcmp.gt.f32.partialorder %v2787, 0.0
      %vm2820 = vcmp.gt.f32.partialorder %v2788, 0.0
      %vm2821 = vcmp.gt.f32.partialorder %v2789, 0.0
      %vm2822 = vcmp.gt.f32.partialorder %v2790, 0.0
      %vm2823 = vcmp.gt.f32.partialorder %v2791, 0.0
      %vm2824 = vcmp.gt.f32.partialorder %v2792, 0.0
      %vm2825 = vcmp.gt.f32.partialorder %v2793, 0.0
      %vm2826 = vcmp.gt.f32.partialorder %v2794, 0.0
      %vm2827 = vcmp.gt.f32.partialorder %v2795, 0.0
      %vm2828 = vcmp.gt.f32.partialorder %v2796, 0.0
      %vm2829 = vcmp.gt.f32.partialorder %v2797, 0.0
      %vm2830 = vcmp.gt.f32.partialorder %v2798, 0.0
      %vm2831 = vcmp.gt.f32.partialorder %v2799, 0.0
      %vm2832 = vcmp.gt.f32.partialorder %v2800, 0.0
      %vm2833 = vcmp.gt.f32.partialorder %v2801, 0.0
      %vm2834 = vcmp.gt.f32.partialorder %v2802, 0.0
      %vm2835 = vcmp.gt.f32.partialorder %v2803, 0.0
      %vm2836 = vcmp.gt.f32.partialorder %v2804, 0.0
      %vm2837 = vcmp.gt.f32.partialorder %v2805, 0.0
      %vm2838 = vcmp.gt.f32.partialorder %v2806, 0.0
      %vm2839 = vcmp.gt.f32.partialorder %v2807, 0.0
      %vm2840 = vcmp.gt.f32.partialorder %v2808, 0.0
      %vm2841 = vcmp.gt.f32.partialorder %v2809, 0.0
      %vm2842 = vcmp.gt.f32.partialorder %v2810, 0.0
      %vm2843 = vcmp.gt.f32.partialorder %v2811, 0.0
      %vm2844 = vcmp.gt.f32.partialorder %v2812, 0.0
      %vm2845 = vcmp.gt.f32.partialorder %v2813, 0.0
      %vm2846 = vcmp.gt.f32.partialorder %v2814, 0.0
      %v2847 = vmul.f32 %v2783, 0.2
      %v2848 = vmul.f32 %v2784, 0.2
      %v2849 = vmul.f32 %v2785, 0.2
      %v2850 = vmul.f32 %v2786, 0.2
      %v2851 = vmul.f32 %v2787, 0.2
      %v2852 = vmul.f32 %v2788, 0.2
      %v2853 = vmul.f32 %v2789, 0.2
      %v2854 = vmul.f32 %v2790, 0.2
      %v2855 = vmul.f32 %v2791, 0.2
      %v2856 = vmul.f32 %v2792, 0.2
      %v2857 = vmul.f32 %v2793, 0.2
      %v2858 = vmul.f32 %v2794, 0.2
      %v2859 = vmul.f32 %v2795, 0.2
      %v2860 = vmul.f32 %v2796, 0.2
      %v2861 = vmul.f32 %v2797, 0.2
      %v2862 = vmul.f32 %v2798, 0.2
      %v2863 = vmul.f32 %v2799, 0.2
      %v2864 = vmul.f32 %v2800, 0.2
      %v2865 = vmul.f32 %v2801, 0.2
      %v2866 = vmul.f32 %v2802, 0.2
      %v2867 = vmul.f32 %v2803, 0.2
      %v2868 = vmul.f32 %v2804, 0.2
      %v2869 = vmul.f32 %v2805, 0.2
      %v2870 = vmul.f32 %v2806, 0.2
      %v2871 = vmul.f32 %v2807, 0.2
      %v2872 = vmul.f32 %v2808, 0.2
      %v2873 = vmul.f32 %v2809, 0.2
      %v2874 = vmul.f32 %v2810, 0.2
      %v2875 = vmul.f32 %v2811, 0.2
      %v2876 = vmul.f32 %v2812, 0.2
      %v2877 = vmul.f32 %v2813, 0.2
      %v2878 = vmul.f32 %v2814, 0.2
      %v2879 = vsel %vm2815, %v2783, %v2847
      %v2880 = vsel %vm2816, %v2784, %v2848
      %v2881 = vsel %vm2817, %v2785, %v2849
      %v2882 = vsel %vm2818, %v2786, %v2850
      %v2883 = vsel %vm2819, %v2787, %v2851
      %v2884 = vsel %vm2820, %v2788, %v2852
      %v2885 = vsel %vm2821, %v2789, %v2853
      %v2886 = vsel %vm2822, %v2790, %v2854
      %v2887 = vsel %vm2823, %v2791, %v2855
      %v2888 = vsel %vm2824, %v2792, %v2856
      %v2889 = vsel %vm2825, %v2793, %v2857
      %v2890 = vsel %vm2826, %v2794, %v2858
      %v2891 = vsel %vm2827, %v2795, %v2859
      %v2892 = vsel %vm2828, %v2796, %v2860
      %v2893 = vsel %vm2829, %v2797, %v2861
      %v2894 = vsel %vm2830, %v2798, %v2862
      %v2895 = vsel %vm2831, %v2799, %v2863
      %v2896 = vsel %vm2832, %v2800, %v2864
      %v2897 = vsel %vm2833, %v2801, %v2865
      %v2898 = vsel %vm2834, %v2802, %v2866
      %v2899 = vsel %vm2835, %v2803, %v2867
      %v2900 = vsel %vm2836, %v2804, %v2868
      %v2901 = vsel %vm2837, %v2805, %v2869
      %v2902 = vsel %vm2838, %v2806, %v2870
      %v2903 = vsel %vm2839, %v2807, %v2871
      %v2904 = vsel %vm2840, %v2808, %v2872
      %v2905 = vsel %vm2841, %v2809, %v2873
      %v2906 = vsel %vm2842, %v2810, %v2874
      %v2907 = vsel %vm2843, %v2811, %v2875
      %v2908 = vsel %vm2844, %v2812, %v2876
      %v2909 = vsel %vm2845, %v2813, %v2877
      %v2910 = vsel %vm2846, %v2814, %v2878
      %v2911 = vld [vmem:[%s12] sm:$0xff]
      %v2912 = vld [vmem:[%s12 + $0x8] sm:$0xff]
      %v2913 = vld [vmem:[%s12 + $0x10] sm:$0xff]
      %v2914 = vld [vmem:[%s12 + $0x18] sm:$0xff]
      %v2915 = vld [vmem:[%s12 + $0x20] sm:$0xff]
      %v2916 = vld [vmem:[%s12 + $0x28] sm:$0xff]
      %v2917 = vld [vmem:[%s12 + $0x30] sm:$0xff]
      %v2918 = vld [vmem:[%s12 + $0x38] sm:$0xff]
      %2951 = vrot.lane.b32.xlu0 %v2879, 64
      %v2952 = vpop.permute.xlu0 %2951
      %2953 = vrot.lane.b32.xlu0 %v2880, 64
      %v2954 = vpop.permute.xlu0 %2953
      %2955 = vrot.lane.b32.xlu0 %v2881, 64
      %v2956 = vpop.permute.xlu0 %2955
      %2957 = vrot.lane.b32.xlu0 %v2882, 64
      %v2958 = vpop.permute.xlu0 %2957
      %2959 = vrot.lane.b32.xlu0 %v2883, 64
      %v2960 = vpop.permute.xlu0 %2959
      %2961 = vrot.lane.b32.xlu0 %v2884, 64
      %v2962 = vpop.permute.xlu0 %2961
      %2963 = vrot.lane.b32.xlu0 %v2885, 64
      %v2964 = vpop.permute.xlu0 %2963
      %2965 = vrot.lane.b32.xlu0 %v2886, 64
      %v2966 = vpop.permute.xlu0 %2965
      %2967 = vrot.lane.b32.xlu0 %v2887, 64
      %v2968 = vpop.permute.xlu0 %2967
      %2969 = vrot.lane.b32.xlu0 %v2888, 64
      %v2970 = vpop.permute.xlu0 %2969
      %2971 = vrot.lane.b32.xlu0 %v2889, 64
      %v2972 = vpop.permute.xlu0 %2971
      %2973 = vrot.lane.b32.xlu0 %v2890, 64
      %v2974 = vpop.permute.xlu0 %2973
      %2975 = vrot.lane.b32.xlu0 %v2891, 64
      %v2976 = vpop.permute.xlu0 %2975
      %2977 = vrot.lane.b32.xlu0 %v2892, 64
      %v2978 = vpop.permute.xlu0 %2977
      %2979 = vrot.lane.b32.xlu0 %v2893, 64
      %v2980 = vpop.permute.xlu0 %2979
      %2981 = vrot.lane.b32.xlu0 %v2894, 64
      %v2982 = vpop.permute.xlu0 %2981
      %2983 = vrot.lane.b32.xlu0 %v2895, 64
      %v2984 = vpop.permute.xlu0 %2983
      %2985 = vrot.lane.b32.xlu0 %v2896, 64
      %v2986 = vpop.permute.xlu0 %2985
      %2987 = vrot.lane.b32.xlu0 %v2897, 64
      %v2988 = vpop.permute.xlu0 %2987
      %2989 = vrot.lane.b32.xlu0 %v2898, 64
      %v2990 = vpop.permute.xlu0 %2989
      %2991 = vrot.lane.b32.xlu0 %v2899, 64
      %v2992 = vpop.permute.xlu0 %2991
      %2993 = vrot.lane.b32.xlu0 %v2900, 64
      %v2994 = vpop.permute.xlu0 %2993
      %2995 = vrot.lane.b32.xlu0 %v2901, 64
      %v2996 = vpop.permute.xlu0 %2995
      %2997 = vrot.lane.b32.xlu0 %v2902, 64
      %v2998 = vpop.permute.xlu0 %2997
      %2999 = vrot.lane.b32.xlu0 %v2903, 64
      %v3000 = vpop.permute.xlu0 %2999
      %3001 = vrot.lane.b32.xlu0 %v2904, 64
      %v3002 = vpop.permute.xlu0 %3001
      %3003 = vrot.lane.b32.xlu0 %v2905, 64
      %v3004 = vpop.permute.xlu0 %3003
      %3005 = vrot.lane.b32.xlu0 %v2906, 64
      %v3006 = vpop.permute.xlu0 %3005
      %3007 = vrot.lane.b32.xlu0 %v2907, 64
      %v3008 = vpop.permute.xlu0 %3007
      %3009 = vrot.lane.b32.xlu0 %v2908, 64
      %v3010 = vpop.permute.xlu0 %3009
      %3011 = vrot.lane.b32.xlu0 %v2909, 64
      %v3012 = vpop.permute.xlu0 %3011
      %3013 = vrot.lane.b32.xlu0 %v2910, 64
      %v3014 = vpop.permute.xlu0 %3013
      %v3015 = vsel %vm1257, %v2952, 0
      %v3017 = vsel %vm1257, %v2954, 0
      %v3019 = vsel %vm1257, %v2956, 0
      %v3021 = vsel %vm1257, %v2958, 0
      %v3023 = vsel %vm1257, %v2960, 0
      %v3025 = vsel %vm1257, %v2962, 0
      %v3027 = vsel %vm1257, %v2964, 0
      %v3029 = vsel %vm1257, %v2966, 0
      %v3031 = vsel %vm1257, %v2968, 0
      %v3033 = vsel %vm1257, %v2970, 0
      %v3035 = vsel %vm1257, %v2972, 0
      %v3037 = vsel %vm1257, %v2974, 0
      %v3039 = vsel %vm1257, %v2976, 0
      %v3041 = vsel %vm1257, %v2978, 0
      %v3043 = vsel %vm1257, %v2980, 0
      %v3045 = vsel %vm1257, %v2982, 0
      %v3047 = vsel %vm1257, %v2984, 0
      %v3049 = vsel %vm1257, %v2986, 0
      %v3051 = vsel %vm1257, %v2988, 0
      %v3053 = vsel %vm1257, %v2990, 0
      %v3055 = vsel %vm1257, %v2992, 0
      %v3057 = vsel %vm1257, %v2994, 0
      %v3059 = vsel %vm1257, %v2996, 0
      %v3061 = vsel %vm1257, %v2998, 0
      %v3063 = vsel %vm1257, %v3000, 0
      %v3065 = vsel %vm1257, %v3002, 0
      %v3067 = vsel %vm1257, %v3004, 0
      %v3069 = vsel %vm1257, %v3006, 0
      %v3071 = vsel %vm1257, %v3008, 0
      %v3073 = vsel %vm1257, %v3010, 0
      %v3075 = vsel %vm1257, %v3012, 0
      %v3077 = vsel %vm1257, %v3014, 0
      %3079 = vmatprep.subr.mxu0 0.0
      %3080 = vmatpush1.msra.mxu0 %v2911
      %3081 = vmatprep.subr.mxu0 0.0
      %3082 = vmatpush1.msra.mxu0 %v2912
      %3083 = vmatprep.subr.mxu0 0.0
      %3084 = vmatpush1.msra.mxu0 %v2913
      %3085 = vmatprep.subr.mxu0 0.0
      %3086 = vmatpush1.msra.mxu0 %v2914
      %3087 = vmatprep.subr.mxu0 0.0
      %3088 = vmatpush1.msra.mxu0 %v2915
      %3089 = vmatprep.subr.mxu0 0.0
      %3090 = vmatpush1.msra.mxu0 %v2916
      %3091 = vmatprep.subr.mxu0 0.0
      %3092 = vmatpush1.msra.mxu0 %v2917
      %3093 = vmatprep.subr.mxu0 0.0
      %3094 = vmatpush1.msra.mxu0 %v2918
      %3095 = vmatprep.subr.mxu0 0.0
      %3096 = vmatpush1.msra.mxu0 0.0
      %3097 = vmatprep.subr.mxu0 0.0
      %3098 = vmatpush1.msra.mxu0 0.0
      %3099 = vmatprep.subr.mxu0 0.0
      %3100 = vmatpush1.msra.mxu0 0.0
      %3101 = vmatprep.subr.mxu0 0.0
      %3102 = vmatpush1.msra.mxu0 0.0
      %3103 = vmatprep.subr.mxu0 0.0
      %3104 = vmatpush1.msra.mxu0 0.0
      %3105 = vmatprep.subr.mxu0 0.0
      %3106 = vmatpush1.msra.mxu0 0.0
      %3107 = vmatprep.subr.mxu0 0.0
      %3108 = vmatpush1.msra.mxu0 0.0
      %3109 = vmatprep.subr.mxu0 0.0
      %3110 = vmatpush1.msra.mxu0 0.0
      %3111 = vmatprep.subr.mxu0 0.0
      %3112 = vmatpush1.msra.mxu0 0.0
      %3113 = vmatprep.subr.mxu0 0.0
      %3114 = vmatpush1.msra.mxu0 0.0
      %3115 = vmatprep.subr.mxu0 0.0
      %3116 = vmatpush1.msra.mxu0 0.0
      %3117 = vmatprep.subr.mxu0 0.0
      %3118 = vmatpush1.msra.mxu0 0.0
      %3119 = vmatprep.subr.mxu0 0.0
      %3120 = vmatpush1.msra.mxu0 0.0
      %3121 = vmatprep.subr.mxu0 0.0
      %3122 = vmatpush1.msra.mxu0 0.0
      %3123 = vmatprep.subr.mxu0 0.0
      %3124 = vmatpush1.msra.mxu0 0.0
      %3125 = vmatprep.subr.mxu0 0.0
      %3126 = vmatpush1.msra.mxu0 0.0
      %3127 = vmatprep.subr.mxu0 0.0
      %3128 = vmatpush1.msra.mxu0 0.0
      %3129 = vmatprep.subr.mxu0 0.0
      %3130 = vmatpush1.msra.mxu0 0.0
      %3131 = vmatprep.subr.mxu0 0.0
      %3132 = vmatpush1.msra.mxu0 0.0
      %3133 = vmatprep.subr.mxu0 0.0
      %3134 = vmatpush1.msra.mxu0 0.0
      %3135 = vmatprep.subr.mxu0 0.0
      %3136 = vmatpush1.msra.mxu0 0.0
      %3137 = vmatprep.subr.mxu0 0.0
      %3138 = vmatpush1.msra.mxu0 0.0
      %3139 = vmatprep.subr.mxu0 0.0
      %3140 = vmatpush1.msra.mxu0 0.0
      %3141 = vmatprep.subr.mxu0 0.0
      %3142 = vmatpush1.msra.mxu0 0.0
      %3143 = vmatprep.mubr.f32.mxu0 0.0
      %3144 = vmatmul.mubr.f32.gmra.mrb[0].mxu0 %v3015
      %v3145 = vpop.f32.mrb[0].mxu0
      %v3146 = vadd.f32 0.0, %v3145
      %v3147 = vpop.f32.mrb[0].mxu0
      %3148 = vmatprep.mubr.f32.mxu0 0.0
      %3149 = vmatmul.mubr.f32.gmra.mrb[0].mxu0 %v3017
      %v3150 = vpop.f32.mrb[0].mxu0
      %v3151 = vadd.f32 0.0, %v3150
      %v3152 = vpop.f32.mrb[0].mxu0
      %3153 = vmatprep.mubr.f32.mxu0 0.0
      %3154 = vmatmul.mubr.f32.gmra.mrb[0].mxu0 %v3019
      %v3155 = vpop.f32.mrb[0].mxu0
      %v3156 = vadd.f32 0.0, %v3155
      %v3157 = vpop.f32.mrb[0].mxu0
      %3158 = vmatprep.mubr.f32.mxu0 0.0
      %3159 = vmatmul.mubr.f32.gmra.mrb[0].mxu0 %v3021
      %v3160 = vpop.f32.mrb[0].mxu0
      %v3161 = vadd.f32 0.0, %v3160
      %v3162 = vpop.f32.mrb[0].mxu0
      %3163 = vmatprep.mubr.f32.mxu0 0.0
      %3164 = vmatmul.mubr.f32.gmra.mrb[0].mxu0 %v3023
      %v3165 = vpop.f32.mrb[0].mxu0
      %v3166 = vadd.f32 0.0, %v3165
      %v3167 = vpop.f32.mrb[0].mxu0
      %3168 = vmatprep.mubr.f32.mxu0 0.0
      %3169 = vmatmul.mubr.f32.gmra.mrb[0].mxu0 %v3025
      %v3170 = vpop.f32.mrb[0].mxu0
      %v3171 = vadd.f32 0.0, %v3170
      %v3172 = vpop.f32.mrb[0].mxu0
      %3173 = vmatprep.mubr.f32.mxu0 0.0
      %3174 = vmatmul.mubr.f32.gmra.mrb[0].mxu0 %v3027
      %v3175 = vpop.f32.mrb[0].mxu0
      %v3176 = vadd.f32 0.0, %v3175
      %v3177 = vpop.f32.mrb[0].mxu0
      %3178 = vmatprep.mubr.f32.mxu0 0.0
      %3179 = vmatmul.mubr.f32.gmra.mrb[0].mxu0 %v3029
      %v3180 = vpop.f32.mrb[0].mxu0
      %v3181 = vadd.f32 0.0, %v3180
      %v3182 = vpop.f32.mrb[0].mxu0
      %3183 = vmatprep.mubr.f32.mxu0 0.0
      %3184 = vmatmul.mubr.f32.gmra.mrb[0].mxu0 %v3031
      %v3185 = vpop.f32.mrb[0].mxu0
      %v3186 = vadd.f32 0.0, %v3185
      %v3187 = vpop.f32.mrb[0].mxu0
      %3188 = vmatprep.mubr.f32.mxu0 0.0
      %3189 = vmatmul.mubr.f32.gmra.mrb[0].mxu0 %v3033
      %v3190 = vpop.f32.mrb[0].mxu0
      %v3191 = vadd.f32 0.0, %v3190
      %v3192 = vpop.f32.mrb[0].mxu0
      %3193 = vmatprep.mubr.f32.mxu0 0.0
      %3194 = vmatmul.mubr.f32.gmra.mrb[0].mxu0 %v3035
      %v3195 = vpop.f32.mrb[0].mxu0
      %v3196 = vadd.f32 0.0, %v3195
      %v3197 = vpop.f32.mrb[0].mxu0
      %3198 = vmatprep.mubr.f32.mxu0 0.0
      %3199 = vmatmul.mubr.f32.gmra.mrb[0].mxu0 %v3037
      %v3200 = vpop.f32.mrb[0].mxu0
      %v3201 = vadd.f32 0.0, %v3200
      %v3202 = vpop.f32.mrb[0].mxu0
      %3203 = vmatprep.mubr.f32.mxu0 0.0
      %3204 = vmatmul.mubr.f32.gmra.mrb[0].mxu0 %v3039
      %v3205 = vpop.f32.mrb[0].mxu0
      %v3206 = vadd.f32 0.0, %v3205
      %v3207 = vpop.f32.mrb[0].mxu0
      %3208 = vmatprep.mubr.f32.mxu0 0.0
      %3209 = vmatmul.mubr.f32.gmra.mrb[0].mxu0 %v3041
      %v3210 = vpop.f32.mrb[0].mxu0
      %v3211 = vadd.f32 0.0, %v3210
      %v3212 = vpop.f32.mrb[0].mxu0
      %3213 = vmatprep.mubr.f32.mxu0 0.0
      %3214 = vmatmul.mubr.f32.gmra.mrb[0].mxu0 %v3043
      %v3215 = vpop.f32.mrb[0].mxu0
      %v3216 = vadd.f32 0.0, %v3215
      %v3217 = vpop.f32.mrb[0].mxu0
      %3218 = vmatprep.mubr.f32.mxu0 0.0
      %3219 = vmatmul.mubr.f32.gmra.mrb[0].mxu0 %v3045
      %v3220 = vpop.f32.mrb[0].mxu0
      %v3221 = vadd.f32 0.0, %v3220
      %v3222 = vpop.f32.mrb[0].mxu0
      %3223 = vmatprep.mubr.f32.mxu0 0.0
      %3224 = vmatmul.mubr.f32.gmra.mrb[0].mxu0 %v3047
      %v3225 = vpop.f32.mrb[0].mxu0
      %v3226 = vadd.f32 0.0, %v3225
      %v3227 = vpop.f32.mrb[0].mxu0
      %3228 = vmatprep.mubr.f32.mxu0 0.0
      %3229 = vmatmul.mubr.f32.gmra.mrb[0].mxu0 %v3049
      %v3230 = vpop.f32.mrb[0].mxu0
      %v3231 = vadd.f32 0.0, %v3230
      %v3232 = vpop.f32.mrb[0].mxu0
      %3233 = vmatprep.mubr.f32.mxu0 0.0
      %3234 = vmatmul.mubr.f32.gmra.mrb[0].mxu0 %v3051
      %v3235 = vpop.f32.mrb[0].mxu0
      %v3236 = vadd.f32 0.0, %v3235
      %v3237 = vpop.f32.mrb[0].mxu0
      %3238 = vmatprep.mubr.f32.mxu0 0.0
      %3239 = vmatmul.mubr.f32.gmra.mrb[0].mxu0 %v3053
      %v3240 = vpop.f32.mrb[0].mxu0
      %v3241 = vadd.f32 0.0, %v3240
      %v3242 = vpop.f32.mrb[0].mxu0
      %3243 = vmatprep.mubr.f32.mxu0 0.0
      %3244 = vmatmul.mubr.f32.gmra.mrb[0].mxu0 %v3055
      %v3245 = vpop.f32.mrb[0].mxu0
      %v3246 = vadd.f32 0.0, %v3245
      %v3247 = vpop.f32.mrb[0].mxu0
      %3248 = vmatprep.mubr.f32.mxu0 0.0
      %3249 = vmatmul.mubr.f32.gmra.mrb[0].mxu0 %v3057
      %v3250 = vpop.f32.mrb[0].mxu0
      %v3251 = vadd.f32 0.0, %v3250
      %v3252 = vpop.f32.mrb[0].mxu0
      %3253 = vmatprep.mubr.f32.mxu0 0.0
      %3254 = vmatmul.mubr.f32.gmra.mrb[0].mxu0 %v3059
      %v3255 = vpop.f32.mrb[0].mxu0
      %v3256 = vadd.f32 0.0, %v3255
      %v3257 = vpop.f32.mrb[0].mxu0
      %3258 = vmatprep.mubr.f32.mxu0 0.0
      %3259 = vmatmul.mubr.f32.gmra.mrb[0].mxu0 %v3061
      %v3260 = vpop.f32.mrb[0].mxu0
      %v3261 = vadd.f32 0.0, %v3260
      %v3262 = vpop.f32.mrb[0].mxu0
      %3263 = vmatprep.mubr.f32.mxu0 0.0
      %3264 = vmatmul.mubr.f32.gmra.mrb[0].mxu0 %v3063
      %v3265 = vpop.f32.mrb[0].mxu0
      %v3266 = vadd.f32 0.0, %v3265
      %v3267 = vpop.f32.mrb[0].mxu0
      %3268 = vmatprep.mubr.f32.mxu0 0.0
      %3269 = vmatmul.mubr.f32.gmra.mrb[0].mxu0 %v3065
      %v3270 = vpop.f32.mrb[0].mxu0
      %v3271 = vadd.f32 0.0, %v3270
      %v3272 = vpop.f32.mrb[0].mxu0
      %3273 = vmatprep.mubr.f32.mxu0 0.0
      %3274 = vmatmul.mubr.f32.gmra.mrb[0].mxu0 %v3067
      %v3275 = vpop.f32.mrb[0].mxu0
      %v3276 = vadd.f32 0.0, %v3275
      %v3277 = vpop.f32.mrb[0].mxu0
      %3278 = vmatprep.mubr.f32.mxu0 0.0
      %3279 = vmatmul.mubr.f32.gmra.mrb[0].mxu0 %v3069
      %v3280 = vpop.f32.mrb[0].mxu0
      %v3281 = vadd.f32 0.0, %v3280
      %v3282 = vpop.f32.mrb[0].mxu0
      %3283 = vmatprep.mubr.f32.mxu0 0.0
      %3284 = vmatmul.mubr.f32.gmra.mrb[0].mxu0 %v3071
      %v3285 = vpop.f32.mrb[0].mxu0
      %v3286 = vadd.f32 0.0, %v3285
      %v3287 = vpop.f32.mrb[0].mxu0
      %3288 = vmatprep.mubr.f32.mxu0 0.0
      %3289 = vmatmul.mubr.f32.gmra.mrb[0].mxu0 %v3073
      %v3290 = vpop.f32.mrb[0].mxu0
      %v3291 = vadd.f32 0.0, %v3290
      %v3292 = vpop.f32.mrb[0].mxu0
      %3293 = vmatprep.mubr.f32.mxu0 0.0
      %3294 = vmatmul.mubr.f32.gmra.mrb[0].mxu0 %v3075
      %v3295 = vpop.f32.mrb[0].mxu0
      %v3296 = vadd.f32 0.0, %v3295
      %v3297 = vpop.f32.mrb[0].mxu0
      %3298 = vmatprep.mubr.f32.mxu0 0.0
      %3299 = vmatmul.mubr.f32.gmra.mrb[0].mxu0 %v3077
      %v3300 = vpop.f32.mrb[0].mxu0
      %v3301 = vadd.f32 0.0, %v3300
      %v3302 = vpop.f32.mrb[0].mxu0
      %3303 = vdwg.mxu0
      %v3304 = vsel %vm1611, %v3146, -1e+30
      %v3305 = vsel %vm1612, %v3151, -1e+30
      %v3306 = vsel %vm1613, %v3156, -1e+30
      %v3307 = vsel %vm1614, %v3161, -1e+30
      %v3308 = vsel %vm1615, %v3166, -1e+30
      %v3309 = vsel %vm1616, %v3171, -1e+30
      %v3310 = vsel %vm1617, %v3176, -1e+30
      %v3311 = vsel %vm1618, %v3181, -1e+30
      %v3312 = vsel %vm1619, %v3186, -1e+30
      %v3313 = vsel %vm1620, %v3191, -1e+30
      %v3314 = vsel %vm1621, %v3196, -1e+30
      %v3315 = vsel %vm1622, %v3201, -1e+30
      %v3316 = vsel %vm1623, %v3206, -1e+30
      %v3317 = vsel %vm1624, %v3211, -1e+30
      %v3318 = vsel %vm1625, %v3216, -1e+30
      %v3319 = vsel %vm1626, %v3221, -1e+30
      %v3320 = vsel %vm1627, %v3226, -1e+30
      %v3321 = vsel %vm1628, %v3231, -1e+30
      %v3322 = vsel %vm1629, %v3236, -1e+30
      %v3323 = vsel %vm1630, %v3241, -1e+30
      %v3324 = vsel %vm1631, %v3246, -1e+30
      %v3325 = vsel %vm1632, %v3251, -1e+30
      %v3326 = vsel %vm1633, %v3256, -1e+30
      %v3327 = vsel %vm1634, %v3261, -1e+30
      %v3328 = vsel %vm1635, %v3266, -1e+30
      %v3329 = vsel %vm1636, %v3271, -1e+30
      %v3330 = vsel %vm1637, %v3276, -1e+30
      %v3331 = vsel %vm1638, %v3281, -1e+30
      %v3332 = vsel %vm1639, %v3286, -1e+30
      %v3333 = vsel %vm1640, %v3291, -1e+30
      %v3334 = vsel %vm1641, %v3296, -1e+30
      %v3335 = vsel %vm1642, %v3301, -1e+30
      %v3336 = vsel %vm1257, %v3304, -inf
      %v3337 = vsel %vm1257, %v3305, -inf
      %v3338 = vmax.f32 %v3336, %v3337
      %v3339 = vrot.slane %v3338, 4
      %v3340 = vmax.f32 %v3338, %v3339
      %v3341 = vrot.slane %v3340, 2
      %v3342 = vmax.f32 %v3340, %v3341
      %v3343 = vrot.slane %v3342, 1
      %v3344 = vmax.f32 %v3342, %v3343
      %v3345 = vsel %vm1257, %v3306, -inf
      %v3346 = vsel %vm1257, %v3307, -inf
      %v3347 = vmax.f32 %v3345, %v3346
      %v3348 = vrot.slane %v3347, 4
      %v3349 = vmax.f32 %v3347, %v3348
      %v3350 = vrot.slane %v3349, 2
      %v3351 = vmax.f32 %v3349, %v3350
      %v3352 = vrot.slane %v3351, 1
      %v3353 = vmax.f32 %v3351, %v3352
      %v3354 = vsel %vm1257, %v3308, -inf
      %v3355 = vsel %vm1257, %v3309, -inf
      %v3356 = vmax.f32 %v3354, %v3355
      %v3357 = vrot.slane %v3356, 4
      %v3358 = vmax.f32 %v3356, %v3357
      %v3359 = vrot.slane %v3358, 2
      %v3360 = vmax.f32 %v3358, %v3359
      %v3361 = vrot.slane %v3360, 1
      %v3362 = vmax.f32 %v3360, %v3361
      %v3363 = vsel %vm1257, %v3310, -inf
      %v3364 = vsel %vm1257, %v3311, -inf
      %v3365 = vmax.f32 %v3363, %v3364
      %v3366 = vrot.slane %v3365, 4
      %v3367 = vmax.f32 %v3365, %v3366
      %v3368 = vrot.slane %v3367, 2
      %v3369 = vmax.f32 %v3367, %v3368
      %v3370 = vrot.slane %v3369, 1
      %v3371 = vmax.f32 %v3369, %v3370
      %v3372 = vsel %vm1257, %v3312, -inf
      %v3373 = vsel %vm1257, %v3313, -inf
      %v3374 = vmax.f32 %v3372, %v3373
      %v3375 = vrot.slane %v3374, 4
      %v3376 = vmax.f32 %v3374, %v3375
      %v3377 = vrot.slane %v3376, 2
      %v3378 = vmax.f32 %v3376, %v3377
      %v3379 = vrot.slane %v3378, 1
      %v3380 = vmax.f32 %v3378, %v3379
      %v3381 = vsel %vm1257, %v3314, -inf
      %v3382 = vsel %vm1257, %v3315, -inf
      %v3383 = vmax.f32 %v3381, %v3382
      %v3384 = vrot.slane %v3383, 4
      %v3385 = vmax.f32 %v3383, %v3384
      %v3386 = vrot.slane %v3385, 2
      %v3387 = vmax.f32 %v3385, %v3386
      %v3388 = vrot.slane %v3387, 1
      %v3389 = vmax.f32 %v3387, %v3388
      %v3390 = vsel %vm1257, %v3316, -inf
      %v3391 = vsel %vm1257, %v3317, -inf
      %v3392 = vmax.f32 %v3390, %v3391
      %v3393 = vrot.slane %v3392, 4
      %v3394 = vmax.f32 %v3392, %v3393
      %v3395 = vrot.slane %v3394, 2
      %v3396 = vmax.f32 %v3394, %v3395
      %v3397 = vrot.slane %v3396, 1
      %v3398 = vmax.f32 %v3396, %v3397
      %v3399 = vsel %vm1257, %v3318, -inf
      %v3400 = vsel %vm1257, %v3319, -inf
      %v3401 = vmax.f32 %v3399, %v3400
      %v3402 = vrot.slane %v3401, 4
      %v3403 = vmax.f32 %v3401, %v3402
      %v3404 = vrot.slane %v3403, 2
      %v3405 = vmax.f32 %v3403, %v3404
      %v3406 = vrot.slane %v3405, 1
      %v3407 = vmax.f32 %v3405, %v3406
      %v3408 = vsel %vm1257, %v3320, -inf
      %v3409 = vsel %vm1257, %v3321, -inf
      %v3410 = vmax.f32 %v3408, %v3409
      %v3411 = vrot.slane %v3410, 4
      %v3412 = vmax.f32 %v3410, %v3411
      %v3413 = vrot.slane %v3412, 2
      %v3414 = vmax.f32 %v3412, %v3413
      %v3415 = vrot.slane %v3414, 1
      %v3416 = vmax.f32 %v3414, %v3415
      %v3417 = vsel %vm1257, %v3322, -inf
      %v3418 = vsel %vm1257, %v3323, -inf
      %v3419 = vmax.f32 %v3417, %v3418
      %v3420 = vrot.slane %v3419, 4
      %v3421 = vmax.f32 %v3419, %v3420
      %v3422 = vrot.slane %v3421, 2
      %v3423 = vmax.f32 %v3421, %v3422
      %v3424 = vrot.slane %v3423, 1
      %v3425 = vmax.f32 %v3423, %v3424
      %v3426 = vsel %vm1257, %v3324, -inf
      %v3427 = vsel %vm1257, %v3325, -inf
      %v3428 = vmax.f32 %v3426, %v3427
      %v3429 = vrot.slane %v3428, 4
      %v3430 = vmax.f32 %v3428, %v3429
      %v3431 = vrot.slane %v3430, 2
      %v3432 = vmax.f32 %v3430, %v3431
      %v3433 = vrot.slane %v3432, 1
      %v3434 = vmax.f32 %v3432, %v3433
      %v3435 = vsel %vm1257, %v3326, -inf
      %v3436 = vsel %vm1257, %v3327, -inf
      %v3437 = vmax.f32 %v3435, %v3436
      %v3438 = vrot.slane %v3437, 4
      %v3439 = vmax.f32 %v3437, %v3438
      %v3440 = vrot.slane %v3439, 2
      %v3441 = vmax.f32 %v3439, %v3440
      %v3442 = vrot.slane %v3441, 1
      %v3443 = vmax.f32 %v3441, %v3442
      %v3444 = vsel %vm1257, %v3328, -inf
      %v3445 = vsel %vm1257, %v3329, -inf
      %v3446 = vmax.f32 %v3444, %v3445
      %v3447 = vrot.slane %v3446, 4
      %v3448 = vmax.f32 %v3446, %v3447
      %v3449 = vrot.slane %v3448, 2
      %v3450 = vmax.f32 %v3448, %v3449
      %v3451 = vrot.slane %v3450, 1
      %v3452 = vmax.f32 %v3450, %v3451
      %v3453 = vsel %vm1257, %v3330, -inf
      %v3454 = vsel %vm1257, %v3331, -inf
      %v3455 = vmax.f32 %v3453, %v3454
      %v3456 = vrot.slane %v3455, 4
      %v3457 = vmax.f32 %v3455, %v3456
      %v3458 = vrot.slane %v3457, 2
      %v3459 = vmax.f32 %v3457, %v3458
      %v3460 = vrot.slane %v3459, 1
      %v3461 = vmax.f32 %v3459, %v3460
      %v3462 = vsel %vm1257, %v3332, -inf
      %v3463 = vsel %vm1257, %v3333, -inf
      %v3464 = vmax.f32 %v3462, %v3463
      %v3465 = vrot.slane %v3464, 4
      %v3466 = vmax.f32 %v3464, %v3465
      %v3467 = vrot.slane %v3466, 2
      %v3468 = vmax.f32 %v3466, %v3467
      %v3469 = vrot.slane %v3468, 1
      %v3470 = vmax.f32 %v3468, %v3469
      %v3471 = vsel %vm1257, %v3334, -inf
      %v3472 = vsel %vm1257, %v3335, -inf
      %v3473 = vmax.f32 %v3471, %v3472
      %v3474 = vrot.slane %v3473, 4
      %v3475 = vmax.f32 %v3473, %v3474
      %v3476 = vrot.slane %v3475, 2
      %v3477 = vmax.f32 %v3475, %v3476
      %v3478 = vrot.slane %v3477, 1
      %v3479 = vmax.f32 %v3477, %v3478
      %v3480 = vsub.f32 %v3304, %v3344
      %v3481 = vsub.f32 %v3305, %v3344
      %v3482 = vsub.f32 %v3306, %v3353
      %v3483 = vsub.f32 %v3307, %v3353
      %v3484 = vsub.f32 %v3308, %v3362
      %v3485 = vsub.f32 %v3309, %v3362
      %v3486 = vsub.f32 %v3310, %v3371
      %v3487 = vsub.f32 %v3311, %v3371
      %v3488 = vsub.f32 %v3312, %v3380
      %v3489 = vsub.f32 %v3313, %v3380
      %v3490 = vsub.f32 %v3314, %v3389
      %v3491 = vsub.f32 %v3315, %v3389
      %v3492 = vsub.f32 %v3316, %v3398
      %v3493 = vsub.f32 %v3317, %v3398
      %v3494 = vsub.f32 %v3318, %v3407
      %v3495 = vsub.f32 %v3319, %v3407
      %v3496 = vsub.f32 %v3320, %v3416
      %v3497 = vsub.f32 %v3321, %v3416
      %v3498 = vsub.f32 %v3322, %v3425
      %v3499 = vsub.f32 %v3323, %v3425
      %v3500 = vsub.f32 %v3324, %v3434
      %v3501 = vsub.f32 %v3325, %v3434
      %v3502 = vsub.f32 %v3326, %v3443
      %v3503 = vsub.f32 %v3327, %v3443
      %v3504 = vsub.f32 %v3328, %v3452
      %v3505 = vsub.f32 %v3329, %v3452
      %v3506 = vsub.f32 %v3330, %v3461
      %v3507 = vsub.f32 %v3331, %v3461
      %v3508 = vsub.f32 %v3332, %v3470
      %v3509 = vsub.f32 %v3333, %v3470
      %v3510 = vsub.f32 %v3334, %v3479
      %v3511 = vsub.f32 %v3335, %v3479
      %v3512 = vmul.f32 %v3480, 1.442695
      %v3513 = vpow.pop %v3512
      %v3514 = vmul.f32 %v3481, 1.442695
      %v3515 = vpow.pop %v3514
      %v3516 = vmul.f32 %v3482, 1.442695
      %v3517 = vpow.pop %v3516
      %v3518 = vmul.f32 %v3483, 1.442695
      %v3519 = vpow.pop %v3518
      %v3520 = vmul.f32 %v3484, 1.442695
      %v3521 = vpow.pop %v3520
      %v3522 = vmul.f32 %v3485, 1.442695
      %v3523 = vpow.pop %v3522
      %v3524 = vmul.f32 %v3486, 1.442695
      %v3525 = vpow.pop %v3524
      %v3526 = vmul.f32 %v3487, 1.442695
      %v3527 = vpow.pop %v3526
      %v3528 = vmul.f32 %v3488, 1.442695
      %v3529 = vpow.pop %v3528
      %v3530 = vmul.f32 %v3489, 1.442695
      %v3531 = vpow.pop %v3530
      %v3532 = vmul.f32 %v3490, 1.442695
      %v3533 = vpow.pop %v3532
      %v3534 = vmul.f32 %v3491, 1.442695
      %v3535 = vpow.pop %v3534
      %v3536 = vmul.f32 %v3492, 1.442695
      %v3537 = vpow.pop %v3536
      %v3538 = vmul.f32 %v3493, 1.442695
      %v3539 = vpow.pop %v3538
      %v3540 = vmul.f32 %v3494, 1.442695
      %v3541 = vpow.pop %v3540
      %v3542 = vmul.f32 %v3495, 1.442695
      %v3543 = vpow.pop %v3542
      %v3544 = vmul.f32 %v3496, 1.442695
      %v3545 = vpow.pop %v3544
      %v3546 = vmul.f32 %v3497, 1.442695
      %v3547 = vpow.pop %v3546
      %v3548 = vmul.f32 %v3498, 1.442695
      %v3549 = vpow.pop %v3548
      %v3550 = vmul.f32 %v3499, 1.442695
      %v3551 = vpow.pop %v3550
      %v3552 = vmul.f32 %v3500, 1.442695
      %v3553 = vpow.pop %v3552
      %v3554 = vmul.f32 %v3501, 1.442695
      %v3555 = vpow.pop %v3554
      %v3556 = vmul.f32 %v3502, 1.442695
      %v3557 = vpow.pop %v3556
      %v3558 = vmul.f32 %v3503, 1.442695
      %v3559 = vpow.pop %v3558
      %v3560 = vmul.f32 %v3504, 1.442695
      %v3561 = vpow.pop %v3560
      %v3562 = vmul.f32 %v3505, 1.442695
      %v3563 = vpow.pop %v3562
      %v3564 = vmul.f32 %v3506, 1.442695
      %v3565 = vpow.pop %v3564
      %v3566 = vmul.f32 %v3507, 1.442695
      %v3567 = vpow.pop %v3566
      %v3568 = vmul.f32 %v3508, 1.442695
      %v3569 = vpow.pop %v3568
      %v3570 = vmul.f32 %v3509, 1.442695
      %v3571 = vpow.pop %v3570
      %v3572 = vmul.f32 %v3510, 1.442695
      %v3573 = vpow.pop %v3572
      %v3574 = vmul.f32 %v3511, 1.442695
      %v3575 = vpow.pop %v3574
      %v3576 = vmul.f32 %v548, %v3513
      %v3577 = vmul.f32 %v552, %v3515
      %v3578 = vmul.f32 %v559, %v3517
      %v3579 = vmul.f32 %v563, %v3519
      %v3580 = vmul.f32 %v570, %v3521
      %v3581 = vmul.f32 %v574, %v3523
      %v3582 = vmul.f32 %v581, %v3525
      %v3583 = vmul.f32 %v585, %v3527
      %v3584 = vmul.f32 %v592, %v3529
      %v3585 = vmul.f32 %v596, %v3531
      %v3586 = vmul.f32 %v603, %v3533
      %v3587 = vmul.f32 %v607, %v3535
      %v3588 = vmul.f32 %v614, %v3537
      %v3589 = vmul.f32 %v618, %v3539
      %v3590 = vmul.f32 %v625, %v3541
      %v3591 = vmul.f32 %v629, %v3543
      %v3592 = vmul.f32 %v636, %v3545
      %v3593 = vmul.f32 %v640, %v3547
      %v3594 = vmul.f32 %v647, %v3549
      %v3595 = vmul.f32 %v651, %v3551
      %v3596 = vmul.f32 %v658, %v3553
      %v3597 = vmul.f32 %v662, %v3555
      %v3598 = vmul.f32 %v669, %v3557
      %v3599 = vmul.f32 %v673, %v3559
      %v3600 = vmul.f32 %v680, %v3561
      %v3601 = vmul.f32 %v684, %v3563
      %v3602 = vmul.f32 %v691, %v3565
      %v3603 = vmul.f32 %v695, %v3567
      %v3604 = vmul.f32 %v702, %v3569
      %v3605 = vmul.f32 %v706, %v3571
      %v3606 = vmul.f32 %v713, %v3573
      %v3607 = vmul.f32 %v717, %v3575
      %v3608 = vsel %vm1257, %v3576, 0.0
      %v3609 = vsel %vm1257, %v3577, 0.0
      %v3610 = vadd.f32 %v3608, %v3609
      %v3611 = vrot.slane %v3610, 4
      %v3612 = vadd.f32 %v3610, %v3611
      %v3613 = vrot.slane %v3612, 2
      %v3614 = vadd.f32 %v3612, %v3613
      %v3615 = vrot.slane %v3614, 1
      %v3616 = vadd.f32 %v3614, %v3615
      %v3617 = vsel %vm1257, %v3578, 0.0
      %v3618 = vsel %vm1257, %v3579, 0.0
      %v3619 = vadd.f32 %v3617, %v3618
      %v3620 = vrot.slane %v3619, 4
      %v3621 = vadd.f32 %v3619, %v3620
      %v3622 = vrot.slane %v3621, 2
      %v3623 = vadd.f32 %v3621, %v3622
      %v3624 = vrot.slane %v3623, 1
      %v3625 = vadd.f32 %v3623, %v3624
      %v3626 = vsel %vm1257, %v3580, 0.0
      %v3627 = vsel %vm1257, %v3581, 0.0
      %v3628 = vadd.f32 %v3626, %v3627
      %v3629 = vrot.slane %v3628, 4
      %v3630 = vadd.f32 %v3628, %v3629
      %v3631 = vrot.slane %v3630, 2
      %v3632 = vadd.f32 %v3630, %v3631
      %v3633 = vrot.slane %v3632, 1
      %v3634 = vadd.f32 %v3632, %v3633
      %v3635 = vsel %vm1257, %v3582, 0.0
      %v3636 = vsel %vm1257, %v3583, 0.0
      %v3637 = vadd.f32 %v3635, %v3636
      %v3638 = vrot.slane %v3637, 4
      %v3639 = vadd.f32 %v3637, %v3638
      %v3640 = vrot.slane %v3639, 2
      %v3641 = vadd.f32 %v3639, %v3640
      %v3642 = vrot.slane %v3641, 1
      %v3643 = vadd.f32 %v3641, %v3642
      %v3644 = vsel %vm1257, %v3584, 0.0
      %v3645 = vsel %vm1257, %v3585, 0.0
      %v3646 = vadd.f32 %v3644, %v3645
      %v3647 = vrot.slane %v3646, 4
      %v3648 = vadd.f32 %v3646, %v3647
      %v3649 = vrot.slane %v3648, 2
      %v3650 = vadd.f32 %v3648, %v3649
      %v3651 = vrot.slane %v3650, 1
      %v3652 = vadd.f32 %v3650, %v3651
      %v3653 = vsel %vm1257, %v3586, 0.0
      %v3654 = vsel %vm1257, %v3587, 0.0
      %v3655 = vadd.f32 %v3653, %v3654
      %v3656 = vrot.slane %v3655, 4
      %v3657 = vadd.f32 %v3655, %v3656
      %v3658 = vrot.slane %v3657, 2
      %v3659 = vadd.f32 %v3657, %v3658
      %v3660 = vrot.slane %v3659, 1
      %v3661 = vadd.f32 %v3659, %v3660
      %v3662 = vsel %vm1257, %v3588, 0.0
      %v3663 = vsel %vm1257, %v3589, 0.0
      %v3664 = vadd.f32 %v3662, %v3663
      %v3665 = vrot.slane %v3664, 4
      %v3666 = vadd.f32 %v3664, %v3665
      %v3667 = vrot.slane %v3666, 2
      %v3668 = vadd.f32 %v3666, %v3667
      %v3669 = vrot.slane %v3668, 1
      %v3670 = vadd.f32 %v3668, %v3669
      %v3671 = vsel %vm1257, %v3590, 0.0
      %v3672 = vsel %vm1257, %v3591, 0.0
      %v3673 = vadd.f32 %v3671, %v3672
      %v3674 = vrot.slane %v3673, 4
      %v3675 = vadd.f32 %v3673, %v3674
      %v3676 = vrot.slane %v3675, 2
      %v3677 = vadd.f32 %v3675, %v3676
      %v3678 = vrot.slane %v3677, 1
      %v3679 = vadd.f32 %v3677, %v3678
      %v3680 = vsel %vm1257, %v3592, 0.0
      %v3681 = vsel %vm1257, %v3593, 0.0
      %v3682 = vadd.f32 %v3680, %v3681
      %v3683 = vrot.slane %v3682, 4
      %v3684 = vadd.f32 %v3682, %v3683
      %v3685 = vrot.slane %v3684, 2
      %v3686 = vadd.f32 %v3684, %v3685
      %v3687 = vrot.slane %v3686, 1
      %v3688 = vadd.f32 %v3686, %v3687
      %v3689 = vsel %vm1257, %v3594, 0.0
      %v3690 = vsel %vm1257, %v3595, 0.0
      %v3691 = vadd.f32 %v3689, %v3690
      %v3692 = vrot.slane %v3691, 4
      %v3693 = vadd.f32 %v3691, %v3692
      %v3694 = vrot.slane %v3693, 2
      %v3695 = vadd.f32 %v3693, %v3694
      %v3696 = vrot.slane %v3695, 1
      %v3697 = vadd.f32 %v3695, %v3696
      %v3698 = vsel %vm1257, %v3596, 0.0
      %v3699 = vsel %vm1257, %v3597, 0.0
      %v3700 = vadd.f32 %v3698, %v3699
      %v3701 = vrot.slane %v3700, 4
      %v3702 = vadd.f32 %v3700, %v3701
      %v3703 = vrot.slane %v3702, 2
      %v3704 = vadd.f32 %v3702, %v3703
      %v3705 = vrot.slane %v3704, 1
      %v3706 = vadd.f32 %v3704, %v3705
      %v3707 = vsel %vm1257, %v3598, 0.0
      %v3708 = vsel %vm1257, %v3599, 0.0
      %v3709 = vadd.f32 %v3707, %v3708
      %v3710 = vrot.slane %v3709, 4
      %v3711 = vadd.f32 %v3709, %v3710
      %v3712 = vrot.slane %v3711, 2
      %v3713 = vadd.f32 %v3711, %v3712
      %v3714 = vrot.slane %v3713, 1
      %v3715 = vadd.f32 %v3713, %v3714
      %v3716 = vsel %vm1257, %v3600, 0.0
      %v3717 = vsel %vm1257, %v3601, 0.0
      %v3718 = vadd.f32 %v3716, %v3717
      %v3719 = vrot.slane %v3718, 4
      %v3720 = vadd.f32 %v3718, %v3719
      %v3721 = vrot.slane %v3720, 2
      %v3722 = vadd.f32 %v3720, %v3721
      %v3723 = vrot.slane %v3722, 1
      %v3724 = vadd.f32 %v3722, %v3723
      %v3725 = vsel %vm1257, %v3602, 0.0
      %v3726 = vsel %vm1257, %v3603, 0.0
      %v3727 = vadd.f32 %v3725, %v3726
      %v3728 = vrot.slane %v3727, 4
      %v3729 = vadd.f32 %v3727, %v3728
      %v3730 = vrot.slane %v3729, 2
      %v3731 = vadd.f32 %v3729, %v3730
      %v3732 = vrot.slane %v3731, 1
      %v3733 = vadd.f32 %v3731, %v3732
      %v3734 = vsel %vm1257, %v3604, 0.0
      %v3735 = vsel %vm1257, %v3605, 0.0
      %v3736 = vadd.f32 %v3734, %v3735
      %v3737 = vrot.slane %v3736, 4
      %v3738 = vadd.f32 %v3736, %v3737
      %v3739 = vrot.slane %v3738, 2
      %v3740 = vadd.f32 %v3738, %v3739
      %v3741 = vrot.slane %v3740, 1
      %v3742 = vadd.f32 %v3740, %v3741
      %v3743 = vsel %vm1257, %v3606, 0.0
      %v3744 = vsel %vm1257, %v3607, 0.0
      %v3745 = vadd.f32 %v3743, %v3744
      %v3746 = vrot.slane %v3745, 4
      %v3747 = vadd.f32 %v3745, %v3746
      %v3748 = vrot.slane %v3747, 2
      %v3749 = vadd.f32 %v3747, %v3748
      %v3750 = vrot.slane %v3749, 1
      %v3751 = vadd.f32 %v3749, %v3750
      %v3752 = vrcp.pop %v3616
      %v3753 = vmul.f32 %v3576, %v3752
      %v3754 = vmul.f32 %v3577, %v3752
      %v3755 = vrcp.pop %v3625
      %v3756 = vmul.f32 %v3578, %v3755
      %v3757 = vmul.f32 %v3579, %v3755
      %v3758 = vrcp.pop %v3634
      %v3759 = vmul.f32 %v3580, %v3758
      %v3760 = vmul.f32 %v3581, %v3758
      %v3761 = vrcp.pop %v3643
      %v3762 = vmul.f32 %v3582, %v3761
      %v3763 = vmul.f32 %v3583, %v3761
      %v3764 = vrcp.pop %v3652
      %v3765 = vmul.f32 %v3584, %v3764
      %v3766 = vmul.f32 %v3585, %v3764
      %v3767 = vrcp.pop %v3661
      %v3768 = vmul.f32 %v3586, %v3767
      %v3769 = vmul.f32 %v3587, %v3767
      %v3770 = vrcp.pop %v3670
      %v3771 = vmul.f32 %v3588, %v3770
      %v3772 = vmul.f32 %v3589, %v3770
      %v3773 = vrcp.pop %v3679
      %v3774 = vmul.f32 %v3590, %v3773
      %v3775 = vmul.f32 %v3591, %v3773
      %v3776 = vrcp.pop %v3688
      %v3777 = vmul.f32 %v3592, %v3776
      %v3778 = vmul.f32 %v3593, %v3776
      %v3779 = vrcp.pop %v3697
      %v3780 = vmul.f32 %v3594, %v3779
      %v3781 = vmul.f32 %v3595, %v3779
      %v3782 = vrcp.pop %v3706
      %v3783 = vmul.f32 %v3596, %v3782
      %v3784 = vmul.f32 %v3597, %v3782
      %v3785 = vrcp.pop %v3715
      %v3786 = vmul.f32 %v3598, %v3785
      %v3787 = vmul.f32 %v3599, %v3785
      %v3788 = vrcp.pop %v3724
      %v3789 = vmul.f32 %v3600, %v3788
      %v3790 = vmul.f32 %v3601, %v3788
      %v3791 = vrcp.pop %v3733
      %v3792 = vmul.f32 %v3602, %v3791
      %v3793 = vmul.f32 %v3603, %v3791
      %v3794 = vrcp.pop %v3742
      %v3795 = vmul.f32 %v3604, %v3794
      %v3796 = vmul.f32 %v3605, %v3794
      %v3797 = vrcp.pop %v3751
      %v3798 = vmul.f32 %v3606, %v3797
      %v3799 = vmul.f32 %v3607, %v3797
      %v3800 = vmul.f32 %v3753, %v2587
      %v3801 = vmul.f32 %v3754, %v2593
      %v3802 = vmul.f32 %v3756, %v2587
      %v3803 = vmul.f32 %v3757, %v2593
      %v3804 = vmul.f32 %v3759, %v2587
      %v3805 = vmul.f32 %v3760, %v2593
      %v3806 = vmul.f32 %v3762, %v2587
      %v3807 = vmul.f32 %v3763, %v2593
      %v3808 = vmul.f32 %v3765, %v2587
      %v3809 = vmul.f32 %v3766, %v2593
      %v3810 = vmul.f32 %v3768, %v2587
      %v3811 = vmul.f32 %v3769, %v2593
      %v3812 = vmul.f32 %v3771, %v2587
      %v3813 = vmul.f32 %v3772, %v2593
      %v3814 = vmul.f32 %v3774, %v2587
      %v3815 = vmul.f32 %v3775, %v2593
      %v3816 = vmul.f32 %v3777, %v2587
      %v3817 = vmul.f32 %v3778, %v2593
      %v3818 = vmul.f32 %v3780, %v2587
      %v3819 = vmul.f32 %v3781, %v2593
      %v3820 = vmul.f32 %v3783, %v2587
      %v3821 = vmul.f32 %v3784, %v2593
      %v3822 = vmul.f32 %v3786, %v2587
      %v3823 = vmul.f32 %v3787, %v2593
      %v3824 = vmul.f32 %v3789, %v2587
      %v3825 = vmul.f32 %v3790, %v2593
      %v3826 = vmul.f32 %v3792, %v2587
      %v3827 = vmul.f32 %v3793, %v2593
      %v3828 = vmul.f32 %v3795, %v2587
      %v3829 = vmul.f32 %v3796, %v2593
      %v3830 = vmul.f32 %v3798, %v2587
      %v3831 = vmul.f32 %v3799, %v2593
      %v3832 = vsel %vm1257, %v3800, 0.0
      %v3833 = vsel %vm1257, %v3801, 0.0
      %v3834 = vadd.f32 %v3832, %v3833
      %v3835 = vrot.slane %v3834, 4
      %v3836 = vadd.f32 %v3834, %v3835
      %v3837 = vrot.slane %v3836, 2
      %v3838 = vadd.f32 %v3836, %v3837
      %v3839 = vrot.slane %v3838, 1
      %v3840 = vadd.f32 %v3838, %v3839
      %v3841 = vsel %vm1257, %v3802, 0.0
      %v3842 = vsel %vm1257, %v3803, 0.0
      %v3843 = vadd.f32 %v3841, %v3842
      %v3844 = vrot.slane %v3843, 4
      %v3845 = vadd.f32 %v3843, %v3844
      %v3846 = vrot.slane %v3845, 2
      %v3847 = vadd.f32 %v3845, %v3846
      %v3848 = vrot.slane %v3847, 1
      %v3849 = vadd.f32 %v3847, %v3848
      %v3850 = vsel %vm1257, %v3804, 0.0
      %v3851 = vsel %vm1257, %v3805, 0.0
      %v3852 = vadd.f32 %v3850, %v3851
      %v3853 = vrot.slane %v3852, 4
      %v3854 = vadd.f32 %v3852, %v3853
      %v3855 = vrot.slane %v3854, 2
      %v3856 = vadd.f32 %v3854, %v3855
      %v3857 = vrot.slane %v3856, 1
      %v3858 = vadd.f32 %v3856, %v3857
      %v3859 = vsel %vm1257, %v3806, 0.0
      %v3860 = vsel %vm1257, %v3807, 0.0
      %v3861 = vadd.f32 %v3859, %v3860
      %v3862 = vrot.slane %v3861, 4
      %v3863 = vadd.f32 %v3861, %v3862
      %v3864 = vrot.slane %v3863, 2
      %v3865 = vadd.f32 %v3863, %v3864
      %v3866 = vrot.slane %v3865, 1
      %v3867 = vadd.f32 %v3865, %v3866
      %v3868 = vsel %vm1257, %v3808, 0.0
      %v3869 = vsel %vm1257, %v3809, 0.0
      %v3870 = vadd.f32 %v3868, %v3869
      %v3871 = vrot.slane %v3870, 4
      %v3872 = vadd.f32 %v3870, %v3871
      %v3873 = vrot.slane %v3872, 2
      %v3874 = vadd.f32 %v3872, %v3873
      %v3875 = vrot.slane %v3874, 1
      %v3876 = vadd.f32 %v3874, %v3875
      %v3877 = vsel %vm1257, %v3810, 0.0
      %v3878 = vsel %vm1257, %v3811, 0.0
      %v3879 = vadd.f32 %v3877, %v3878
      %v3880 = vrot.slane %v3879, 4
      %v3881 = vadd.f32 %v3879, %v3880
      %v3882 = vrot.slane %v3881, 2
      %v3883 = vadd.f32 %v3881, %v3882
      %v3884 = vrot.slane %v3883, 1
      %v3885 = vadd.f32 %v3883, %v3884
      %v3886 = vsel %vm1257, %v3812, 0.0
      %v3887 = vsel %vm1257, %v3813, 0.0
      %v3888 = vadd.f32 %v3886, %v3887
      %v3889 = vrot.slane %v3888, 4
      %v3890 = vadd.f32 %v3888, %v3889
      %v3891 = vrot.slane %v3890, 2
      %v3892 = vadd.f32 %v3890, %v3891
      %v3893 = vrot.slane %v3892, 1
      %v3894 = vadd.f32 %v3892, %v3893
      %v3895 = vsel %vm1257, %v3814, 0.0
      %v3896 = vsel %vm1257, %v3815, 0.0
      %v3897 = vadd.f32 %v3895, %v3896
      %v3898 = vrot.slane %v3897, 4
      %v3899 = vadd.f32 %v3897, %v3898
      %v3900 = vrot.slane %v3899, 2
      %v3901 = vadd.f32 %v3899, %v3900
      %v3902 = vrot.slane %v3901, 1
      %v3903 = vadd.f32 %v3901, %v3902
      %v3904 = vsel %vm1257, %v3816, 0.0
      %v3905 = vsel %vm1257, %v3817, 0.0
      %v3906 = vadd.f32 %v3904, %v3905
      %v3907 = vrot.slane %v3906, 4
      %v3908 = vadd.f32 %v3906, %v3907
      %v3909 = vrot.slane %v3908, 2
      %v3910 = vadd.f32 %v3908, %v3909
      %v3911 = vrot.slane %v3910, 1
      %v3912 = vadd.f32 %v3910, %v3911
      %v3913 = vsel %vm1257, %v3818, 0.0
      %v3914 = vsel %vm1257, %v3819, 0.0
      %v3915 = vadd.f32 %v3913, %v3914
      %v3916 = vrot.slane %v3915, 4
      %v3917 = vadd.f32 %v3915, %v3916
      %v3918 = vrot.slane %v3917, 2
      %v3919 = vadd.f32 %v3917, %v3918
      %v3920 = vrot.slane %v3919, 1
      %v3921 = vadd.f32 %v3919, %v3920
      %v3922 = vsel %vm1257, %v3820, 0.0
      %v3923 = vsel %vm1257, %v3821, 0.0
      %v3924 = vadd.f32 %v3922, %v3923
      %v3925 = vrot.slane %v3924, 4
      %v3926 = vadd.f32 %v3924, %v3925
      %v3927 = vrot.slane %v3926, 2
      %v3928 = vadd.f32 %v3926, %v3927
      %v3929 = vrot.slane %v3928, 1
      %v3930 = vadd.f32 %v3928, %v3929
      %v3931 = vsel %vm1257, %v3822, 0.0
      %v3932 = vsel %vm1257, %v3823, 0.0
      %v3933 = vadd.f32 %v3931, %v3932
      %v3934 = vrot.slane %v3933, 4
      %v3935 = vadd.f32 %v3933, %v3934
      %v3936 = vrot.slane %v3935, 2
      %v3937 = vadd.f32 %v3935, %v3936
      %v3938 = vrot.slane %v3937, 1
      %v3939 = vadd.f32 %v3937, %v3938
      %v3940 = vsel %vm1257, %v3824, 0.0
      %v3941 = vsel %vm1257, %v3825, 0.0
      %v3942 = vadd.f32 %v3940, %v3941
      %v3943 = vrot.slane %v3942, 4
      %v3944 = vadd.f32 %v3942, %v3943
      %v3945 = vrot.slane %v3944, 2
      %v3946 = vadd.f32 %v3944, %v3945
      %v3947 = vrot.slane %v3946, 1
      %v3948 = vadd.f32 %v3946, %v3947
      %v3949 = vsel %vm1257, %v3826, 0.0
      %v3950 = vsel %vm1257, %v3827, 0.0
      %v3951 = vadd.f32 %v3949, %v3950
      %v3952 = vrot.slane %v3951, 4
      %v3953 = vadd.f32 %v3951, %v3952
      %v3954 = vrot.slane %v3953, 2
      %v3955 = vadd.f32 %v3953, %v3954
      %v3956 = vrot.slane %v3955, 1
      %v3957 = vadd.f32 %v3955, %v3956
      %v3958 = vsel %vm1257, %v3828, 0.0
      %v3959 = vsel %vm1257, %v3829, 0.0
      %v3960 = vadd.f32 %v3958, %v3959
      %v3961 = vrot.slane %v3960, 4
      %v3962 = vadd.f32 %v3960, %v3961
      %v3963 = vrot.slane %v3962, 2
      %v3964 = vadd.f32 %v3962, %v3963
      %v3965 = vrot.slane %v3964, 1
      %v3966 = vadd.f32 %v3964, %v3965
      %v3967 = vsel %vm1257, %v3830, 0.0
      %v3968 = vsel %vm1257, %v3831, 0.0
      %v3969 = vadd.f32 %v3967, %v3968
      %v3970 = vrot.slane %v3969, 4
      %v3971 = vadd.f32 %v3969, %v3970
      %v3972 = vrot.slane %v3971, 2
      %v3973 = vadd.f32 %v3971, %v3972
      %v3974 = vrot.slane %v3973, 1
      %v3975 = vadd.f32 %v3973, %v3974
      %v3992 = vsel %vm2331, %v3849, %v3840
      %v3993 = vsel %vm2333, %v3858, %v3992
      %v3994 = vsel %vm2335, %v3867, %v3993
      %v3995 = vsel %vm2337, %v3876, %v3994
      %v3996 = vsel %vm2339, %v3885, %v3995
      %v3997 = vsel %vm2341, %v3894, %v3996
      %v3998 = vsel %vm2343, %v3903, %v3997
      %v3999 = vsel %vm2331, %v3921, %v3912
      %v4000 = vsel %vm2333, %v3930, %v3999
      %v4001 = vsel %vm2335, %v3939, %v4000
      %v4002 = vsel %vm2337, %v3948, %v4001
      %v4003 = vsel %vm2339, %v3957, %v4002
      %v4004 = vsel %vm2341, %v3966, %v4003
      %v4005 = vsel %vm2343, %v3975, %v4004
      %v4006 = vsel %vm1257, %v3998, 0
      %v4008 = vsel %vm1257, %v4005, 0
      %4010 = vmatprep.subr.mxu0 0.0
      %4011 = vmatpush1.msra.mxu0 %v534
      %4012 = vmatprep.subr.mxu0 0.0
      %4013 = vmatpush1.msra.mxu0 %v535
      %4014 = vmatprep.subr.mxu0 0.0
      %4015 = vmatpush1.msra.mxu0 %v536
      %4016 = vmatprep.subr.mxu0 0.0
      %4017 = vmatpush1.msra.mxu0 %v537
      %4018 = vmatprep.subr.mxu0 0.0
      %4019 = vmatpush1.msra.mxu0 %v538
      %4020 = vmatprep.subr.mxu0 0.0
      %4021 = vmatpush1.msra.mxu0 %v539
      %4022 = vmatprep.subr.mxu0 0.0
      %4023 = vmatpush1.msra.mxu0 %v540
      %4024 = vmatprep.subr.mxu0 0.0
      %4025 = vmatpush1.msra.mxu0 %v541
      %4026 = vmatprep.subr.mxu0 0.0
      %4027 = vmatpush1.msra.mxu0 0.0
      %4028 = vmatprep.subr.mxu0 0.0
      %4029 = vmatpush1.msra.mxu0 0.0
      %4030 = vmatprep.subr.mxu0 0.0
      %4031 = vmatpush1.msra.mxu0 0.0
      %4032 = vmatprep.subr.mxu0 0.0
      %4033 = vmatpush1.msra.mxu0 0.0
      %4034 = vmatprep.subr.mxu0 0.0
      %4035 = vmatpush1.msra.mxu0 0.0
      %4036 = vmatprep.subr.mxu0 0.0
      %4037 = vmatpush1.msra.mxu0 0.0
      %4038 = vmatprep.subr.mxu0 0.0
      %4039 = vmatpush1.msra.mxu0 0.0
      %4040 = vmatprep.subr.mxu0 0.0
      %4041 = vmatpush1.msra.mxu0 0.0
      %4042 = vmatprep.subr.mxu0 0.0
      %4043 = vmatpush1.msra.mxu0 0.0
      %4044 = vmatprep.subr.mxu0 0.0
      %4045 = vmatpush1.msra.mxu0 0.0
      %4046 = vmatprep.subr.mxu0 0.0
      %4047 = vmatpush1.msra.mxu0 0.0
      %4048 = vmatprep.subr.mxu0 0.0
      %4049 = vmatpush1.msra.mxu0 0.0
      %4050 = vmatprep.subr.mxu0 0.0
      %4051 = vmatpush1.msra.mxu0 0.0
      %4052 = vmatprep.subr.mxu0 0.0
      %4053 = vmatpush1.msra.mxu0 0.0
      %4054 = vmatprep.subr.mxu0 0.0
      %4055 = vmatpush1.msra.mxu0 0.0
      %4056 = vmatprep.subr.mxu0 0.0
      %4057 = vmatpush1.msra.mxu0 0.0
      %4058 = vmatprep.subr.mxu0 0.0
      %4059 = vmatpush1.msra.mxu0 0.0
      %4060 = vmatprep.subr.mxu0 0.0
      %4061 = vmatpush1.msra.mxu0 0.0
      %4062 = vmatprep.subr.mxu0 0.0
      %4063 = vmatpush1.msra.mxu0 0.0
      %4064 = vmatprep.subr.mxu0 0.0
      %4065 = vmatpush1.msra.mxu0 0.0
      %4066 = vmatprep.subr.mxu0 0.0
      %4067 = vmatpush1.msra.mxu0 0.0
      %4068 = vmatprep.subr.mxu0 0.0
      %4069 = vmatpush1.msra.mxu0 0.0
      %4070 = vmatprep.subr.mxu0 0.0
      %4071 = vmatpush1.msra.mxu0 0.0
      %4072 = vmatprep.subr.mxu0 0.0
      %4073 = vmatpush1.msra.mxu0 0.0
      %4074 = vmatprep.mubr.f32.mxu0 0.0
      %4075 = vmatmul.mubr.f32.gmra.mrb[0].mxu0 %v4006
      %v4076 = vpop.f32.mrb[0].mxu0
      %v4077 = vadd.f32 0.0, %v4076
      %v4078 = vpop.f32.mrb[0].mxu0
      %4079 = vmatprep.mubr.f32.mxu0 0.0
      %4080 = vmatmul.mubr.f32.gmra.mrb[0].mxu0 %v4008
      %v4081 = vpop.f32.mrb[0].mxu0
      %v4082 = vadd.f32 0.0, %v4081
      %v4083 = vpop.f32.mrb[0].mxu0
      %4084 = vdwg.mxu0
      %v4085 = vmul.f32 %v4077, %v2431
      %v4086 = vmul.f32 %v4082, %v2431
      %v4087 = vadd.f32 %v4085, %v2589
      %v4088 = vadd.f32 %v4086, %v2595
      %v4089 = vld [vmem:[%s13] sm:$0x1]
      %v4090 = vlaneseq
      %v4091 = vshrl.u32 %v4090, 7
      %v4092 = vsub.s32 0, %v4091
      %v4093 = vrot.slane %v4089, %v4092
      %v4094 = vadd.f32 %v4087, %v4093
      %v4095 = vadd.f32 %v4088, %v4093
      %v4096 = vsel %vm2443, %v4094, 0.0
      %v4097 = vsel %vm2443, %v4095, 0.0
      %v4098 = vadd.f32 %v4096, %v4097
      %v4099 = vrot.slane %v4098, 4
      %v4100 = vadd.f32 %v4098, %v4099
      %v4101 = vrot.slane %v4100, 2
      %v4102 = vadd.f32 %v4100, %v4101
      %v4103 = vrot.slane %v4102, 1
      %v4104 = vadd.f32 %v4102, %v4103
      %v4105 = vmul.f32 %v4104, %v2453
      %v4106 = vsub.f32 %v4094, %v4105
      %v4107 = vsub.f32 %v4095, %v4105
      %v4108 = vmul.f32 %v4106, %v4106
      %v4109 = vmul.f32 %v4107, %v4107
      %v4110 = vsel %vm2443, %v4108, 0.0
      %v4111 = vsel %vm2443, %v4109, 0.0
      %v4112 = vadd.f32 %v4110, %v4111
      %v4113 = vrot.slane %v4112, 4
      %v4114 = vadd.f32 %v4112, %v4113
      %v4115 = vrot.slane %v4114, 2
      %v4116 = vadd.f32 %v4114, %v4115
      %v4117 = vrot.slane %v4116, 1
      %v4118 = vadd.f32 %v4116, %v4117
      %v4119 = vmul.f32 %v4118, %v2453
      %v4120 = vadd.f32 %v4119, 1e-05
      %v4121 = vrsqrt.pop %v4120
      %v4122 = vmul.f32 %v4106, %v4121
      %v4123 = vmul.f32 %v4107, %v4121
      %v4124 = vld [vmem:[%s13 + $0x1] sm:$0x1]
      %v4125 = vlaneseq
      %v4126 = vshrl.u32 %v4125, 7
      %v4127 = vsub.s32 0, %v4126
      %v4128 = vrot.slane %v4124, %v4127
      %v4129 = vmul.f32 %v4122, %v4128
      %v4130 = vmul.f32 %v4123, %v4128
      %v4131 = vld [vmem:[%s13 + $0x2] sm:$0x1]
      %v4132 = vlaneseq
      %v4133 = vshrl.u32 %v4132, 7
      %v4134 = vsub.s32 0, %v4133
      %v4135 = vrot.slane %v4131, %v4134
      %v4136 = vadd.f32 %v4129, %v4135
      %v4137 = vadd.f32 %v4130, %v4135
      %vm4138 = vcmp.gt.f32.partialorder %v4136, 0.0
      %vm4139 = vcmp.gt.f32.partialorder %v4137, 0.0
      %v4140 = vld [vmem:[%s13 + $0x3] sm:$0x1]
      %v4141 = vlaneseq
      %v4142 = vshrl.u32 %v4141, 7
      %v4143 = vsub.s32 0, %v4142
      %v4144 = vrot.slane %v4140, %v4143
      %v4145 = vmul.f32 %v4144, %v4136
      %v4146 = vmul.f32 %v4144, %v4137
      %v4147 = vsel %vm4138, %v4136, %v4145
      %v4148 = vsel %vm4139, %v4137, %v4146
      %4151 = vrot.lane.b32.xlu0 %v4147, 16
      %v4152 = vpop.permute.xlu0 %4151
      %4153 = vrot.lane.b32.xlu0 %v4148, 16
      %v4154 = vpop.permute.xlu0 %4153
      %v4157 = vsel %vm2443, %v2496, %v4152
      %v4158 = vsel %vm2443, %v2497, %v4154
      %v4159 = vld [vmem:[%s3] sm:$0xff]
      %v4161 = vsel %vm2443, %v4159, 0
      %4163 = vmatprep.subr.mxu0 0.0
      %4164 = vmatpush1.msra.mxu0 %v4157
      %4165 = vmatprep.subr.mxu0 0.0
      %4166 = vmatpush1.msra.mxu0 %v4158
      %4167 = vmatprep.subr.mxu0 0.0
      %4168 = vmatpush1.msra.mxu0 0.0
      %4169 = vmatprep.subr.mxu0 0.0
      %4170 = vmatpush1.msra.mxu0 0.0
      %4171 = vmatprep.subr.mxu0 0.0
      %4172 = vmatpush1.msra.mxu0 0.0
      %4173 = vmatprep.subr.mxu0 0.0
      %4174 = vmatpush1.msra.mxu0 0.0
      %4175 = vmatprep.subr.mxu0 0.0
      %4176 = vmatpush1.msra.mxu0 0.0
      %4177 = vmatprep.subr.mxu0 0.0
      %4178 = vmatpush1.msra.mxu0 0.0
      %4179 = vmatprep.subr.mxu0 0.0
      %4180 = vmatpush1.msra.mxu0 0.0
      %4181 = vmatprep.subr.mxu0 0.0
      %4182 = vmatpush1.msra.mxu0 0.0
      %4183 = vmatprep.subr.mxu0 0.0
      %4184 = vmatpush1.msra.mxu0 0.0
      %4185 = vmatprep.subr.mxu0 0.0
      %4186 = vmatpush1.msra.mxu0 0.0
      %4187 = vmatprep.subr.mxu0 0.0
      %4188 = vmatpush1.msra.mxu0 0.0
      %4189 = vmatprep.subr.mxu0 0.0
      %4190 = vmatpush1.msra.mxu0 0.0
      %4191 = vmatprep.subr.mxu0 0.0
      %4192 = vmatpush1.msra.mxu0 0.0
      %4193 = vmatprep.subr.mxu0 0.0
      %4194 = vmatpush1.msra.mxu0 0.0
      %4195 = vmatprep.subr.mxu0 0.0
      %4196 = vmatpush1.msra.mxu0 0.0
      %4197 = vmatprep.subr.mxu0 0.0
      %4198 = vmatpush1.msra.mxu0 0.0
      %4199 = vmatprep.subr.mxu0 0.0
      %4200 = vmatpush1.msra.mxu0 0.0
      %4201 = vmatprep.subr.mxu0 0.0
      %4202 = vmatpush1.msra.mxu0 0.0
      %4203 = vmatprep.subr.mxu0 0.0
      %4204 = vmatpush1.msra.mxu0 0.0
      %4205 = vmatprep.subr.mxu0 0.0
      %4206 = vmatpush1.msra.mxu0 0.0
      %4207 = vmatprep.subr.mxu0 0.0
      %4208 = vmatpush1.msra.mxu0 0.0
      %4209 = vmatprep.subr.mxu0 0.0
      %4210 = vmatpush1.msra.mxu0 0.0
      %4211 = vmatprep.subr.mxu0 0.0
      %4212 = vmatpush1.msra.mxu0 0.0
      %4213 = vmatprep.subr.mxu0 0.0
      %4214 = vmatpush1.msra.mxu0 0.0
      %4215 = vmatprep.subr.mxu0 0.0
      %4216 = vmatpush1.msra.mxu0 0.0
      %4217 = vmatprep.subr.mxu0 0.0
      %4218 = vmatpush1.msra.mxu0 0.0
      %4219 = vmatprep.subr.mxu0 0.0
      %4220 = vmatpush1.msra.mxu0 0.0
      %4221 = vmatprep.subr.mxu0 0.0
      %4222 = vmatpush1.msra.mxu0 0.0
      %4223 = vmatprep.subr.mxu0 0.0
      %4224 = vmatpush1.msra.mxu0 0.0
      %4225 = vmatprep.subr.mxu0 0.0
      %4226 = vmatpush1.msra.mxu0 0.0
      %4227 = vmatprep.mubr.f32.mxu0 0.0
      %4228 = vmatmul.mubr.f32.gmra.mrb[0].mxu0 %v4161
      %v4229 = vpop.f32.mrb[0].mxu0
      %v4230 = vadd.f32 0.0, %v4229
      %v4231 = vpop.f32.mrb[0].mxu0
      %4232 = vdwg.mxu0
      %v4233 = vld [vmem:[%s4] sm:$0xff]
      %v4235 = vsel %vm2443, %v4233, 0
      %4237 = vmatprep.subr.mxu0 0.0
      %4238 = vmatpush1.msra.mxu0 %v4157
      %4239 = vmatprep.subr.mxu0 0.0
      %4240 = vmatpush1.msra.mxu0 %v4158
      %4241 = vmatprep.subr.mxu0 0.0
      %4242 = vmatpush1.msra.mxu0 0.0
      %4243 = vmatprep.subr.mxu0 0.0
      %4244 = vmatpush1.msra.mxu0 0.0
      %4245 = vmatprep.subr.mxu0 0.0
      %4246 = vmatpush1.msra.mxu0 0.0
      %4247 = vmatprep.subr.mxu0 0.0
      %4248 = vmatpush1.msra.mxu0 0.0
      %4249 = vmatprep.subr.mxu0 0.0
      %4250 = vmatpush1.msra.mxu0 0.0
      %4251 = vmatprep.subr.mxu0 0.0
      %4252 = vmatpush1.msra.mxu0 0.0
      %4253 = vmatprep.subr.mxu0 0.0
      %4254 = vmatpush1.msra.mxu0 0.0
      %4255 = vmatprep.subr.mxu0 0.0
      %4256 = vmatpush1.msra.mxu0 0.0
      %4257 = vmatprep.subr.mxu0 0.0
      %4258 = vmatpush1.msra.mxu0 0.0
      %4259 = vmatprep.subr.mxu0 0.0
      %4260 = vmatpush1.msra.mxu0 0.0
      %4261 = vmatprep.subr.mxu0 0.0
      %4262 = vmatpush1.msra.mxu0 0.0
      %4263 = vmatprep.subr.mxu0 0.0
      %4264 = vmatpush1.msra.mxu0 0.0
      %4265 = vmatprep.subr.mxu0 0.0
      %4266 = vmatpush1.msra.mxu0 0.0
      %4267 = vmatprep.subr.mxu0 0.0
      %4268 = vmatpush1.msra.mxu0 0.0
      %4269 = vmatprep.subr.mxu0 0.0
      %4270 = vmatpush1.msra.mxu0 0.0
      %4271 = vmatprep.subr.mxu0 0.0
      %4272 = vmatpush1.msra.mxu0 0.0
      %4273 = vmatprep.subr.mxu0 0.0
      %4274 = vmatpush1.msra.mxu0 0.0
      %4275 = vmatprep.subr.mxu0 0.0
      %4276 = vmatpush1.msra.mxu0 0.0
      %4277 = vmatprep.subr.mxu0 0.0
      %4278 = vmatpush1.msra.mxu0 0.0
      %4279 = vmatprep.subr.mxu0 0.0
      %4280 = vmatpush1.msra.mxu0 0.0
      %4281 = vmatprep.subr.mxu0 0.0
      %4282 = vmatpush1.msra.mxu0 0.0
      %4283 = vmatprep.subr.mxu0 0.0
      %4284 = vmatpush1.msra.mxu0 0.0
      %4285 = vmatprep.subr.mxu0 0.0
      %4286 = vmatpush1.msra.mxu0 0.0
      %4287 = vmatprep.subr.mxu0 0.0
      %4288 = vmatpush1.msra.mxu0 0.0
      %4289 = vmatprep.subr.mxu0 0.0
      %4290 = vmatpush1.msra.mxu0 0.0
      %4291 = vmatprep.subr.mxu0 0.0
      %4292 = vmatpush1.msra.mxu0 0.0
      %4293 = vmatprep.subr.mxu0 0.0
      %4294 = vmatpush1.msra.mxu0 0.0
      %4295 = vmatprep.subr.mxu0 0.0
      %4296 = vmatpush1.msra.mxu0 0.0
      %4297 = vmatprep.subr.mxu0 0.0
      %4298 = vmatpush1.msra.mxu0 0.0
      %4299 = vmatprep.subr.mxu0 0.0
      %4300 = vmatpush1.msra.mxu0 0.0
      %4301 = vmatprep.mubr.f32.mxu0 0.0
      %4302 = vmatmul.mubr.f32.gmra.mrb[0].mxu0 %v4235
      %v4303 = vpop.f32.mrb[0].mxu0
      %v4304 = vadd.f32 0.0, %v4303
      %v4305 = vpop.f32.mrb[0].mxu0
      %4306 = vdwg.mxu0
      %v4307 = vld [vmem:[%s525] sm:$0xff]
      %4309 = vrot.lane.b32.xlu0 %v4304, 32
      %v4310 = vpop.permute.xlu0 %4309
      %4313 = vrot.lane.b32.xlu0 %v4307, 64
      %v4314 = vpop.permute.xlu0 %4313
      %vm4316 = vcmask 261120
      %v4317 = vsel %vm4316, %v4230, %v4310
      %v4318 = vsel %vm1257, %v4317, %v4314
      %vm4319 = vcmask 703488
      %v4320 = vsel %vm4319, %v4318, 0.0
      %v4321 = vrot.slane %v4320, 4
      %v4322 = vadd.f32 %v4320, %v4321
      %v4323 = vrot.slane %v4322, 2
      %v4324 = vadd.f32 %v4322, %v4323
      %v4325 = vrot.slane %v4324, 1
      %v4326 = vadd.f32 %v4324, %v4325
      %v4327 = vrcp.pop 8.0
      %v4328 = vmul.f32 %v4326, %v4327
      %v4329 = vsub.f32 %v4318, %v4328
      %v4330 = vmul.f32 %v4329, %v4329
      %v4331 = vsel %vm4319, %v4330, 0.0
      %v4332 = vrot.slane %v4331, 4
      %v4333 = vadd.f32 %v4331, %v4332
      %v4334 = vrot.slane %v4333, 2
      %v4335 = vadd.f32 %v4333, %v4334
      %v4336 = vrot.slane %v4335, 1
      %v4337 = vadd.f32 %v4335, %v4336
      %v4338 = vmul.f32 %v4337, %v4327
      %v4339 = vadd.f32 %v4338, 1e-05
      %v4340 = vrsqrt.pop %v4339
      %v4341 = vmul.f32 %v4329, %v4340
      %v4342 = vld [vmem:[%s14] sm:$0x1]
      %v4343 = vlaneseq
      %v4344 = vshrl.u32 %v4343, 7
      %v4345 = vsub.s32 0, %v4344
      %v4346 = vrot.slane %v4342, %v4345
      %v4347 = vmul.f32 %v4341, %v4346
      %v4348 = vld [vmem:[%s14 + $0x1] sm:$0x1]
      %v4349 = vlaneseq
      %v4350 = vshrl.u32 %v4349, 7
      %v4351 = vsub.s32 0, %v4350
      %v4352 = vrot.slane %v4348, %v4351
      %v4353 = vadd.f32 %v4347, %v4352
      %4354 = vst.msk [vmem:[%s529] sm:$0xff] %vm4319, %v4353
      %p4355 = scmp.lt.s32.totalorder %s26, 4
      %s4356 = scalar_select %p4355, %s26, 4
      %s4357 = smul.addr %s4356, 8
      %s4358 = scalar_lea.vmem %s15, %s4357
      // Predicated region
      $region81: #{model_tn_forward.2} parent=79 // pred_check
        %p4359 = pneg %p374
      $region82: #{model_tn_forward.2} parent=79 // pred_check_branch
        %4361 = sbr.rel (%p4359) target = $region84
      $region83: #{model_tn_forward.2} parent=79 // pred_region
        _
      $region84: #{model_tn_forward.2} parent=79 // pred_fallthru
        _
    $region80: #{model_tn_forward.2} parent=5 // pred_fallthru
      _
    %p4362 = scmp.le.s32.totalorder 2, %s21
    // Predicated region
    $region85: #{model_tn_forward.2} parent=5 // pred_check
      %p4363 = pneg %p4362
    $region86: #{model_tn_forward.2} parent=5 // pred_check_branch
      %4365 = sbr.rel (%p4363) target = $region88
    $region87: #{model_tn_forward.2} parent=5 // pred_region
      %s4366 = ssub.s32 %s21, 2
      // Predicated region
      $region89: #{model_tn_forward.2} parent=87 // pred_check
        %p4367 = pneg %p380
      $region90: #{model_tn_forward.2} parent=87 // pred_check_branch
        %4369 = sbr.rel (%p4367) target = $region92
      $region91: #{model_tn_forward.2} parent=87 // pred_region
        %p4370 = scmp.lt.s32.totalorder %s27, 4
        %s4371 = scalar_select %p4370, %s27, 4
        %s4372 = smul.addr %s4371, 8
        %s4373 = scalar_lea.vmem %s15, %s4372
      $region92: #{model_tn_forward.2} parent=87 // pred_fallthru
        _
    $region88: #{model_tn_forward.2} parent=5 // pred_fallthru
      _
  $region6: #{model_tn_forward.2} parent=0 // loop_footer
    %s25 = sadd.s32 1, %s21
  $region7: #{model_tn_forward.2} parent=0 // loop_footer_branch
    %20 = sbr.rel target = $region3
  $region8: #{model_tn_forward.2} parent=0 // loop_exit
    _

</llo_original>
